<compile_context>
chip_gen: v7x
topology: tpu7x:2x2x1
jax: 0.10.0
libtpu: 0.0.40
codegen_flags: <defaults>
</compile_context>

<pallas_src>
import functools

import jax
import jax.numpy as jnp
from jax.experimental import pallas as pl
from jax.experimental.pallas import tpu as pltpu


# ---------------------------------------------------------------------------
# Kernel
# ---------------------------------------------------------------------------
def _window_attn_kernel(x_ref, wqkv_ref, bqkv_ref, wp_ref, bp_ref,
                        biasmask_ref, o_ref, *, num_heads, nw):
    bb, n, c = x_ref.shape            # block_b windows, n tokens, c channels
    hd = c // num_heads
    m = bb * n

    # ---- fused qkv projection (qk scale already folded into the q columns) --
    x = x_ref[...].reshape(m, c).astype(jnp.bfloat16)                   # (M, C)
    qkv = (jnp.dot(x, wqkv_ref[...], preferred_element_type=jnp.float32)
           + bqkv_ref[0]).astype(jnp.bfloat16)                          # (M, 3C)

    # ---- split heads into a leading batch axis: (H*bb, n, hd), head-major ---
    # Heads live in lanes after the projection, so moving them into the batch
    # axis is a one-off lane relayout; every matmul below is head-batched.
    def split_heads(t2d):                                                # (M, C)
        return jnp.concatenate(
            [t2d[:, h * hd:(h + 1) * hd].reshape(bb, n, hd)
             for h in range(num_heads)], axis=0)                        # (H*bb, n, hd)

    q = split_heads(qkv[:, :c])
    k = split_heads(qkv[:, c:2 * c])
    v = split_heads(qkv[:, 2 * c:])

    # ---- head-batched scores, f32 accumulation on the MXU -------------------
    s = jnp.einsum('bqd,bkd->bqk', q, k,
                   preferred_element_type=jnp.float32)                  # (H*bb, n, n)

    # Single fused additive term (rel-pos bias + per-window mask), (H, nw, n, n).
    # Batch index is h*bb + b with windows varying fastest inside b, so the
    # reshape below matches the reference's attn.view(B // nw, nw, H, n, n).
    s = (s.reshape(num_heads, bb // nw, nw, n, n)
         + biasmask_ref[...][:, None]).reshape(num_heads * bb, n, n)

    # ---- softmax in f32 (attn_drop has p = 0.0 -> identity) ------------------
    s = s - jnp.max(s, axis=-1, keepdims=True)
    p = jnp.exp(s)
    p = p * pl.reciprocal(jnp.sum(p, axis=-1, keepdims=True), approx=True)

    # ---- head-batched PV -----------------------------------------------------
    o = jnp.einsum('bqk,bkd->bqd', p.astype(jnp.bfloat16), v,
                   preferred_element_type=jnp.float32
                   ).astype(jnp.bfloat16)                                # (H*bb, n, hd)

    # Re-assemble head-major channels -> (M, C), then ONE output projection.
    o_cat = jnp.concatenate(
        [o[h * bb:(h + 1) * bb].reshape(m, hd) for h in range(num_heads)],
        axis=-1)                                                         # (M, C) bf16
    y = jnp.dot(o_cat, wp_ref[...],
                preferred_element_type=jnp.float32) + bp_ref[0]          # proj_drop p=0.0
    # TODO(synk): for production configs that keep C < 128, a lane-dense out
    # view (block_b, N*C) would avoid the masked vst on this store.
    o_ref[...] = y.reshape(bb, n, c).astype(o_ref.dtype)                 # single slab store


# ---------------------------------------------------------------------------
# VMEM model / block-size selection (generation-aware)
# ---------------------------------------------------------------------------
def _padded_bytes(shape, itemsize):
    """Bytes of a VMEM-resident array including (sublane, lane) tile padding."""
    s = list(shape)
    if s:
        s[-1] = -(-s[-1] // 128) * 128
    if len(s) >= 2:
        sub = {4: 8, 2: 16, 1: 32}.get(itemsize, 8)
        s[-2] = -(-s[-2] // sub) * sub
    size = itemsize
    for d in s:
        size *= d
    return size


def _block_vmem_bytes(bb, N, C, H, nw, io_itemsize, const_bufs=2):
    """Conservative per-grid-step VMEM working-set estimate (bytes)."""
    hd = C // H
    M = bb * N
    b = 0
    # double-buffered pipelined input / output slabs
    b += 2 * _padded_bytes((bb, N, C), io_itemsize)                    # x
    b += 2 * _padded_bytes((bb, N, C), io_itemsize)                    # out
    # resident constants (double-buffered by default)
    b += const_bufs * (_padded_bytes((C, 3 * C), 2)                    # fused qkv W (bf16)
                       + _padded_bytes((1, 3 * C), 4)                  # fused qkv b (f32)
                       + _padded_bytes((C, C), 2)                      # proj W (bf16)
                       + _padded_bytes((1, C), 4)                      # proj b (f32)
                       + _padded_bytes((H, nw, N, N), 4))              # fused bias + mask
    # in-kernel intermediates (single copy each, rough upper bound)
    b += _padded_bytes((M, C), 2)                                      # x bf16
    b += _padded_bytes((M, 3 * C), 4) + _padded_bytes((M, 3 * C), 2)   # qkv f32 + bf16
    b += 3 * _padded_bytes((H * bb, N, hd), 2)                         # q / k / v
    b += 2 * _padded_bytes((H * bb, N, N), 4)                          # scores + exp (f32)
    b += _padded_bytes((H * bb, N, N), 2)                              # probs (bf16)
    b += _padded_bytes((H * bb, N, hd), 2)                             # PV out (bf16)
    b += _padded_bytes((M, C), 2) + _padded_bytes((M, C), 4)           # o_cat + projected y
    return b


def _vmem_capacity_bytes():
    """Per-core VMEM capacity (v5e/v6e: 128 MiB, v7x: 64 MiB per TensorCore)."""
    try:
        return int(pltpu.get_tpu_info().vmem_capacity_bytes)
    except Exception:
        return 64 << 20          # conservative fallback (v7x per-core VMEM)


def _choose_block_b(B, nw, N, C, H, io_itemsize, budget, const_bufs=2):
    """Largest multiple of nw dividing B whose working set fits the budget.

    Prefers an even number of grid steps >= 4 (keeps both v7x TensorCores
    busy with overlapped DMA), then >= 2 steps, then whatever fits.
    """
    cands = [bb for bb in range(nw, B + 1, nw) if B % bb == 0]
    fits = [bb for bb in cands
            if _block_vmem_bytes(bb, N, C, H, nw, io_itemsize, const_bufs) <= budget]
    if not fits:
        return nw
    tier1 = [bb for bb in fits if (B // bb) >= 4 and (B // bb) % 2 == 0]
    if tier1:
        return max(tier1)
    tier2 = [bb for bb in fits if (B // bb) >= 2]
    if tier2:
        return max(tier2)
    return max(fits)


# ---------------------------------------------------------------------------
# Wrapper
# ---------------------------------------------------------------------------
def window_attention_3d(x, *, wqkv, bqkv, wproj, bproj, bias_table,
                        rel_index, num_heads, scale, mask=None, block_b=None):
    """Pallas forward of WindowAttention3D.

    x: (B, N, C), B = batch * num_windows with windows varying fastest
    (matches the PyTorch reference's attn.view(B // nw, nw, ...)).
    """
    B, N, C = x.shape
    assert C % num_heads == 0
    hd = C // num_heads

    # ---- plain-JAX glue: relative-position-bias gather, fused with the mask --
    rel_bias = bias_table[rel_index[:N, :N].reshape(-1)]                 # (N*N, H)
    rel_bias = rel_bias.reshape(N, N, num_heads).transpose(2, 0, 1)      # (H, N, N)
    rel_bias = rel_bias.astype(jnp.float32)

    if mask is None:
        mask_arr = jnp.zeros((1, N, N), jnp.float32)
    else:
        mask_arr = mask.astype(jnp.float32)
    nw = mask_arr.shape[0]
    assert B % nw == 0, "B must be batch * num_windows (windows fastest along B)"

    # Single additive term for the score path (halves the VPU adds in-kernel).
    # TODO(synk): for very large H*nw*N^2 keep bias and mask separate instead.
    biasmask = rel_bias[:, None, :, :] + mask_arr[None, :, :, :]         # (H, nw, N, N)

    # ---- fused qkv weight with the qk scale folded into the q columns -------
    col_scale = jnp.concatenate([jnp.full((C,), scale, jnp.float32),
                                 jnp.ones((2 * C,), jnp.float32)])
    wqkv_t = (wqkv.astype(jnp.float32).T * col_scale[None, :]).astype(jnp.bfloat16)
    bqkv_s = (bqkv.astype(jnp.float32) * col_scale).reshape(1, 3 * C)

    wproj_t = wproj.astype(jnp.float32).T.astype(jnp.bfloat16)           # (C, C)
    bp = bproj.astype(jnp.float32).reshape(1, C)

    # ---- block size / VMEM budget (generation-aware) -------------------------
    vmem_cap = _vmem_capacity_bytes()
    budget = vmem_cap // 2            # ~32 MiB on v7x, ~64 MiB on v5e/v6e
    if block_b is None:
        block_b = _choose_block_b(B, nw, N, C, num_heads, x.dtype.itemsize, budget)
    assert B % block_b == 0 and block_b % nw == 0

    est = _block_vmem_bytes(block_b, N, C, num_heads, nw, x.dtype.itemsize)
    vmem_limit = int(min(int(0.9 * vmem_cap),
                         max(int(1.4 * est) + (2 << 20), 32 << 20)))

    cost = pl.CostEstimate(
        flops=(2 * B * N * C * 3 * C                    # fused qkv projection
               + 2 * 2 * B * num_heads * N * N * hd     # scores + PV
               + 2 * B * N * C * C),                    # output projection
        transcendentals=B * num_heads * N * N,          # softmax exp
        bytes_accessed=(2 * B * N * C * x.dtype.itemsize
                        + wqkv_t.size * 2 + wproj_t.size * 2
                        + biasmask.size * 4 + bqkv_s.size * 4 + bp.size * 4))

    kern = functools.partial(_window_attn_kernel, num_heads=num_heads, nw=nw)
    args = (x, wqkv_t, bqkv_s, wproj_t, bp, biasmask)

    def build(single_buffer_consts):
        ck = ({"pipeline_mode": pl.Buffered(buffer_count=1)}
              if single_buffer_consts else {})
        return pl.pallas_call(
            kern,
            out_shape=jax.ShapeDtypeStruct((B, N, C), x.dtype),
            grid_spec=pltpu.PrefetchScalarGridSpec(
                num_scalar_prefetch=0,
                grid=(B // block_b,),
                in_specs=[
                    pl.BlockSpec((block_b, N, C), lambda i: (i, 0, 0)),          # x slab
                    pl.BlockSpec((C, 3 * C), lambda i: (0, 0), **ck),            # fused qkv W
                    pl.BlockSpec((1, 3 * C), lambda i: (0, 0), **ck),            # fused qkv b
                    pl.BlockSpec((C, C), lambda i: (0, 0), **ck),                # proj W
                    pl.BlockSpec((1, C), lambda i: (0, 0), **ck),                # proj b
                    pl.BlockSpec((num_heads, nw, N, N),
                                 lambda i: (0, 0, 0, 0), **ck),                  # bias + mask
                ],
                out_specs=pl.BlockSpec((block_b, N, C), lambda i: (i, 0, 0)),
            ),
            compiler_params=pltpu.CompilerParams(
                dimension_semantics=("parallel",),
                vmem_limit_bytes=vmem_limit),
            cost_estimate=cost,
        )

    try:
        # Resident constants single-buffered (frees VMEM, matters on v7x 64 MiB).
        return build(True)(*args)
    except Exception:
        # pl.Buffered(1) not supported on this jax version -> default buffering.
        return build(False)(*args)


# ---------------------------------------------------------------------------
# Host helpers / reference
# ---------------------------------------------------------------------------
def _relative_position_index(window_size):
    Wd, Wh, Ww = window_size
    coords = jnp.stack(jnp.meshgrid(jnp.arange(Wd), jnp.arange(Wh), jnp.arange(Ww),
                                    indexing="ij"))                      # (3, Wd, Wh, Ww)
    coords_flat = coords.reshape(3, -1)
    rel = coords_flat[:, :, None] - coords_flat[:, None, :]              # (3, n, n)
    rel = rel.transpose(1, 2, 0)                                         # (n, n, 3)
    rel = rel + jnp.array([Wd - 1, Wh - 1, Ww - 1])
    rel = rel * jnp.array([(2 * Wh - 1) * (2 * Ww - 1), (2 * Ww - 1), 1])
    return rel.sum(-1)                                                   # (n, n)


def _reference(x, wqkv, bqkv, wproj, bproj, bias_table, rel_index,
               num_heads, scale, mask):
    # Pure-JAX f32 transcription of the PyTorch forward (for verification).
    B, N, C = x.shape
    qkv = x @ wqkv.T + bqkv
    qkv = qkv.reshape(B, N, 3, num_heads, C // num_heads).transpose(2, 0, 3, 1, 4)
    q, k, v = qkv[0], qkv[1], qkv[2]
    q = q * scale
    attn = q @ jnp.swapaxes(k, -2, -1)
    bias = bias_table[rel_index[:N, :N].reshape(-1)].reshape(N, N, -1).transpose(2, 0, 1)
    attn = attn + bias[None]
    if mask is not None:
        nw = mask.shape[0]
        attn = attn.reshape(B // nw, nw, num_heads, N, N) + mask[None, :, None]
        attn = attn.reshape(-1, num_heads, N, N)
    attn = jax.nn.softmax(attn, axis=-1)
    out = jnp.swapaxes(attn @ v, 1, 2).reshape(B, N, C)
    return out @ wproj.T + bproj


if __name__ == "__main__":
    dim = 32
    num_heads = 4
    window_size = (2, 4, 4)                    # n = 2*4*4 = 32 tokens per window
    head_dim = dim // num_heads
    scale = head_dim ** (-0.5)
    N = window_size[0] * window_size[1] * window_size[2]
    nw = 4                                     # number of windows
    batch = 2
    B = batch * nw                             # (batch * num_windows) leading dim

    key = jax.random.PRNGKey(0)
    ks = jax.random.split(key, 8)
    table_rows = ((2 * window_size[0] - 1) * (2 * window_size[1] - 1)
                  * (2 * window_size[2] - 1))

    # deterministic synthetic parameters (qkv_bias=True)
    bias_table = 0.02 * jax.random.truncated_normal(ks[0], -2.0, 2.0,
                                                    (table_rows, num_heads), jnp.float32)
    wqkv = 0.05 * jax.random.normal(ks[1], (3 * dim, dim), jnp.float32)
    bqkv = 0.05 * jax.random.normal(ks[2], (3 * dim,), jnp.float32)
    wproj = 0.05 * jax.random.normal(ks[3], (dim, dim), jnp.float32)
    bproj = 0.05 * jax.random.normal(ks[4], (dim,), jnp.float32)

    rel_index = _relative_position_index(window_size)

    x = jax.random.normal(ks[5], (B, N, dim), jnp.float32)
    mask = jnp.where(jax.random.bernoulli(ks[6], 0.2, (nw, N, N)),
                     -100.0, 0.0).astype(jnp.float32)

    out = window_attention_3d(
        x, wqkv=wqkv, bqkv=bqkv, wproj=wproj, bproj=bproj,
        bias_table=bias_table, rel_index=rel_index,
        num_heads=num_heads, scale=scale, mask=mask)
    out = jax.block_until_ready(out)

    ref = _reference(x, wqkv, bqkv, wproj, bproj, bias_table, rel_index,
                     num_heads, scale, mask)
    assert out.shape == (B, N, dim)
    # bf16 MXU operands (f32 accumulation / f32 softmax) -> relaxed tolerance
    assert jnp.allclose(out, ref, atol=2e-2, rtol=2e-2), "mismatch vs reference"

    print("KERNEL_OK")
</pallas_src>

<mosaic_0001>
module attributes {stable_mosaic.version = 11 : i64} {
  func.func @_window_attn_kernel(%arg0: i32, %arg1: memref<4x32x32xf32, #tpu.memory_space<vmem>>, %arg2: memref<32x96xbf16, #tpu.memory_space<vmem>>, %arg3: memref<1x96xf32, #tpu.memory_space<vmem>>, %arg4: memref<32x32xbf16, #tpu.memory_space<vmem>>, %arg5: memref<1x32xf32, #tpu.memory_space<vmem>>, %arg6: memref<4x4x32x32xf32, #tpu.memory_space<vmem>>, %arg7: memref<4x32x32xf32, #tpu.memory_space<vmem>>) attributes {dimension_semantics = [#tpu.dimension_semantics<parallel>], iteration_bounds = array<i64: 2>, scalar_prefetch = 0 : i64, scratch_operands = 0 : i64, tpu.core_type = #tpu.core_type<tc>, window_params = [{transform_indices = @transform_0, window_bounds = array<i64: 4, 32, 32>}, {pipeline_mode = #tpu.pipeline_mode<synchronous>, transform_indices = @transform_1, window_bounds = array<i64: 32, 96>}, {pipeline_mode = #tpu.pipeline_mode<synchronous>, transform_indices = @transform_2, window_bounds = array<i64: 1, 96>}, {pipeline_mode = #tpu.pipeline_mode<synchronous>, transform_indices = @transform_3, window_bounds = array<i64: 32, 32>}, {pipeline_mode = #tpu.pipeline_mode<synchronous>, transform_indices = @transform_4, window_bounds = array<i64: 1, 32>}, {pipeline_mode = #tpu.pipeline_mode<synchronous>, transform_indices = @transform_5, window_bounds = array<i64: 4, 4, 32, 32>}, {transform_indices = @transform_6, window_bounds = array<i64: 4, 32, 32>}]} {
    %c0 = arith.constant 0 : index
    %c0_0 = arith.constant 0 : index
    %c0_1 = arith.constant 0 : index
    %0 = vector.load %arg1[%c0, %c0_0, %c0_1] : memref<4x32x32xf32, #tpu.memory_space<vmem>>, vector<4x32x32xf32>
    %1 = vector.shape_cast %0 : vector<4x32x32xf32> to vector<128x32xf32>
    %2 = arith.truncf %1 : vector<128x32xf32> to vector<128x32xbf16>
    %c0_2 = arith.constant 0 : index
    %c0_3 = arith.constant 0 : index
    %3 = vector.load %arg2[%c0_2, %c0_3] : memref<32x96xbf16, #tpu.memory_space<vmem>>, vector<32x96xbf16>
    %cst = arith.constant dense<0.000000e+00> : vector<128x96xf32>
    %4 = tpu.matmul %2, %3, %cst {dimension_numbers = #tpu.dot_dimension_numbers<[1], [0], [0], [1], [0, 0, 1, 1], [], []>} : vector<128x32xbf16>, vector<32x96xbf16>, vector<128x96xf32> -> vector<128x96xf32>
    %c0_4 = arith.constant 0 : index
    %c0_5 = arith.constant 0 : index
    %5 = vector.load %arg3[%c0_4, %c0_5] : memref<1x96xf32, #tpu.memory_space<vmem>>, vector<1x96xf32>
    %6 = vector.shape_cast %5 : vector<1x96xf32> to vector<96xf32>
    %7 = vector.shape_cast %6 : vector<96xf32> to vector<1x96xf32>
    %8 = vector.broadcast %7 : vector<1x96xf32> to vector<128x96xf32>
    %9 = arith.addf %4, %8 : vector<128x96xf32>
    %10 = arith.truncf %9 : vector<128x96xf32> to vector<128x96xbf16>
    %11 = vector.extract_strided_slice %10 {offsets = [0, 0], sizes = [128, 32], strides = [1, 1]} : vector<128x96xbf16> to vector<128x32xbf16>
    %12 = vector.extract_strided_slice %11 {offsets = [0, 0], sizes = [128, 8], strides = [1, 1]} : vector<128x32xbf16> to vector<128x8xbf16>
    %13 = vector.shape_cast %12 : vector<128x8xbf16> to vector<4x32x8xbf16>
    %14 = vector.extract_strided_slice %11 {offsets = [0, 8], sizes = [128, 8], strides = [1, 1]} : vector<128x32xbf16> to vector<128x8xbf16>
    %15 = vector.shape_cast %14 : vector<128x8xbf16> to vector<4x32x8xbf16>
    %16 = vector.extract_strided_slice %11 {offsets = [0, 16], sizes = [128, 8], strides = [1, 1]} : vector<128x32xbf16> to vector<128x8xbf16>
    %17 = vector.shape_cast %16 : vector<128x8xbf16> to vector<4x32x8xbf16>
    %18 = vector.extract_strided_slice %11 {offsets = [0, 24], sizes = [128, 8], strides = [1, 1]} : vector<128x32xbf16> to vector<128x8xbf16>
    %19 = vector.shape_cast %18 : vector<128x8xbf16> to vector<4x32x8xbf16>
    %20 = tpu.concatenate %13, %15, %17, %19 in 0 : vector<4x32x8xbf16>, vector<4x32x8xbf16>, vector<4x32x8xbf16>, vector<4x32x8xbf16> -> vector<16x32x8xbf16>
    %21 = vector.extract_strided_slice %10 {offsets = [0, 32], sizes = [128, 32], strides = [1, 1]} : vector<128x96xbf16> to vector<128x32xbf16>
    %22 = vector.extract_strided_slice %21 {offsets = [0, 0], sizes = [128, 8], strides = [1, 1]} : vector<128x32xbf16> to vector<128x8xbf16>
    %23 = vector.shape_cast %22 : vector<128x8xbf16> to vector<4x32x8xbf16>
    %24 = vector.extract_strided_slice %21 {offsets = [0, 8], sizes = [128, 8], strides = [1, 1]} : vector<128x32xbf16> to vector<128x8xbf16>
    %25 = vector.shape_cast %24 : vector<128x8xbf16> to vector<4x32x8xbf16>
    %26 = vector.extract_strided_slice %21 {offsets = [0, 16], sizes = [128, 8], strides = [1, 1]} : vector<128x32xbf16> to vector<128x8xbf16>
    %27 = vector.shape_cast %26 : vector<128x8xbf16> to vector<4x32x8xbf16>
    %28 = vector.extract_strided_slice %21 {offsets = [0, 24], sizes = [128, 8], strides = [1, 1]} : vector<128x32xbf16> to vector<128x8xbf16>
    %29 = vector.shape_cast %28 : vector<128x8xbf16> to vector<4x32x8xbf16>
    %30 = tpu.concatenate %23, %25, %27, %29 in 0 : vector<4x32x8xbf16>, vector<4x32x8xbf16>, vector<4x32x8xbf16>, vector<4x32x8xbf16> -> vector<16x32x8xbf16>
    %31 = vector.extract_strided_slice %10 {offsets = [0, 64], sizes = [128, 32], strides = [1, 1]} : vector<128x96xbf16> to vector<128x32xbf16>
    %32 = vector.extract_strided_slice %31 {offsets = [0, 0], sizes = [128, 8], strides = [1, 1]} : vector<128x32xbf16> to vector<128x8xbf16>
    %33 = vector.shape_cast %32 : vector<128x8xbf16> to vector<4x32x8xbf16>
    %34 = vector.extract_strided_slice %31 {offsets = [0, 8], sizes = [128, 8], strides = [1, 1]} : vector<128x32xbf16> to vector<128x8xbf16>
    %35 = vector.shape_cast %34 : vector<128x8xbf16> to vector<4x32x8xbf16>
    %36 = vector.extract_strided_slice %31 {offsets = [0, 16], sizes = [128, 8], strides = [1, 1]} : vector<128x32xbf16> to vector<128x8xbf16>
    %37 = vector.shape_cast %36 : vector<128x8xbf16> to vector<4x32x8xbf16>
    %38 = vector.extract_strided_slice %31 {offsets = [0, 24], sizes = [128, 8], strides = [1, 1]} : vector<128x32xbf16> to vector<128x8xbf16>
    %39 = vector.shape_cast %38 : vector<128x8xbf16> to vector<4x32x8xbf16>
    %40 = tpu.concatenate %33, %35, %37, %39 in 0 : vector<4x32x8xbf16>, vector<4x32x8xbf16>, vector<4x32x8xbf16>, vector<4x32x8xbf16> -> vector<16x32x8xbf16>
    "tpu.trace_start"() <{level = 10 : i32, message = "bqd,bkd->bqk"}> : () -> ()
    %cst_6 = arith.constant dense<0.000000e+00> : vector<16x32x32xf32>
    %41 = tpu.matmul %20, %30, %cst_6 {dimension_numbers = #tpu.dot_dimension_numbers<[2], [2], [1], [1], [0, 0, 0, 1, 1, 1], [0], [0]>} : vector<16x32x8xbf16>, vector<16x32x8xbf16>, vector<16x32x32xf32> -> vector<16x32x32xf32>
    "tpu.trace_stop"() : () -> ()
    %42 = vector.shape_cast %41 : vector<16x32x32xf32> to vector<4x1x4x32x32xf32>
    %c0_7 = arith.constant 0 : index
    %c0_8 = arith.constant 0 : index
    %c0_9 = arith.constant 0 : index
    %c0_10 = arith.constant 0 : index
    %43 = vector.load %arg6[%c0_7, %c0_8, %c0_9, %c0_10] : memref<4x4x32x32xf32, #tpu.memory_space<vmem>>, vector<4x4x32x32xf32>
    %44 = vector.shape_cast %43 : vector<4x4x32x32xf32> to vector<4x1x4x32x32xf32>
    %45 = arith.addf %42, %44 : vector<4x1x4x32x32xf32>
    %46 = vector.shape_cast %45 : vector<4x1x4x32x32xf32> to vector<16x32x32xf32>
    %cst_11 = arith.constant dense<0xFF800000> : vector<16x32xf32>
    %47 = vector.multi_reduction <maximumf>, %46, %cst_11 [2] : vector<16x32x32xf32> to vector<16x32xf32>
    %48 = vector.shape_cast %47 : vector<16x32xf32> to vector<16x32x1xf32>
    %49 = vector.broadcast %48 : vector<16x32x1xf32> to vector<16x32x32xf32>
    %50 = arith.subf %46, %49 : vector<16x32x32xf32>
    %51 = math.exp %50 : vector<16x32x32xf32>
    %cst_12 = arith.constant dense<0.000000e+00> : vector<16x32xf32>
    %52 = vector.multi_reduction <add>, %51, %cst_12 [2] : vector<16x32x32xf32> to vector<16x32xf32>
    %53 = vector.shape_cast %52 : vector<16x32xf32> to vector<16x32x1xf32>
    %54 = tpu.reciprocal %53 {approx = true} : vector<16x32x1xf32> -> vector<16x32x1xf32>
    %55 = vector.broadcast %54 : vector<16x32x1xf32> to vector<16x32x32xf32>
    %56 = arith.mulf %51, %55 : vector<16x32x32xf32>
    %57 = arith.truncf %56 : vector<16x32x32xf32> to vector<16x32x32xbf16>
    "tpu.trace_start"() <{level = 10 : i32, message = "bqk,bkd->bqd"}> : () -> ()
    %cst_13 = arith.constant dense<0.000000e+00> : vector<16x32x8xf32>
    %58 = tpu.matmul %57, %40, %cst_13 {dimension_numbers = #tpu.dot_dimension_numbers<[2], [1], [1], [2], [0, 0, 0, 1, 1, 2], [0], [0]>} : vector<16x32x32xbf16>, vector<16x32x8xbf16>, vector<16x32x8xf32> -> vector<16x32x8xf32>
    "tpu.trace_stop"() : () -> ()
    %59 = arith.truncf %58 : vector<16x32x8xf32> to vector<16x32x8xbf16>
    %60 = vector.extract_strided_slice %59 {offsets = [0, 0, 0], sizes = [4, 32, 8], strides = [1, 1, 1]} : vector<16x32x8xbf16> to vector<4x32x8xbf16>
    %61 = vector.shape_cast %60 : vector<4x32x8xbf16> to vector<128x8xbf16>
    %62 = vector.extract_strided_slice %59 {offsets = [4, 0, 0], sizes = [4, 32, 8], strides = [1, 1, 1]} : vector<16x32x8xbf16> to vector<4x32x8xbf16>
    %63 = vector.shape_cast %62 : vector<4x32x8xbf16> to vector<128x8xbf16>
    %64 = vector.extract_strided_slice %59 {offsets = [8, 0, 0], sizes = [4, 32, 8], strides = [1, 1, 1]} : vector<16x32x8xbf16> to vector<4x32x8xbf16>
    %65 = vector.shape_cast %64 : vector<4x32x8xbf16> to vector<128x8xbf16>
    %66 = vector.extract_strided_slice %59 {offsets = [12, 0, 0], sizes = [4, 32, 8], strides = [1, 1, 1]} : vector<16x32x8xbf16> to vector<4x32x8xbf16>
    %67 = vector.shape_cast %66 : vector<4x32x8xbf16> to vector<128x8xbf16>
    %68 = tpu.concatenate %61, %63, %65, %67 in 1 : vector<128x8xbf16>, vector<128x8xbf16>, vector<128x8xbf16>, vector<128x8xbf16> -> vector<128x32xbf16>
    %c0_14 = arith.constant 0 : index
    %c0_15 = arith.constant 0 : index
    %69 = vector.load %arg4[%c0_14, %c0_15] : memref<32x32xbf16, #tpu.memory_space<vmem>>, vector<32x32xbf16>
    %cst_16 = arith.constant dense<0.000000e+00> : vector<128x32xf32>
    %70 = tpu.matmul %68, %69, %cst_16 {dimension_numbers = #tpu.dot_dimension_numbers<[1], [0], [0], [1], [0, 0, 1, 1], [], []>} : vector<128x32xbf16>, vector<32x32xbf16>, vector<128x32xf32> -> vector<128x32xf32>
    %c0_17 = arith.constant 0 : index
    %c0_18 = arith.constant 0 : index
    %71 = vector.load %arg5[%c0_17, %c0_18] : memref<1x32xf32, #tpu.memory_space<vmem>>, vector<1x32xf32>
    %72 = vector.shape_cast %71 : vector<1x32xf32> to vector<32xf32>
    %73 = vector.shape_cast %72 : vector<32xf32> to vector<1x32xf32>
    %74 = vector.broadcast %73 : vector<1x32xf32> to vector<128x32xf32>
    %75 = arith.addf %70, %74 : vector<128x32xf32>
    %76 = vector.shape_cast %75 : vector<128x32xf32> to vector<4x32x32xf32>
    %c0_19 = arith.constant 0 : index
    %c0_20 = arith.constant 0 : index
    %c0_21 = arith.constant 0 : index
    %77 = vector.load %arg7[%c0_19, %c0_20, %c0_21] : memref<4x32x32xf32, #tpu.memory_space<vmem>>, vector<4x32x32xf32>
    tpu.vector_store %arg7[%c0_19, %c0_20, %c0_21], %76 {strides = array<i32>} : memref<4x32x32xf32, #tpu.memory_space<vmem>>, vector<4x32x32xf32>,
    return
  }
  func.func @transform_0(%arg0: i32) -> (i32, i32, i32) {
    %c0_i32 = arith.constant 0 : i32
    %c0_i32_0 = arith.constant 0 : i32
    %c0_i32_1 = arith.constant 0 : i32
    return %arg0, %c0_i32, %c0_i32_0 : i32, i32, i32
  }
  func.func @transform_1(%arg0: i32) -> (i32, i32) {
    %c0_i32 = arith.constant 0 : i32
    %c0_i32_0 = arith.constant 0 : i32
    %c0_i32_1 = arith.constant 0 : i32
    return %c0_i32, %c0_i32_0 : i32, i32
  }
  func.func @transform_2(%arg0: i32) -> (i32, i32) {
    %c0_i32 = arith.constant 0 : i32
    %c0_i32_0 = arith.constant 0 : i32
    %c0_i32_1 = arith.constant 0 : i32
    return %c0_i32, %c0_i32_0 : i32, i32
  }
  func.func @transform_3(%arg0: i32) -> (i32, i32) {
    %c0_i32 = arith.constant 0 : i32
    %c0_i32_0 = arith.constant 0 : i32
    %c0_i32_1 = arith.constant 0 : i32
    return %c0_i32, %c0_i32_0 : i32, i32
  }
  func.func @transform_4(%arg0: i32) -> (i32, i32) {
    %c0_i32 = arith.constant 0 : i32
    %c0_i32_0 = arith.constant 0 : i32
    %c0_i32_1 = arith.constant 0 : i32
    return %c0_i32, %c0_i32_0 : i32, i32
  }
  func.func @transform_5(%arg0: i32) -> (i32, i32, i32, i32) {
    %c0_i32 = arith.constant 0 : i32
    %c0_i32_0 = arith.constant 0 : i32
    %c0_i32_1 = arith.constant 0 : i32
    %c0_i32_2 = arith.constant 0 : i32
    %c0_i32_3 = arith.constant 0 : i32
    return %c0_i32, %c0_i32_0, %c0_i32_1, %c0_i32_2 : i32, i32, i32, i32
  }
  func.func @transform_6(%arg0: i32) -> (i32, i32, i32) {
    %c0_i32 = arith.constant 0 : i32
    %c0_i32_0 = arith.constant 0 : i32
    %c0_i32_1 = arith.constant 0 : i32
    return %arg0, %c0_i32, %c0_i32_0 : i32, i32, i32
  }
}

module attributes {stable_mosaic.version = 11 : i64} {
  func.func @_window_attn_kernel(%arg0: i32, %arg1: memref<4x32x32xf32, #tpu.memory_space<vmem>>, %arg2: memref<32x96xbf16, #tpu.memory_space<vmem>>, %arg3: memref<1x96xf32, #tpu.memory_space<vmem>>, %arg4: memref<32x32xbf16, #tpu.memory_space<vmem>>, %arg5: memref<1x32xf32, #tpu.memory_space<vmem>>, %arg6: memref<4x4x32x32xf32, #tpu.memory_space<vmem>>, %arg7: memref<4x32x32xf32, #tpu.memory_space<vmem>>) attributes {dimension_semantics = [#tpu.dimension_semantics<parallel>], iteration_bounds = array<i64: 2>, scalar_prefetch = 0 : i64, scratch_operands = 0 : i64, tpu.core_type = #tpu.core_type<tc>, window_params = [{transform_indices = @transform_0, window_bounds = array<i64: 4, 32, 32>}, {pipeline_mode = #tpu.pipeline_mode<synchronous>, transform_indices = @transform_1, window_bounds = array<i64: 32, 96>}, {pipeline_mode = #tpu.pipeline_mode<synchronous>, transform_indices = @transform_2, window_bounds = array<i64: 1, 96>}, {pipeline_mode = #tpu.pipeline_mode<synchronous>, transform_indices = @transform_3, window_bounds = array<i64: 32, 32>}, {pipeline_mode = #tpu.pipeline_mode<synchronous>, transform_indices = @transform_4, window_bounds = array<i64: 1, 32>}, {pipeline_mode = #tpu.pipeline_mode<synchronous>, transform_indices = @transform_5, window_bounds = array<i64: 4, 4, 32, 32>}, {transform_indices = @transform_6, window_bounds = array<i64: 4, 32, 32>}]} {
    %c0 = arith.constant 0 : index
    %c0_0 = arith.constant 0 : index
    %c0_1 = arith.constant 0 : index
    %0 = vector.load %arg1[%c0, %c0_0, %c0_1] : memref<4x32x32xf32, #tpu.memory_space<vmem>>, vector<4x32x32xf32>
    %1 = vector.shape_cast %0 : vector<4x32x32xf32> to vector<128x32xf32>
    %2 = arith.truncf %1 : vector<128x32xf32> to vector<128x32xbf16>
    %c0_2 = arith.constant 0 : index
    %c0_3 = arith.constant 0 : index
    %3 = vector.load %arg2[%c0_2, %c0_3] : memref<32x96xbf16, #tpu.memory_space<vmem>>, vector<32x96xbf16>
    %cst = arith.constant dense<0.000000e+00> : vector<128x96xf32>
    %4 = tpu.matmul %2, %3, %cst {dimension_numbers = #tpu.dot_dimension_numbers<[1], [0], [0], [1], [0, 0, 1, 1], [], []>} : vector<128x32xbf16>, vector<32x96xbf16>, vector<128x96xf32> -> vector<128x96xf32>
    %c0_4 = arith.constant 0 : index
    %c0_5 = arith.constant 0 : index
    %5 = vector.load %arg3[%c0_4, %c0_5] : memref<1x96xf32, #tpu.memory_space<vmem>>, vector<1x96xf32>
    %6 = vector.shape_cast %5 : vector<1x96xf32> to vector<96xf32>
    %7 = vector.shape_cast %6 : vector<96xf32> to vector<1x96xf32>
    %8 = vector.broadcast %7 : vector<1x96xf32> to vector<128x96xf32>
    %9 = arith.addf %4, %8 : vector<128x96xf32>
    %10 = arith.truncf %9 : vector<128x96xf32> to vector<128x96xbf16>
    %11 = vector.extract_strided_slice %10 {offsets = [0, 0], sizes = [128, 32], strides = [1, 1]} : vector<128x96xbf16> to vector<128x32xbf16>
    %12 = vector.extract_strided_slice %11 {offsets = [0, 0], sizes = [128, 8], strides = [1, 1]} : vector<128x32xbf16> to vector<128x8xbf16>
    %13 = vector.shape_cast %12 : vector<128x8xbf16> to vector<4x32x8xbf16>
    %14 = vector.extract_strided_slice %11 {offsets = [0, 8], sizes = [128, 8], strides = [1, 1]} : vector<128x32xbf16> to vector<128x8xbf16>
    %15 = vector.shape_cast %14 : vector<128x8xbf16> to vector<4x32x8xbf16>
    %16 = vector.extract_strided_slice %11 {offsets = [0, 16], sizes = [128, 8], strides = [1, 1]} : vector<128x32xbf16> to vector<128x8xbf16>
    %17 = vector.shape_cast %16 : vector<128x8xbf16> to vector<4x32x8xbf16>
    %18 = vector.extract_strided_slice %11 {offsets = [0, 24], sizes = [128, 8], strides = [1, 1]} : vector<128x32xbf16> to vector<128x8xbf16>
    %19 = vector.shape_cast %18 : vector<128x8xbf16> to vector<4x32x8xbf16>
    %20 = tpu.concatenate %13, %15, %17, %19 in 0 : vector<4x32x8xbf16>, vector<4x32x8xbf16>, vector<4x32x8xbf16>, vector<4x32x8xbf16> -> vector<16x32x8xbf16>
    %21 = vector.extract_strided_slice %10 {offsets = [0, 32], sizes = [128, 32], strides = [1, 1]} : vector<128x96xbf16> to vector<128x32xbf16>
    %22 = vector.extract_strided_slice %21 {offsets = [0, 0], sizes = [128, 8], strides = [1, 1]} : vector<128x32xbf16> to vector<128x8xbf16>
    %23 = vector.shape_cast %22 : vector<128x8xbf16> to vector<4x32x8xbf16>
    %24 = vector.extract_strided_slice %21 {offsets = [0, 8], sizes = [128, 8], strides = [1, 1]} : vector<128x32xbf16> to vector<128x8xbf16>
    %25 = vector.shape_cast %24 : vector<128x8xbf16> to vector<4x32x8xbf16>
    %26 = vector.extract_strided_slice %21 {offsets = [0, 16], sizes = [128, 8], strides = [1, 1]} : vector<128x32xbf16> to vector<128x8xbf16>
    %27 = vector.shape_cast %26 : vector<128x8xbf16> to vector<4x32x8xbf16>
    %28 = vector.extract_strided_slice %21 {offsets = [0, 24], sizes = [128, 8], strides = [1, 1]} : vector<128x32xbf16> to vector<128x8xbf16>
    %29 = vector.shape_cast %28 : vector<128x8xbf16> to vector<4x32x8xbf16>
    %30 = tpu.concatenate %23, %25, %27, %29 in 0 : vector<4x32x8xbf16>, vector<4x32x8xbf16>, vector<4x32x8xbf16>, vector<4x32x8xbf16> -> vector<16x32x8xbf16>
    %31 = vector.extract_strided_slice %10 {offsets = [0, 64], sizes = [128, 32], strides = [1, 1]} : vector<128x96xbf16> to vector<128x32xbf16>
    %32 = vector.extract_strided_slice %31 {offsets = [0, 0], sizes = [128, 8], strides = [1, 1]} : vector<128x32xbf16> to vector<128x8xbf16>
    %33 = vector.shape_cast %32 : vector<128x8xbf16> to vector<4x32x8xbf16>
    %34 = vector.extract_strided_slice %31 {offsets = [0, 8], sizes = [128, 8], strides = [1, 1]} : vector<128x32xbf16> to vector<128x8xbf16>
    %35 = vector.shape_cast %34 : vector<128x8xbf16> to vector<4x32x8xbf16>
    %36 = vector.extract_strided_slice %31 {offsets = [0, 16], sizes = [128, 8], strides = [1, 1]} : vector<128x32xbf16> to vector<128x8xbf16>
    %37 = vector.shape_cast %36 : vector<128x8xbf16> to vector<4x32x8xbf16>
    %38 = vector.extract_strided_slice %31 {offsets = [0, 24], sizes = [128, 8], strides = [1, 1]} : vector<128x32xbf16> to vector<128x8xbf16>
    %39 = vector.shape_cast %38 : vector<128x8xbf16> to vector<4x32x8xbf16>
    %40 = tpu.concatenate %33, %35, %37, %39 in 0 : vector<4x32x8xbf16>, vector<4x32x8xbf16>, vector<4x32x8xbf16>, vector<4x32x8xbf16> -> vector<16x32x8xbf16>
    "tpu.trace_start"() <{level = 10 : i32, message = "bqd,bkd->bqk"}> : () -> ()
    %cst_6 = arith.constant dense<0.000000e+00> : vector<16x32x32xf32>
    %41 = tpu.matmul %20, %30, %cst_6 {dimension_numbers = #tpu.dot_dimension_numbers<[2], [2], [1], [1], [0, 0, 0, 1, 1, 1], [0], [0]>} : vector<16x32x8xbf16>, vector<16x32x8xbf16>, vector<16x32x32xf32> -> vector<16x32x32xf32>
    "tpu.trace_stop"() : () -> ()
    %42 = vector.shape_cast %41 : vector<16x32x32xf32> to vector<4x1x4x32x32xf32>
    %c0_7 = arith.constant 0 : index
    %c0_8 = arith.constant 0 : index
    %c0_9 = arith.constant 0 : index
    %c0_10 = arith.constant 0 : index
    %43 = vector.load %arg6[%c0_7, %c0_8, %c0_9, %c0_10] : memref<4x4x32x32xf32, #tpu.memory_space<vmem>>, vector<4x4x32x32xf32>
    %44 = vector.shape_cast %43 : vector<4x4x32x32xf32> to vector<4x1x4x32x32xf32>
    %45 = arith.addf %42, %44 : vector<4x1x4x32x32xf32>
    %46 = vector.shape_cast %45 : vector<4x1x4x32x32xf32> to vector<16x32x32xf32>
    %cst_11 = arith.constant dense<0xFF800000> : vector<16x32xf32>
    %47 = vector.multi_reduction <maximumf>, %46, %cst_11 [2] : vector<16x32x32xf32> to vector<16x32xf32>
    %48 = vector.shape_cast %47 : vector<16x32xf32> to vector<16x32x1xf32>
    %49 = vector.broadcast %48 : vector<16x32x1xf32> to vector<16x32x32xf32>
    %50 = arith.subf %46, %49 : vector<16x32x32xf32>
    %51 = math.exp %50 : vector<16x32x32xf32>
    %cst_12 = arith.constant dense<0.000000e+00> : vector<16x32xf32>
    %52 = vector.multi_reduction <add>, %51, %cst_12 [2] : vector<16x32x32xf32> to vector<16x32xf32>
    %53 = vector.shape_cast %52 : vector<16x32xf32> to vector<16x32x1xf32>
    %54 = tpu.reciprocal %53 {approx = true} : vector<16x32x1xf32> -> vector<16x32x1xf32>
    %55 = vector.broadcast %54 : vector<16x32x1xf32> to vector<16x32x32xf32>
    %56 = arith.mulf %51, %55 : vector<16x32x32xf32>
    %57 = arith.truncf %56 : vector<16x32x32xf32> to vector<16x32x32xbf16>
    "tpu.trace_start"() <{level = 10 : i32, message = "bqk,bkd->bqd"}> : () -> ()
    %cst_13 = arith.constant dense<0.000000e+00> : vector<16x32x8xf32>
    %58 = tpu.matmul %57, %40, %cst_13 {dimension_numbers = #tpu.dot_dimension_numbers<[2], [1], [1], [2], [0, 0, 0, 1, 1, 2], [0], [0]>} : vector<16x32x32xbf16>, vector<16x32x8xbf16>, vector<16x32x8xf32> -> vector<16x32x8xf32>
    "tpu.trace_stop"() : () -> ()
    %59 = arith.truncf %58 : vector<16x32x8xf32> to vector<16x32x8xbf16>
    %60 = vector.extract_strided_slice %59 {offsets = [0, 0, 0], sizes = [4, 32, 8], strides = [1, 1, 1]} : vector<16x32x8xbf16> to vector<4x32x8xbf16>
    %61 = vector.shape_cast %60 : vector<4x32x8xbf16> to vector<128x8xbf16>
    %62 = vector.extract_strided_slice %59 {offsets = [4, 0, 0], sizes = [4, 32, 8], strides = [1, 1, 1]} : vector<16x32x8xbf16> to vector<4x32x8xbf16>
    %63 = vector.shape_cast %62 : vector<4x32x8xbf16> to vector<128x8xbf16>
    %64 = vector.extract_strided_slice %59 {offsets = [8, 0, 0], sizes = [4, 32, 8], strides = [1, 1, 1]} : vector<16x32x8xbf16> to vector<4x32x8xbf16>
    %65 = vector.shape_cast %64 : vector<4x32x8xbf16> to vector<128x8xbf16>
    %66 = vector.extract_strided_slice %59 {offsets = [12, 0, 0], sizes = [4, 32, 8], strides = [1, 1, 1]} : vector<16x32x8xbf16> to vector<4x32x8xbf16>
    %67 = vector.shape_cast %66 : vector<4x32x8xbf16> to vector<128x8xbf16>
    %68 = tpu.concatenate %61, %63, %65, %67 in 1 : vector<128x8xbf16>, vector<128x8xbf16>, vector<128x8xbf16>, vector<128x8xbf16> -> vector<128x32xbf16>
    %c0_14 = arith.constant 0 : index
    %c0_15 = arith.constant 0 : index
    %69 = vector.load %arg4[%c0_14, %c0_15] : memref<32x32xbf16, #tpu.memory_space<vmem>>, vector<32x32xbf16>
    %cst_16 = arith.constant dense<0.000000e+00> : vector<128x32xf32>
    %70 = tpu.matmul %68, %69, %cst_16 {dimension_numbers = #tpu.dot_dimension_numbers<[1], [0], [0], [1], [0, 0, 1, 1], [], []>} : vector<128x32xbf16>, vector<32x32xbf16>, vector<128x32xf32> -> vector<128x32xf32>
    %c0_17 = arith.constant 0 : index
    %c0_18 = arith.constant 0 : index
    %71 = vector.load %arg5[%c0_17, %c0_18] : memref<1x32xf32, #tpu.memory_space<vmem>>, vector<1x32xf32>
    %72 = vector.shape_cast %71 : vector<1x32xf32> to vector<32xf32>
    %73 = vector.shape_cast %72 : vector<32xf32> to vector<1x32xf32>
    %74 = vector.broadcast %73 : vector<1x32xf32> to vector<128x32xf32>
    %75 = arith.addf %70, %74 : vector<128x32xf32>
    %76 = vector.shape_cast %75 : vector<128x32xf32> to vector<4x32x32xf32>
    %c0_19 = arith.constant 0 : index
    %c0_20 = arith.constant 0 : index
    %c0_21 = arith.constant 0 : index
    %77 = vector.load %arg7[%c0_19, %c0_20, %c0_21] : memref<4x32x32xf32, #tpu.memory_space<vmem>>, vector<4x32x32xf32>
    tpu.vector_store %arg7[%c0_19, %c0_20, %c0_21], %76 {strides = array<i32>} : memref<4x32x32xf32, #tpu.memory_space<vmem>>, vector<4x32x32xf32>,
    return
  }
  func.func @transform_0(%arg0: i32) -> (i32, i32, i32) {
    %c0_i32 = arith.constant 0 : i32
    %c0_i32_0 = arith.constant 0 : i32
    %c0_i32_1 = arith.constant 0 : i32
    return %arg0, %c0_i32, %c0_i32_0 : i32, i32, i32
  }
  func.func @transform_1(%arg0: i32) -> (i32, i32) {
    %c0_i32 = arith.constant 0 : i32
    %c0_i32_0 = arith.constant 0 : i32
    %c0_i32_1 = arith.constant 0 : i32
    return %c0_i32, %c0_i32_0 : i32, i32
  }
  func.func @transform_2(%arg0: i32) -> (i32, i32) {
    %c0_i32 = arith.constant 0 : i32
    %c0_i32_0 = arith.constant 0 : i32
    %c0_i32_1 = arith.constant 0 : i32
    return %c0_i32, %c0_i32_0 : i32, i32
  }
  func.func @transform_3(%arg0: i32) -> (i32, i32) {
    %c0_i32 = arith.constant 0 : i32
    %c0_i32_0 = arith.constant 0 : i32
    %c0_i32_1 = arith.constant 0 : i32
    return %c0_i32, %c0_i32_0 : i32, i32
  }
  func.func @transform_4(%arg0: i32) -> (i32, i32) {
    %c0_i32 = arith.constant 0 : i32
    %c0_i32_0 = arith.constant 0 : i32
    %c0_i32_1 = arith.constant 0 : i32
    return %c0_i32, %c0_i32_0 : i32, i32
  }
  func.func @transform_5(%arg0: i32) -> (i32, i32, i32, i32) {
    %c0_i32 = arith.constant 0 : i32
    %c0_i32_0 = arith.constant 0 : i32
    %c0_i32_1 = arith.constant 0 : i32
    %c0_i32_2 = arith.constant 0 : i32
    %c0_i32_3 = arith.constant 0 : i32
    return %c0_i32, %c0_i32_0, %c0_i32_1, %c0_i32_2 : i32, i32, i32, i32
  }
  func.func @transform_6(%arg0: i32) -> (i32, i32, i32) {
    %c0_i32 = arith.constant 0 : i32
    %c0_i32_0 = arith.constant 0 : i32
    %c0_i32_1 = arith.constant 0 : i32
    return %arg0, %c0_i32, %c0_i32_0 : i32, i32, i32
  }
}

</mosaic_0001>

<llo_original>
// kernel: tpu_custom_call.1
$region0: #{tpu_custom_call.1}
  #allocation0 [shape = 'u32[]', space=smem, size = 0x4, offset = 0x4, fixed_abs, tag = 'smem constant byte address 0x4 - core index']
  #allocation1 [shape = 'u32[144,128]{1,0:T(1,128)}', space=vmem, size = 0x12000, scoped, tag = 'internal scratch']
  %s0 = inlined_call_operand.hbm [shape: f32[8,32,32], index: 0, kind: input, shape index: {}]
  %s1 = inlined_call_operand.hbm [shape: bf16[32,96], index: 1, kind: input, shape index: {}]
  %s2 = inlined_call_operand.vmem [shape: f32[1,96], index: 2, kind: input, shape index: {}]
  %s3 = inlined_call_operand.hbm [shape: bf16[32,32], index: 3, kind: input, shape index: {}]
  %s4 = inlined_call_operand.vmem [shape: f32[1,32], index: 4, kind: input, shape index: {}]
  %s5 = inlined_call_operand.hbm [shape: f32[4,4,32,32], index: 5, kind: input, shape index: {}]
  %s6 = inlined_call_operand.hbm [shape: f32[8,32,32], index: 6, kind: output, shape index: {}]
  %s7 = sld [smem:[#allocation0]]
  $region73: #{tpu_custom_call.1} parent=0
    _
  %s9 = ssub.s32 1, %s7
  %s10 = scalar_select 0, %s9, %s7
  $region1: #{tpu_custom_call.1} parent=0
    #allocation2 [shape = 'u8[131072]{0}', space=vmem, size = 0x20000, scoped, tag = 'input window, operand 0']
    #allocation3 [shape = 's32[2]{0}', space=sflag, size = 0x8, scoped, tag = 'scoped memory for tpu_custom_call.1']
    #allocation4 [shape = 's32[2]{0}', space=sflag, size = 0x8, scoped, tag = 'scoped memory for tpu_custom_call.1']
    #allocation5 [shape = 'u8[8192]{0}', space=vmem, size = 0x2000, scoped, tag = 'input window, operand 1, single buffered']
    #allocation6 [shape = 's32[1]{0}', space=sflag, size = 0x4, scoped, tag = 'scoped memory for tpu_custom_call.1']
    #allocation7 [shape = 'u8[8192]{0}', space=vmem, size = 0x2000, scoped, tag = 'input window, operand 3, single buffered']
    #allocation8 [shape = 'u8[262144]{0}', space=vmem, size = 0x40000, scoped, tag = 'input window, operand 5, single buffered']
    #allocation9 [shape = 's32[1]{0}', space=sflag, size = 0x4, scoped, tag = 'scoped memory for tpu_custom_call.1']
    #allocation10 [shape = 'u8[131072]{0}', space=vmem, size = 0x20000, scoped, tag = 'output window, operand 0']
    %11 = vsyncpa [#allocation3], 0
    %s12 = scalar_lea.sflag [#allocation3], 1
    %13 = vsyncpa %s12, 0
    %14 = vsyncpa [#allocation6], 0
    %15 = vsyncpa [#allocation9], 0
    %16 = vsyncpa [#allocation4], 0
    %s17 = scalar_lea.sflag [#allocation4], 1
    %18 = vsyncpa %s17, 0
    loop: start=0, step=1, limit=4
    $region2: #{tpu_custom_call.1} parent=1 // loop_pre_header
      _
    $region3: #{tpu_custom_call.1} parent=1 // loop_header
      %s20 = sphi 0, %s24
      %p21 = scmp.ge.s32.totalorder %s20, 4
      %s30 = sphi 0, %s32
      %s33 = sphi 0, %s30
      %s34 = sphi 0, %s33
      %s50 = sphi 0, %s34
      %s54 = sphi 0, %s54
      %s56 = sphi 0, %s54
      %s57 = sphi 0, %s56
      %s71 = sphi 0, %s57
      %s75 = sphi 0, %s75
      %s77 = sphi 0, %s75
      %s78 = sphi 0, %s77
      %s92 = sphi 0, %s78
      %s96 = sphi 0, %s96
      %s98 = sphi 0, %s96
      %s99 = sphi 0, %s98
      %s113 = sphi 0, %s99
      %s117 = sphi 0, %s117
      %s119 = sphi 0, %s117
      %s120 = sphi 0, %s119
      %s134 = sphi 0, %s120
      %s138 = sphi 0, %s138
      %s140 = sphi 0, %s138
      %s141 = sphi 0, %s140
      %s155 = sphi 0, %s141
      %s161 = sphi 0, %s163
      %s164 = sphi 0, %s161
      %s165 = sphi 0, %s164
      %s181 = sphi 0, %s165
    $region4: #{tpu_custom_call.1} parent=1 // loop_header_branch
      %23 = sbr.rel (%p21) target = $region8
    $region5: #{tpu_custom_call.1} parent=1 // loop_body
      %s25 = ssub.s32 %s20, 1
      %s26 = ssub.s32 %s20, 2
      %s27 = sadd.s32 %s20, 1
      %s28 = ssub.s32 %s20, %s27
      %p29 = scmp.eq.s32.totalorder %s28, 0
      %s31 = sadd.s32 %s30, 1
      %s32 = scalar_select %p29, %s30, %s31
      %p35 = pneg %p29
      %p36 = scmp.eq.s32.totalorder %s20, 1
      %p37 = por %p35, %p36
      %p38 = scmp.ne.s32.totalorder %s30, %s33
      %p39 = scmp.eq.s32.totalorder %s20, 0
      %p40 = por %p38, %p39
      %p41 = scmp.ne.s32.totalorder %s30, %s33
      %p42 = scmp.eq.s32.totalorder %s25, 1
      %p43 = por %p41, %p42
      %p44 = scmp.ne.s32.totalorder %s33, %s34
      %p45 = scmp.eq.s32.totalorder %s25, 0
      %p46 = por %p44, %p45
      %p47 = scmp.ne.s32.totalorder %s33, %s34
      %p48 = scmp.eq.s32.totalorder %s26, 1
      %p49 = por %p47, %p48
      %p51 = scmp.ne.s32.totalorder %s34, %s50
      %p52 = scmp.eq.s32.totalorder %s26, 0
      %p53 = por %p51, %p52
      %s55 = sadd.s32 %s54, 1
      %p58 = scmp.eq.s32.totalorder %s20, 1
      %p59 = scmp.ne.s32.totalorder %s54, %s56
      %p60 = scmp.eq.s32.totalorder %s20, 0
      %p61 = por %p59, %p60
      %p62 = scmp.ne.s32.totalorder %s54, %s56
      %p63 = scmp.eq.s32.totalorder %s25, 1
      %p64 = por %p62, %p63
      %p65 = scmp.ne.s32.totalorder %s56, %s57
      %p66 = scmp.eq.s32.totalorder %s25, 0
      %p67 = por %p65, %p66
      %p68 = scmp.ne.s32.totalorder %s56, %s57
      %p69 = scmp.eq.s32.totalorder %s26, 1
      %p70 = por %p68, %p69
      %p72 = scmp.ne.s32.totalorder %s57, %s71
      %p73 = scmp.eq.s32.totalorder %s26, 0
      %p74 = por %p72, %p73
      %s76 = sadd.s32 %s75, 1
      %p79 = scmp.eq.s32.totalorder %s20, 1
      %p80 = scmp.ne.s32.totalorder %s75, %s77
      %p81 = scmp.eq.s32.totalorder %s20, 0
      %p82 = por %p80, %p81
      %p83 = scmp.ne.s32.totalorder %s75, %s77
      %p84 = scmp.eq.s32.totalorder %s25, 1
      %p85 = por %p83, %p84
      %p86 = scmp.ne.s32.totalorder %s77, %s78
      %p87 = scmp.eq.s32.totalorder %s25, 0
      %p88 = por %p86, %p87
      %p89 = scmp.ne.s32.totalorder %s77, %s78
      %p90 = scmp.eq.s32.totalorder %s26, 1
      %p91 = por %p89, %p90
      %p93 = scmp.ne.s32.totalorder %s78, %s92
      %p94 = scmp.eq.s32.totalorder %s26, 0
      %p95 = por %p93, %p94
      %s97 = sadd.s32 %s96, 1
      %p100 = scmp.eq.s32.totalorder %s20, 1
      %p101 = scmp.ne.s32.totalorder %s96, %s98
      %p102 = scmp.eq.s32.totalorder %s20, 0
      %p103 = por %p101, %p102
      %p104 = scmp.ne.s32.totalorder %s96, %s98
      %p105 = scmp.eq.s32.totalorder %s25, 1
      %p106 = por %p104, %p105
      %p107 = scmp.ne.s32.totalorder %s98, %s99
      %p108 = scmp.eq.s32.totalorder %s25, 0
      %p109 = por %p107, %p108
      %p110 = scmp.ne.s32.totalorder %s98, %s99
      %p111 = scmp.eq.s32.totalorder %s26, 1
      %p112 = por %p110, %p111
      %p114 = scmp.ne.s32.totalorder %s99, %s113
      %p115 = scmp.eq.s32.totalorder %s26, 0
      %p116 = por %p114, %p115
      %s118 = sadd.s32 %s117, 1
      %p121 = scmp.eq.s32.totalorder %s20, 1
      %p122 = scmp.ne.s32.totalorder %s117, %s119
      %p123 = scmp.eq.s32.totalorder %s20, 0
      %p124 = por %p122, %p123
      %p125 = scmp.ne.s32.totalorder %s117, %s119
      %p126 = scmp.eq.s32.totalorder %s25, 1
      %p127 = por %p125, %p126
      %p128 = scmp.ne.s32.totalorder %s119, %s120
      %p129 = scmp.eq.s32.totalorder %s25, 0
      %p130 = por %p128, %p129
      %p131 = scmp.ne.s32.totalorder %s119, %s120
      %p132 = scmp.eq.s32.totalorder %s26, 1
      %p133 = por %p131, %p132
      %p135 = scmp.ne.s32.totalorder %s120, %s134
      %p136 = scmp.eq.s32.totalorder %s26, 0
      %p137 = por %p135, %p136
      %s139 = sadd.s32 %s138, 1
      %p142 = scmp.eq.s32.totalorder %s20, 1
      %p143 = scmp.ne.s32.totalorder %s138, %s140
      %p144 = scmp.eq.s32.totalorder %s20, 0
      %p145 = por %p143, %p144
      %p146 = scmp.ne.s32.totalorder %s138, %s140
      %p147 = scmp.eq.s32.totalorder %s25, 1
      %p148 = por %p146, %p147
      %p149 = scmp.ne.s32.totalorder %s140, %s141
      %p150 = scmp.eq.s32.totalorder %s25, 0
      %p151 = por %p149, %p150
      %p152 = scmp.ne.s32.totalorder %s140, %s141
      %p153 = scmp.eq.s32.totalorder %s26, 1
      %p154 = por %p152, %p153
      %p156 = scmp.ne.s32.totalorder %s141, %s155
      %p157 = scmp.eq.s32.totalorder %s26, 0
      %p158 = por %p156, %p157
      %s159 = ssub.s32 %s20, %s27
      %p160 = scmp.eq.s32.totalorder %s159, 0
      %s162 = sadd.s32 %s161, 1
      %s163 = scalar_select %p160, %s161, %s162
      %p166 = pneg %p160
      %p167 = scmp.eq.s32.totalorder %s20, 1
      %p168 = por %p166, %p167
      %p169 = scmp.ne.s32.totalorder %s161, %s164
      %p170 = scmp.eq.s32.totalorder %s20, 0
      %p171 = por %p169, %p170
      %p172 = scmp.ne.s32.totalorder %s161, %s164
      %p173 = scmp.eq.s32.totalorder %s25, 1
      %p174 = por %p172, %p173
      %p175 = scmp.ne.s32.totalorder %s164, %s165
      %p176 = scmp.eq.s32.totalorder %s25, 0
      %p177 = por %p175, %p176
      %p178 = scmp.ne.s32.totalorder %s164, %s165
      %p179 = scmp.eq.s32.totalorder %s26, 1
      %p180 = por %p178, %p179
      %p182 = scmp.ne.s32.totalorder %s165, %s181
      %p183 = scmp.eq.s32.totalorder %s26, 0
      %p184 = por %p182, %p183
      %p185 = scmp.le.s32.totalorder 1, %s20
      %p186 = scmp.lt.s32.totalorder %s20, 3
      %p187 = pnand %p185, %p186
      %p188 = pneg %p187
      // Predicated region
      $region9: #{tpu_custom_call.1} parent=5 // pred_check
        _
      $region10: #{tpu_custom_call.1} parent=5 // pred_check_branch
        %190 = sbr.rel (%p187) target = $region12
      $region11: #{tpu_custom_call.1} parent=5 // pred_region
        %s191 = ssub.s32 %s20, 1
        // Predicated region
        $region13: #{tpu_custom_call.1} parent=11 // pred_check
          %p192 = pneg %p67
        $region14: #{tpu_custom_call.1} parent=11 // pred_check_branch
          %194 = sbr.rel (%p192) target = $region16
        $region15: #{tpu_custom_call.1} parent=11 // pred_region
          %s196 = ssub.s32 256, 256
          %197 = vsyncadd [#allocation6], %s196
          %s198 = sshll.u32 [#allocation5], 4
          %s199 = int_to_ptr.vmem [resolvable:$true] %s198
          %204 = dma.hbm_to_vmem [thread:$0]  %s1, 256, %s199, [#allocation6], 64, 64, 4
        $region16: #{tpu_custom_call.1} parent=11 // pred_fallthru
          _
        // Predicated region
        $region17: #{tpu_custom_call.1} parent=11 // pred_check
          %p205 = pneg %p88
        $region18: #{tpu_custom_call.1} parent=11 // pred_check_branch
          %207 = sbr.rel (%p205) target = $region20
        $region19: #{tpu_custom_call.1} parent=11 // pred_region
          _
        $region20: #{tpu_custom_call.1} parent=11 // pred_fallthru
          _
        // Predicated region
        $region21: #{tpu_custom_call.1} parent=11 // pred_check
          %p208 = pneg %p109
        $region22: #{tpu_custom_call.1} parent=11 // pred_check_branch
          %210 = sbr.rel (%p208) target = $region24
        $region23: #{tpu_custom_call.1} parent=11 // pred_region
          %s212 = ssub.s32 256, 256
          %213 = vsyncadd [#allocation6], %s212
          %s214 = sshll.u32 [#allocation7], 4
          %s215 = int_to_ptr.vmem [resolvable:$true] %s214
          %220 = dma.hbm_to_vmem [thread:$0]  %s3, 256, %s215, [#allocation6], 64, 64, 4
        $region24: #{tpu_custom_call.1} parent=11 // pred_fallthru
          _
        // Predicated region
        $region25: #{tpu_custom_call.1} parent=11 // pred_check
          %p221 = pneg %p130
        $region26: #{tpu_custom_call.1} parent=11 // pred_check_branch
          %223 = sbr.rel (%p221) target = $region28
        $region27: #{tpu_custom_call.1} parent=11 // pred_region
          _
        $region28: #{tpu_custom_call.1} parent=11 // pred_fallthru
          _
        // Predicated region
        $region29: #{tpu_custom_call.1} parent=11 // pred_check
          %p224 = pneg %p151
        $region30: #{tpu_custom_call.1} parent=11 // pred_check_branch
          %226 = sbr.rel (%p224) target = $region32
        $region31: #{tpu_custom_call.1} parent=11 // pred_region
          %s228 = ssub.s32 8192, 8192
          %229 = vsyncadd [#allocation9], %s228
          %s230 = sshll.u32 [#allocation8], 4
          %s231 = int_to_ptr.vmem [resolvable:$true] %s230
          %236 = dma.hbm_to_vmem [thread:$0]  %s5, 8192, %s231, [#allocation9], 128, 128, 8
        $region32: #{tpu_custom_call.1} parent=11 // pred_fallthru
          _
      $region12: #{tpu_custom_call.1} parent=5 // pred_fallthru
        _
      %p237 = scmp.lt.s32.totalorder %s20, 2
      // Predicated region
      $region33: #{tpu_custom_call.1} parent=5 // pred_check
        %p238 = pneg %p237
      $region34: #{tpu_custom_call.1} parent=5 // pred_check_branch
        %240 = sbr.rel (%p238) target = $region36
      $region35: #{tpu_custom_call.1} parent=5 // pred_region
        // Predicated region
        $region37: #{tpu_custom_call.1} parent=35 // pred_check
          %p241 = pneg %p40
        $region38: #{tpu_custom_call.1} parent=35 // pred_check_branch
          %243 = sbr.rel (%p241) target = $region40
        $region39: #{tpu_custom_call.1} parent=35 // pred_region
          %s244 = sand.u32 %s30, 1
          %s245 = scalar_lea.sflag [#allocation3], %s244
          %s246 = sand.u32 %s30, 1
          %s247 = smul.addr %s246, 128
          %s248 = scalar_lea.vmem [#allocation2], %s247
          %s249 = smul.u32 4, %s20
          %s251 = ssub.s32 2048, 2048
          %252 = vsyncadd %s245, %s251
          %s253 = smul.addr %s249, 4
          %s254 = smul.addr %s253, 128
          %s255 = scalar_lea.hbm %s0, %s254
          %s256 = sshll.u32 %s248, 4
          %s257 = int_to_ptr.vmem [resolvable:$true] %s256
          %262 = dma.hbm_to_vmem [thread:$0]  %s255, 2048, %s257, %s245, 128, 128, 8
        $region40: #{tpu_custom_call.1} parent=35 // pred_fallthru
          _
      $region36: #{tpu_custom_call.1} parent=5 // pred_fallthru
        _
      %p263 = scmp.le.s32.totalorder 1, %s20
      %p264 = scmp.lt.s32.totalorder %s20, 3
      %p265 = pnand %p263, %p264
      %p266 = pneg %p265
      // Predicated region
      $region41: #{tpu_custom_call.1} parent=5 // pred_check
        _
      $region42: #{tpu_custom_call.1} parent=5 // pred_check_branch
        %268 = sbr.rel (%p265) target = $region44
      $region43: #{tpu_custom_call.1} parent=5 // pred_region
        %s269 = ssub.s32 %s20, 1
        %s270 = sand.u32 %s33, 1
        %s271 = scalar_lea.sflag [#allocation3], %s270
        %s272 = sand.u32 %s33, 1
        %s273 = smul.addr %s272, 128
        %s274 = scalar_lea.vmem [#allocation2], %s273
        // Predicated region
        $region45: #{tpu_custom_call.1} parent=43 // pred_check
          %p275 = pneg %p46
        $region46: #{tpu_custom_call.1} parent=43 // pred_check_branch
          %277 = sbr.rel (%p275) target = $region48
        $region47: #{tpu_custom_call.1} parent=43 // pred_region
          %278 = dma.done %s271, 2048
        $region48: #{tpu_custom_call.1} parent=43 // pred_fallthru
          _
        // Predicated region
        $region49: #{tpu_custom_call.1} parent=43 // pred_check
          %p279 = pneg %p67
        $region50: #{tpu_custom_call.1} parent=43 // pred_check_branch
          %281 = sbr.rel (%p279) target = $region52
        $region51: #{tpu_custom_call.1} parent=43 // pred_region
          %282 = dma.done [#allocation6], 256
        $region52: #{tpu_custom_call.1} parent=43 // pred_fallthru
          _
        // Predicated region
        $region53: #{tpu_custom_call.1} parent=43 // pred_check
          %p283 = pneg %p109
        $region54: #{tpu_custom_call.1} parent=43 // pred_check_branch
          %285 = sbr.rel (%p283) target = $region56
        $region55: #{tpu_custom_call.1} parent=43 // pred_region
          %286 = dma.done [#allocation6], 256
        $region56: #{tpu_custom_call.1} parent=43 // pred_fallthru
          _
        // Predicated region
        $region57: #{tpu_custom_call.1} parent=43 // pred_check
          %p287 = pneg %p151
        $region58: #{tpu_custom_call.1} parent=43 // pred_check_branch
          %289 = sbr.rel (%p287) target = $region60
        $region59: #{tpu_custom_call.1} parent=43 // pred_region
          %290 = dma.done [#allocation9], 8192
        $region60: #{tpu_custom_call.1} parent=43 // pred_fallthru
          _
        %s291 = sand.u32 %s33, 1
        %s292 = scalar_lea.sflag [#allocation3], %s291
        %s293 = sand.u32 %s33, 1
        %s294 = smul.addr %s293, 128
        %s295 = scalar_lea.vmem [#allocation2], %s294
        %p296 = pneg %p46
        %p297 = pneg %p43
        %p298 = pneg %p67
        %p299 = pneg %p64
        %p300 = pneg %p88
        %p301 = pneg %p85
        %p302 = pneg %p109
        %p303 = pneg %p106
        %p304 = pneg %p130
        %p305 = pneg %p127
        %p306 = pneg %p151
        %p307 = pneg %p148
        %p308 = pneg %p177
        %p309 = pneg %p174
        %s310 = sand.u32 %s164, 1
        %s311 = scalar_lea.sflag [#allocation4], %s310
        %s312 = sand.u32 %s164, 1
        %s313 = smul.addr %s312, 128
        %s314 = scalar_lea.vmem [#allocation10], %s313
        %s315 = smul.u32 4, %s25
        %s316 = smul.u32 4, %s25
        %v318 = vld [vmem:[%s274] sm:$0xff]
        %v319 = vld [vmem:[%s274 + $0x8] sm:$0xff]
        %v320 = vld [vmem:[%s274 + $0x10] sm:$0xff]
        %v321 = vld [vmem:[%s274 + $0x18] sm:$0xff]
        %v322 = vld [vmem:[%s274 + $0x20] sm:$0xff]
        %v323 = vld [vmem:[%s274 + $0x28] sm:$0xff]
        %v324 = vld [vmem:[%s274 + $0x30] sm:$0xff]
        %v325 = vld [vmem:[%s274 + $0x38] sm:$0xff]
        %v326 = vld [vmem:[%s274 + $0x40] sm:$0xff]
        %v327 = vld [vmem:[%s274 + $0x48] sm:$0xff]
        %v328 = vld [vmem:[%s274 + $0x50] sm:$0xff]
        %v329 = vld [vmem:[%s274 + $0x58] sm:$0xff]
        %v330 = vld [vmem:[%s274 + $0x60] sm:$0xff]
        %v331 = vld [vmem:[%s274 + $0x68] sm:$0xff]
        %v332 = vld [vmem:[%s274 + $0x70] sm:$0xff]
        %v333 = vld [vmem:[%s274 + $0x78] sm:$0xff]
        %v334 = vpack.c.bf16 %v319, %v318
        %v335 = vpack.c.bf16 %v321, %v320
        %v336 = vpack.c.bf16 %v323, %v322
        %v337 = vpack.c.bf16 %v325, %v324
        %v338 = vpack.c.bf16 %v327, %v326
        %v339 = vpack.c.bf16 %v329, %v328
        %v340 = vpack.c.bf16 %v331, %v330
        %v341 = vpack.c.bf16 %v333, %v332
        %v342 = vld [vmem:[#allocation5] sm:$0xf]
        %v343 = vld [vmem:[#allocation5 + $0x4] sm:$0xf]
        %v344 = vld [vmem:[#allocation5 + $0x8] sm:$0xf]
        %v345 = vld [vmem:[#allocation5 + $0xc] sm:$0xf]
        %v346 = vld [vmem:[%s2] sm:$0x1]
        %v348 = vlaneseq
        %v349 = vshrl.u32 %v348, 7
        %v350 = vsub.s32 0, %v349
        %v351 = vrot.slane %v346, %v350
        %v357 = vunpack.c.l.b16 %v342
        %v358 = vunpack.c.l.b16 %v343
        %v359 = vunpack.c.l.b16 %v344
        %v360 = vunpack.c.l.b16 %v345
        %v361 = vpack.c.b16 %v358, %v357
        %v362 = vpack.c.b16 %v360, %v359
        %vm365 = vcmask 261120
        %v367 = vsel %vm365, %v334, 0
        %v370 = vsel %vm365, %v335, 0
        %v373 = vsel %vm365, %v336, 0
        %v376 = vsel %vm365, %v337, 0
        %v379 = vsel %vm365, %v338, 0
        %v382 = vsel %vm365, %v339, 0
        %v385 = vsel %vm365, %v340, 0
        %v388 = vsel %vm365, %v341, 0
        %390 = vmatprep.subr.bf16.mxu0 0
        %391 = vmatpush1.bf16.msra.mxu0 %v361
        %392 = vmatprep.subr.bf16.mxu0 0
        %393 = vmatpush1.bf16.msra.mxu0 %v362
        %394 = vmatprep.subr.bf16.mxu0 0
        %395 = vmatpush1.bf16.msra.mxu0 0
        %396 = vmatprep.subr.bf16.mxu0 0
        %397 = vmatpush1.bf16.msra.mxu0 0
        %398 = vmatprep.subr.bf16.mxu0 0
        %399 = vmatpush1.bf16.msra.mxu0 0
        %400 = vmatprep.subr.bf16.mxu0 0
        %401 = vmatpush1.bf16.msra.mxu0 0
        %402 = vmatprep.subr.bf16.mxu0 0
        %403 = vmatpush1.bf16.msra.mxu0 0
        %404 = vmatprep.subr.bf16.mxu0 0
        %405 = vmatpush1.bf16.msra.mxu0 0
        %406 = vmatprep.subr.bf16.mxu0 0
        %407 = vmatpush1.bf16.msra.mxu0 0
        %408 = vmatprep.subr.bf16.mxu0 0
        %409 = vmatpush1.bf16.msra.mxu0 0
        %410 = vmatprep.subr.bf16.mxu0 0
        %411 = vmatpush1.bf16.msra.mxu0 0
        %412 = vmatprep.subr.bf16.mxu0 0
        %413 = vmatpush1.bf16.msra.mxu0 0
        %414 = vmatprep.subr.bf16.mxu0 0
        %415 = vmatpush1.bf16.msra.mxu0 0
        %416 = vmatprep.subr.bf16.mxu0 0
        %417 = vmatpush1.bf16.msra.mxu0 0
        %418 = vmatprep.subr.bf16.mxu0 0
        %419 = vmatpush1.bf16.msra.mxu0 0
        %420 = vmatprep.subr.bf16.mxu0 0
        %421 = vmatpush1.bf16.msra.mxu0 0
        %422 = vmatprep.mubr.bf16.mxu0 0
        %423 = vmatmul.mubr.bf16.gmra.mrb[0].mxu0 %v367
        %v424 = vpop.f32.mrb[0].mxu0
        %v425 = vadd.f32 %v351, %v424
        %v426 = vpop.f32.mrb[0].mxu0
        %v427 = vpop.f32.mrb[0].mxu0
        %v428 = vadd.f32 %v351, %v427
        %v429 = vpop.f32.mrb[0].mxu0
        %430 = vmatprep.mubr.bf16.mxu0 0
        %431 = vmatmul.mubr.bf16.gmra.mrb[0].mxu0 %v370
        %v432 = vpop.f32.mrb[0].mxu0
        %v433 = vadd.f32 %v351, %v432
        %v434 = vpop.f32.mrb[0].mxu0
        %v435 = vpop.f32.mrb[0].mxu0
        %v436 = vadd.f32 %v351, %v435
        %v437 = vpop.f32.mrb[0].mxu0
        %438 = vmatprep.mubr.bf16.mxu0 0
        %439 = vmatmul.mubr.bf16.gmra.mrb[0].mxu0 %v373
        %v440 = vpop.f32.mrb[0].mxu0
        %v441 = vadd.f32 %v351, %v440
        %v442 = vpop.f32.mrb[0].mxu0
        %v443 = vpop.f32.mrb[0].mxu0
        %v444 = vadd.f32 %v351, %v443
        %v445 = vpop.f32.mrb[0].mxu0
        %446 = vmatprep.mubr.bf16.mxu0 0
        %447 = vmatmul.mubr.bf16.gmra.mrb[0].mxu0 %v376
        %v448 = vpop.f32.mrb[0].mxu0
        %v449 = vadd.f32 %v351, %v448
        %v450 = vpop.f32.mrb[0].mxu0
        %v451 = vpop.f32.mrb[0].mxu0
        %v452 = vadd.f32 %v351, %v451
        %v453 = vpop.f32.mrb[0].mxu0
        %454 = vmatprep.mubr.bf16.mxu0 0
        %455 = vmatmul.mubr.bf16.gmra.mrb[0].mxu0 %v379
        %v456 = vpop.f32.mrb[0].mxu0
        %v457 = vadd.f32 %v351, %v456
        %v458 = vpop.f32.mrb[0].mxu0
        %v459 = vpop.f32.mrb[0].mxu0
        %v460 = vadd.f32 %v351, %v459
        %v461 = vpop.f32.mrb[0].mxu0
        %462 = vmatprep.mubr.bf16.mxu0 0
        %463 = vmatmul.mubr.bf16.gmra.mrb[0].mxu0 %v382
        %v464 = vpop.f32.mrb[0].mxu0
        %v465 = vadd.f32 %v351, %v464
        %v466 = vpop.f32.mrb[0].mxu0
        %v467 = vpop.f32.mrb[0].mxu0
        %v468 = vadd.f32 %v351, %v467
        %v469 = vpop.f32.mrb[0].mxu0
        %470 = vmatprep.mubr.bf16.mxu0 0
        %471 = vmatmul.mubr.bf16.gmra.mrb[0].mxu0 %v385
        %v472 = vpop.f32.mrb[0].mxu0
        %v473 = vadd.f32 %v351, %v472
        %v474 = vpop.f32.mrb[0].mxu0
        %v475 = vpop.f32.mrb[0].mxu0
        %v476 = vadd.f32 %v351, %v475
        %v477 = vpop.f32.mrb[0].mxu0
        %478 = vmatprep.mubr.bf16.mxu0 0
        %479 = vmatmul.mubr.bf16.gmra.mrb[0].mxu0 %v388
        %v480 = vpop.f32.mrb[0].mxu0
        %v481 = vadd.f32 %v351, %v480
        %v482 = vpop.f32.mrb[0].mxu0
        %v483 = vpop.f32.mrb[0].mxu0
        %v484 = vadd.f32 %v351, %v483
        %v485 = vpop.f32.mrb[0].mxu0
        %486 = vdwg.mxu0
        %v487 = vpack.c.bf16 %v428, %v425
        %v488 = vpack.c.bf16 %v436, %v433
        %v489 = vpack.c.bf16 %v444, %v441
        %v490 = vpack.c.bf16 %v452, %v449
        %v491 = vpack.c.bf16 %v460, %v457
        %v492 = vpack.c.bf16 %v468, %v465
        %v493 = vpack.c.bf16 %v476, %v473
        %v494 = vpack.c.bf16 %v484, %v481
        %503 = vrot.lane.b32.xlu0 %v487, 120
        %v504 = vpop.permute.xlu0 %503
        %505 = vrot.lane.b32.xlu0 %v488, 120
        %v506 = vpop.permute.xlu0 %505
        %507 = vrot.lane.b32.xlu0 %v489, 120
        %v508 = vpop.permute.xlu0 %507
        %509 = vrot.lane.b32.xlu0 %v490, 120
        %v510 = vpop.permute.xlu0 %509
        %511 = vrot.lane.b32.xlu0 %v491, 120
        %v512 = vpop.permute.xlu0 %511
        %513 = vrot.lane.b32.xlu0 %v492, 120
        %v514 = vpop.permute.xlu0 %513
        %515 = vrot.lane.b32.xlu0 %v493, 120
        %v516 = vpop.permute.xlu0 %515
        %517 = vrot.lane.b32.xlu0 %v494, 120
        %v518 = vpop.permute.xlu0 %517
        %519 = vrot.lane.b32.xlu0 %v487, 112
        %v520 = vpop.permute.xlu0 %519
        %521 = vrot.lane.b32.xlu0 %v488, 112
        %v522 = vpop.permute.xlu0 %521
        %523 = vrot.lane.b32.xlu0 %v489, 112
        %v524 = vpop.permute.xlu0 %523
        %525 = vrot.lane.b32.xlu0 %v490, 112
        %v526 = vpop.permute.xlu0 %525
        %527 = vrot.lane.b32.xlu0 %v491, 112
        %v528 = vpop.permute.xlu0 %527
        %529 = vrot.lane.b32.xlu0 %v492, 112
        %v530 = vpop.permute.xlu0 %529
        %531 = vrot.lane.b32.xlu0 %v493, 112
        %v532 = vpop.permute.xlu0 %531
        %533 = vrot.lane.b32.xlu0 %v494, 112
        %v534 = vpop.permute.xlu0 %533
        %535 = vrot.lane.b32.xlu0 %v487, 104
        %v536 = vpop.permute.xlu0 %535
        %537 = vrot.lane.b32.xlu0 %v488, 104
        %v538 = vpop.permute.xlu0 %537
        %539 = vrot.lane.b32.xlu0 %v489, 104
        %v540 = vpop.permute.xlu0 %539
        %541 = vrot.lane.b32.xlu0 %v490, 104
        %v542 = vpop.permute.xlu0 %541
        %543 = vrot.lane.b32.xlu0 %v491, 104
        %v544 = vpop.permute.xlu0 %543
        %545 = vrot.lane.b32.xlu0 %v492, 104
        %v546 = vpop.permute.xlu0 %545
        %547 = vrot.lane.b32.xlu0 %v493, 104
        %v548 = vpop.permute.xlu0 %547
        %549 = vrot.lane.b32.xlu0 %v494, 104
        %v550 = vpop.permute.xlu0 %549
        %551 = vrot.lane.b32.xlu0 %v487, 96
        %v552 = vpop.permute.xlu0 %551
        %553 = vrot.lane.b32.xlu0 %v488, 96
        %v554 = vpop.permute.xlu0 %553
        %vm555 = vcmask 64512
        %v557 = vsel %vm555, %v487, 0
        %v560 = vsel %vm555, %v488, 0
        %v563 = vsel %vm555, %v552, 0
        %v566 = vsel %vm555, %v554, 0
        %568 = vmatprep.subr.bf16.mxu0 0
        %569 = vmatpush1.bf16.xpose.msra.mxu0 %v563
        %570 = vmatprep.subr.bf16.mxu0 0
        %571 = vmatpush1.bf16.xpose.msra.mxu0 %v566
        %572 = vmatprep.subr.bf16.mxu0 0
        %573 = vmatpush1.bf16.xpose.msra.mxu0 0
        %574 = vmatprep.subr.bf16.mxu0 0
        %575 = vmatpush1.bf16.xpose.msra.mxu0 0
        %576 = vmatprep.subr.bf16.mxu0 0
        %577 = vmatpush1.bf16.xpose.msra.mxu0 0
        %578 = vmatprep.subr.bf16.mxu0 0
        %579 = vmatpush1.bf16.xpose.msra.mxu0 0
        %580 = vmatprep.subr.bf16.mxu0 0
        %581 = vmatpush1.bf16.xpose.msra.mxu0 0
        %582 = vmatprep.subr.bf16.mxu0 0
        %583 = vmatpush1.bf16.xpose.msra.mxu0 0
        %584 = vmatprep.subr.bf16.mxu0 0
        %585 = vmatpush1.bf16.xpose.msra.mxu0 0
        %586 = vmatprep.subr.bf16.mxu0 0
        %587 = vmatpush1.bf16.xpose.msra.mxu0 0
        %588 = vmatprep.subr.bf16.mxu0 0
        %589 = vmatpush1.bf16.xpose.msra.mxu0 0
        %590 = vmatprep.subr.bf16.mxu0 0
        %591 = vmatpush1.bf16.xpose.msra.mxu0 0
        %592 = vmatprep.subr.bf16.mxu0 0
        %593 = vmatpush1.bf16.xpose.msra.mxu0 0
        %594 = vmatprep.subr.bf16.mxu0 0
        %595 = vmatpush1.bf16.xpose.msra.mxu0 0
        %596 = vmatprep.subr.bf16.mxu0 0
        %597 = vmatpush1.bf16.xpose.msra.mxu0 0
        %598 = vmatprep.subr.bf16.mxu0 0
        %599 = vmatpush1.bf16.xpose.msra.mxu0 0
        %600 = vmatprep.mubr.bf16.mxu0 0
        %601 = vmatmul.mubr.bf16.gmra.mrb[0].mxu0 %v557
        %v602 = vpop.f32.mrb[0].mxu0
        %v603 = vadd.f32 0.0, %v602
        %v604 = vpop.f32.mrb[0].mxu0
        %v605 = vpop.f32.mrb[0].mxu0
        %v606 = vadd.f32 0.0, %v605
        %v607 = vpop.f32.mrb[0].mxu0
        %608 = vmatprep.mubr.bf16.mxu0 0
        %609 = vmatmul.mubr.bf16.gmra.mrb[0].mxu0 %v560
        %v610 = vpop.f32.mrb[0].mxu0
        %v611 = vadd.f32 0.0, %v610
        %v612 = vpop.f32.mrb[0].mxu0
        %v613 = vpop.f32.mrb[0].mxu0
        %v614 = vadd.f32 0.0, %v613
        %v615 = vpop.f32.mrb[0].mxu0
        %616 = vdwg.mxu0
        %617 = vrot.lane.b32.xlu0 %v489, 96
        %v618 = vpop.permute.xlu0 %617
        %619 = vrot.lane.b32.xlu0 %v490, 96
        %v620 = vpop.permute.xlu0 %619
        %v622 = vsel %vm555, %v489, 0
        %v625 = vsel %vm555, %v490, 0
        %v628 = vsel %vm555, %v618, 0
        %v631 = vsel %vm555, %v620, 0
        %633 = vmatprep.subr.bf16.mxu0 0
        %634 = vmatpush1.bf16.xpose.msra.mxu0 %v628
        %635 = vmatprep.subr.bf16.mxu0 0
        %636 = vmatpush1.bf16.xpose.msra.mxu0 %v631
        %637 = vmatprep.subr.bf16.mxu0 0
        %638 = vmatpush1.bf16.xpose.msra.mxu0 0
        %639 = vmatprep.subr.bf16.mxu0 0
        %640 = vmatpush1.bf16.xpose.msra.mxu0 0
        %641 = vmatprep.subr.bf16.mxu0 0
        %642 = vmatpush1.bf16.xpose.msra.mxu0 0
        %643 = vmatprep.subr.bf16.mxu0 0
        %644 = vmatpush1.bf16.xpose.msra.mxu0 0
        %645 = vmatprep.subr.bf16.mxu0 0
        %646 = vmatpush1.bf16.xpose.msra.mxu0 0
        %647 = vmatprep.subr.bf16.mxu0 0
        %648 = vmatpush1.bf16.xpose.msra.mxu0 0
        %649 = vmatprep.subr.bf16.mxu0 0
        %650 = vmatpush1.bf16.xpose.msra.mxu0 0
        %651 = vmatprep.subr.bf16.mxu0 0
        %652 = vmatpush1.bf16.xpose.msra.mxu0 0
        %653 = vmatprep.subr.bf16.mxu0 0
        %654 = vmatpush1.bf16.xpose.msra.mxu0 0
        %655 = vmatprep.subr.bf16.mxu0 0
        %656 = vmatpush1.bf16.xpose.msra.mxu0 0
        %657 = vmatprep.subr.bf16.mxu0 0
        %658 = vmatpush1.bf16.xpose.msra.mxu0 0
        %659 = vmatprep.subr.bf16.mxu0 0
        %660 = vmatpush1.bf16.xpose.msra.mxu0 0
        %661 = vmatprep.subr.bf16.mxu0 0
        %662 = vmatpush1.bf16.xpose.msra.mxu0 0
        %663 = vmatprep.subr.bf16.mxu0 0
        %664 = vmatpush1.bf16.xpose.msra.mxu0 0
        %665 = vmatprep.mubr.bf16.mxu0 0
        %666 = vmatmul.mubr.bf16.gmra.mrb[0].mxu0 %v622
        %v667 = vpop.f32.mrb[0].mxu0
        %v668 = vadd.f32 0.0, %v667
        %v669 = vpop.f32.mrb[0].mxu0
        %v670 = vpop.f32.mrb[0].mxu0
        %v671 = vadd.f32 0.0, %v670
        %v672 = vpop.f32.mrb[0].mxu0
        %673 = vmatprep.mubr.bf16.mxu0 0
        %674 = vmatmul.mubr.bf16.gmra.mrb[0].mxu0 %v625
        %v675 = vpop.f32.mrb[0].mxu0
        %v676 = vadd.f32 0.0, %v675
        %v677 = vpop.f32.mrb[0].mxu0
        %v678 = vpop.f32.mrb[0].mxu0
        %v679 = vadd.f32 0.0, %v678
        %v680 = vpop.f32.mrb[0].mxu0
        %681 = vdwg.mxu0
        %682 = vrot.lane.b32.xlu0 %v491, 96
        %v683 = vpop.permute.xlu0 %682
        %684 = vrot.lane.b32.xlu0 %v492, 96
        %v685 = vpop.permute.xlu0 %684
        %v687 = vsel %vm555, %v491, 0
        %v690 = vsel %vm555, %v492, 0
        %v693 = vsel %vm555, %v683, 0
        %v696 = vsel %vm555, %v685, 0
        %698 = vmatprep.subr.bf16.mxu0 0
        %699 = vmatpush1.bf16.xpose.msra.mxu0 %v693
        %700 = vmatprep.subr.bf16.mxu0 0
        %701 = vmatpush1.bf16.xpose.msra.mxu0 %v696
        %702 = vmatprep.subr.bf16.mxu0 0
        %703 = vmatpush1.bf16.xpose.msra.mxu0 0
        %704 = vmatprep.subr.bf16.mxu0 0
        %705 = vmatpush1.bf16.xpose.msra.mxu0 0
        %706 = vmatprep.subr.bf16.mxu0 0
        %707 = vmatpush1.bf16.xpose.msra.mxu0 0
        %708 = vmatprep.subr.bf16.mxu0 0
        %709 = vmatpush1.bf16.xpose.msra.mxu0 0
        %710 = vmatprep.subr.bf16.mxu0 0
        %711 = vmatpush1.bf16.xpose.msra.mxu0 0
        %712 = vmatprep.subr.bf16.mxu0 0
        %713 = vmatpush1.bf16.xpose.msra.mxu0 0
        %714 = vmatprep.subr.bf16.mxu0 0
        %715 = vmatpush1.bf16.xpose.msra.mxu0 0
        %716 = vmatprep.subr.bf16.mxu0 0
        %717 = vmatpush1.bf16.xpose.msra.mxu0 0
        %718 = vmatprep.subr.bf16.mxu0 0
        %719 = vmatpush1.bf16.xpose.msra.mxu0 0
        %720 = vmatprep.subr.bf16.mxu0 0
        %721 = vmatpush1.bf16.xpose.msra.mxu0 0
        %722 = vmatprep.subr.bf16.mxu0 0
        %723 = vmatpush1.bf16.xpose.msra.mxu0 0
        %724 = vmatprep.subr.bf16.mxu0 0
        %725 = vmatpush1.bf16.xpose.msra.mxu0 0
        %726 = vmatprep.subr.bf16.mxu0 0
        %727 = vmatpush1.bf16.xpose.msra.mxu0 0
        %728 = vmatprep.subr.bf16.mxu0 0
        %729 = vmatpush1.bf16.xpose.msra.mxu0 0
        %730 = vmatprep.mubr.bf16.mxu0 0
        %731 = vmatmul.mubr.bf16.gmra.mrb[0].mxu0 %v687
        %v732 = vpop.f32.mrb[0].mxu0
        %v733 = vadd.f32 0.0, %v732
        %v734 = vpop.f32.mrb[0].mxu0
        %v735 = vpop.f32.mrb[0].mxu0
        %v736 = vadd.f32 0.0, %v735
        %v737 = vpop.f32.mrb[0].mxu0
        %738 = vmatprep.mubr.bf16.mxu0 0
        %739 = vmatmul.mubr.bf16.gmra.mrb[0].mxu0 %v690
        %v740 = vpop.f32.mrb[0].mxu0
        %v741 = vadd.f32 0.0, %v740
        %v742 = vpop.f32.mrb[0].mxu0
        %v743 = vpop.f32.mrb[0].mxu0
        %v744 = vadd.f32 0.0, %v743
        %v745 = vpop.f32.mrb[0].mxu0
        %746 = vdwg.mxu0
        %747 = vrot.lane.b32.xlu0 %v493, 96
        %v748 = vpop.permute.xlu0 %747
        %749 = vrot.lane.b32.xlu0 %v494, 96
        %v750 = vpop.permute.xlu0 %749
        %v752 = vsel %vm555, %v493, 0
        %v755 = vsel %vm555, %v494, 0
        %v758 = vsel %vm555, %v748, 0
        %v761 = vsel %vm555, %v750, 0
        %763 = vmatprep.subr.bf16.mxu0 0
        %764 = vmatpush1.bf16.xpose.msra.mxu0 %v758
        %765 = vmatprep.subr.bf16.mxu0 0
        %766 = vmatpush1.bf16.xpose.msra.mxu0 %v761
        %767 = vmatprep.subr.bf16.mxu0 0
        %768 = vmatpush1.bf16.xpose.msra.mxu0 0
        %769 = vmatprep.subr.bf16.mxu0 0
        %770 = vmatpush1.bf16.xpose.msra.mxu0 0
        %771 = vmatprep.subr.bf16.mxu0 0
        %772 = vmatpush1.bf16.xpose.msra.mxu0 0
        %773 = vmatprep.subr.bf16.mxu0 0
        %774 = vmatpush1.bf16.xpose.msra.mxu0 0
        %775 = vmatprep.subr.bf16.mxu0 0
        %776 = vmatpush1.bf16.xpose.msra.mxu0 0
        %777 = vmatprep.subr.bf16.mxu0 0
        %778 = vmatpush1.bf16.xpose.msra.mxu0 0
        %779 = vmatprep.subr.bf16.mxu0 0
        %780 = vmatpush1.bf16.xpose.msra.mxu0 0
        %781 = vmatprep.subr.bf16.mxu0 0
        %782 = vmatpush1.bf16.xpose.msra.mxu0 0
        %783 = vmatprep.subr.bf16.mxu0 0
        %784 = vmatpush1.bf16.xpose.msra.mxu0 0
        %785 = vmatprep.subr.bf16.mxu0 0
        %786 = vmatpush1.bf16.xpose.msra.mxu0 0
        %787 = vmatprep.subr.bf16.mxu0 0
        %788 = vmatpush1.bf16.xpose.msra.mxu0 0
        %789 = vmatprep.subr.bf16.mxu0 0
        %790 = vmatpush1.bf16.xpose.msra.mxu0 0
        %791 = vmatprep.subr.bf16.mxu0 0
        %792 = vmatpush1.bf16.xpose.msra.mxu0 0
        %793 = vmatprep.subr.bf16.mxu0 0
        %794 = vmatpush1.bf16.xpose.msra.mxu0 0
        %795 = vmatprep.mubr.bf16.mxu0 0
        %796 = vmatmul.mubr.bf16.gmra.mrb[0].mxu0 %v752
        %v797 = vpop.f32.mrb[0].mxu0
        %v798 = vadd.f32 0.0, %v797
        %v799 = vpop.f32.mrb[0].mxu0
        %v800 = vpop.f32.mrb[0].mxu0
        %v801 = vadd.f32 0.0, %v800
        %v802 = vpop.f32.mrb[0].mxu0
        %803 = vmatprep.mubr.bf16.mxu0 0
        %804 = vmatmul.mubr.bf16.gmra.mrb[0].mxu0 %v755
        %v805 = vpop.f32.mrb[0].mxu0
        %v806 = vadd.f32 0.0, %v805
        %v807 = vpop.f32.mrb[0].mxu0
        %v808 = vpop.f32.mrb[0].mxu0
        %v809 = vadd.f32 0.0, %v808
        %v810 = vpop.f32.mrb[0].mxu0
        %811 = vdwg.mxu0
        %812 = vrot.lane.b32.xlu0 %v504, 96
        %v813 = vpop.permute.xlu0 %812
        %814 = vrot.lane.b32.xlu0 %v506, 96
        %v815 = vpop.permute.xlu0 %814
        %v817 = vsel %vm555, %v504, 0
        %v820 = vsel %vm555, %v506, 0
        %v823 = vsel %vm555, %v813, 0
        %v826 = vsel %vm555, %v815, 0
        %828 = vmatprep.subr.bf16.mxu0 0
        %829 = vmatpush1.bf16.xpose.msra.mxu0 %v823
        %830 = vmatprep.subr.bf16.mxu0 0
        %831 = vmatpush1.bf16.xpose.msra.mxu0 %v826
        %832 = vmatprep.subr.bf16.mxu0 0
        %833 = vmatpush1.bf16.xpose.msra.mxu0 0
        %834 = vmatprep.subr.bf16.mxu0 0
        %835 = vmatpush1.bf16.xpose.msra.mxu0 0
        %836 = vmatprep.subr.bf16.mxu0 0
        %837 = vmatpush1.bf16.xpose.msra.mxu0 0
        %838 = vmatprep.subr.bf16.mxu0 0
        %839 = vmatpush1.bf16.xpose.msra.mxu0 0
        %840 = vmatprep.subr.bf16.mxu0 0
        %841 = vmatpush1.bf16.xpose.msra.mxu0 0
        %842 = vmatprep.subr.bf16.mxu0 0
        %843 = vmatpush1.bf16.xpose.msra.mxu0 0
        %844 = vmatprep.subr.bf16.mxu0 0
        %845 = vmatpush1.bf16.xpose.msra.mxu0 0
        %846 = vmatprep.subr.bf16.mxu0 0
        %847 = vmatpush1.bf16.xpose.msra.mxu0 0
        %848 = vmatprep.subr.bf16.mxu0 0
        %849 = vmatpush1.bf16.xpose.msra.mxu0 0
        %850 = vmatprep.subr.bf16.mxu0 0
        %851 = vmatpush1.bf16.xpose.msra.mxu0 0
        %852 = vmatprep.subr.bf16.mxu0 0
        %853 = vmatpush1.bf16.xpose.msra.mxu0 0
        %854 = vmatprep.subr.bf16.mxu0 0
        %855 = vmatpush1.bf16.xpose.msra.mxu0 0
        %856 = vmatprep.subr.bf16.mxu0 0
        %857 = vmatpush1.bf16.xpose.msra.mxu0 0
        %858 = vmatprep.subr.bf16.mxu0 0
        %859 = vmatpush1.bf16.xpose.msra.mxu0 0
        %860 = vmatprep.mubr.bf16.mxu0 0
        %861 = vmatmul.mubr.bf16.gmra.mrb[0].mxu0 %v817
        %v862 = vpop.f32.mrb[0].mxu0
        %v863 = vadd.f32 0.0, %v862
        %v864 = vpop.f32.mrb[0].mxu0
        %v865 = vpop.f32.mrb[0].mxu0
        %v866 = vadd.f32 0.0, %v865
        %v867 = vpop.f32.mrb[0].mxu0
        %868 = vmatprep.mubr.bf16.mxu0 0
        %869 = vmatmul.mubr.bf16.gmra.mrb[0].mxu0 %v820
        %v870 = vpop.f32.mrb[0].mxu0
        %v871 = vadd.f32 0.0, %v870
        %v872 = vpop.f32.mrb[0].mxu0
        %v873 = vpop.f32.mrb[0].mxu0
        %v874 = vadd.f32 0.0, %v873
        %v875 = vpop.f32.mrb[0].mxu0
        %876 = vdwg.mxu0
        %877 = vrot.lane.b32.xlu0 %v508, 96
        %v878 = vpop.permute.xlu0 %877
        %879 = vrot.lane.b32.xlu0 %v510, 96
        %v880 = vpop.permute.xlu0 %879
        %v882 = vsel %vm555, %v508, 0
        %v885 = vsel %vm555, %v510, 0
        %v888 = vsel %vm555, %v878, 0
        %v891 = vsel %vm555, %v880, 0
        %893 = vmatprep.subr.bf16.mxu0 0
        %894 = vmatpush1.bf16.xpose.msra.mxu0 %v888
        %895 = vmatprep.subr.bf16.mxu0 0
        %896 = vmatpush1.bf16.xpose.msra.mxu0 %v891
        %897 = vmatprep.subr.bf16.mxu0 0
        %898 = vmatpush1.bf16.xpose.msra.mxu0 0
        %899 = vmatprep.subr.bf16.mxu0 0
        %900 = vmatpush1.bf16.xpose.msra.mxu0 0
        %901 = vmatprep.subr.bf16.mxu0 0
        %902 = vmatpush1.bf16.xpose.msra.mxu0 0
        %903 = vmatprep.subr.bf16.mxu0 0
        %904 = vmatpush1.bf16.xpose.msra.mxu0 0
        %905 = vmatprep.subr.bf16.mxu0 0
        %906 = vmatpush1.bf16.xpose.msra.mxu0 0
        %907 = vmatprep.subr.bf16.mxu0 0
        %908 = vmatpush1.bf16.xpose.msra.mxu0 0
        %909 = vmatprep.subr.bf16.mxu0 0
        %910 = vmatpush1.bf16.xpose.msra.mxu0 0
        %911 = vmatprep.subr.bf16.mxu0 0
        %912 = vmatpush1.bf16.xpose.msra.mxu0 0
        %913 = vmatprep.subr.bf16.mxu0 0
        %914 = vmatpush1.bf16.xpose.msra.mxu0 0
        %915 = vmatprep.subr.bf16.mxu0 0
        %916 = vmatpush1.bf16.xpose.msra.mxu0 0
        %917 = vmatprep.subr.bf16.mxu0 0
        %918 = vmatpush1.bf16.xpose.msra.mxu0 0
        %919 = vmatprep.subr.bf16.mxu0 0
        %920 = vmatpush1.bf16.xpose.msra.mxu0 0
        %921 = vmatprep.subr.bf16.mxu0 0
        %922 = vmatpush1.bf16.xpose.msra.mxu0 0
        %923 = vmatprep.subr.bf16.mxu0 0
        %924 = vmatpush1.bf16.xpose.msra.mxu0 0
        %925 = vmatprep.mubr.bf16.mxu0 0
        %926 = vmatmul.mubr.bf16.gmra.mrb[0].mxu0 %v882
        %v927 = vpop.f32.mrb[0].mxu0
        %v928 = vadd.f32 0.0, %v927
        %v929 = vpop.f32.mrb[0].mxu0
        %v930 = vpop.f32.mrb[0].mxu0
        %v931 = vadd.f32 0.0, %v930
        %v932 = vpop.f32.mrb[0].mxu0
        %933 = vmatprep.mubr.bf16.mxu0 0
        %934 = vmatmul.mubr.bf16.gmra.mrb[0].mxu0 %v885
        %v935 = vpop.f32.mrb[0].mxu0
        %v936 = vadd.f32 0.0, %v935
        %v937 = vpop.f32.mrb[0].mxu0
        %v938 = vpop.f32.mrb[0].mxu0
        %v939 = vadd.f32 0.0, %v938
        %v940 = vpop.f32.mrb[0].mxu0
        %941 = vdwg.mxu0
        %942 = vrot.lane.b32.xlu0 %v512, 96
        %v943 = vpop.permute.xlu0 %942
        %944 = vrot.lane.b32.xlu0 %v514, 96
        %v945 = vpop.permute.xlu0 %944
        %v947 = vsel %vm555, %v512, 0
        %v950 = vsel %vm555, %v514, 0
        %v953 = vsel %vm555, %v943, 0
        %v956 = vsel %vm555, %v945, 0
        %958 = vmatprep.subr.bf16.mxu0 0
        %959 = vmatpush1.bf16.xpose.msra.mxu0 %v953
        %960 = vmatprep.subr.bf16.mxu0 0
        %961 = vmatpush1.bf16.xpose.msra.mxu0 %v956
        %962 = vmatprep.subr.bf16.mxu0 0
        %963 = vmatpush1.bf16.xpose.msra.mxu0 0
        %964 = vmatprep.subr.bf16.mxu0 0
        %965 = vmatpush1.bf16.xpose.msra.mxu0 0
        %966 = vmatprep.subr.bf16.mxu0 0
        %967 = vmatpush1.bf16.xpose.msra.mxu0 0
        %968 = vmatprep.subr.bf16.mxu0 0
        %969 = vmatpush1.bf16.xpose.msra.mxu0 0
        %970 = vmatprep.subr.bf16.mxu0 0
        %971 = vmatpush1.bf16.xpose.msra.mxu0 0
        %972 = vmatprep.subr.bf16.mxu0 0
        %973 = vmatpush1.bf16.xpose.msra.mxu0 0
        %974 = vmatprep.subr.bf16.mxu0 0
        %975 = vmatpush1.bf16.xpose.msra.mxu0 0
        %976 = vmatprep.subr.bf16.mxu0 0
        %977 = vmatpush1.bf16.xpose.msra.mxu0 0
        %978 = vmatprep.subr.bf16.mxu0 0
        %979 = vmatpush1.bf16.xpose.msra.mxu0 0
        %980 = vmatprep.subr.bf16.mxu0 0
        %981 = vmatpush1.bf16.xpose.msra.mxu0 0
        %982 = vmatprep.subr.bf16.mxu0 0
        %983 = vmatpush1.bf16.xpose.msra.mxu0 0
        %984 = vmatprep.subr.bf16.mxu0 0
        %985 = vmatpush1.bf16.xpose.msra.mxu0 0
        %986 = vmatprep.subr.bf16.mxu0 0
        %987 = vmatpush1.bf16.xpose.msra.mxu0 0
        %988 = vmatprep.subr.bf16.mxu0 0
        %989 = vmatpush1.bf16.xpose.msra.mxu0 0
        %990 = vmatprep.mubr.bf16.mxu0 0
        %991 = vmatmul.mubr.bf16.gmra.mrb[0].mxu0 %v947
        %v992 = vpop.f32.mrb[0].mxu0
        %v993 = vadd.f32 0.0, %v992
        %v994 = vpop.f32.mrb[0].mxu0
        %v995 = vpop.f32.mrb[0].mxu0
        %v996 = vadd.f32 0.0, %v995
        %v997 = vpop.f32.mrb[0].mxu0
        %998 = vmatprep.mubr.bf16.mxu0 0
        %999 = vmatmul.mubr.bf16.gmra.mrb[0].mxu0 %v950
        %v1000 = vpop.f32.mrb[0].mxu0
        %v1001 = vadd.f32 0.0, %v1000
        %v1002 = vpop.f32.mrb[0].mxu0
        %v1003 = vpop.f32.mrb[0].mxu0
        %v1004 = vadd.f32 0.0, %v1003
        %v1005 = vpop.f32.mrb[0].mxu0
        %1006 = vdwg.mxu0
        %1007 = vrot.lane.b32.xlu0 %v516, 96
        %v1008 = vpop.permute.xlu0 %1007
        %1009 = vrot.lane.b32.xlu0 %v518, 96
        %v1010 = vpop.permute.xlu0 %1009
        %v1012 = vsel %vm555, %v516, 0
        %v1015 = vsel %vm555, %v518, 0
        %v1018 = vsel %vm555, %v1008, 0
        %v1021 = vsel %vm555, %v1010, 0
        %1023 = vmatprep.subr.bf16.mxu0 0
        %1024 = vmatpush1.bf16.xpose.msra.mxu0 %v1018
        %1025 = vmatprep.subr.bf16.mxu0 0
        %1026 = vmatpush1.bf16.xpose.msra.mxu0 %v1021
        %1027 = vmatprep.subr.bf16.mxu0 0
        %1028 = vmatpush1.bf16.xpose.msra.mxu0 0
        %1029 = vmatprep.subr.bf16.mxu0 0
        %1030 = vmatpush1.bf16.xpose.msra.mxu0 0
        %1031 = vmatprep.subr.bf16.mxu0 0
        %1032 = vmatpush1.bf16.xpose.msra.mxu0 0
        %1033 = vmatprep.subr.bf16.mxu0 0
        %1034 = vmatpush1.bf16.xpose.msra.mxu0 0
        %1035 = vmatprep.subr.bf16.mxu0 0
        %1036 = vmatpush1.bf16.xpose.msra.mxu0 0
        %1037 = vmatprep.subr.bf16.mxu0 0
        %1038 = vmatpush1.bf16.xpose.msra.mxu0 0
        %1039 = vmatprep.subr.bf16.mxu0 0
        %1040 = vmatpush1.bf16.xpose.msra.mxu0 0
        %1041 = vmatprep.subr.bf16.mxu0 0
        %1042 = vmatpush1.bf16.xpose.msra.mxu0 0
        %1043 = vmatprep.subr.bf16.mxu0 0
        %1044 = vmatpush1.bf16.xpose.msra.mxu0 0
        %1045 = vmatprep.subr.bf16.mxu0 0
        %1046 = vmatpush1.bf16.xpose.msra.mxu0 0
        %1047 = vmatprep.subr.bf16.mxu0 0
        %1048 = vmatpush1.bf16.xpose.msra.mxu0 0
        %1049 = vmatprep.subr.bf16.mxu0 0
        %1050 = vmatpush1.bf16.xpose.msra.mxu0 0
        %1051 = vmatprep.subr.bf16.mxu0 0
        %1052 = vmatpush1.bf16.xpose.msra.mxu0 0
        %1053 = vmatprep.subr.bf16.mxu0 0
        %1054 = vmatpush1.bf16.xpose.msra.mxu0 0
        %1055 = vmatprep.mubr.bf16.mxu0 0
        %1056 = vmatmul.mubr.bf16.gmra.mrb[0].mxu0 %v1012
        %v1057 = vpop.f32.mrb[0].mxu0
        %v1058 = vadd.f32 0.0, %v1057
        %v1059 = vpop.f32.mrb[0].mxu0
        %v1060 = vpop.f32.mrb[0].mxu0
        %v1061 = vadd.f32 0.0, %v1060
        %v1062 = vpop.f32.mrb[0].mxu0
        %1063 = vmatprep.mubr.bf16.mxu0 0
        %1064 = vmatmul.mubr.bf16.gmra.mrb[0].mxu0 %v1015
        %v1065 = vpop.f32.mrb[0].mxu0
        %v1066 = vadd.f32 0.0, %v1065
        %v1067 = vpop.f32.mrb[0].mxu0
        %v1068 = vpop.f32.mrb[0].mxu0
        %v1069 = vadd.f32 0.0, %v1068
        %v1070 = vpop.f32.mrb[0].mxu0
        %1071 = vdwg.mxu0
        %1072 = vrot.lane.b32.xlu0 %v520, 96
        %v1073 = vpop.permute.xlu0 %1072
        %1074 = vrot.lane.b32.xlu0 %v522, 96
        %v1075 = vpop.permute.xlu0 %1074
        %v1077 = vsel %vm555, %v520, 0
        %v1080 = vsel %vm555, %v522, 0
        %v1083 = vsel %vm555, %v1073, 0
        %v1086 = vsel %vm555, %v1075, 0
        %1088 = vmatprep.subr.bf16.mxu0 0
        %1089 = vmatpush1.bf16.xpose.msra.mxu0 %v1083
        %1090 = vmatprep.subr.bf16.mxu0 0
        %1091 = vmatpush1.bf16.xpose.msra.mxu0 %v1086
        %1092 = vmatprep.subr.bf16.mxu0 0
        %1093 = vmatpush1.bf16.xpose.msra.mxu0 0
        %1094 = vmatprep.subr.bf16.mxu0 0
        %1095 = vmatpush1.bf16.xpose.msra.mxu0 0
        %1096 = vmatprep.subr.bf16.mxu0 0
        %1097 = vmatpush1.bf16.xpose.msra.mxu0 0
        %1098 = vmatprep.subr.bf16.mxu0 0
        %1099 = vmatpush1.bf16.xpose.msra.mxu0 0
        %1100 = vmatprep.subr.bf16.mxu0 0
        %1101 = vmatpush1.bf16.xpose.msra.mxu0 0
        %1102 = vmatprep.subr.bf16.mxu0 0
        %1103 = vmatpush1.bf16.xpose.msra.mxu0 0
        %1104 = vmatprep.subr.bf16.mxu0 0
        %1105 = vmatpush1.bf16.xpose.msra.mxu0 0
        %1106 = vmatprep.subr.bf16.mxu0 0
        %1107 = vmatpush1.bf16.xpose.msra.mxu0 0
        %1108 = vmatprep.subr.bf16.mxu0 0
        %1109 = vmatpush1.bf16.xpose.msra.mxu0 0
        %1110 = vmatprep.subr.bf16.mxu0 0
        %1111 = vmatpush1.bf16.xpose.msra.mxu0 0
        %1112 = vmatprep.subr.bf16.mxu0 0
        %1113 = vmatpush1.bf16.xpose.msra.mxu0 0
        %1114 = vmatprep.subr.bf16.mxu0 0
        %1115 = vmatpush1.bf16.xpose.msra.mxu0 0
        %1116 = vmatprep.subr.bf16.mxu0 0
        %1117 = vmatpush1.bf16.xpose.msra.mxu0 0
        %1118 = vmatprep.subr.bf16.mxu0 0
        %1119 = vmatpush1.bf16.xpose.msra.mxu0 0
        %1120 = vmatprep.mubr.bf16.mxu0 0
        %1121 = vmatmul.mubr.bf16.gmra.mrb[0].mxu0 %v1077
        %v1122 = vpop.f32.mrb[0].mxu0
        %v1123 = vadd.f32 0.0, %v1122
        %v1124 = vpop.f32.mrb[0].mxu0
        %v1125 = vpop.f32.mrb[0].mxu0
        %v1126 = vadd.f32 0.0, %v1125
        %v1127 = vpop.f32.mrb[0].mxu0
        %1128 = vmatprep.mubr.bf16.mxu0 0
        %1129 = vmatmul.mubr.bf16.gmra.mrb[0].mxu0 %v1080
        %v1130 = vpop.f32.mrb[0].mxu0
        %v1131 = vadd.f32 0.0, %v1130
        %v1132 = vpop.f32.mrb[0].mxu0
        %v1133 = vpop.f32.mrb[0].mxu0
        %v1134 = vadd.f32 0.0, %v1133
        %v1135 = vpop.f32.mrb[0].mxu0
        %1136 = vdwg.mxu0
        %1137 = vrot.lane.b32.xlu0 %v524, 96
        %v1138 = vpop.permute.xlu0 %1137
        %1139 = vrot.lane.b32.xlu0 %v526, 96
        %v1140 = vpop.permute.xlu0 %1139
        %v1142 = vsel %vm555, %v524, 0
        %v1145 = vsel %vm555, %v526, 0
        %v1148 = vsel %vm555, %v1138, 0
        %v1151 = vsel %vm555, %v1140, 0
        %1153 = vmatprep.subr.bf16.mxu0 0
        %1154 = vmatpush1.bf16.xpose.msra.mxu0 %v1148
        %1155 = vmatprep.subr.bf16.mxu0 0
        %1156 = vmatpush1.bf16.xpose.msra.mxu0 %v1151
        %1157 = vmatprep.subr.bf16.mxu0 0
        %1158 = vmatpush1.bf16.xpose.msra.mxu0 0
        %1159 = vmatprep.subr.bf16.mxu0 0
        %1160 = vmatpush1.bf16.xpose.msra.mxu0 0
        %1161 = vmatprep.subr.bf16.mxu0 0
        %1162 = vmatpush1.bf16.xpose.msra.mxu0 0
        %1163 = vmatprep.subr.bf16.mxu0 0
        %1164 = vmatpush1.bf16.xpose.msra.mxu0 0
        %1165 = vmatprep.subr.bf16.mxu0 0
        %1166 = vmatpush1.bf16.xpose.msra.mxu0 0
        %1167 = vmatprep.subr.bf16.mxu0 0
        %1168 = vmatpush1.bf16.xpose.msra.mxu0 0
        %1169 = vmatprep.subr.bf16.mxu0 0
        %1170 = vmatpush1.bf16.xpose.msra.mxu0 0
        %1171 = vmatprep.subr.bf16.mxu0 0
        %1172 = vmatpush1.bf16.xpose.msra.mxu0 0
        %1173 = vmatprep.subr.bf16.mxu0 0
        %1174 = vmatpush1.bf16.xpose.msra.mxu0 0
        %1175 = vmatprep.subr.bf16.mxu0 0
        %1176 = vmatpush1.bf16.xpose.msra.mxu0 0
        %1177 = vmatprep.subr.bf16.mxu0 0
        %1178 = vmatpush1.bf16.xpose.msra.mxu0 0
        %1179 = vmatprep.subr.bf16.mxu0 0
        %1180 = vmatpush1.bf16.xpose.msra.mxu0 0
        %1181 = vmatprep.subr.bf16.mxu0 0
        %1182 = vmatpush1.bf16.xpose.msra.mxu0 0
        %1183 = vmatprep.subr.bf16.mxu0 0
        %1184 = vmatpush1.bf16.xpose.msra.mxu0 0
        %1185 = vmatprep.mubr.bf16.mxu0 0
        %1186 = vmatmul.mubr.bf16.gmra.mrb[0].mxu0 %v1142
        %v1187 = vpop.f32.mrb[0].mxu0
        %v1188 = vadd.f32 0.0, %v1187
        %v1189 = vpop.f32.mrb[0].mxu0
        %v1190 = vpop.f32.mrb[0].mxu0
        %v1191 = vadd.f32 0.0, %v1190
        %v1192 = vpop.f32.mrb[0].mxu0
        %1193 = vmatprep.mubr.bf16.mxu0 0
        %1194 = vmatmul.mubr.bf16.gmra.mrb[0].mxu0 %v1145
        %v1195 = vpop.f32.mrb[0].mxu0
        %v1196 = vadd.f32 0.0, %v1195
        %v1197 = vpop.f32.mrb[0].mxu0
        %v1198 = vpop.f32.mrb[0].mxu0
        %v1199 = vadd.f32 0.0, %v1198
        %v1200 = vpop.f32.mrb[0].mxu0
        %1201 = vdwg.mxu0
        %1202 = vrot.lane.b32.xlu0 %v528, 96
        %v1203 = vpop.permute.xlu0 %1202
        %1204 = vrot.lane.b32.xlu0 %v530, 96
        %v1205 = vpop.permute.xlu0 %1204
        %v1207 = vsel %vm555, %v528, 0
        %v1210 = vsel %vm555, %v530, 0
        %v1213 = vsel %vm555, %v1203, 0
        %v1216 = vsel %vm555, %v1205, 0
        %1218 = vmatprep.subr.bf16.mxu0 0
        %1219 = vmatpush1.bf16.xpose.msra.mxu0 %v1213
        %1220 = vmatprep.subr.bf16.mxu0 0
        %1221 = vmatpush1.bf16.xpose.msra.mxu0 %v1216
        %1222 = vmatprep.subr.bf16.mxu0 0
        %1223 = vmatpush1.bf16.xpose.msra.mxu0 0
        %1224 = vmatprep.subr.bf16.mxu0 0
        %1225 = vmatpush1.bf16.xpose.msra.mxu0 0
        %1226 = vmatprep.subr.bf16.mxu0 0
        %1227 = vmatpush1.bf16.xpose.msra.mxu0 0
        %1228 = vmatprep.subr.bf16.mxu0 0
        %1229 = vmatpush1.bf16.xpose.msra.mxu0 0
        %1230 = vmatprep.subr.bf16.mxu0 0
        %1231 = vmatpush1.bf16.xpose.msra.mxu0 0
        %1232 = vmatprep.subr.bf16.mxu0 0
        %1233 = vmatpush1.bf16.xpose.msra.mxu0 0
        %1234 = vmatprep.subr.bf16.mxu0 0
        %1235 = vmatpush1.bf16.xpose.msra.mxu0 0
        %1236 = vmatprep.subr.bf16.mxu0 0
        %1237 = vmatpush1.bf16.xpose.msra.mxu0 0
        %1238 = vmatprep.subr.bf16.mxu0 0
        %1239 = vmatpush1.bf16.xpose.msra.mxu0 0
        %1240 = vmatprep.subr.bf16.mxu0 0
        %1241 = vmatpush1.bf16.xpose.msra.mxu0 0
        %1242 = vmatprep.subr.bf16.mxu0 0
        %1243 = vmatpush1.bf16.xpose.msra.mxu0 0
        %1244 = vmatprep.subr.bf16.mxu0 0
        %1245 = vmatpush1.bf16.xpose.msra.mxu0 0
        %1246 = vmatprep.subr.bf16.mxu0 0
        %1247 = vmatpush1.bf16.xpose.msra.mxu0 0
        %1248 = vmatprep.subr.bf16.mxu0 0
        %1249 = vmatpush1.bf16.xpose.msra.mxu0 0
        %1250 = vmatprep.mubr.bf16.mxu0 0
        %1251 = vmatmul.mubr.bf16.gmra.mrb[0].mxu0 %v1207
        %v1252 = vpop.f32.mrb[0].mxu0
        %v1253 = vadd.f32 0.0, %v1252
        %v1254 = vpop.f32.mrb[0].mxu0
        %v1255 = vpop.f32.mrb[0].mxu0
        %v1256 = vadd.f32 0.0, %v1255
        %v1257 = vpop.f32.mrb[0].mxu0
        %1258 = vmatprep.mubr.bf16.mxu0 0
        %1259 = vmatmul.mubr.bf16.gmra.mrb[0].mxu0 %v1210
        %v1260 = vpop.f32.mrb[0].mxu0
        %v1261 = vadd.f32 0.0, %v1260
        %v1262 = vpop.f32.mrb[0].mxu0
        %v1263 = vpop.f32.mrb[0].mxu0
        %v1264 = vadd.f32 0.0, %v1263
        %v1265 = vpop.f32.mrb[0].mxu0
        %1266 = vdwg.mxu0
        %1267 = vrot.lane.b32.xlu0 %v532, 96
        %v1268 = vpop.permute.xlu0 %1267
        %1269 = vrot.lane.b32.xlu0 %v534, 96
        %v1270 = vpop.permute.xlu0 %1269
        %v1272 = vsel %vm555, %v532, 0
        %v1275 = vsel %vm555, %v534, 0
        %v1278 = vsel %vm555, %v1268, 0
        %v1281 = vsel %vm555, %v1270, 0
        %1283 = vmatprep.subr.bf16.mxu0 0
        %1284 = vmatpush1.bf16.xpose.msra.mxu0 %v1278
        %1285 = vmatprep.subr.bf16.mxu0 0
        %1286 = vmatpush1.bf16.xpose.msra.mxu0 %v1281
        %1287 = vmatprep.subr.bf16.mxu0 0
        %1288 = vmatpush1.bf16.xpose.msra.mxu0 0
        %1289 = vmatprep.subr.bf16.mxu0 0
        %1290 = vmatpush1.bf16.xpose.msra.mxu0 0
        %1291 = vmatprep.subr.bf16.mxu0 0
        %1292 = vmatpush1.bf16.xpose.msra.mxu0 0
        %1293 = vmatprep.subr.bf16.mxu0 0
        %1294 = vmatpush1.bf16.xpose.msra.mxu0 0
        %1295 = vmatprep.subr.bf16.mxu0 0
        %1296 = vmatpush1.bf16.xpose.msra.mxu0 0
        %1297 = vmatprep.subr.bf16.mxu0 0
        %1298 = vmatpush1.bf16.xpose.msra.mxu0 0
        %1299 = vmatprep.subr.bf16.mxu0 0
        %1300 = vmatpush1.bf16.xpose.msra.mxu0 0
        %1301 = vmatprep.subr.bf16.mxu0 0
        %1302 = vmatpush1.bf16.xpose.msra.mxu0 0
        %1303 = vmatprep.subr.bf16.mxu0 0
        %1304 = vmatpush1.bf16.xpose.msra.mxu0 0
        %1305 = vmatprep.subr.bf16.mxu0 0
        %1306 = vmatpush1.bf16.xpose.msra.mxu0 0
        %1307 = vmatprep.subr.bf16.mxu0 0
        %1308 = vmatpush1.bf16.xpose.msra.mxu0 0
        %1309 = vmatprep.subr.bf16.mxu0 0
        %1310 = vmatpush1.bf16.xpose.msra.mxu0 0
        %1311 = vmatprep.subr.bf16.mxu0 0
        %1312 = vmatpush1.bf16.xpose.msra.mxu0 0
        %1313 = vmatprep.subr.bf16.mxu0 0
        %1314 = vmatpush1.bf16.xpose.msra.mxu0 0
        %1315 = vmatprep.mubr.bf16.mxu0 0
        %1316 = vmatmul.mubr.bf16.gmra.mrb[0].mxu0 %v1272
        %v1317 = vpop.f32.mrb[0].mxu0
        %v1318 = vadd.f32 0.0, %v1317
        %v1319 = vpop.f32.mrb[0].mxu0
        %v1320 = vpop.f32.mrb[0].mxu0
        %v1321 = vadd.f32 0.0, %v1320
        %v1322 = vpop.f32.mrb[0].mxu0
        %1323 = vmatprep.mubr.bf16.mxu0 0
        %1324 = vmatmul.mubr.bf16.gmra.mrb[0].mxu0 %v1275
        %v1325 = vpop.f32.mrb[0].mxu0
        %v1326 = vadd.f32 0.0, %v1325
        %v1327 = vpop.f32.mrb[0].mxu0
        %v1328 = vpop.f32.mrb[0].mxu0
        %v1329 = vadd.f32 0.0, %v1328
        %v1330 = vpop.f32.mrb[0].mxu0
        %1331 = vdwg.mxu0
        %1332 = vrot.lane.b32.xlu0 %v536, 96
        %v1333 = vpop.permute.xlu0 %1332
        %1334 = vrot.lane.b32.xlu0 %v538, 96
        %v1335 = vpop.permute.xlu0 %1334
        %v1337 = vsel %vm555, %v536, 0
        %v1340 = vsel %vm555, %v538, 0
        %v1343 = vsel %vm555, %v1333, 0
        %v1346 = vsel %vm555, %v1335, 0
        %1348 = vmatprep.subr.bf16.mxu0 0
        %1349 = vmatpush1.bf16.xpose.msra.mxu0 %v1343
        %1350 = vmatprep.subr.bf16.mxu0 0
        %1351 = vmatpush1.bf16.xpose.msra.mxu0 %v1346
        %1352 = vmatprep.subr.bf16.mxu0 0
        %1353 = vmatpush1.bf16.xpose.msra.mxu0 0
        %1354 = vmatprep.subr.bf16.mxu0 0
        %1355 = vmatpush1.bf16.xpose.msra.mxu0 0
        %1356 = vmatprep.subr.bf16.mxu0 0
        %1357 = vmatpush1.bf16.xpose.msra.mxu0 0
        %1358 = vmatprep.subr.bf16.mxu0 0
        %1359 = vmatpush1.bf16.xpose.msra.mxu0 0
        %1360 = vmatprep.subr.bf16.mxu0 0
        %1361 = vmatpush1.bf16.xpose.msra.mxu0 0
        %1362 = vmatprep.subr.bf16.mxu0 0
        %1363 = vmatpush1.bf16.xpose.msra.mxu0 0
        %1364 = vmatprep.subr.bf16.mxu0 0
        %1365 = vmatpush1.bf16.xpose.msra.mxu0 0
        %1366 = vmatprep.subr.bf16.mxu0 0
        %1367 = vmatpush1.bf16.xpose.msra.mxu0 0
        %1368 = vmatprep.subr.bf16.mxu0 0
        %1369 = vmatpush1.bf16.xpose.msra.mxu0 0
        %1370 = vmatprep.subr.bf16.mxu0 0
        %1371 = vmatpush1.bf16.xpose.msra.mxu0 0
        %1372 = vmatprep.subr.bf16.mxu0 0
        %1373 = vmatpush1.bf16.xpose.msra.mxu0 0
        %1374 = vmatprep.subr.bf16.mxu0 0
        %1375 = vmatpush1.bf16.xpose.msra.mxu0 0
        %1376 = vmatprep.subr.bf16.mxu0 0
        %1377 = vmatpush1.bf16.xpose.msra.mxu0 0
        %1378 = vmatprep.subr.bf16.mxu0 0
        %1379 = vmatpush1.bf16.xpose.msra.mxu0 0
        %1380 = vmatprep.mubr.bf16.mxu0 0
        %1381 = vmatmul.mubr.bf16.gmra.mrb[0].mxu0 %v1337
        %v1382 = vpop.f32.mrb[0].mxu0
        %v1383 = vadd.f32 0.0, %v1382
        %v1384 = vpop.f32.mrb[0].mxu0
        %v1385 = vpop.f32.mrb[0].mxu0
        %v1386 = vadd.f32 0.0, %v1385
        %v1387 = vpop.f32.mrb[0].mxu0
        %1388 = vmatprep.mubr.bf16.mxu0 0
        %1389 = vmatmul.mubr.bf16.gmra.mrb[0].mxu0 %v1340
        %v1390 = vpop.f32.mrb[0].mxu0
        %v1391 = vadd.f32 0.0, %v1390
        %v1392 = vpop.f32.mrb[0].mxu0
        %v1393 = vpop.f32.mrb[0].mxu0
        %v1394 = vadd.f32 0.0, %v1393
        %v1395 = vpop.f32.mrb[0].mxu0
        %1396 = vdwg.mxu0
        %1397 = vrot.lane.b32.xlu0 %v540, 96
        %v1398 = vpop.permute.xlu0 %1397
        %1399 = vrot.lane.b32.xlu0 %v542, 96
        %v1400 = vpop.permute.xlu0 %1399
        %v1402 = vsel %vm555, %v540, 0
        %v1405 = vsel %vm555, %v542, 0
        %v1408 = vsel %vm555, %v1398, 0
        %v1411 = vsel %vm555, %v1400, 0
        %1413 = vmatprep.subr.bf16.mxu0 0
        %1414 = vmatpush1.bf16.xpose.msra.mxu0 %v1408
        %1415 = vmatprep.subr.bf16.mxu0 0
        %1416 = vmatpush1.bf16.xpose.msra.mxu0 %v1411
        %1417 = vmatprep.subr.bf16.mxu0 0
        %1418 = vmatpush1.bf16.xpose.msra.mxu0 0
        %1419 = vmatprep.subr.bf16.mxu0 0
        %1420 = vmatpush1.bf16.xpose.msra.mxu0 0
        %1421 = vmatprep.subr.bf16.mxu0 0
        %1422 = vmatpush1.bf16.xpose.msra.mxu0 0
        %1423 = vmatprep.subr.bf16.mxu0 0
        %1424 = vmatpush1.bf16.xpose.msra.mxu0 0
        %1425 = vmatprep.subr.bf16.mxu0 0
        %1426 = vmatpush1.bf16.xpose.msra.mxu0 0
        %1427 = vmatprep.subr.bf16.mxu0 0
        %1428 = vmatpush1.bf16.xpose.msra.mxu0 0
        %1429 = vmatprep.subr.bf16.mxu0 0
        %1430 = vmatpush1.bf16.xpose.msra.mxu0 0
        %1431 = vmatprep.subr.bf16.mxu0 0
        %1432 = vmatpush1.bf16.xpose.msra.mxu0 0
        %1433 = vmatprep.subr.bf16.mxu0 0
        %1434 = vmatpush1.bf16.xpose.msra.mxu0 0
        %1435 = vmatprep.subr.bf16.mxu0 0
        %1436 = vmatpush1.bf16.xpose.msra.mxu0 0
        %1437 = vmatprep.subr.bf16.mxu0 0
        %1438 = vmatpush1.bf16.xpose.msra.mxu0 0
        %1439 = vmatprep.subr.bf16.mxu0 0
        %1440 = vmatpush1.bf16.xpose.msra.mxu0 0
        %1441 = vmatprep.subr.bf16.mxu0 0
        %1442 = vmatpush1.bf16.xpose.msra.mxu0 0
        %1443 = vmatprep.subr.bf16.mxu0 0
        %1444 = vmatpush1.bf16.xpose.msra.mxu0 0
        %1445 = vmatprep.mubr.bf16.mxu0 0
        %1446 = vmatmul.mubr.bf16.gmra.mrb[0].mxu0 %v1402
        %v1447 = vpop.f32.mrb[0].mxu0
        %v1448 = vadd.f32 0.0, %v1447
        %v1449 = vpop.f32.mrb[0].mxu0
        %v1450 = vpop.f32.mrb[0].mxu0
        %v1451 = vadd.f32 0.0, %v1450
        %v1452 = vpop.f32.mrb[0].mxu0
        %1453 = vmatprep.mubr.bf16.mxu0 0
        %1454 = vmatmul.mubr.bf16.gmra.mrb[0].mxu0 %v1405
        %v1455 = vpop.f32.mrb[0].mxu0
        %v1456 = vadd.f32 0.0, %v1455
        %v1457 = vpop.f32.mrb[0].mxu0
        %v1458 = vpop.f32.mrb[0].mxu0
        %v1459 = vadd.f32 0.0, %v1458
        %v1460 = vpop.f32.mrb[0].mxu0
        %1461 = vdwg.mxu0
        %1462 = vrot.lane.b32.xlu0 %v544, 96
        %v1463 = vpop.permute.xlu0 %1462
        %1464 = vrot.lane.b32.xlu0 %v546, 96
        %v1465 = vpop.permute.xlu0 %1464
        %v1467 = vsel %vm555, %v544, 0
        %v1470 = vsel %vm555, %v546, 0
        %v1473 = vsel %vm555, %v1463, 0
        %v1476 = vsel %vm555, %v1465, 0
        %1478 = vmatprep.subr.bf16.mxu0 0
        %1479 = vmatpush1.bf16.xpose.msra.mxu0 %v1473
        %1480 = vmatprep.subr.bf16.mxu0 0
        %1481 = vmatpush1.bf16.xpose.msra.mxu0 %v1476
        %1482 = vmatprep.subr.bf16.mxu0 0
        %1483 = vmatpush1.bf16.xpose.msra.mxu0 0
        %1484 = vmatprep.subr.bf16.mxu0 0
        %1485 = vmatpush1.bf16.xpose.msra.mxu0 0
        %1486 = vmatprep.subr.bf16.mxu0 0
        %1487 = vmatpush1.bf16.xpose.msra.mxu0 0
        %1488 = vmatprep.subr.bf16.mxu0 0
        %1489 = vmatpush1.bf16.xpose.msra.mxu0 0
        %1490 = vmatprep.subr.bf16.mxu0 0
        %1491 = vmatpush1.bf16.xpose.msra.mxu0 0
        %1492 = vmatprep.subr.bf16.mxu0 0
        %1493 = vmatpush1.bf16.xpose.msra.mxu0 0
        %1494 = vmatprep.subr.bf16.mxu0 0
        %1495 = vmatpush1.bf16.xpose.msra.mxu0 0
        %1496 = vmatprep.subr.bf16.mxu0 0
        %1497 = vmatpush1.bf16.xpose.msra.mxu0 0
        %1498 = vmatprep.subr.bf16.mxu0 0
        %1499 = vmatpush1.bf16.xpose.msra.mxu0 0
        %1500 = vmatprep.subr.bf16.mxu0 0
        %1501 = vmatpush1.bf16.xpose.msra.mxu0 0
        %1502 = vmatprep.subr.bf16.mxu0 0
        %1503 = vmatpush1.bf16.xpose.msra.mxu0 0
        %1504 = vmatprep.subr.bf16.mxu0 0
        %1505 = vmatpush1.bf16.xpose.msra.mxu0 0
        %1506 = vmatprep.subr.bf16.mxu0 0
        %1507 = vmatpush1.bf16.xpose.msra.mxu0 0
        %1508 = vmatprep.subr.bf16.mxu0 0
        %1509 = vmatpush1.bf16.xpose.msra.mxu0 0
        %1510 = vmatprep.mubr.bf16.mxu0 0
        %1511 = vmatmul.mubr.bf16.gmra.mrb[0].mxu0 %v1467
        %v1512 = vpop.f32.mrb[0].mxu0
        %v1513 = vadd.f32 0.0, %v1512
        %v1514 = vpop.f32.mrb[0].mxu0
        %v1515 = vpop.f32.mrb[0].mxu0
        %v1516 = vadd.f32 0.0, %v1515
        %v1517 = vpop.f32.mrb[0].mxu0
        %1518 = vmatprep.mubr.bf16.mxu0 0
        %1519 = vmatmul.mubr.bf16.gmra.mrb[0].mxu0 %v1470
        %v1520 = vpop.f32.mrb[0].mxu0
        %v1521 = vadd.f32 0.0, %v1520
        %v1522 = vpop.f32.mrb[0].mxu0
        %v1523 = vpop.f32.mrb[0].mxu0
        %v1524 = vadd.f32 0.0, %v1523
        %v1525 = vpop.f32.mrb[0].mxu0
        %1526 = vdwg.mxu0
        %1527 = vrot.lane.b32.xlu0 %v548, 96
        %v1528 = vpop.permute.xlu0 %1527
        %1529 = vrot.lane.b32.xlu0 %v550, 96
        %v1530 = vpop.permute.xlu0 %1529
        %v1532 = vsel %vm555, %v548, 0
        %v1535 = vsel %vm555, %v550, 0
        %v1538 = vsel %vm555, %v1528, 0
        %v1541 = vsel %vm555, %v1530, 0
        %1543 = vmatprep.subr.bf16.mxu0 0
        %1544 = vmatpush1.bf16.xpose.msra.mxu0 %v1538
        %1545 = vmatprep.subr.bf16.mxu0 0
        %1546 = vmatpush1.bf16.xpose.msra.mxu0 %v1541
        %1547 = vmatprep.subr.bf16.mxu0 0
        %1548 = vmatpush1.bf16.xpose.msra.mxu0 0
        %1549 = vmatprep.subr.bf16.mxu0 0
        %1550 = vmatpush1.bf16.xpose.msra.mxu0 0
        %1551 = vmatprep.subr.bf16.mxu0 0
        %1552 = vmatpush1.bf16.xpose.msra.mxu0 0
        %1553 = vmatprep.subr.bf16.mxu0 0
        %1554 = vmatpush1.bf16.xpose.msra.mxu0 0
        %1555 = vmatprep.subr.bf16.mxu0 0
        %1556 = vmatpush1.bf16.xpose.msra.mxu0 0
        %1557 = vmatprep.subr.bf16.mxu0 0
        %1558 = vmatpush1.bf16.xpose.msra.mxu0 0
        %1559 = vmatprep.subr.bf16.mxu0 0
        %1560 = vmatpush1.bf16.xpose.msra.mxu0 0
        %1561 = vmatprep.subr.bf16.mxu0 0
        %1562 = vmatpush1.bf16.xpose.msra.mxu0 0
        %1563 = vmatprep.subr.bf16.mxu0 0
        %1564 = vmatpush1.bf16.xpose.msra.mxu0 0
        %1565 = vmatprep.subr.bf16.mxu0 0
        %1566 = vmatpush1.bf16.xpose.msra.mxu0 0
        %1567 = vmatprep.subr.bf16.mxu0 0
        %1568 = vmatpush1.bf16.xpose.msra.mxu0 0
        %1569 = vmatprep.subr.bf16.mxu0 0
        %1570 = vmatpush1.bf16.xpose.msra.mxu0 0
        %1571 = vmatprep.subr.bf16.mxu0 0
        %1572 = vmatpush1.bf16.xpose.msra.mxu0 0
        %1573 = vmatprep.subr.bf16.mxu0 0
        %1574 = vmatpush1.bf16.xpose.msra.mxu0 0
        %1575 = vmatprep.mubr.bf16.mxu0 0
        %1576 = vmatmul.mubr.bf16.gmra.mrb[0].mxu0 %v1532
        %v1577 = vpop.f32.mrb[0].mxu0
        %v1578 = vadd.f32 0.0, %v1577
        %v1579 = vpop.f32.mrb[0].mxu0
        %v1580 = vpop.f32.mrb[0].mxu0
        %v1581 = vadd.f32 0.0, %v1580
        %v1582 = vpop.f32.mrb[0].mxu0
        %1583 = vmatprep.mubr.bf16.mxu0 0
        %1584 = vmatmul.mubr.bf16.gmra.mrb[0].mxu0 %v1535
        %v1585 = vpop.f32.mrb[0].mxu0
        %v1586 = vadd.f32 0.0, %v1585
        %v1587 = vpop.f32.mrb[0].mxu0
        %v1588 = vpop.f32.mrb[0].mxu0
        %v1589 = vadd.f32 0.0, %v1588
        %v1590 = vpop.f32.mrb[0].mxu0
        %1591 = vdwg.mxu0
        %v1592 = vld [vmem:[#allocation8] sm:$0xff]
        %v1593 = vld [vmem:[#allocation8 + $0x8] sm:$0xff]
        %v1594 = vld [vmem:[#allocation8 + $0x10] sm:$0xff]
        %v1595 = vld [vmem:[#allocation8 + $0x18] sm:$0xff]
        %v1596 = vld [vmem:[#allocation8 + $0x20] sm:$0xff]
        %v1597 = vld [vmem:[#allocation8 + $0x28] sm:$0xff]
        %v1598 = vld [vmem:[#allocation8 + $0x30] sm:$0xff]
        %v1599 = vld [vmem:[#allocation8 + $0x38] sm:$0xff]
        %v1600 = vld [vmem:[#allocation8 + $0x40] sm:$0xff]
        %v1601 = vld [vmem:[#allocation8 + $0x48] sm:$0xff]
        %v1602 = vld [vmem:[#allocation8 + $0x50] sm:$0xff]
        %v1603 = vld [vmem:[#allocation8 + $0x58] sm:$0xff]
        %v1604 = vld [vmem:[#allocation8 + $0x60] sm:$0xff]
        %v1605 = vld [vmem:[#allocation8 + $0x68] sm:$0xff]
        %v1606 = vld [vmem:[#allocation8 + $0x70] sm:$0xff]
        %v1607 = vld [vmem:[#allocation8 + $0x78] sm:$0xff]
        %v1608 = vld [vmem:[#allocation8 + $0x80] sm:$0xff]
        %v1609 = vld [vmem:[#allocation8 + $0x88] sm:$0xff]
        %v1610 = vld [vmem:[#allocation8 + $0x90] sm:$0xff]
        %v1611 = vld [vmem:[#allocation8 + $0x98] sm:$0xff]
        %v1612 = vld [vmem:[#allocation8 + $0xa0] sm:$0xff]
        %v1613 = vld [vmem:[#allocation8 + $0xa8] sm:$0xff]
        %v1614 = vld [vmem:[#allocation8 + $0xb0] sm:$0xff]
        %v1615 = vld [vmem:[#allocation8 + $0xb8] sm:$0xff]
        %v1616 = vld [vmem:[#allocation8 + $0xc0] sm:$0xff]
        %v1617 = vld [vmem:[#allocation8 + $0xc8] sm:$0xff]
        %v1618 = vld [vmem:[#allocation8 + $0xd0] sm:$0xff]
        %v1619 = vld [vmem:[#allocation8 + $0xd8] sm:$0xff]
        %v1620 = vld [vmem:[#allocation8 + $0xe0] sm:$0xff]
        %v1621 = vld [vmem:[#allocation8 + $0xe8] sm:$0xff]
        %v1622 = vld [vmem:[#allocation8 + $0xf0] sm:$0xff]
        %v1623 = vld [vmem:[#allocation8 + $0xf8] sm:$0xff]
        %v1624 = vld [vmem:[#allocation8 + $0x100] sm:$0xff]
        %v1625 = vld [vmem:[#allocation8 + $0x108] sm:$0xff]
        %v1626 = vld [vmem:[#allocation8 + $0x110] sm:$0xff]
        %v1627 = vld [vmem:[#allocation8 + $0x118] sm:$0xff]
        %v1628 = vld [vmem:[#allocation8 + $0x120] sm:$0xff]
        %v1629 = vld [vmem:[#allocation8 + $0x128] sm:$0xff]
        %v1630 = vld [vmem:[#allocation8 + $0x130] sm:$0xff]
        %v1631 = vld [vmem:[#allocation8 + $0x138] sm:$0xff]
        %v1632 = vld [vmem:[#allocation8 + $0x140] sm:$0xff]
        %v1633 = vld [vmem:[#allocation8 + $0x148] sm:$0xff]
        %v1634 = vld [vmem:[#allocation8 + $0x150] sm:$0xff]
        %v1635 = vld [vmem:[#allocation8 + $0x158] sm:$0xff]
        %v1636 = vld [vmem:[#allocation8 + $0x160] sm:$0xff]
        %v1637 = vld [vmem:[#allocation8 + $0x168] sm:$0xff]
        %v1638 = vld [vmem:[#allocation8 + $0x170] sm:$0xff]
        %v1639 = vld [vmem:[#allocation8 + $0x178] sm:$0xff]
        %v1640 = vld [vmem:[#allocation8 + $0x180] sm:$0xff]
        %v1641 = vld [vmem:[#allocation8 + $0x188] sm:$0xff]
        %v1642 = vld [vmem:[#allocation8 + $0x190] sm:$0xff]
        %v1643 = vld [vmem:[#allocation8 + $0x198] sm:$0xff]
        %v1644 = vld [vmem:[#allocation8 + $0x1a0] sm:$0xff]
        %v1645 = vld [vmem:[#allocation8 + $0x1a8] sm:$0xff]
        %v1646 = vld [vmem:[#allocation8 + $0x1b0] sm:$0xff]
        %v1647 = vld [vmem:[#allocation8 + $0x1b8] sm:$0xff]
        %v1648 = vld [vmem:[#allocation8 + $0x1c0] sm:$0xff]
        %v1649 = vld [vmem:[#allocation8 + $0x1c8] sm:$0xff]
        %v1650 = vld [vmem:[#allocation8 + $0x1d0] sm:$0xff]
        %v1651 = vld [vmem:[#allocation8 + $0x1d8] sm:$0xff]
        %v1652 = vld [vmem:[#allocation8 + $0x1e0] sm:$0xff]
        %v1653 = vld [vmem:[#allocation8 + $0x1e8] sm:$0xff]
        %v1654 = vld [vmem:[#allocation8 + $0x1f0] sm:$0xff]
        %v1655 = vld [vmem:[#allocation8 + $0x1f8] sm:$0xff]
        %v1656 = vadd.f32 %v603, %v1592
        %v1657 = vadd.f32 %v606, %v1593
        %v1658 = vadd.f32 %v611, %v1594
        %v1659 = vadd.f32 %v614, %v1595
        %v1660 = vadd.f32 %v668, %v1596
        %v1661 = vadd.f32 %v671, %v1597
        %v1662 = vadd.f32 %v676, %v1598
        %v1663 = vadd.f32 %v679, %v1599
        %v1664 = vadd.f32 %v733, %v1600
        %v1665 = vadd.f32 %v736, %v1601
        %v1666 = vadd.f32 %v741, %v1602
        %v1667 = vadd.f32 %v744, %v1603
        %v1668 = vadd.f32 %v798, %v1604
        %v1669 = vadd.f32 %v801, %v1605
        %v1670 = vadd.f32 %v806, %v1606
        %v1671 = vadd.f32 %v809, %v1607
        %v1672 = vadd.f32 %v863, %v1608
        %v1673 = vadd.f32 %v866, %v1609
        %v1674 = vadd.f32 %v871, %v1610
        %v1675 = vadd.f32 %v874, %v1611
        %v1676 = vadd.f32 %v928, %v1612
        %v1677 = vadd.f32 %v931, %v1613
        %v1678 = vadd.f32 %v936, %v1614
        %v1679 = vadd.f32 %v939, %v1615
        %v1680 = vadd.f32 %v993, %v1616
        %v1681 = vadd.f32 %v996, %v1617
        %v1682 = vadd.f32 %v1001, %v1618
        %v1683 = vadd.f32 %v1004, %v1619
        %v1684 = vadd.f32 %v1058, %v1620
        %v1685 = vadd.f32 %v1061, %v1621
        %v1686 = vadd.f32 %v1066, %v1622
        %v1687 = vadd.f32 %v1069, %v1623
        %v1688 = vadd.f32 %v1123, %v1624
        %v1689 = vadd.f32 %v1126, %v1625
        %v1690 = vadd.f32 %v1131, %v1626
        %v1691 = vadd.f32 %v1134, %v1627
        %v1692 = vadd.f32 %v1188, %v1628
        %v1693 = vadd.f32 %v1191, %v1629
        %v1694 = vadd.f32 %v1196, %v1630
        %v1695 = vadd.f32 %v1199, %v1631
        %v1696 = vadd.f32 %v1253, %v1632
        %v1697 = vadd.f32 %v1256, %v1633
        %v1698 = vadd.f32 %v1261, %v1634
        %v1699 = vadd.f32 %v1264, %v1635
        %v1700 = vadd.f32 %v1318, %v1636
        %v1701 = vadd.f32 %v1321, %v1637
        %v1702 = vadd.f32 %v1326, %v1638
        %v1703 = vadd.f32 %v1329, %v1639
        %v1704 = vadd.f32 %v1383, %v1640
        %v1705 = vadd.f32 %v1386, %v1641
        %v1706 = vadd.f32 %v1391, %v1642
        %v1707 = vadd.f32 %v1394, %v1643
        %v1708 = vadd.f32 %v1448, %v1644
        %v1709 = vadd.f32 %v1451, %v1645
        %v1710 = vadd.f32 %v1456, %v1646
        %v1711 = vadd.f32 %v1459, %v1647
        %v1712 = vadd.f32 %v1513, %v1648
        %v1713 = vadd.f32 %v1516, %v1649
        %v1714 = vadd.f32 %v1521, %v1650
        %v1715 = vadd.f32 %v1524, %v1651
        %v1716 = vadd.f32 %v1578, %v1652
        %v1717 = vadd.f32 %v1581, %v1653
        %v1718 = vadd.f32 %v1586, %v1654
        %v1719 = vadd.f32 %v1589, %v1655
        %v1720 = vsel %vm365, %v1656, -inf
        %1721 = vmax.xlane.f32.xlu0 %v1720
        %v1722 = vpop.xlane.xlu0 %1721
        %v1723 = vsel %vm365, %v1657, -inf
        %1724 = vmax.xlane.f32.xlu0 %v1723
        %v1725 = vpop.xlane.xlu0 %1724
        %v1726 = vsel %vm365, %v1658, -inf
        %1727 = vmax.xlane.f32.xlu0 %v1726
        %v1728 = vpop.xlane.xlu0 %1727
        %v1729 = vsel %vm365, %v1659, -inf
        %1730 = vmax.xlane.f32.xlu0 %v1729
        %v1731 = vpop.xlane.xlu0 %1730
        %v1732 = vsel %vm365, %v1660, -inf
        %1733 = vmax.xlane.f32.xlu0 %v1732
        %v1734 = vpop.xlane.xlu0 %1733
        %v1735 = vsel %vm365, %v1661, -inf
        %1736 = vmax.xlane.f32.xlu0 %v1735
        %v1737 = vpop.xlane.xlu0 %1736
        %v1738 = vsel %vm365, %v1662, -inf
        %1739 = vmax.xlane.f32.xlu0 %v1738
        %v1740 = vpop.xlane.xlu0 %1739
        %v1741 = vsel %vm365, %v1663, -inf
        %1742 = vmax.xlane.f32.xlu0 %v1741
        %v1743 = vpop.xlane.xlu0 %1742
        %v1744 = vsel %vm365, %v1664, -inf
        %1745 = vmax.xlane.f32.xlu0 %v1744
        %v1746 = vpop.xlane.xlu0 %1745
        %v1747 = vsel %vm365, %v1665, -inf
        %1748 = vmax.xlane.f32.xlu0 %v1747
        %v1749 = vpop.xlane.xlu0 %1748
        %v1750 = vsel %vm365, %v1666, -inf
        %1751 = vmax.xlane.f32.xlu0 %v1750
        %v1752 = vpop.xlane.xlu0 %1751
        %v1753 = vsel %vm365, %v1667, -inf
        %1754 = vmax.xlane.f32.xlu0 %v1753
        %v1755 = vpop.xlane.xlu0 %1754
        %v1756 = vsel %vm365, %v1668, -inf
        %1757 = vmax.xlane.f32.xlu0 %v1756
        %v1758 = vpop.xlane.xlu0 %1757
        %v1759 = vsel %vm365, %v1669, -inf
        %1760 = vmax.xlane.f32.xlu0 %v1759
        %v1761 = vpop.xlane.xlu0 %1760
        %v1762 = vsel %vm365, %v1670, -inf
        %1763 = vmax.xlane.f32.xlu0 %v1762
        %v1764 = vpop.xlane.xlu0 %1763
        %v1765 = vsel %vm365, %v1671, -inf
        %1766 = vmax.xlane.f32.xlu0 %v1765
        %v1767 = vpop.xlane.xlu0 %1766
        %v1768 = vsel %vm365, %v1672, -inf
        %1769 = vmax.xlane.f32.xlu0 %v1768
        %v1770 = vpop.xlane.xlu0 %1769
        %v1771 = vsel %vm365, %v1673, -inf
        %1772 = vmax.xlane.f32.xlu0 %v1771
        %v1773 = vpop.xlane.xlu0 %1772
        %v1774 = vsel %vm365, %v1674, -inf
        %1775 = vmax.xlane.f32.xlu0 %v1774
        %v1776 = vpop.xlane.xlu0 %1775
        %v1777 = vsel %vm365, %v1675, -inf
        %1778 = vmax.xlane.f32.xlu0 %v1777
        %v1779 = vpop.xlane.xlu0 %1778
        %v1780 = vsel %vm365, %v1676, -inf
        %1781 = vmax.xlane.f32.xlu0 %v1780
        %v1782 = vpop.xlane.xlu0 %1781
        %v1783 = vsel %vm365, %v1677, -inf
        %1784 = vmax.xlane.f32.xlu0 %v1783
        %v1785 = vpop.xlane.xlu0 %1784
        %v1786 = vsel %vm365, %v1678, -inf
        %1787 = vmax.xlane.f32.xlu0 %v1786
        %v1788 = vpop.xlane.xlu0 %1787
        %v1789 = vsel %vm365, %v1679, -inf
        %1790 = vmax.xlane.f32.xlu0 %v1789
        %v1791 = vpop.xlane.xlu0 %1790
        %v1792 = vsel %vm365, %v1680, -inf
        %1793 = vmax.xlane.f32.xlu0 %v1792
        %v1794 = vpop.xlane.xlu0 %1793
        %v1795 = vsel %vm365, %v1681, -inf
        %1796 = vmax.xlane.f32.xlu0 %v1795
        %v1797 = vpop.xlane.xlu0 %1796
        %v1798 = vsel %vm365, %v1682, -inf
        %1799 = vmax.xlane.f32.xlu0 %v1798
        %v1800 = vpop.xlane.xlu0 %1799
        %v1801 = vsel %vm365, %v1683, -inf
        %1802 = vmax.xlane.f32.xlu0 %v1801
        %v1803 = vpop.xlane.xlu0 %1802
        %v1804 = vsel %vm365, %v1684, -inf
        %1805 = vmax.xlane.f32.xlu0 %v1804
        %v1806 = vpop.xlane.xlu0 %1805
        %v1807 = vsel %vm365, %v1685, -inf
        %1808 = vmax.xlane.f32.xlu0 %v1807
        %v1809 = vpop.xlane.xlu0 %1808
        %v1810 = vsel %vm365, %v1686, -inf
        %1811 = vmax.xlane.f32.xlu0 %v1810
        %v1812 = vpop.xlane.xlu0 %1811
        %v1813 = vsel %vm365, %v1687, -inf
        %1814 = vmax.xlane.f32.xlu0 %v1813
        %v1815 = vpop.xlane.xlu0 %1814
        %v1816 = vsel %vm365, %v1688, -inf
        %1817 = vmax.xlane.f32.xlu0 %v1816
        %v1818 = vpop.xlane.xlu0 %1817
        %v1819 = vsel %vm365, %v1689, -inf
        %1820 = vmax.xlane.f32.xlu0 %v1819
        %v1821 = vpop.xlane.xlu0 %1820
        %v1822 = vsel %vm365, %v1690, -inf
        %1823 = vmax.xlane.f32.xlu0 %v1822
        %v1824 = vpop.xlane.xlu0 %1823
        %v1825 = vsel %vm365, %v1691, -inf
        %1826 = vmax.xlane.f32.xlu0 %v1825
        %v1827 = vpop.xlane.xlu0 %1826
        %v1828 = vsel %vm365, %v1692, -inf
        %1829 = vmax.xlane.f32.xlu0 %v1828
        %v1830 = vpop.xlane.xlu0 %1829
        %v1831 = vsel %vm365, %v1693, -inf
        %1832 = vmax.xlane.f32.xlu0 %v1831
        %v1833 = vpop.xlane.xlu0 %1832
        %v1834 = vsel %vm365, %v1694, -inf
        %1835 = vmax.xlane.f32.xlu0 %v1834
        %v1836 = vpop.xlane.xlu0 %1835
        %v1837 = vsel %vm365, %v1695, -inf
        %1838 = vmax.xlane.f32.xlu0 %v1837
        %v1839 = vpop.xlane.xlu0 %1838
        %v1840 = vsel %vm365, %v1696, -inf
        %1841 = vmax.xlane.f32.xlu0 %v1840
        %v1842 = vpop.xlane.xlu0 %1841
        %v1843 = vsel %vm365, %v1697, -inf
        %1844 = vmax.xlane.f32.xlu0 %v1843
        %v1845 = vpop.xlane.xlu0 %1844
        %v1846 = vsel %vm365, %v1698, -inf
        %1847 = vmax.xlane.f32.xlu0 %v1846
        %v1848 = vpop.xlane.xlu0 %1847
        %v1849 = vsel %vm365, %v1699, -inf
        %1850 = vmax.xlane.f32.xlu0 %v1849
        %v1851 = vpop.xlane.xlu0 %1850
        %v1852 = vsel %vm365, %v1700, -inf
        %1853 = vmax.xlane.f32.xlu0 %v1852
        %v1854 = vpop.xlane.xlu0 %1853
        %v1855 = vsel %vm365, %v1701, -inf
        %1856 = vmax.xlane.f32.xlu0 %v1855
        %v1857 = vpop.xlane.xlu0 %1856
        %v1858 = vsel %vm365, %v1702, -inf
        %1859 = vmax.xlane.f32.xlu0 %v1858
        %v1860 = vpop.xlane.xlu0 %1859
        %v1861 = vsel %vm365, %v1703, -inf
        %1862 = vmax.xlane.f32.xlu0 %v1861
        %v1863 = vpop.xlane.xlu0 %1862
        %v1864 = vsel %vm365, %v1704, -inf
        %1865 = vmax.xlane.f32.xlu0 %v1864
        %v1866 = vpop.xlane.xlu0 %1865
        %v1867 = vsel %vm365, %v1705, -inf
        %1868 = vmax.xlane.f32.xlu0 %v1867
        %v1869 = vpop.xlane.xlu0 %1868
        %v1870 = vsel %vm365, %v1706, -inf
        %1871 = vmax.xlane.f32.xlu0 %v1870
        %v1872 = vpop.xlane.xlu0 %1871
        %v1873 = vsel %vm365, %v1707, -inf
        %1874 = vmax.xlane.f32.xlu0 %v1873
        %v1875 = vpop.xlane.xlu0 %1874
        %v1876 = vsel %vm365, %v1708, -inf
        %1877 = vmax.xlane.f32.xlu0 %v1876
        %v1878 = vpop.xlane.xlu0 %1877
        %v1879 = vsel %vm365, %v1709, -inf
        %1880 = vmax.xlane.f32.xlu0 %v1879
        %v1881 = vpop.xlane.xlu0 %1880
        %v1882 = vsel %vm365, %v1710, -inf
        %1883 = vmax.xlane.f32.xlu0 %v1882
        %v1884 = vpop.xlane.xlu0 %1883
        %v1885 = vsel %vm365, %v1711, -inf
        %1886 = vmax.xlane.f32.xlu0 %v1885
        %v1887 = vpop.xlane.xlu0 %1886
        %v1888 = vsel %vm365, %v1712, -inf
        %1889 = vmax.xlane.f32.xlu0 %v1888
        %v1890 = vpop.xlane.xlu0 %1889
        %v1891 = vsel %vm365, %v1713, -inf
        %1892 = vmax.xlane.f32.xlu0 %v1891
        %v1893 = vpop.xlane.xlu0 %1892
        %v1894 = vsel %vm365, %v1714, -inf
        %1895 = vmax.xlane.f32.xlu0 %v1894
        %v1896 = vpop.xlane.xlu0 %1895
        %v1897 = vsel %vm365, %v1715, -inf
        %1898 = vmax.xlane.f32.xlu0 %v1897
        %v1899 = vpop.xlane.xlu0 %1898
        %v1900 = vsel %vm365, %v1716, -inf
        %1901 = vmax.xlane.f32.xlu0 %v1900
        %v1902 = vpop.xlane.xlu0 %1901
        %v1903 = vsel %vm365, %v1717, -inf
        %1904 = vmax.xlane.f32.xlu0 %v1903
        %v1905 = vpop.xlane.xlu0 %1904
        %v1906 = vsel %vm365, %v1718, -inf
        %1907 = vmax.xlane.f32.xlu0 %v1906
        %v1908 = vpop.xlane.xlu0 %1907
        %v1909 = vsel %vm365, %v1719, -inf
        %1910 = vmax.xlane.f32.xlu0 %v1909
        %v1911 = vpop.xlane.xlu0 %1910
        %v1912 = vsub.f32 %v1656, %v1722
        %v1913 = vsub.f32 %v1657, %v1725
        %v1914 = vsub.f32 %v1658, %v1728
        %v1915 = vsub.f32 %v1659, %v1731
        %v1916 = vsub.f32 %v1660, %v1734
        %v1917 = vsub.f32 %v1661, %v1737
        %v1918 = vsub.f32 %v1662, %v1740
        %v1919 = vsub.f32 %v1663, %v1743
        %v1920 = vsub.f32 %v1664, %v1746
        %v1921 = vsub.f32 %v1665, %v1749
        %v1922 = vsub.f32 %v1666, %v1752
        %v1923 = vsub.f32 %v1667, %v1755
        %v1924 = vsub.f32 %v1668, %v1758
        %v1925 = vsub.f32 %v1669, %v1761
        %v1926 = vsub.f32 %v1670, %v1764
        %v1927 = vsub.f32 %v1671, %v1767
        %v1928 = vsub.f32 %v1672, %v1770
        %v1929 = vsub.f32 %v1673, %v1773
        %v1930 = vsub.f32 %v1674, %v1776
        %v1931 = vsub.f32 %v1675, %v1779
        %v1932 = vsub.f32 %v1676, %v1782
        %v1933 = vsub.f32 %v1677, %v1785
        %v1934 = vsub.f32 %v1678, %v1788
        %v1935 = vsub.f32 %v1679, %v1791
        %v1936 = vsub.f32 %v1680, %v1794
        %v1937 = vsub.f32 %v1681, %v1797
        %v1938 = vsub.f32 %v1682, %v1800
        %v1939 = vsub.f32 %v1683, %v1803
        %v1940 = vsub.f32 %v1684, %v1806
        %v1941 = vsub.f32 %v1685, %v1809
        %v1942 = vsub.f32 %v1686, %v1812
        %v1943 = vsub.f32 %v1687, %v1815
        %v1944 = vsub.f32 %v1688, %v1818
        %v1945 = vsub.f32 %v1689, %v1821
        %v1946 = vsub.f32 %v1690, %v1824
        %v1947 = vsub.f32 %v1691, %v1827
        %v1948 = vsub.f32 %v1692, %v1830
        %v1949 = vsub.f32 %v1693, %v1833
        %v1950 = vsub.f32 %v1694, %v1836
        %v1951 = vsub.f32 %v1695, %v1839
        %v1952 = vsub.f32 %v1696, %v1842
        %v1953 = vsub.f32 %v1697, %v1845
        %v1954 = vsub.f32 %v1698, %v1848
        %v1955 = vsub.f32 %v1699, %v1851
        %v1956 = vsub.f32 %v1700, %v1854
        %v1957 = vsub.f32 %v1701, %v1857
        %v1958 = vsub.f32 %v1702, %v1860
        %v1959 = vsub.f32 %v1703, %v1863
        %v1960 = vsub.f32 %v1704, %v1866
        %v1961 = vsub.f32 %v1705, %v1869
        %v1962 = vsub.f32 %v1706, %v1872
        %v1963 = vsub.f32 %v1707, %v1875
        %v1964 = vsub.f32 %v1708, %v1878
        %v1965 = vsub.f32 %v1709, %v1881
        %v1966 = vsub.f32 %v1710, %v1884
        %v1967 = vsub.f32 %v1711, %v1887
        %v1968 = vsub.f32 %v1712, %v1890
        %v1969 = vsub.f32 %v1713, %v1893
        %v1970 = vsub.f32 %v1714, %v1896
        %v1971 = vsub.f32 %v1715, %v1899
        %v1972 = vsub.f32 %v1716, %v1902
        %v1973 = vsub.f32 %v1717, %v1905
        %v1974 = vsub.f32 %v1718, %v1908
        %v1975 = vsub.f32 %v1719, %v1911
        %v1976 = vmul.f32 %v1912, 1.442695
        %v1977 = vpow.pop %v1976
        %v1978 = vmul.f32 %v1913, 1.442695
        %v1979 = vpow.pop %v1978
        %v1980 = vmul.f32 %v1914, 1.442695
        %v1981 = vpow.pop %v1980
        %v1982 = vmul.f32 %v1915, 1.442695
        %v1983 = vpow.pop %v1982
        %v1984 = vmul.f32 %v1916, 1.442695
        %v1985 = vpow.pop %v1984
        %v1986 = vmul.f32 %v1917, 1.442695
        %v1987 = vpow.pop %v1986
        %v1988 = vmul.f32 %v1918, 1.442695
        %v1989 = vpow.pop %v1988
        %v1990 = vmul.f32 %v1919, 1.442695
        %v1991 = vpow.pop %v1990
        %v1992 = vmul.f32 %v1920, 1.442695
        %v1993 = vpow.pop %v1992
        %v1994 = vmul.f32 %v1921, 1.442695
        %v1995 = vpow.pop %v1994
        %v1996 = vmul.f32 %v1922, 1.442695
        %v1997 = vpow.pop %v1996
        %v1998 = vmul.f32 %v1923, 1.442695
        %v1999 = vpow.pop %v1998
        %v2000 = vmul.f32 %v1924, 1.442695
        %v2001 = vpow.pop %v2000
        %v2002 = vmul.f32 %v1925, 1.442695
        %v2003 = vpow.pop %v2002
        %v2004 = vmul.f32 %v1926, 1.442695
        %v2005 = vpow.pop %v2004
        %v2006 = vmul.f32 %v1927, 1.442695
        %v2007 = vpow.pop %v2006
        %v2008 = vmul.f32 %v1928, 1.442695
        %v2009 = vpow.pop %v2008
        %v2010 = vmul.f32 %v1929, 1.442695
        %v2011 = vpow.pop %v2010
        %v2012 = vmul.f32 %v1930, 1.442695
        %v2013 = vpow.pop %v2012
        %v2014 = vmul.f32 %v1931, 1.442695
        %v2015 = vpow.pop %v2014
        %v2016 = vmul.f32 %v1932, 1.442695
        %v2017 = vpow.pop %v2016
        %v2018 = vmul.f32 %v1933, 1.442695
        %v2019 = vpow.pop %v2018
        %v2020 = vmul.f32 %v1934, 1.442695
        %v2021 = vpow.pop %v2020
        %v2022 = vmul.f32 %v1935, 1.442695
        %v2023 = vpow.pop %v2022
        %v2024 = vmul.f32 %v1936, 1.442695
        %v2025 = vpow.pop %v2024
        %v2026 = vmul.f32 %v1937, 1.442695
        %v2027 = vpow.pop %v2026
        %v2028 = vmul.f32 %v1938, 1.442695
        %v2029 = vpow.pop %v2028
        %v2030 = vmul.f32 %v1939, 1.442695
        %v2031 = vpow.pop %v2030
        %v2032 = vmul.f32 %v1940, 1.442695
        %v2033 = vpow.pop %v2032
        %v2034 = vmul.f32 %v1941, 1.442695
        %v2035 = vpow.pop %v2034
        %v2036 = vmul.f32 %v1942, 1.442695
        %v2037 = vpow.pop %v2036
        %v2038 = vmul.f32 %v1943, 1.442695
        %v2039 = vpow.pop %v2038
        %v2040 = vmul.f32 %v1944, 1.442695
        %v2041 = vpow.pop %v2040
        %v2042 = vmul.f32 %v1945, 1.442695
        %v2043 = vpow.pop %v2042
        %v2044 = vmul.f32 %v1946, 1.442695
        %v2045 = vpow.pop %v2044
        %v2046 = vmul.f32 %v1947, 1.442695
        %v2047 = vpow.pop %v2046
        %v2048 = vmul.f32 %v1948, 1.442695
        %v2049 = vpow.pop %v2048
        %v2050 = vmul.f32 %v1949, 1.442695
        %v2051 = vpow.pop %v2050
        %v2052 = vmul.f32 %v1950, 1.442695
        %v2053 = vpow.pop %v2052
        %v2054 = vmul.f32 %v1951, 1.442695
        %v2055 = vpow.pop %v2054
        %v2056 = vmul.f32 %v1952, 1.442695
        %v2057 = vpow.pop %v2056
        %v2058 = vmul.f32 %v1953, 1.442695
        %v2059 = vpow.pop %v2058
        %v2060 = vmul.f32 %v1954, 1.442695
        %v2061 = vpow.pop %v2060
        %v2062 = vmul.f32 %v1955, 1.442695
        %v2063 = vpow.pop %v2062
        %v2064 = vmul.f32 %v1956, 1.442695
        %v2065 = vpow.pop %v2064
        %v2066 = vmul.f32 %v1957, 1.442695
        %v2067 = vpow.pop %v2066
        %v2068 = vmul.f32 %v1958, 1.442695
        %v2069 = vpow.pop %v2068
        %v2070 = vmul.f32 %v1959, 1.442695
        %v2071 = vpow.pop %v2070
        %v2072 = vmul.f32 %v1960, 1.442695
        %v2073 = vpow.pop %v2072
        %v2074 = vmul.f32 %v1961, 1.442695
        %v2075 = vpow.pop %v2074
        %v2076 = vmul.f32 %v1962, 1.442695
        %v2077 = vpow.pop %v2076
        %v2078 = vmul.f32 %v1963, 1.442695
        %v2079 = vpow.pop %v2078
        %v2080 = vmul.f32 %v1964, 1.442695
        %v2081 = vpow.pop %v2080
        %v2082 = vmul.f32 %v1965, 1.442695
        %v2083 = vpow.pop %v2082
        %v2084 = vmul.f32 %v1966, 1.442695
        %v2085 = vpow.pop %v2084
        %v2086 = vmul.f32 %v1967, 1.442695
        %v2087 = vpow.pop %v2086
        %v2088 = vmul.f32 %v1968, 1.442695
        %v2089 = vpow.pop %v2088
        %v2090 = vmul.f32 %v1969, 1.442695
        %v2091 = vpow.pop %v2090
        %v2092 = vmul.f32 %v1970, 1.442695
        %v2093 = vpow.pop %v2092
        %v2094 = vmul.f32 %v1971, 1.442695
        %v2095 = vpow.pop %v2094
        %v2096 = vmul.f32 %v1972, 1.442695
        %v2097 = vpow.pop %v2096
        %v2098 = vmul.f32 %v1973, 1.442695
        %v2099 = vpow.pop %v2098
        %v2100 = vmul.f32 %v1974, 1.442695
        %v2101 = vpow.pop %v2100
        %v2102 = vmul.f32 %v1975, 1.442695
        %v2103 = vpow.pop %v2102
        %v2104 = vsel %vm365, %v1977, 0.0
        %2105 = vadd.xlane.f32.xlu0 %v2104
        %v2106 = vpop.xlane.xlu0 %2105
        %v2107 = vsel %vm365, %v1979, 0.0
        %2108 = vadd.xlane.f32.xlu0 %v2107
        %v2109 = vpop.xlane.xlu0 %2108
        %v2110 = vsel %vm365, %v1981, 0.0
        %2111 = vadd.xlane.f32.xlu0 %v2110
        %v2112 = vpop.xlane.xlu0 %2111
        %v2113 = vsel %vm365, %v1983, 0.0
        %2114 = vadd.xlane.f32.xlu0 %v2113
        %v2115 = vpop.xlane.xlu0 %2114
        %v2116 = vsel %vm365, %v1985, 0.0
        %2117 = vadd.xlane.f32.xlu0 %v2116
        %v2118 = vpop.xlane.xlu0 %2117
        %v2119 = vsel %vm365, %v1987, 0.0
        %2120 = vadd.xlane.f32.xlu0 %v2119
        %v2121 = vpop.xlane.xlu0 %2120
        %v2122 = vsel %vm365, %v1989, 0.0
        %2123 = vadd.xlane.f32.xlu0 %v2122
        %v2124 = vpop.xlane.xlu0 %2123
        %v2125 = vsel %vm365, %v1991, 0.0
        %2126 = vadd.xlane.f32.xlu0 %v2125
        %v2127 = vpop.xlane.xlu0 %2126
        %v2128 = vsel %vm365, %v1993, 0.0
        %2129 = vadd.xlane.f32.xlu0 %v2128
        %v2130 = vpop.xlane.xlu0 %2129
        %v2131 = vsel %vm365, %v1995, 0.0
        %2132 = vadd.xlane.f32.xlu0 %v2131
        %v2133 = vpop.xlane.xlu0 %2132
        %v2134 = vsel %vm365, %v1997, 0.0
        %2135 = vadd.xlane.f32.xlu0 %v2134
        %v2136 = vpop.xlane.xlu0 %2135
        %v2137 = vsel %vm365, %v1999, 0.0
        %2138 = vadd.xlane.f32.xlu0 %v2137
        %v2139 = vpop.xlane.xlu0 %2138
        %v2140 = vsel %vm365, %v2001, 0.0
        %2141 = vadd.xlane.f32.xlu0 %v2140
        %v2142 = vpop.xlane.xlu0 %2141
        %v2143 = vsel %vm365, %v2003, 0.0
        %2144 = vadd.xlane.f32.xlu0 %v2143
        %v2145 = vpop.xlane.xlu0 %2144
        %v2146 = vsel %vm365, %v2005, 0.0
        %2147 = vadd.xlane.f32.xlu0 %v2146
        %v2148 = vpop.xlane.xlu0 %2147
        %v2149 = vsel %vm365, %v2007, 0.0
        %2150 = vadd.xlane.f32.xlu0 %v2149
        %v2151 = vpop.xlane.xlu0 %2150
        %v2152 = vsel %vm365, %v2009, 0.0
        %2153 = vadd.xlane.f32.xlu0 %v2152
        %v2154 = vpop.xlane.xlu0 %2153
        %v2155 = vsel %vm365, %v2011, 0.0
        %2156 = vadd.xlane.f32.xlu0 %v2155
        %v2157 = vpop.xlane.xlu0 %2156
        %v2158 = vsel %vm365, %v2013, 0.0
        %2159 = vadd.xlane.f32.xlu0 %v2158
        %v2160 = vpop.xlane.xlu0 %2159
        %v2161 = vsel %vm365, %v2015, 0.0
        %2162 = vadd.xlane.f32.xlu0 %v2161
        %v2163 = vpop.xlane.xlu0 %2162
        %v2164 = vsel %vm365, %v2017, 0.0
        %2165 = vadd.xlane.f32.xlu0 %v2164
        %v2166 = vpop.xlane.xlu0 %2165
        %v2167 = vsel %vm365, %v2019, 0.0
        %2168 = vadd.xlane.f32.xlu0 %v2167
        %v2169 = vpop.xlane.xlu0 %2168
        %v2170 = vsel %vm365, %v2021, 0.0
        %2171 = vadd.xlane.f32.xlu0 %v2170
        %v2172 = vpop.xlane.xlu0 %2171
        %v2173 = vsel %vm365, %v2023, 0.0
        %2174 = vadd.xlane.f32.xlu0 %v2173
        %v2175 = vpop.xlane.xlu0 %2174
        %v2176 = vsel %vm365, %v2025, 0.0
        %2177 = vadd.xlane.f32.xlu0 %v2176
        %v2178 = vpop.xlane.xlu0 %2177
        %v2179 = vsel %vm365, %v2027, 0.0
        %2180 = vadd.xlane.f32.xlu0 %v2179
        %v2181 = vpop.xlane.xlu0 %2180
        %v2182 = vsel %vm365, %v2029, 0.0
        %2183 = vadd.xlane.f32.xlu0 %v2182
        %v2184 = vpop.xlane.xlu0 %2183
        %v2185 = vsel %vm365, %v2031, 0.0
        %2186 = vadd.xlane.f32.xlu0 %v2185
        %v2187 = vpop.xlane.xlu0 %2186
        %v2188 = vsel %vm365, %v2033, 0.0
        %2189 = vadd.xlane.f32.xlu0 %v2188
        %v2190 = vpop.xlane.xlu0 %2189
        %v2191 = vsel %vm365, %v2035, 0.0
        %2192 = vadd.xlane.f32.xlu0 %v2191
        %v2193 = vpop.xlane.xlu0 %2192
        %v2194 = vsel %vm365, %v2037, 0.0
        %2195 = vadd.xlane.f32.xlu0 %v2194
        %v2196 = vpop.xlane.xlu0 %2195
        %v2197 = vsel %vm365, %v2039, 0.0
        %2198 = vadd.xlane.f32.xlu0 %v2197
        %v2199 = vpop.xlane.xlu0 %2198
        %v2200 = vsel %vm365, %v2041, 0.0
        %2201 = vadd.xlane.f32.xlu0 %v2200
        %v2202 = vpop.xlane.xlu0 %2201
        %v2203 = vsel %vm365, %v2043, 0.0
        %2204 = vadd.xlane.f32.xlu0 %v2203
        %v2205 = vpop.xlane.xlu0 %2204
        %v2206 = vsel %vm365, %v2045, 0.0
        %2207 = vadd.xlane.f32.xlu0 %v2206
        %v2208 = vpop.xlane.xlu0 %2207
        %v2209 = vsel %vm365, %v2047, 0.0
        %2210 = vadd.xlane.f32.xlu0 %v2209
        %v2211 = vpop.xlane.xlu0 %2210
        %v2212 = vsel %vm365, %v2049, 0.0
        %2213 = vadd.xlane.f32.xlu0 %v2212
        %v2214 = vpop.xlane.xlu0 %2213
        %v2215 = vsel %vm365, %v2051, 0.0
        %2216 = vadd.xlane.f32.xlu0 %v2215
        %v2217 = vpop.xlane.xlu0 %2216
        %v2218 = vsel %vm365, %v2053, 0.0
        %2219 = vadd.xlane.f32.xlu0 %v2218
        %v2220 = vpop.xlane.xlu0 %2219
        %v2221 = vsel %vm365, %v2055, 0.0
        %2222 = vadd.xlane.f32.xlu0 %v2221
        %v2223 = vpop.xlane.xlu0 %2222
        %v2224 = vsel %vm365, %v2057, 0.0
        %2225 = vadd.xlane.f32.xlu0 %v2224
        %v2226 = vpop.xlane.xlu0 %2225
        %v2227 = vsel %vm365, %v2059, 0.0
        %2228 = vadd.xlane.f32.xlu0 %v2227
        %v2229 = vpop.xlane.xlu0 %2228
        %v2230 = vsel %vm365, %v2061, 0.0
        %2231 = vadd.xlane.f32.xlu0 %v2230
        %v2232 = vpop.xlane.xlu0 %2231
        %v2233 = vsel %vm365, %v2063, 0.0
        %2234 = vadd.xlane.f32.xlu0 %v2233
        %v2235 = vpop.xlane.xlu0 %2234
        %v2236 = vsel %vm365, %v2065, 0.0
        %2237 = vadd.xlane.f32.xlu0 %v2236
        %v2238 = vpop.xlane.xlu0 %2237
        %v2239 = vsel %vm365, %v2067, 0.0
        %2240 = vadd.xlane.f32.xlu0 %v2239
        %v2241 = vpop.xlane.xlu0 %2240
        %v2242 = vsel %vm365, %v2069, 0.0
        %2243 = vadd.xlane.f32.xlu0 %v2242
        %v2244 = vpop.xlane.xlu0 %2243
        %v2245 = vsel %vm365, %v2071, 0.0
        %2246 = vadd.xlane.f32.xlu0 %v2245
        %v2247 = vpop.xlane.xlu0 %2246
        %v2248 = vsel %vm365, %v2073, 0.0
        %2249 = vadd.xlane.f32.xlu0 %v2248
        %v2250 = vpop.xlane.xlu0 %2249
        %v2251 = vsel %vm365, %v2075, 0.0
        %2252 = vadd.xlane.f32.xlu0 %v2251
        %v2253 = vpop.xlane.xlu0 %2252
        %v2254 = vsel %vm365, %v2077, 0.0
        %2255 = vadd.xlane.f32.xlu0 %v2254
        %v2256 = vpop.xlane.xlu0 %2255
        %v2257 = vsel %vm365, %v2079, 0.0
        %2258 = vadd.xlane.f32.xlu0 %v2257
        %v2259 = vpop.xlane.xlu0 %2258
        %v2260 = vsel %vm365, %v2081, 0.0
        %2261 = vadd.xlane.f32.xlu0 %v2260
        %v2262 = vpop.xlane.xlu0 %2261
        %v2263 = vsel %vm365, %v2083, 0.0
        %2264 = vadd.xlane.f32.xlu0 %v2263
        %v2265 = vpop.xlane.xlu0 %2264
        %v2266 = vsel %vm365, %v2085, 0.0
        %2267 = vadd.xlane.f32.xlu0 %v2266
        %v2268 = vpop.xlane.xlu0 %2267
        %v2269 = vsel %vm365, %v2087, 0.0
        %2270 = vadd.xlane.f32.xlu0 %v2269
        %v2271 = vpop.xlane.xlu0 %2270
        %v2272 = vsel %vm365, %v2089, 0.0
        %2273 = vadd.xlane.f32.xlu0 %v2272
        %v2274 = vpop.xlane.xlu0 %2273
        %v2275 = vsel %vm365, %v2091, 0.0
        %2276 = vadd.xlane.f32.xlu0 %v2275
        %v2277 = vpop.xlane.xlu0 %2276
        %v2278 = vsel %vm365, %v2093, 0.0
        %2279 = vadd.xlane.f32.xlu0 %v2278
        %v2280 = vpop.xlane.xlu0 %2279
        %v2281 = vsel %vm365, %v2095, 0.0
        %2282 = vadd.xlane.f32.xlu0 %v2281
        %v2283 = vpop.xlane.xlu0 %2282
        %v2284 = vsel %vm365, %v2097, 0.0
        %2285 = vadd.xlane.f32.xlu0 %v2284
        %v2286 = vpop.xlane.xlu0 %2285
        %v2287 = vsel %vm365, %v2099, 0.0
        %2288 = vadd.xlane.f32.xlu0 %v2287
        %v2289 = vpop.xlane.xlu0 %2288
        %v2290 = vsel %vm365, %v2101, 0.0
        %2291 = vadd.xlane.f32.xlu0 %v2290
        %v2292 = vpop.xlane.xlu0 %2291
        %v2293 = vsel %vm365, %v2103, 0.0
        %2294 = vadd.xlane.f32.xlu0 %v2293
        %v2295 = vpop.xlane.xlu0 %2294
        %v2296 = vrcp.pop %v2106
        %v2297 = vrcp.pop %v2109
        %v2298 = vrcp.pop %v2112
        %v2299 = vrcp.pop %v2115
        %v2300 = vrcp.pop %v2118
        %v2301 = vrcp.pop %v2121
        %v2302 = vrcp.pop %v2124
        %v2303 = vrcp.pop %v2127
        %v2304 = vrcp.pop %v2130
        %v2305 = vrcp.pop %v2133
        %v2306 = vrcp.pop %v2136
        %v2307 = vrcp.pop %v2139
        %v2308 = vrcp.pop %v2142
        %v2309 = vrcp.pop %v2145
        %v2310 = vrcp.pop %v2148
        %v2311 = vrcp.pop %v2151
        %v2312 = vrcp.pop %v2154
        %v2313 = vrcp.pop %v2157
        %v2314 = vrcp.pop %v2160
        %v2315 = vrcp.pop %v2163
        %v2316 = vrcp.pop %v2166
        %v2317 = vrcp.pop %v2169
        %v2318 = vrcp.pop %v2172
        %v2319 = vrcp.pop %v2175
        %v2320 = vrcp.pop %v2178
        %v2321 = vrcp.pop %v2181
        %v2322 = vrcp.pop %v2184
        %v2323 = vrcp.pop %v2187
        %v2324 = vrcp.pop %v2190
        %v2325 = vrcp.pop %v2193
        %v2326 = vrcp.pop %v2196
        %v2327 = vrcp.pop %v2199
        %v2328 = vrcp.pop %v2202
        %v2329 = vrcp.pop %v2205
        %v2330 = vrcp.pop %v2208
        %v2331 = vrcp.pop %v2211
        %v2332 = vrcp.pop %v2214
        %v2333 = vrcp.pop %v2217
        %v2334 = vrcp.pop %v2220
        %v2335 = vrcp.pop %v2223
        %v2336 = vrcp.pop %v2226
        %v2337 = vrcp.pop %v2229
        %v2338 = vrcp.pop %v2232
        %v2339 = vrcp.pop %v2235
        %v2340 = vrcp.pop %v2238
        %v2341 = vrcp.pop %v2241
        %v2342 = vrcp.pop %v2244
        %v2343 = vrcp.pop %v2247
        %v2344 = vrcp.pop %v2250
        %v2345 = vrcp.pop %v2253
        %v2346 = vrcp.pop %v2256
        %v2347 = vrcp.pop %v2259
        %v2348 = vrcp.pop %v2262
        %v2349 = vrcp.pop %v2265
        %v2350 = vrcp.pop %v2268
        %v2351 = vrcp.pop %v2271
        %v2352 = vrcp.pop %v2274
        %v2353 = vrcp.pop %v2277
        %v2354 = vrcp.pop %v2280
        %v2355 = vrcp.pop %v2283
        %v2356 = vrcp.pop %v2286
        %v2357 = vrcp.pop %v2289
        %v2358 = vrcp.pop %v2292
        %v2359 = vrcp.pop %v2295
        %v2360 = vmul.f32 %v1977, %v2296
        %v2361 = vmul.f32 %v1979, %v2297
        %v2362 = vmul.f32 %v1981, %v2298
        %v2363 = vmul.f32 %v1983, %v2299
        %v2364 = vmul.f32 %v1985, %v2300
        %v2365 = vmul.f32 %v1987, %v2301
        %v2366 = vmul.f32 %v1989, %v2302
        %v2367 = vmul.f32 %v1991, %v2303
        %v2368 = vmul.f32 %v1993, %v2304
        %v2369 = vmul.f32 %v1995, %v2305
        %v2370 = vmul.f32 %v1997, %v2306
        %v2371 = vmul.f32 %v1999, %v2307
        %v2372 = vmul.f32 %v2001, %v2308
        %v2373 = vmul.f32 %v2003, %v2309
        %v2374 = vmul.f32 %v2005, %v2310
        %v2375 = vmul.f32 %v2007, %v2311
        %v2376 = vmul.f32 %v2009, %v2312
        %v2377 = vmul.f32 %v2011, %v2313
        %v2378 = vmul.f32 %v2013, %v2314
        %v2379 = vmul.f32 %v2015, %v2315
        %v2380 = vmul.f32 %v2017, %v2316
        %v2381 = vmul.f32 %v2019, %v2317
        %v2382 = vmul.f32 %v2021, %v2318
        %v2383 = vmul.f32 %v2023, %v2319
        %v2384 = vmul.f32 %v2025, %v2320
        %v2385 = vmul.f32 %v2027, %v2321
        %v2386 = vmul.f32 %v2029, %v2322
        %v2387 = vmul.f32 %v2031, %v2323
        %v2388 = vmul.f32 %v2033, %v2324
        %v2389 = vmul.f32 %v2035, %v2325
        %v2390 = vmul.f32 %v2037, %v2326
        %v2391 = vmul.f32 %v2039, %v2327
        %v2392 = vmul.f32 %v2041, %v2328
        %v2393 = vmul.f32 %v2043, %v2329
        %v2394 = vmul.f32 %v2045, %v2330
        %v2395 = vmul.f32 %v2047, %v2331
        %v2396 = vmul.f32 %v2049, %v2332
        %v2397 = vmul.f32 %v2051, %v2333
        %v2398 = vmul.f32 %v2053, %v2334
        %v2399 = vmul.f32 %v2055, %v2335
        %v2400 = vmul.f32 %v2057, %v2336
        %v2401 = vmul.f32 %v2059, %v2337
        %v2402 = vmul.f32 %v2061, %v2338
        %v2403 = vmul.f32 %v2063, %v2339
        %v2404 = vmul.f32 %v2065, %v2340
        %v2405 = vmul.f32 %v2067, %v2341
        %v2406 = vmul.f32 %v2069, %v2342
        %v2407 = vmul.f32 %v2071, %v2343
        %v2408 = vmul.f32 %v2073, %v2344
        %v2409 = vmul.f32 %v2075, %v2345
        %v2410 = vmul.f32 %v2077, %v2346
        %v2411 = vmul.f32 %v2079, %v2347
        %v2412 = vmul.f32 %v2081, %v2348
        %v2413 = vmul.f32 %v2083, %v2349
        %v2414 = vmul.f32 %v2085, %v2350
        %v2415 = vmul.f32 %v2087, %v2351
        %v2416 = vmul.f32 %v2089, %v2352
        %v2417 = vmul.f32 %v2091, %v2353
        %v2418 = vmul.f32 %v2093, %v2354
        %v2419 = vmul.f32 %v2095, %v2355
        %v2420 = vmul.f32 %v2097, %v2356
        %v2421 = vmul.f32 %v2099, %v2357
        %v2422 = vmul.f32 %v2101, %v2358
        %v2423 = vmul.f32 %v2103, %v2359
        %v2424 = vpack.c.bf16 %v2361, %v2360
        %v2425 = vpack.c.bf16 %v2363, %v2362
        %v2426 = vpack.c.bf16 %v2365, %v2364
        %v2427 = vpack.c.bf16 %v2367, %v2366
        %v2428 = vpack.c.bf16 %v2369, %v2368
        %v2429 = vpack.c.bf16 %v2371, %v2370
        %v2430 = vpack.c.bf16 %v2373, %v2372
        %v2431 = vpack.c.bf16 %v2375, %v2374
        %v2432 = vpack.c.bf16 %v2377, %v2376
        %v2433 = vpack.c.bf16 %v2379, %v2378
        %v2434 = vpack.c.bf16 %v2381, %v2380
        %v2435 = vpack.c.bf16 %v2383, %v2382
        %v2436 = vpack.c.bf16 %v2385, %v2384
        %v2437 = vpack.c.bf16 %v2387, %v2386
        %v2438 = vpack.c.bf16 %v2389, %v2388
        %v2439 = vpack.c.bf16 %v2391, %v2390
        %v2440 = vpack.c.bf16 %v2393, %v2392
        %v2441 = vpack.c.bf16 %v2395, %v2394
        %v2442 = vpack.c.bf16 %v2397, %v2396
        %v2443 = vpack.c.bf16 %v2399, %v2398
        %v2444 = vpack.c.bf16 %v2401, %v2400
        %v2445 = vpack.c.bf16 %v2403, %v2402
        %v2446 = vpack.c.bf16 %v2405, %v2404
        %v2447 = vpack.c.bf16 %v2407, %v2406
        %v2448 = vpack.c.bf16 %v2409, %v2408
        %v2449 = vpack.c.bf16 %v2411, %v2410
        %v2450 = vpack.c.bf16 %v2413, %v2412
        %v2451 = vpack.c.bf16 %v2415, %v2414
        %v2452 = vpack.c.bf16 %v2417, %v2416
        %v2453 = vpack.c.bf16 %v2419, %v2418
        %v2454 = vpack.c.bf16 %v2421, %v2420
        %v2455 = vpack.c.bf16 %v2423, %v2422
        %2456 = vrot.lane.b32.xlu0 %v487, 64
        %v2457 = vpop.permute.xlu0 %2456
        %2458 = vrot.lane.b32.xlu0 %v488, 64
        %v2459 = vpop.permute.xlu0 %2458
        %v2463 = vsel %vm365, %v2424, 0
        %v2466 = vsel %vm365, %v2425, 0
        %2468 = vmatprep.subr.bf16.mxu0 0
        %2469 = vmatpush1.bf16.msra.mxu0 %v2457
        %2470 = vmatprep.subr.bf16.mxu0 0
        %2471 = vmatpush1.bf16.msra.mxu0 %v2459
        %2472 = vmatprep.subr.bf16.mxu0 0
        %2473 = vmatpush1.bf16.msra.mxu0 0
        %2474 = vmatprep.subr.bf16.mxu0 0
        %2475 = vmatpush1.bf16.msra.mxu0 0
        %2476 = vmatprep.subr.bf16.mxu0 0
        %2477 = vmatpush1.bf16.msra.mxu0 0
        %2478 = vmatprep.subr.bf16.mxu0 0
        %2479 = vmatpush1.bf16.msra.mxu0 0
        %2480 = vmatprep.subr.bf16.mxu0 0
        %2481 = vmatpush1.bf16.msra.mxu0 0
        %2482 = vmatprep.subr.bf16.mxu0 0
        %2483 = vmatpush1.bf16.msra.mxu0 0
        %2484 = vmatprep.subr.bf16.mxu0 0
        %2485 = vmatpush1.bf16.msra.mxu0 0
        %2486 = vmatprep.subr.bf16.mxu0 0
        %2487 = vmatpush1.bf16.msra.mxu0 0
        %2488 = vmatprep.subr.bf16.mxu0 0
        %2489 = vmatpush1.bf16.msra.mxu0 0
        %2490 = vmatprep.subr.bf16.mxu0 0
        %2491 = vmatpush1.bf16.msra.mxu0 0
        %2492 = vmatprep.subr.bf16.mxu0 0
        %2493 = vmatpush1.bf16.msra.mxu0 0
        %2494 = vmatprep.subr.bf16.mxu0 0
        %2495 = vmatpush1.bf16.msra.mxu0 0
        %2496 = vmatprep.subr.bf16.mxu0 0
        %2497 = vmatpush1.bf16.msra.mxu0 0
        %2498 = vmatprep.subr.bf16.mxu0 0
        %2499 = vmatpush1.bf16.msra.mxu0 0
        %2500 = vmatprep.mubr.bf16.mxu0 0
        %2501 = vmatmul.mubr.bf16.gmra.mrb[0].mxu0 %v2463
        %v2502 = vpop.f32.mrb[0].mxu0
        %v2503 = vadd.f32 0.0, %v2502
        %v2504 = vpop.f32.mrb[0].mxu0
        %v2505 = vpop.f32.mrb[0].mxu0
        %v2506 = vadd.f32 0.0, %v2505
        %v2507 = vpop.f32.mrb[0].mxu0
        %2508 = vmatprep.mubr.bf16.mxu0 0
        %2509 = vmatmul.mubr.bf16.gmra.mrb[0].mxu0 %v2466
        %v2510 = vpop.f32.mrb[0].mxu0
        %v2511 = vadd.f32 0.0, %v2510
        %v2512 = vpop.f32.mrb[0].mxu0
        %v2513 = vpop.f32.mrb[0].mxu0
        %v2514 = vadd.f32 0.0, %v2513
        %v2515 = vpop.f32.mrb[0].mxu0
        %2516 = vdwg.mxu0
        %2517 = vrot.lane.b32.xlu0 %v489, 64
        %v2518 = vpop.permute.xlu0 %2517
        %2519 = vrot.lane.b32.xlu0 %v490, 64
        %v2520 = vpop.permute.xlu0 %2519
        %v2524 = vsel %vm365, %v2426, 0
        %v2527 = vsel %vm365, %v2427, 0
        %2529 = vmatprep.subr.bf16.mxu0 0
        %2530 = vmatpush1.bf16.msra.mxu0 %v2518
        %2531 = vmatprep.subr.bf16.mxu0 0
        %2532 = vmatpush1.bf16.msra.mxu0 %v2520
        %2533 = vmatprep.subr.bf16.mxu0 0
        %2534 = vmatpush1.bf16.msra.mxu0 0
        %2535 = vmatprep.subr.bf16.mxu0 0
        %2536 = vmatpush1.bf16.msra.mxu0 0
        %2537 = vmatprep.subr.bf16.mxu0 0
        %2538 = vmatpush1.bf16.msra.mxu0 0
        %2539 = vmatprep.subr.bf16.mxu0 0
        %2540 = vmatpush1.bf16.msra.mxu0 0
        %2541 = vmatprep.subr.bf16.mxu0 0
        %2542 = vmatpush1.bf16.msra.mxu0 0
        %2543 = vmatprep.subr.bf16.mxu0 0
        %2544 = vmatpush1.bf16.msra.mxu0 0
        %2545 = vmatprep.subr.bf16.mxu0 0
        %2546 = vmatpush1.bf16.msra.mxu0 0
        %2547 = vmatprep.subr.bf16.mxu0 0
        %2548 = vmatpush1.bf16.msra.mxu0 0
        %2549 = vmatprep.subr.bf16.mxu0 0
        %2550 = vmatpush1.bf16.msra.mxu0 0
        %2551 = vmatprep.subr.bf16.mxu0 0
        %2552 = vmatpush1.bf16.msra.mxu0 0
        %2553 = vmatprep.subr.bf16.mxu0 0
        %2554 = vmatpush1.bf16.msra.mxu0 0
        %2555 = vmatprep.subr.bf16.mxu0 0
        %2556 = vmatpush1.bf16.msra.mxu0 0
        %2557 = vmatprep.subr.bf16.mxu0 0
        %2558 = vmatpush1.bf16.msra.mxu0 0
        %2559 = vmatprep.subr.bf16.mxu0 0
        %2560 = vmatpush1.bf16.msra.mxu0 0
        %2561 = vmatprep.mubr.bf16.mxu0 0
        %2562 = vmatmul.mubr.bf16.gmra.mrb[0].mxu0 %v2524
        %v2563 = vpop.f32.mrb[0].mxu0
        %v2564 = vadd.f32 0.0, %v2563
        %v2565 = vpop.f32.mrb[0].mxu0
        %v2566 = vpop.f32.mrb[0].mxu0
        %v2567 = vadd.f32 0.0, %v2566
        %v2568 = vpop.f32.mrb[0].mxu0
        %2569 = vmatprep.mubr.bf16.mxu0 0
        %2570 = vmatmul.mubr.bf16.gmra.mrb[0].mxu0 %v2527
        %v2571 = vpop.f32.mrb[0].mxu0
        %v2572 = vadd.f32 0.0, %v2571
        %v2573 = vpop.f32.mrb[0].mxu0
        %v2574 = vpop.f32.mrb[0].mxu0
        %v2575 = vadd.f32 0.0, %v2574
        %v2576 = vpop.f32.mrb[0].mxu0
        %2577 = vdwg.mxu0
        %2578 = vrot.lane.b32.xlu0 %v491, 64
        %v2579 = vpop.permute.xlu0 %2578
        %2580 = vrot.lane.b32.xlu0 %v492, 64
        %v2581 = vpop.permute.xlu0 %2580
        %v2585 = vsel %vm365, %v2428, 0
        %v2588 = vsel %vm365, %v2429, 0
        %2590 = vmatprep.subr.bf16.mxu0 0
        %2591 = vmatpush1.bf16.msra.mxu0 %v2579
        %2592 = vmatprep.subr.bf16.mxu0 0
        %2593 = vmatpush1.bf16.msra.mxu0 %v2581
        %2594 = vmatprep.subr.bf16.mxu0 0
        %2595 = vmatpush1.bf16.msra.mxu0 0
        %2596 = vmatprep.subr.bf16.mxu0 0
        %2597 = vmatpush1.bf16.msra.mxu0 0
        %2598 = vmatprep.subr.bf16.mxu0 0
        %2599 = vmatpush1.bf16.msra.mxu0 0
        %2600 = vmatprep.subr.bf16.mxu0 0
        %2601 = vmatpush1.bf16.msra.mxu0 0
        %2602 = vmatprep.subr.bf16.mxu0 0
        %2603 = vmatpush1.bf16.msra.mxu0 0
        %2604 = vmatprep.subr.bf16.mxu0 0
        %2605 = vmatpush1.bf16.msra.mxu0 0
        %2606 = vmatprep.subr.bf16.mxu0 0
        %2607 = vmatpush1.bf16.msra.mxu0 0
        %2608 = vmatprep.subr.bf16.mxu0 0
        %2609 = vmatpush1.bf16.msra.mxu0 0
        %2610 = vmatprep.subr.bf16.mxu0 0
        %2611 = vmatpush1.bf16.msra.mxu0 0
        %2612 = vmatprep.subr.bf16.mxu0 0
        %2613 = vmatpush1.bf16.msra.mxu0 0
        %2614 = vmatprep.subr.bf16.mxu0 0
        %2615 = vmatpush1.bf16.msra.mxu0 0
        %2616 = vmatprep.subr.bf16.mxu0 0
        %2617 = vmatpush1.bf16.msra.mxu0 0
        %2618 = vmatprep.subr.bf16.mxu0 0
        %2619 = vmatpush1.bf16.msra.mxu0 0
        %2620 = vmatprep.subr.bf16.mxu0 0
        %2621 = vmatpush1.bf16.msra.mxu0 0
        %2622 = vmatprep.mubr.bf16.mxu0 0
        %2623 = vmatmul.mubr.bf16.gmra.mrb[0].mxu0 %v2585
        %v2624 = vpop.f32.mrb[0].mxu0
        %v2625 = vadd.f32 0.0, %v2624
        %v2626 = vpop.f32.mrb[0].mxu0
        %v2627 = vpop.f32.mrb[0].mxu0
        %v2628 = vadd.f32 0.0, %v2627
        %v2629 = vpop.f32.mrb[0].mxu0
        %2630 = vmatprep.mubr.bf16.mxu0 0
        %2631 = vmatmul.mubr.bf16.gmra.mrb[0].mxu0 %v2588
        %v2632 = vpop.f32.mrb[0].mxu0
        %v2633 = vadd.f32 0.0, %v2632
        %v2634 = vpop.f32.mrb[0].mxu0
        %v2635 = vpop.f32.mrb[0].mxu0
        %v2636 = vadd.f32 0.0, %v2635
        %v2637 = vpop.f32.mrb[0].mxu0
        %2638 = vdwg.mxu0
        %2639 = vrot.lane.b32.xlu0 %v493, 64
        %v2640 = vpop.permute.xlu0 %2639
        %2641 = vrot.lane.b32.xlu0 %v494, 64
        %v2642 = vpop.permute.xlu0 %2641
        %v2646 = vsel %vm365, %v2430, 0
        %v2649 = vsel %vm365, %v2431, 0
        %2651 = vmatprep.subr.bf16.mxu0 0
        %2652 = vmatpush1.bf16.msra.mxu0 %v2640
        %2653 = vmatprep.subr.bf16.mxu0 0
        %2654 = vmatpush1.bf16.msra.mxu0 %v2642
        %2655 = vmatprep.subr.bf16.mxu0 0
        %2656 = vmatpush1.bf16.msra.mxu0 0
        %2657 = vmatprep.subr.bf16.mxu0 0
        %2658 = vmatpush1.bf16.msra.mxu0 0
        %2659 = vmatprep.subr.bf16.mxu0 0
        %2660 = vmatpush1.bf16.msra.mxu0 0
        %2661 = vmatprep.subr.bf16.mxu0 0
        %2662 = vmatpush1.bf16.msra.mxu0 0
        %2663 = vmatprep.subr.bf16.mxu0 0
        %2664 = vmatpush1.bf16.msra.mxu0 0
        %2665 = vmatprep.subr.bf16.mxu0 0
        %2666 = vmatpush1.bf16.msra.mxu0 0
        %2667 = vmatprep.subr.bf16.mxu0 0
        %2668 = vmatpush1.bf16.msra.mxu0 0
        %2669 = vmatprep.subr.bf16.mxu0 0
        %2670 = vmatpush1.bf16.msra.mxu0 0
        %2671 = vmatprep.subr.bf16.mxu0 0
        %2672 = vmatpush1.bf16.msra.mxu0 0
        %2673 = vmatprep.subr.bf16.mxu0 0
        %2674 = vmatpush1.bf16.msra.mxu0 0
        %2675 = vmatprep.subr.bf16.mxu0 0
        %2676 = vmatpush1.bf16.msra.mxu0 0
        %2677 = vmatprep.subr.bf16.mxu0 0
        %2678 = vmatpush1.bf16.msra.mxu0 0
        %2679 = vmatprep.subr.bf16.mxu0 0
        %2680 = vmatpush1.bf16.msra.mxu0 0
        %2681 = vmatprep.subr.bf16.mxu0 0
        %2682 = vmatpush1.bf16.msra.mxu0 0
        %2683 = vmatprep.mubr.bf16.mxu0 0
        %2684 = vmatmul.mubr.bf16.gmra.mrb[0].mxu0 %v2646
        %v2685 = vpop.f32.mrb[0].mxu0
        %v2686 = vadd.f32 0.0, %v2685
        %v2687 = vpop.f32.mrb[0].mxu0
        %v2688 = vpop.f32.mrb[0].mxu0
        %v2689 = vadd.f32 0.0, %v2688
        %v2690 = vpop.f32.mrb[0].mxu0
        %2691 = vmatprep.mubr.bf16.mxu0 0
        %2692 = vmatmul.mubr.bf16.gmra.mrb[0].mxu0 %v2649
        %v2693 = vpop.f32.mrb[0].mxu0
        %v2694 = vadd.f32 0.0, %v2693
        %v2695 = vpop.f32.mrb[0].mxu0
        %v2696 = vpop.f32.mrb[0].mxu0
        %v2697 = vadd.f32 0.0, %v2696
        %v2698 = vpop.f32.mrb[0].mxu0
        %2699 = vdwg.mxu0
        %2700 = vrot.lane.b32.xlu0 %v504, 64
        %v2701 = vpop.permute.xlu0 %2700
        %2702 = vrot.lane.b32.xlu0 %v506, 64
        %v2703 = vpop.permute.xlu0 %2702
        %v2707 = vsel %vm365, %v2432, 0
        %v2710 = vsel %vm365, %v2433, 0
        %2712 = vmatprep.subr.bf16.mxu0 0
        %2713 = vmatpush1.bf16.msra.mxu0 %v2701
        %2714 = vmatprep.subr.bf16.mxu0 0
        %2715 = vmatpush1.bf16.msra.mxu0 %v2703
        %2716 = vmatprep.subr.bf16.mxu0 0
        %2717 = vmatpush1.bf16.msra.mxu0 0
        %2718 = vmatprep.subr.bf16.mxu0 0
        %2719 = vmatpush1.bf16.msra.mxu0 0
        %2720 = vmatprep.subr.bf16.mxu0 0
        %2721 = vmatpush1.bf16.msra.mxu0 0
        %2722 = vmatprep.subr.bf16.mxu0 0
        %2723 = vmatpush1.bf16.msra.mxu0 0
        %2724 = vmatprep.subr.bf16.mxu0 0
        %2725 = vmatpush1.bf16.msra.mxu0 0
        %2726 = vmatprep.subr.bf16.mxu0 0
        %2727 = vmatpush1.bf16.msra.mxu0 0
        %2728 = vmatprep.subr.bf16.mxu0 0
        %2729 = vmatpush1.bf16.msra.mxu0 0
        %2730 = vmatprep.subr.bf16.mxu0 0
        %2731 = vmatpush1.bf16.msra.mxu0 0
        %2732 = vmatprep.subr.bf16.mxu0 0
        %2733 = vmatpush1.bf16.msra.mxu0 0
        %2734 = vmatprep.subr.bf16.mxu0 0
        %2735 = vmatpush1.bf16.msra.mxu0 0
        %2736 = vmatprep.subr.bf16.mxu0 0
        %2737 = vmatpush1.bf16.msra.mxu0 0
        %2738 = vmatprep.subr.bf16.mxu0 0
        %2739 = vmatpush1.bf16.msra.mxu0 0
        %2740 = vmatprep.subr.bf16.mxu0 0
        %2741 = vmatpush1.bf16.msra.mxu0 0
        %2742 = vmatprep.subr.bf16.mxu0 0
        %2743 = vmatpush1.bf16.msra.mxu0 0
        %2744 = vmatprep.mubr.bf16.mxu0 0
        %2745 = vmatmul.mubr.bf16.gmra.mrb[0].mxu0 %v2707
        %v2746 = vpop.f32.mrb[0].mxu0
        %v2747 = vadd.f32 0.0, %v2746
        %v2748 = vpop.f32.mrb[0].mxu0
        %v2749 = vpop.f32.mrb[0].mxu0
        %v2750 = vadd.f32 0.0, %v2749
        %v2751 = vpop.f32.mrb[0].mxu0
        %2752 = vmatprep.mubr.bf16.mxu0 0
        %2753 = vmatmul.mubr.bf16.gmra.mrb[0].mxu0 %v2710
        %v2754 = vpop.f32.mrb[0].mxu0
        %v2755 = vadd.f32 0.0, %v2754
        %v2756 = vpop.f32.mrb[0].mxu0
        %v2757 = vpop.f32.mrb[0].mxu0
        %v2758 = vadd.f32 0.0, %v2757
        %v2759 = vpop.f32.mrb[0].mxu0
        %2760 = vdwg.mxu0
        %2761 = vrot.lane.b32.xlu0 %v508, 64
        %v2762 = vpop.permute.xlu0 %2761
        %2763 = vrot.lane.b32.xlu0 %v510, 64
        %v2764 = vpop.permute.xlu0 %2763
        %v2768 = vsel %vm365, %v2434, 0
        %v2771 = vsel %vm365, %v2435, 0
        %2773 = vmatprep.subr.bf16.mxu0 0
        %2774 = vmatpush1.bf16.msra.mxu0 %v2762
        %2775 = vmatprep.subr.bf16.mxu0 0
        %2776 = vmatpush1.bf16.msra.mxu0 %v2764
        %2777 = vmatprep.subr.bf16.mxu0 0
        %2778 = vmatpush1.bf16.msra.mxu0 0
        %2779 = vmatprep.subr.bf16.mxu0 0
        %2780 = vmatpush1.bf16.msra.mxu0 0
        %2781 = vmatprep.subr.bf16.mxu0 0
        %2782 = vmatpush1.bf16.msra.mxu0 0
        %2783 = vmatprep.subr.bf16.mxu0 0
        %2784 = vmatpush1.bf16.msra.mxu0 0
        %2785 = vmatprep.subr.bf16.mxu0 0
        %2786 = vmatpush1.bf16.msra.mxu0 0
        %2787 = vmatprep.subr.bf16.mxu0 0
        %2788 = vmatpush1.bf16.msra.mxu0 0
        %2789 = vmatprep.subr.bf16.mxu0 0
        %2790 = vmatpush1.bf16.msra.mxu0 0
        %2791 = vmatprep.subr.bf16.mxu0 0
        %2792 = vmatpush1.bf16.msra.mxu0 0
        %2793 = vmatprep.subr.bf16.mxu0 0
        %2794 = vmatpush1.bf16.msra.mxu0 0
        %2795 = vmatprep.subr.bf16.mxu0 0
        %2796 = vmatpush1.bf16.msra.mxu0 0
        %2797 = vmatprep.subr.bf16.mxu0 0
        %2798 = vmatpush1.bf16.msra.mxu0 0
        %2799 = vmatprep.subr.bf16.mxu0 0
        %2800 = vmatpush1.bf16.msra.mxu0 0
        %2801 = vmatprep.subr.bf16.mxu0 0
        %2802 = vmatpush1.bf16.msra.mxu0 0
        %2803 = vmatprep.subr.bf16.mxu0 0
        %2804 = vmatpush1.bf16.msra.mxu0 0
        %2805 = vmatprep.mubr.bf16.mxu0 0
        %2806 = vmatmul.mubr.bf16.gmra.mrb[0].mxu0 %v2768
        %v2807 = vpop.f32.mrb[0].mxu0
        %v2808 = vadd.f32 0.0, %v2807
        %v2809 = vpop.f32.mrb[0].mxu0
        %v2810 = vpop.f32.mrb[0].mxu0
        %v2811 = vadd.f32 0.0, %v2810
        %v2812 = vpop.f32.mrb[0].mxu0
        %2813 = vmatprep.mubr.bf16.mxu0 0
        %2814 = vmatmul.mubr.bf16.gmra.mrb[0].mxu0 %v2771
        %v2815 = vpop.f32.mrb[0].mxu0
        %v2816 = vadd.f32 0.0, %v2815
        %v2817 = vpop.f32.mrb[0].mxu0
        %v2818 = vpop.f32.mrb[0].mxu0
        %v2819 = vadd.f32 0.0, %v2818
        %v2820 = vpop.f32.mrb[0].mxu0
        %2821 = vdwg.mxu0
        %2822 = vrot.lane.b32.xlu0 %v512, 64
        %v2823 = vpop.permute.xlu0 %2822
        %2824 = vrot.lane.b32.xlu0 %v514, 64
        %v2825 = vpop.permute.xlu0 %2824
        %v2829 = vsel %vm365, %v2436, 0
        %v2832 = vsel %vm365, %v2437, 0
        %2834 = vmatprep.subr.bf16.mxu0 0
        %2835 = vmatpush1.bf16.msra.mxu0 %v2823
        %2836 = vmatprep.subr.bf16.mxu0 0
        %2837 = vmatpush1.bf16.msra.mxu0 %v2825
        %2838 = vmatprep.subr.bf16.mxu0 0
        %2839 = vmatpush1.bf16.msra.mxu0 0
        %2840 = vmatprep.subr.bf16.mxu0 0
        %2841 = vmatpush1.bf16.msra.mxu0 0
        %2842 = vmatprep.subr.bf16.mxu0 0
        %2843 = vmatpush1.bf16.msra.mxu0 0
        %2844 = vmatprep.subr.bf16.mxu0 0
        %2845 = vmatpush1.bf16.msra.mxu0 0
        %2846 = vmatprep.subr.bf16.mxu0 0
        %2847 = vmatpush1.bf16.msra.mxu0 0
        %2848 = vmatprep.subr.bf16.mxu0 0
        %2849 = vmatpush1.bf16.msra.mxu0 0
        %2850 = vmatprep.subr.bf16.mxu0 0
        %2851 = vmatpush1.bf16.msra.mxu0 0
        %2852 = vmatprep.subr.bf16.mxu0 0
        %2853 = vmatpush1.bf16.msra.mxu0 0
        %2854 = vmatprep.subr.bf16.mxu0 0
        %2855 = vmatpush1.bf16.msra.mxu0 0
        %2856 = vmatprep.subr.bf16.mxu0 0
        %2857 = vmatpush1.bf16.msra.mxu0 0
        %2858 = vmatprep.subr.bf16.mxu0 0
        %2859 = vmatpush1.bf16.msra.mxu0 0
        %2860 = vmatprep.subr.bf16.mxu0 0
        %2861 = vmatpush1.bf16.msra.mxu0 0
        %2862 = vmatprep.subr.bf16.mxu0 0
        %2863 = vmatpush1.bf16.msra.mxu0 0
        %2864 = vmatprep.subr.bf16.mxu0 0
        %2865 = vmatpush1.bf16.msra.mxu0 0
        %2866 = vmatprep.mubr.bf16.mxu0 0
        %2867 = vmatmul.mubr.bf16.gmra.mrb[0].mxu0 %v2829
        %v2868 = vpop.f32.mrb[0].mxu0
        %v2869 = vadd.f32 0.0, %v2868
        %v2870 = vpop.f32.mrb[0].mxu0
        %v2871 = vpop.f32.mrb[0].mxu0
        %v2872 = vadd.f32 0.0, %v2871
        %v2873 = vpop.f32.mrb[0].mxu0
        %2874 = vmatprep.mubr.bf16.mxu0 0
        %2875 = vmatmul.mubr.bf16.gmra.mrb[0].mxu0 %v2832
        %v2876 = vpop.f32.mrb[0].mxu0
        %v2877 = vadd.f32 0.0, %v2876
        %v2878 = vpop.f32.mrb[0].mxu0
        %v2879 = vpop.f32.mrb[0].mxu0
        %v2880 = vadd.f32 0.0, %v2879
        %v2881 = vpop.f32.mrb[0].mxu0
        %2882 = vdwg.mxu0
        %2883 = vrot.lane.b32.xlu0 %v516, 64
        %v2884 = vpop.permute.xlu0 %2883
        %2885 = vrot.lane.b32.xlu0 %v518, 64
        %v2886 = vpop.permute.xlu0 %2885
        %v2890 = vsel %vm365, %v2438, 0
        %v2893 = vsel %vm365, %v2439, 0
        %2895 = vmatprep.subr.bf16.mxu0 0
        %2896 = vmatpush1.bf16.msra.mxu0 %v2884
        %2897 = vmatprep.subr.bf16.mxu0 0
        %2898 = vmatpush1.bf16.msra.mxu0 %v2886
        %2899 = vmatprep.subr.bf16.mxu0 0
        %2900 = vmatpush1.bf16.msra.mxu0 0
        %2901 = vmatprep.subr.bf16.mxu0 0
        %2902 = vmatpush1.bf16.msra.mxu0 0
        %2903 = vmatprep.subr.bf16.mxu0 0
        %2904 = vmatpush1.bf16.msra.mxu0 0
        %2905 = vmatprep.subr.bf16.mxu0 0
        %2906 = vmatpush1.bf16.msra.mxu0 0
        %2907 = vmatprep.subr.bf16.mxu0 0
        %2908 = vmatpush1.bf16.msra.mxu0 0
        %2909 = vmatprep.subr.bf16.mxu0 0
        %2910 = vmatpush1.bf16.msra.mxu0 0
        %2911 = vmatprep.subr.bf16.mxu0 0
        %2912 = vmatpush1.bf16.msra.mxu0 0
        %2913 = vmatprep.subr.bf16.mxu0 0
        %2914 = vmatpush1.bf16.msra.mxu0 0
        %2915 = vmatprep.subr.bf16.mxu0 0
        %2916 = vmatpush1.bf16.msra.mxu0 0
        %2917 = vmatprep.subr.bf16.mxu0 0
        %2918 = vmatpush1.bf16.msra.mxu0 0
        %2919 = vmatprep.subr.bf16.mxu0 0
        %2920 = vmatpush1.bf16.msra.mxu0 0
        %2921 = vmatprep.subr.bf16.mxu0 0
        %2922 = vmatpush1.bf16.msra.mxu0 0
        %2923 = vmatprep.subr.bf16.mxu0 0
        %2924 = vmatpush1.bf16.msra.mxu0 0
        %2925 = vmatprep.subr.bf16.mxu0 0
        %2926 = vmatpush1.bf16.msra.mxu0 0
        %2927 = vmatprep.mubr.bf16.mxu0 0
        %2928 = vmatmul.mubr.bf16.gmra.mrb[0].mxu0 %v2890
        %v2929 = vpop.f32.mrb[0].mxu0
        %v2930 = vadd.f32 0.0, %v2929
        %v2931 = vpop.f32.mrb[0].mxu0
        %v2932 = vpop.f32.mrb[0].mxu0
        %v2933 = vadd.f32 0.0, %v2932
        %v2934 = vpop.f32.mrb[0].mxu0
        %2935 = vmatprep.mubr.bf16.mxu0 0
        %2936 = vmatmul.mubr.bf16.gmra.mrb[0].mxu0 %v2893
        %v2937 = vpop.f32.mrb[0].mxu0
        %v2938 = vadd.f32 0.0, %v2937
        %v2939 = vpop.f32.mrb[0].mxu0
        %v2940 = vpop.f32.mrb[0].mxu0
        %v2941 = vadd.f32 0.0, %v2940
        %v2942 = vpop.f32.mrb[0].mxu0
        %2943 = vdwg.mxu0
        %2944 = vrot.lane.b32.xlu0 %v520, 64
        %v2945 = vpop.permute.xlu0 %2944
        %2946 = vrot.lane.b32.xlu0 %v522, 64
        %v2947 = vpop.permute.xlu0 %2946
        %v2951 = vsel %vm365, %v2440, 0
        %v2954 = vsel %vm365, %v2441, 0
        %2956 = vmatprep.subr.bf16.mxu0 0
        %2957 = vmatpush1.bf16.msra.mxu0 %v2945
        %2958 = vmatprep.subr.bf16.mxu0 0
        %2959 = vmatpush1.bf16.msra.mxu0 %v2947
        %2960 = vmatprep.subr.bf16.mxu0 0
        %2961 = vmatpush1.bf16.msra.mxu0 0
        %2962 = vmatprep.subr.bf16.mxu0 0
        %2963 = vmatpush1.bf16.msra.mxu0 0
        %2964 = vmatprep.subr.bf16.mxu0 0
        %2965 = vmatpush1.bf16.msra.mxu0 0
        %2966 = vmatprep.subr.bf16.mxu0 0
        %2967 = vmatpush1.bf16.msra.mxu0 0
        %2968 = vmatprep.subr.bf16.mxu0 0
        %2969 = vmatpush1.bf16.msra.mxu0 0
        %2970 = vmatprep.subr.bf16.mxu0 0
        %2971 = vmatpush1.bf16.msra.mxu0 0
        %2972 = vmatprep.subr.bf16.mxu0 0
        %2973 = vmatpush1.bf16.msra.mxu0 0
        %2974 = vmatprep.subr.bf16.mxu0 0
        %2975 = vmatpush1.bf16.msra.mxu0 0
        %2976 = vmatprep.subr.bf16.mxu0 0
        %2977 = vmatpush1.bf16.msra.mxu0 0
        %2978 = vmatprep.subr.bf16.mxu0 0
        %2979 = vmatpush1.bf16.msra.mxu0 0
        %2980 = vmatprep.subr.bf16.mxu0 0
        %2981 = vmatpush1.bf16.msra.mxu0 0
        %2982 = vmatprep.subr.bf16.mxu0 0
        %2983 = vmatpush1.bf16.msra.mxu0 0
        %2984 = vmatprep.subr.bf16.mxu0 0
        %2985 = vmatpush1.bf16.msra.mxu0 0
        %2986 = vmatprep.subr.bf16.mxu0 0
        %2987 = vmatpush1.bf16.msra.mxu0 0
        %2988 = vmatprep.mubr.bf16.mxu0 0
        %2989 = vmatmul.mubr.bf16.gmra.mrb[0].mxu0 %v2951
        %v2990 = vpop.f32.mrb[0].mxu0
        %v2991 = vadd.f32 0.0, %v2990
        %v2992 = vpop.f32.mrb[0].mxu0
        %v2993 = vpop.f32.mrb[0].mxu0
        %v2994 = vadd.f32 0.0, %v2993
        %v2995 = vpop.f32.mrb[0].mxu0
        %2996 = vmatprep.mubr.bf16.mxu0 0
        %2997 = vmatmul.mubr.bf16.gmra.mrb[0].mxu0 %v2954
        %v2998 = vpop.f32.mrb[0].mxu0
        %v2999 = vadd.f32 0.0, %v2998
        %v3000 = vpop.f32.mrb[0].mxu0
        %v3001 = vpop.f32.mrb[0].mxu0
        %v3002 = vadd.f32 0.0, %v3001
        %v3003 = vpop.f32.mrb[0].mxu0
        %3004 = vdwg.mxu0
        %3005 = vrot.lane.b32.xlu0 %v524, 64
        %v3006 = vpop.permute.xlu0 %3005
        %3007 = vrot.lane.b32.xlu0 %v526, 64
        %v3008 = vpop.permute.xlu0 %3007
        %v3012 = vsel %vm365, %v2442, 0
        %v3015 = vsel %vm365, %v2443, 0
        %3017 = vmatprep.subr.bf16.mxu0 0
        %3018 = vmatpush1.bf16.msra.mxu0 %v3006
        %3019 = vmatprep.subr.bf16.mxu0 0
        %3020 = vmatpush1.bf16.msra.mxu0 %v3008
        %3021 = vmatprep.subr.bf16.mxu0 0
        %3022 = vmatpush1.bf16.msra.mxu0 0
        %3023 = vmatprep.subr.bf16.mxu0 0
        %3024 = vmatpush1.bf16.msra.mxu0 0
        %3025 = vmatprep.subr.bf16.mxu0 0
        %3026 = vmatpush1.bf16.msra.mxu0 0
        %3027 = vmatprep.subr.bf16.mxu0 0
        %3028 = vmatpush1.bf16.msra.mxu0 0
        %3029 = vmatprep.subr.bf16.mxu0 0
        %3030 = vmatpush1.bf16.msra.mxu0 0
        %3031 = vmatprep.subr.bf16.mxu0 0
        %3032 = vmatpush1.bf16.msra.mxu0 0
        %3033 = vmatprep.subr.bf16.mxu0 0
        %3034 = vmatpush1.bf16.msra.mxu0 0
        %3035 = vmatprep.subr.bf16.mxu0 0
        %3036 = vmatpush1.bf16.msra.mxu0 0
        %3037 = vmatprep.subr.bf16.mxu0 0
        %3038 = vmatpush1.bf16.msra.mxu0 0
        %3039 = vmatprep.subr.bf16.mxu0 0
        %3040 = vmatpush1.bf16.msra.mxu0 0
        %3041 = vmatprep.subr.bf16.mxu0 0
        %3042 = vmatpush1.bf16.msra.mxu0 0
        %3043 = vmatprep.subr.bf16.mxu0 0
        %3044 = vmatpush1.bf16.msra.mxu0 0
        %3045 = vmatprep.subr.bf16.mxu0 0
        %3046 = vmatpush1.bf16.msra.mxu0 0
        %3047 = vmatprep.subr.bf16.mxu0 0
        %3048 = vmatpush1.bf16.msra.mxu0 0
        %3049 = vmatprep.mubr.bf16.mxu0 0
        %3050 = vmatmul.mubr.bf16.gmra.mrb[0].mxu0 %v3012
        %v3051 = vpop.f32.mrb[0].mxu0
        %v3052 = vadd.f32 0.0, %v3051
        %v3053 = vpop.f32.mrb[0].mxu0
        %v3054 = vpop.f32.mrb[0].mxu0
        %v3055 = vadd.f32 0.0, %v3054
        %v3056 = vpop.f32.mrb[0].mxu0
        %3057 = vmatprep.mubr.bf16.mxu0 0
        %3058 = vmatmul.mubr.bf16.gmra.mrb[0].mxu0 %v3015
        %v3059 = vpop.f32.mrb[0].mxu0
        %v3060 = vadd.f32 0.0, %v3059
        %v3061 = vpop.f32.mrb[0].mxu0
        %v3062 = vpop.f32.mrb[0].mxu0
        %v3063 = vadd.f32 0.0, %v3062
        %v3064 = vpop.f32.mrb[0].mxu0
        %3065 = vdwg.mxu0
        %3066 = vrot.lane.b32.xlu0 %v528, 64
        %v3067 = vpop.permute.xlu0 %3066
        %3068 = vrot.lane.b32.xlu0 %v530, 64
        %v3069 = vpop.permute.xlu0 %3068
        %v3073 = vsel %vm365, %v2444, 0
        %v3076 = vsel %vm365, %v2445, 0
        %3078 = vmatprep.subr.bf16.mxu0 0
        %3079 = vmatpush1.bf16.msra.mxu0 %v3067
        %3080 = vmatprep.subr.bf16.mxu0 0
        %3081 = vmatpush1.bf16.msra.mxu0 %v3069
        %3082 = vmatprep.subr.bf16.mxu0 0
        %3083 = vmatpush1.bf16.msra.mxu0 0
        %3084 = vmatprep.subr.bf16.mxu0 0
        %3085 = vmatpush1.bf16.msra.mxu0 0
        %3086 = vmatprep.subr.bf16.mxu0 0
        %3087 = vmatpush1.bf16.msra.mxu0 0
        %3088 = vmatprep.subr.bf16.mxu0 0
        %3089 = vmatpush1.bf16.msra.mxu0 0
        %3090 = vmatprep.subr.bf16.mxu0 0
        %3091 = vmatpush1.bf16.msra.mxu0 0
        %3092 = vmatprep.subr.bf16.mxu0 0
        %3093 = vmatpush1.bf16.msra.mxu0 0
        %3094 = vmatprep.subr.bf16.mxu0 0
        %3095 = vmatpush1.bf16.msra.mxu0 0
        %3096 = vmatprep.subr.bf16.mxu0 0
        %3097 = vmatpush1.bf16.msra.mxu0 0
        %3098 = vmatprep.subr.bf16.mxu0 0
        %3099 = vmatpush1.bf16.msra.mxu0 0
        %3100 = vmatprep.subr.bf16.mxu0 0
        %3101 = vmatpush1.bf16.msra.mxu0 0
        %3102 = vmatprep.subr.bf16.mxu0 0
        %3103 = vmatpush1.bf16.msra.mxu0 0
        %3104 = vmatprep.subr.bf16.mxu0 0
        %3105 = vmatpush1.bf16.msra.mxu0 0
        %3106 = vmatprep.subr.bf16.mxu0 0
        %3107 = vmatpush1.bf16.msra.mxu0 0
        %3108 = vmatprep.subr.bf16.mxu0 0
        %3109 = vmatpush1.bf16.msra.mxu0 0
        %3110 = vmatprep.mubr.bf16.mxu0 0
        %3111 = vmatmul.mubr.bf16.gmra.mrb[0].mxu0 %v3073
        %v3112 = vpop.f32.mrb[0].mxu0
        %v3113 = vadd.f32 0.0, %v3112
        %v3114 = vpop.f32.mrb[0].mxu0
        %v3115 = vpop.f32.mrb[0].mxu0
        %v3116 = vadd.f32 0.0, %v3115
        %v3117 = vpop.f32.mrb[0].mxu0
        %3118 = vmatprep.mubr.bf16.mxu0 0
        %3119 = vmatmul.mubr.bf16.gmra.mrb[0].mxu0 %v3076
        %v3120 = vpop.f32.mrb[0].mxu0
        %v3121 = vadd.f32 0.0, %v3120
        %v3122 = vpop.f32.mrb[0].mxu0
        %v3123 = vpop.f32.mrb[0].mxu0
        %v3124 = vadd.f32 0.0, %v3123
        %v3125 = vpop.f32.mrb[0].mxu0
        %3126 = vdwg.mxu0
        %3127 = vrot.lane.b32.xlu0 %v532, 64
        %v3128 = vpop.permute.xlu0 %3127
        %3129 = vrot.lane.b32.xlu0 %v534, 64
        %v3130 = vpop.permute.xlu0 %3129
        %v3134 = vsel %vm365, %v2446, 0
        %v3137 = vsel %vm365, %v2447, 0
        %3139 = vmatprep.subr.bf16.mxu0 0
        %3140 = vmatpush1.bf16.msra.mxu0 %v3128
        %3141 = vmatprep.subr.bf16.mxu0 0
        %3142 = vmatpush1.bf16.msra.mxu0 %v3130
        %3143 = vmatprep.subr.bf16.mxu0 0
        %3144 = vmatpush1.bf16.msra.mxu0 0
        %3145 = vmatprep.subr.bf16.mxu0 0
        %3146 = vmatpush1.bf16.msra.mxu0 0
        %3147 = vmatprep.subr.bf16.mxu0 0
        %3148 = vmatpush1.bf16.msra.mxu0 0
        %3149 = vmatprep.subr.bf16.mxu0 0
        %3150 = vmatpush1.bf16.msra.mxu0 0
        %3151 = vmatprep.subr.bf16.mxu0 0
        %3152 = vmatpush1.bf16.msra.mxu0 0
        %3153 = vmatprep.subr.bf16.mxu0 0
        %3154 = vmatpush1.bf16.msra.mxu0 0
        %3155 = vmatprep.subr.bf16.mxu0 0
        %3156 = vmatpush1.bf16.msra.mxu0 0
        %3157 = vmatprep.subr.bf16.mxu0 0
        %3158 = vmatpush1.bf16.msra.mxu0 0
        %3159 = vmatprep.subr.bf16.mxu0 0
        %3160 = vmatpush1.bf16.msra.mxu0 0
        %3161 = vmatprep.subr.bf16.mxu0 0
        %3162 = vmatpush1.bf16.msra.mxu0 0
        %3163 = vmatprep.subr.bf16.mxu0 0
        %3164 = vmatpush1.bf16.msra.mxu0 0
        %3165 = vmatprep.subr.bf16.mxu0 0
        %3166 = vmatpush1.bf16.msra.mxu0 0
        %3167 = vmatprep.subr.bf16.mxu0 0
        %3168 = vmatpush1.bf16.msra.mxu0 0
        %3169 = vmatprep.subr.bf16.mxu0 0
        %3170 = vmatpush1.bf16.msra.mxu0 0
        %3171 = vmatprep.mubr.bf16.mxu0 0
        %3172 = vmatmul.mubr.bf16.gmra.mrb[0].mxu0 %v3134
        %v3173 = vpop.f32.mrb[0].mxu0
        %v3174 = vadd.f32 0.0, %v3173
        %v3175 = vpop.f32.mrb[0].mxu0
        %v3176 = vpop.f32.mrb[0].mxu0
        %v3177 = vadd.f32 0.0, %v3176
        %v3178 = vpop.f32.mrb[0].mxu0
        %3179 = vmatprep.mubr.bf16.mxu0 0
        %3180 = vmatmul.mubr.bf16.gmra.mrb[0].mxu0 %v3137
        %v3181 = vpop.f32.mrb[0].mxu0
        %v3182 = vadd.f32 0.0, %v3181
        %v3183 = vpop.f32.mrb[0].mxu0
        %v3184 = vpop.f32.mrb[0].mxu0
        %v3185 = vadd.f32 0.0, %v3184
        %v3186 = vpop.f32.mrb[0].mxu0
        %3187 = vdwg.mxu0
        %3188 = vrot.lane.b32.xlu0 %v536, 64
        %v3189 = vpop.permute.xlu0 %3188
        %3190 = vrot.lane.b32.xlu0 %v538, 64
        %v3191 = vpop.permute.xlu0 %3190
        %v3195 = vsel %vm365, %v2448, 0
        %v3198 = vsel %vm365, %v2449, 0
        %3200 = vmatprep.subr.bf16.mxu0 0
        %3201 = vmatpush1.bf16.msra.mxu0 %v3189
        %3202 = vmatprep.subr.bf16.mxu0 0
        %3203 = vmatpush1.bf16.msra.mxu0 %v3191
        %3204 = vmatprep.subr.bf16.mxu0 0
        %3205 = vmatpush1.bf16.msra.mxu0 0
        %3206 = vmatprep.subr.bf16.mxu0 0
        %3207 = vmatpush1.bf16.msra.mxu0 0
        %3208 = vmatprep.subr.bf16.mxu0 0
        %3209 = vmatpush1.bf16.msra.mxu0 0
        %3210 = vmatprep.subr.bf16.mxu0 0
        %3211 = vmatpush1.bf16.msra.mxu0 0
        %3212 = vmatprep.subr.bf16.mxu0 0
        %3213 = vmatpush1.bf16.msra.mxu0 0
        %3214 = vmatprep.subr.bf16.mxu0 0
        %3215 = vmatpush1.bf16.msra.mxu0 0
        %3216 = vmatprep.subr.bf16.mxu0 0
        %3217 = vmatpush1.bf16.msra.mxu0 0
        %3218 = vmatprep.subr.bf16.mxu0 0
        %3219 = vmatpush1.bf16.msra.mxu0 0
        %3220 = vmatprep.subr.bf16.mxu0 0
        %3221 = vmatpush1.bf16.msra.mxu0 0
        %3222 = vmatprep.subr.bf16.mxu0 0
        %3223 = vmatpush1.bf16.msra.mxu0 0
        %3224 = vmatprep.subr.bf16.mxu0 0
        %3225 = vmatpush1.bf16.msra.mxu0 0
        %3226 = vmatprep.subr.bf16.mxu0 0
        %3227 = vmatpush1.bf16.msra.mxu0 0
        %3228 = vmatprep.subr.bf16.mxu0 0
        %3229 = vmatpush1.bf16.msra.mxu0 0
        %3230 = vmatprep.subr.bf16.mxu0 0
        %3231 = vmatpush1.bf16.msra.mxu0 0
        %3232 = vmatprep.mubr.bf16.mxu0 0
        %3233 = vmatmul.mubr.bf16.gmra.mrb[0].mxu0 %v3195
        %v3234 = vpop.f32.mrb[0].mxu0
        %v3235 = vadd.f32 0.0, %v3234
        %v3236 = vpop.f32.mrb[0].mxu0
        %v3237 = vpop.f32.mrb[0].mxu0
        %v3238 = vadd.f32 0.0, %v3237
        %v3239 = vpop.f32.mrb[0].mxu0
        %3240 = vmatprep.mubr.bf16.mxu0 0
        %3241 = vmatmul.mubr.bf16.gmra.mrb[0].mxu0 %v3198
        %v3242 = vpop.f32.mrb[0].mxu0
        %v3243 = vadd.f32 0.0, %v3242
        %v3244 = vpop.f32.mrb[0].mxu0
        %v3245 = vpop.f32.mrb[0].mxu0
        %v3246 = vadd.f32 0.0, %v3245
        %v3247 = vpop.f32.mrb[0].mxu0
        %3248 = vdwg.mxu0
        %3249 = vrot.lane.b32.xlu0 %v540, 64
        %v3250 = vpop.permute.xlu0 %3249
        %3251 = vrot.lane.b32.xlu0 %v542, 64
        %v3252 = vpop.permute.xlu0 %3251
        %v3256 = vsel %vm365, %v2450, 0
        %v3259 = vsel %vm365, %v2451, 0
        %3261 = vmatprep.subr.bf16.mxu0 0
        %3262 = vmatpush1.bf16.msra.mxu0 %v3250
        %3263 = vmatprep.subr.bf16.mxu0 0
        %3264 = vmatpush1.bf16.msra.mxu0 %v3252
        %3265 = vmatprep.subr.bf16.mxu0 0
        %3266 = vmatpush1.bf16.msra.mxu0 0
        %3267 = vmatprep.subr.bf16.mxu0 0
        %3268 = vmatpush1.bf16.msra.mxu0 0
        %3269 = vmatprep.subr.bf16.mxu0 0
        %3270 = vmatpush1.bf16.msra.mxu0 0
        %3271 = vmatprep.subr.bf16.mxu0 0
        %3272 = vmatpush1.bf16.msra.mxu0 0
        %3273 = vmatprep.subr.bf16.mxu0 0
        %3274 = vmatpush1.bf16.msra.mxu0 0
        %3275 = vmatprep.subr.bf16.mxu0 0
        %3276 = vmatpush1.bf16.msra.mxu0 0
        %3277 = vmatprep.subr.bf16.mxu0 0
        %3278 = vmatpush1.bf16.msra.mxu0 0
        %3279 = vmatprep.subr.bf16.mxu0 0
        %3280 = vmatpush1.bf16.msra.mxu0 0
        %3281 = vmatprep.subr.bf16.mxu0 0
        %3282 = vmatpush1.bf16.msra.mxu0 0
        %3283 = vmatprep.subr.bf16.mxu0 0
        %3284 = vmatpush1.bf16.msra.mxu0 0
        %3285 = vmatprep.subr.bf16.mxu0 0
        %3286 = vmatpush1.bf16.msra.mxu0 0
        %3287 = vmatprep.subr.bf16.mxu0 0
        %3288 = vmatpush1.bf16.msra.mxu0 0
        %3289 = vmatprep.subr.bf16.mxu0 0
        %3290 = vmatpush1.bf16.msra.mxu0 0
        %3291 = vmatprep.subr.bf16.mxu0 0
        %3292 = vmatpush1.bf16.msra.mxu0 0
        %3293 = vmatprep.mubr.bf16.mxu0 0
        %3294 = vmatmul.mubr.bf16.gmra.mrb[0].mxu0 %v3256
        %v3295 = vpop.f32.mrb[0].mxu0
        %v3296 = vadd.f32 0.0, %v3295
        %v3297 = vpop.f32.mrb[0].mxu0
        %v3298 = vpop.f32.mrb[0].mxu0
        %v3299 = vadd.f32 0.0, %v3298
        %v3300 = vpop.f32.mrb[0].mxu0
        %3301 = vmatprep.mubr.bf16.mxu0 0
        %3302 = vmatmul.mubr.bf16.gmra.mrb[0].mxu0 %v3259
        %v3303 = vpop.f32.mrb[0].mxu0
        %v3304 = vadd.f32 0.0, %v3303
        %v3305 = vpop.f32.mrb[0].mxu0
        %v3306 = vpop.f32.mrb[0].mxu0
        %v3307 = vadd.f32 0.0, %v3306
        %v3308 = vpop.f32.mrb[0].mxu0
        %3309 = vdwg.mxu0
        %3310 = vrot.lane.b32.xlu0 %v544, 64
        %v3311 = vpop.permute.xlu0 %3310
        %3312 = vrot.lane.b32.xlu0 %v546, 64
        %v3313 = vpop.permute.xlu0 %3312
        %v3317 = vsel %vm365, %v2452, 0
        %v3320 = vsel %vm365, %v2453, 0
        %3322 = vmatprep.subr.bf16.mxu0 0
        %3323 = vmatpush1.bf16.msra.mxu0 %v3311
        %3324 = vmatprep.subr.bf16.mxu0 0
        %3325 = vmatpush1.bf16.msra.mxu0 %v3313
        %3326 = vmatprep.subr.bf16.mxu0 0
        %3327 = vmatpush1.bf16.msra.mxu0 0
        %3328 = vmatprep.subr.bf16.mxu0 0
        %3329 = vmatpush1.bf16.msra.mxu0 0
        %3330 = vmatprep.subr.bf16.mxu0 0
        %3331 = vmatpush1.bf16.msra.mxu0 0
        %3332 = vmatprep.subr.bf16.mxu0 0
        %3333 = vmatpush1.bf16.msra.mxu0 0
        %3334 = vmatprep.subr.bf16.mxu0 0
        %3335 = vmatpush1.bf16.msra.mxu0 0
        %3336 = vmatprep.subr.bf16.mxu0 0
        %3337 = vmatpush1.bf16.msra.mxu0 0
        %3338 = vmatprep.subr.bf16.mxu0 0
        %3339 = vmatpush1.bf16.msra.mxu0 0
        %3340 = vmatprep.subr.bf16.mxu0 0
        %3341 = vmatpush1.bf16.msra.mxu0 0
        %3342 = vmatprep.subr.bf16.mxu0 0
        %3343 = vmatpush1.bf16.msra.mxu0 0
        %3344 = vmatprep.subr.bf16.mxu0 0
        %3345 = vmatpush1.bf16.msra.mxu0 0
        %3346 = vmatprep.subr.bf16.mxu0 0
        %3347 = vmatpush1.bf16.msra.mxu0 0
        %3348 = vmatprep.subr.bf16.mxu0 0
        %3349 = vmatpush1.bf16.msra.mxu0 0
        %3350 = vmatprep.subr.bf16.mxu0 0
        %3351 = vmatpush1.bf16.msra.mxu0 0
        %3352 = vmatprep.subr.bf16.mxu0 0
        %3353 = vmatpush1.bf16.msra.mxu0 0
        %3354 = vmatprep.mubr.bf16.mxu0 0
        %3355 = vmatmul.mubr.bf16.gmra.mrb[0].mxu0 %v3317
        %v3356 = vpop.f32.mrb[0].mxu0
        %v3357 = vadd.f32 0.0, %v3356
        %v3358 = vpop.f32.mrb[0].mxu0
        %v3359 = vpop.f32.mrb[0].mxu0
        %v3360 = vadd.f32 0.0, %v3359
        %v3361 = vpop.f32.mrb[0].mxu0
        %3362 = vmatprep.mubr.bf16.mxu0 0
        %3363 = vmatmul.mubr.bf16.gmra.mrb[0].mxu0 %v3320
        %v3364 = vpop.f32.mrb[0].mxu0
        %v3365 = vadd.f32 0.0, %v3364
        %v3366 = vpop.f32.mrb[0].mxu0
        %v3367 = vpop.f32.mrb[0].mxu0
        %v3368 = vadd.f32 0.0, %v3367
        %v3369 = vpop.f32.mrb[0].mxu0
        %3370 = vdwg.mxu0
        %3371 = vrot.lane.b32.xlu0 %v548, 64
        %v3372 = vpop.permute.xlu0 %3371
        %3373 = vrot.lane.b32.xlu0 %v550, 64
        %v3374 = vpop.permute.xlu0 %3373
        %v3378 = vsel %vm365, %v2454, 0
        %v3381 = vsel %vm365, %v2455, 0
        %3383 = vmatprep.subr.bf16.mxu0 0
        %3384 = vmatpush1.bf16.msra.mxu0 %v3372
        %3385 = vmatprep.subr.bf16.mxu0 0
        %3386 = vmatpush1.bf16.msra.mxu0 %v3374
        %3387 = vmatprep.subr.bf16.mxu0 0
        %3388 = vmatpush1.bf16.msra.mxu0 0
        %3389 = vmatprep.subr.bf16.mxu0 0
        %3390 = vmatpush1.bf16.msra.mxu0 0
        %3391 = vmatprep.subr.bf16.mxu0 0
        %3392 = vmatpush1.bf16.msra.mxu0 0
        %3393 = vmatprep.subr.bf16.mxu0 0
        %3394 = vmatpush1.bf16.msra.mxu0 0
        %3395 = vmatprep.subr.bf16.mxu0 0
        %3396 = vmatpush1.bf16.msra.mxu0 0
        %3397 = vmatprep.subr.bf16.mxu0 0
        %3398 = vmatpush1.bf16.msra.mxu0 0
        %3399 = vmatprep.subr.bf16.mxu0 0
        %3400 = vmatpush1.bf16.msra.mxu0 0
        %3401 = vmatprep.subr.bf16.mxu0 0
        %3402 = vmatpush1.bf16.msra.mxu0 0
        %3403 = vmatprep.subr.bf16.mxu0 0
        %3404 = vmatpush1.bf16.msra.mxu0 0
        %3405 = vmatprep.subr.bf16.mxu0 0
        %3406 = vmatpush1.bf16.msra.mxu0 0
        %3407 = vmatprep.subr.bf16.mxu0 0
        %3408 = vmatpush1.bf16.msra.mxu0 0
        %3409 = vmatprep.subr.bf16.mxu0 0
        %3410 = vmatpush1.bf16.msra.mxu0 0
        %3411 = vmatprep.subr.bf16.mxu0 0
        %3412 = vmatpush1.bf16.msra.mxu0 0
        %3413 = vmatprep.subr.bf16.mxu0 0
        %3414 = vmatpush1.bf16.msra.mxu0 0
        %3415 = vmatprep.mubr.bf16.mxu0 0
        %3416 = vmatmul.mubr.bf16.gmra.mrb[0].mxu0 %v3378
        %v3417 = vpop.f32.mrb[0].mxu0
        %v3418 = vadd.f32 0.0, %v3417
        %v3419 = vpop.f32.mrb[0].mxu0
        %v3420 = vpop.f32.mrb[0].mxu0
        %v3421 = vadd.f32 0.0, %v3420
        %v3422 = vpop.f32.mrb[0].mxu0
        %3423 = vmatprep.mubr.bf16.mxu0 0
        %3424 = vmatmul.mubr.bf16.gmra.mrb[0].mxu0 %v3381
        %v3425 = vpop.f32.mrb[0].mxu0
        %v3426 = vadd.f32 0.0, %v3425
        %v3427 = vpop.f32.mrb[0].mxu0
        %v3428 = vpop.f32.mrb[0].mxu0
        %v3429 = vadd.f32 0.0, %v3428
        %v3430 = vpop.f32.mrb[0].mxu0
        %3431 = vdwg.mxu0
        %v3432 = vpack.c.bf16 %v2506, %v2503
        %v3433 = vpack.c.bf16 %v2514, %v2511
        %v3434 = vpack.c.bf16 %v2567, %v2564
        %v3435 = vpack.c.bf16 %v2575, %v2572
        %v3436 = vpack.c.bf16 %v2628, %v2625
        %v3437 = vpack.c.bf16 %v2636, %v2633
        %v3438 = vpack.c.bf16 %v2689, %v2686
        %v3439 = vpack.c.bf16 %v2697, %v2694
        %v3440 = vpack.c.bf16 %v2750, %v2747
        %v3441 = vpack.c.bf16 %v2758, %v2755
        %v3442 = vpack.c.bf16 %v2811, %v2808
        %v3443 = vpack.c.bf16 %v2819, %v2816
        %v3444 = vpack.c.bf16 %v2872, %v2869
        %v3445 = vpack.c.bf16 %v2880, %v2877
        %v3446 = vpack.c.bf16 %v2933, %v2930
        %v3447 = vpack.c.bf16 %v2941, %v2938
        %v3448 = vpack.c.bf16 %v2994, %v2991
        %v3449 = vpack.c.bf16 %v3002, %v2999
        %v3450 = vpack.c.bf16 %v3055, %v3052
        %v3451 = vpack.c.bf16 %v3063, %v3060
        %v3452 = vpack.c.bf16 %v3116, %v3113
        %v3453 = vpack.c.bf16 %v3124, %v3121
        %v3454 = vpack.c.bf16 %v3177, %v3174
        %v3455 = vpack.c.bf16 %v3185, %v3182
        %v3456 = vpack.c.bf16 %v3238, %v3235
        %v3457 = vpack.c.bf16 %v3246, %v3243
        %v3458 = vpack.c.bf16 %v3299, %v3296
        %v3459 = vpack.c.bf16 %v3307, %v3304
        %v3460 = vpack.c.bf16 %v3360, %v3357
        %v3461 = vpack.c.bf16 %v3368, %v3365
        %v3462 = vpack.c.bf16 %v3421, %v3418
        %v3463 = vpack.c.bf16 %v3429, %v3426
        %3472 = vrot.lane.b32.xlu0 %v3440, 8
        %v3473 = vpop.permute.xlu0 %3472
        %3474 = vrot.lane.b32.xlu0 %v3441, 8
        %v3475 = vpop.permute.xlu0 %3474
        %3476 = vrot.lane.b32.xlu0 %v3442, 8
        %v3477 = vpop.permute.xlu0 %3476
        %3478 = vrot.lane.b32.xlu0 %v3443, 8
        %v3479 = vpop.permute.xlu0 %3478
        %3480 = vrot.lane.b32.xlu0 %v3444, 8
        %v3481 = vpop.permute.xlu0 %3480
        %3482 = vrot.lane.b32.xlu0 %v3445, 8
        %v3483 = vpop.permute.xlu0 %3482
        %3484 = vrot.lane.b32.xlu0 %v3446, 8
        %v3485 = vpop.permute.xlu0 %3484
        %3486 = vrot.lane.b32.xlu0 %v3447, 8
        %v3487 = vpop.permute.xlu0 %3486
        %3496 = vrot.lane.b32.xlu0 %v3448, 16
        %v3497 = vpop.permute.xlu0 %3496
        %3498 = vrot.lane.b32.xlu0 %v3449, 16
        %v3499 = vpop.permute.xlu0 %3498
        %3500 = vrot.lane.b32.xlu0 %v3450, 16
        %v3501 = vpop.permute.xlu0 %3500
        %3502 = vrot.lane.b32.xlu0 %v3451, 16
        %v3503 = vpop.permute.xlu0 %3502
        %3504 = vrot.lane.b32.xlu0 %v3452, 16
        %v3505 = vpop.permute.xlu0 %3504
        %3506 = vrot.lane.b32.xlu0 %v3453, 16
        %v3507 = vpop.permute.xlu0 %3506
        %3508 = vrot.lane.b32.xlu0 %v3454, 16
        %v3509 = vpop.permute.xlu0 %3508
        %3510 = vrot.lane.b32.xlu0 %v3455, 16
        %v3511 = vpop.permute.xlu0 %3510
        %3520 = vrot.lane.b32.xlu0 %v3456, 24
        %v3521 = vpop.permute.xlu0 %3520
        %3522 = vrot.lane.b32.xlu0 %v3457, 24
        %v3523 = vpop.permute.xlu0 %3522
        %3524 = vrot.lane.b32.xlu0 %v3458, 24
        %v3525 = vpop.permute.xlu0 %3524
        %3526 = vrot.lane.b32.xlu0 %v3459, 24
        %v3527 = vpop.permute.xlu0 %3526
        %3528 = vrot.lane.b32.xlu0 %v3460, 24
        %v3529 = vpop.permute.xlu0 %3528
        %3530 = vrot.lane.b32.xlu0 %v3461, 24
        %v3531 = vpop.permute.xlu0 %3530
        %3532 = vrot.lane.b32.xlu0 %v3462, 24
        %v3533 = vpop.permute.xlu0 %3532
        %3534 = vrot.lane.b32.xlu0 %v3463, 24
        %v3535 = vpop.permute.xlu0 %3534
        %v3538 = vsel %vm555, %v3432, %v3473
        %v3541 = vsel %vm555, %v3433, %v3475
        %v3544 = vsel %vm555, %v3434, %v3477
        %v3547 = vsel %vm555, %v3435, %v3479
        %v3550 = vsel %vm555, %v3436, %v3481
        %v3553 = vsel %vm555, %v3437, %v3483
        %v3556 = vsel %vm555, %v3438, %v3485
        %v3559 = vsel %vm555, %v3439, %v3487
        %vm3560 = vcmask 130048
        %v3562 = vsel %vm3560, %v3538, %v3497
        %v3564 = vsel %vm3560, %v3541, %v3499
        %v3566 = vsel %vm3560, %v3544, %v3501
        %v3568 = vsel %vm3560, %v3547, %v3503
        %v3570 = vsel %vm3560, %v3550, %v3505
        %v3572 = vsel %vm3560, %v3553, %v3507
        %v3574 = vsel %vm3560, %v3556, %v3509
        %v3576 = vsel %vm3560, %v3559, %v3511
        %vm3577 = vcmask 195584
        %v3579 = vsel %vm3577, %v3562, %v3521
        %v3581 = vsel %vm3577, %v3564, %v3523
        %v3583 = vsel %vm3577, %v3566, %v3525
        %v3585 = vsel %vm3577, %v3568, %v3527
        %v3587 = vsel %vm3577, %v3570, %v3529
        %v3589 = vsel %vm3577, %v3572, %v3531
        %v3591 = vsel %vm3577, %v3574, %v3533
        %v3593 = vsel %vm3577, %v3576, %v3535
        %v3594 = vld [vmem:[#allocation7] sm:$0xf]
        %v3595 = vld [vmem:[#allocation7 + $0x4] sm:$0xf]
        %v3596 = vld [vmem:[#allocation7 + $0x8] sm:$0xf]
        %v3597 = vld [vmem:[#allocation7 + $0xc] sm:$0xf]
        %v3598 = vld [vmem:[%s4] sm:$0x1]
        %v3600 = vlaneseq
        %v3601 = vshrl.u32 %v3600, 7
        %v3602 = vsub.s32 0, %v3601
        %v3603 = vrot.slane %v3598, %v3602
        %v3609 = vunpack.c.l.b16 %v3594
        %v3610 = vunpack.c.l.b16 %v3595
        %v3611 = vunpack.c.l.b16 %v3596
        %v3612 = vunpack.c.l.b16 %v3597
        %v3613 = vpack.c.b16 %v3610, %v3609
        %v3614 = vpack.c.b16 %v3612, %v3611
        %v3617 = vsel %vm365, %v3579, 0
        %v3619 = vsel %vm365, %v3581, 0
        %v3621 = vsel %vm365, %v3583, 0
        %v3623 = vsel %vm365, %v3585, 0
        %v3625 = vsel %vm365, %v3587, 0
        %v3627 = vsel %vm365, %v3589, 0
        %v3629 = vsel %vm365, %v3591, 0
        %v3631 = vsel %vm365, %v3593, 0
        %3633 = vmatprep.subr.bf16.mxu0 0
        %3634 = vmatpush1.bf16.msra.mxu0 %v3613
        %3635 = vmatprep.subr.bf16.mxu0 0
        %3636 = vmatpush1.bf16.msra.mxu0 %v3614
        %3637 = vmatprep.subr.bf16.mxu0 0
        %3638 = vmatpush1.bf16.msra.mxu0 0
        %3639 = vmatprep.subr.bf16.mxu0 0
        %3640 = vmatpush1.bf16.msra.mxu0 0
        %3641 = vmatprep.subr.bf16.mxu0 0
        %3642 = vmatpush1.bf16.msra.mxu0 0
        %3643 = vmatprep.subr.bf16.mxu0 0
        %3644 = vmatpush1.bf16.msra.mxu0 0
        %3645 = vmatprep.subr.bf16.mxu0 0
        %3646 = vmatpush1.bf16.msra.mxu0 0
        %3647 = vmatprep.subr.bf16.mxu0 0
        %3648 = vmatpush1.bf16.msra.mxu0 0
        %3649 = vmatprep.subr.bf16.mxu0 0
        %3650 = vmatpush1.bf16.msra.mxu0 0
        %3651 = vmatprep.subr.bf16.mxu0 0
        %3652 = vmatpush1.bf16.msra.mxu0 0
        %3653 = vmatprep.subr.bf16.mxu0 0
        %3654 = vmatpush1.bf16.msra.mxu0 0
        %3655 = vmatprep.subr.bf16.mxu0 0
        %3656 = vmatpush1.bf16.msra.mxu0 0
        %3657 = vmatprep.subr.bf16.mxu0 0
        %3658 = vmatpush1.bf16.msra.mxu0 0
        %3659 = vmatprep.subr.bf16.mxu0 0
        %3660 = vmatpush1.bf16.msra.mxu0 0
        %3661 = vmatprep.subr.bf16.mxu0 0
        %3662 = vmatpush1.bf16.msra.mxu0 0
        %3663 = vmatprep.subr.bf16.mxu0 0
        %3664 = vmatpush1.bf16.msra.mxu0 0
        %3665 = vmatprep.mubr.bf16.mxu0 0
        %3666 = vmatmul.mubr.bf16.gmra.mrb[0].mxu0 %v3617
        %v3667 = vpop.f32.mrb[0].mxu0
        %v3668 = vadd.f32 %v3603, %v3667
        %v3669 = vpop.f32.mrb[0].mxu0
        %v3670 = vpop.f32.mrb[0].mxu0
        %v3671 = vadd.f32 %v3603, %v3670
        %v3672 = vpop.f32.mrb[0].mxu0
        %3673 = vmatprep.mubr.bf16.mxu0 0
        %3674 = vmatmul.mubr.bf16.gmra.mrb[0].mxu0 %v3619
        %v3675 = vpop.f32.mrb[0].mxu0
        %v3676 = vadd.f32 %v3603, %v3675
        %v3677 = vpop.f32.mrb[0].mxu0
        %v3678 = vpop.f32.mrb[0].mxu0
        %v3679 = vadd.f32 %v3603, %v3678
        %v3680 = vpop.f32.mrb[0].mxu0
        %3681 = vmatprep.mubr.bf16.mxu0 0
        %3682 = vmatmul.mubr.bf16.gmra.mrb[0].mxu0 %v3621
        %v3683 = vpop.f32.mrb[0].mxu0
        %v3684 = vadd.f32 %v3603, %v3683
        %v3685 = vpop.f32.mrb[0].mxu0
        %v3686 = vpop.f32.mrb[0].mxu0
        %v3687 = vadd.f32 %v3603, %v3686
        %v3688 = vpop.f32.mrb[0].mxu0
        %3689 = vmatprep.mubr.bf16.mxu0 0
        %3690 = vmatmul.mubr.bf16.gmra.mrb[0].mxu0 %v3623
        %v3691 = vpop.f32.mrb[0].mxu0
        %v3692 = vadd.f32 %v3603, %v3691
        %v3693 = vpop.f32.mrb[0].mxu0
        %v3694 = vpop.f32.mrb[0].mxu0
        %v3695 = vadd.f32 %v3603, %v3694
        %v3696 = vpop.f32.mrb[0].mxu0
        %3697 = vmatprep.mubr.bf16.mxu0 0
        %3698 = vmatmul.mubr.bf16.gmra.mrb[0].mxu0 %v3625
        %v3699 = vpop.f32.mrb[0].mxu0
        %v3700 = vadd.f32 %v3603, %v3699
        %v3701 = vpop.f32.mrb[0].mxu0
        %v3702 = vpop.f32.mrb[0].mxu0
        %v3703 = vadd.f32 %v3603, %v3702
        %v3704 = vpop.f32.mrb[0].mxu0
        %3705 = vmatprep.mubr.bf16.mxu0 0
        %3706 = vmatmul.mubr.bf16.gmra.mrb[0].mxu0 %v3627
        %v3707 = vpop.f32.mrb[0].mxu0
        %v3708 = vadd.f32 %v3603, %v3707
        %v3709 = vpop.f32.mrb[0].mxu0
        %v3710 = vpop.f32.mrb[0].mxu0
        %v3711 = vadd.f32 %v3603, %v3710
        %v3712 = vpop.f32.mrb[0].mxu0
        %3713 = vmatprep.mubr.bf16.mxu0 0
        %3714 = vmatmul.mubr.bf16.gmra.mrb[0].mxu0 %v3629
        %v3715 = vpop.f32.mrb[0].mxu0
        %v3716 = vadd.f32 %v3603, %v3715
        %v3717 = vpop.f32.mrb[0].mxu0
        %v3718 = vpop.f32.mrb[0].mxu0
        %v3719 = vadd.f32 %v3603, %v3718
        %v3720 = vpop.f32.mrb[0].mxu0
        %3721 = vmatprep.mubr.bf16.mxu0 0
        %3722 = vmatmul.mubr.bf16.gmra.mrb[0].mxu0 %v3631
        %v3723 = vpop.f32.mrb[0].mxu0
        %v3724 = vadd.f32 %v3603, %v3723
        %v3725 = vpop.f32.mrb[0].mxu0
        %v3726 = vpop.f32.mrb[0].mxu0
        %v3727 = vadd.f32 %v3603, %v3726
        %v3728 = vpop.f32.mrb[0].mxu0
        %3729 = vdwg.mxu0
        %3730 = vst.msk [vmem:[%s314] sm:$0xff] %vm365, %v3668
        %3731 = vst.msk [vmem:[%s314 + $0x8] sm:$0xff] %vm365, %v3671
        %3732 = vst.msk [vmem:[%s314 + $0x10] sm:$0xff] %vm365, %v3676
        %3733 = vst.msk [vmem:[%s314 + $0x18] sm:$0xff] %vm365, %v3679
        %3734 = vst.msk [vmem:[%s314 + $0x20] sm:$0xff] %vm365, %v3684
        %3735 = vst.msk [vmem:[%s314 + $0x28] sm:$0xff] %vm365, %v3687
        %3736 = vst.msk [vmem:[%s314 + $0x30] sm:$0xff] %vm365, %v3692
        %3737 = vst.msk [vmem:[%s314 + $0x38] sm:$0xff] %vm365, %v3695
        %3738 = vst.msk [vmem:[%s314 + $0x40] sm:$0xff] %vm365, %v3700
        %3739 = vst.msk [vmem:[%s314 + $0x48] sm:$0xff] %vm365, %v3703
        %3740 = vst.msk [vmem:[%s314 + $0x50] sm:$0xff] %vm365, %v3708
        %3741 = vst.msk [vmem:[%s314 + $0x58] sm:$0xff] %vm365, %v3711
        %3742 = vst.msk [vmem:[%s314 + $0x60] sm:$0xff] %vm365, %v3716
        %3743 = vst.msk [vmem:[%s314 + $0x68] sm:$0xff] %vm365, %v3719
        %3744 = vst.msk [vmem:[%s314 + $0x70] sm:$0xff] %vm365, %v3724
        %3745 = vst.msk [vmem:[%s314 + $0x78] sm:$0xff] %vm365, %v3727
        %s3746 = sand.u32 %s164, 1
        %s3747 = scalar_lea.sflag [#allocation4], %s3746
        %s3748 = sand.u32 %s164, 1
        %s3749 = smul.addr %s3748, 128
        %s3750 = scalar_lea.vmem [#allocation10], %s3749
        // Predicated region
        $region61: #{tpu_custom_call.1} parent=43 // pred_check
          %p3751 = pneg %p174
        $region62: #{tpu_custom_call.1} parent=43 // pred_check_branch
          %3753 = sbr.rel (%p3751) target = $region64
        $region63: #{tpu_custom_call.1} parent=43 // pred_region
          %s3754 = smul.u32 4, %s25
          %s3756 = ssub.s32 2048, 2048
          %3757 = vsyncadd %s3747, %s3756
          %s3758 = smul.addr %s3754, 4
          %s3759 = smul.addr %s3758, 128
          %s3760 = scalar_lea.hbm %s6, %s3759
          %s3761 = sshll.u32 %s3750, 4
          %s3762 = int_to_ptr.vmem [resolvable:$true] %s3761
          %3767 = dma.vmem_to_hbm [thread:$0]  %s3762, 2048, %s3760, %s3747, 128, 128, 8
        $region64: #{tpu_custom_call.1} parent=43 // pred_fallthru
          _
      $region44: #{tpu_custom_call.1} parent=5 // pred_fallthru
        _
      %p3768 = scmp.le.s32.totalorder 2, %s20
      // Predicated region
      $region65: #{tpu_custom_call.1} parent=5 // pred_check
        %p3769 = pneg %p3768
      $region66: #{tpu_custom_call.1} parent=5 // pred_check_branch
        %3771 = sbr.rel (%p3769) target = $region68
      $region67: #{tpu_custom_call.1} parent=5 // pred_region
        %s3772 = ssub.s32 %s20, 2
        // Predicated region
        $region69: #{tpu_custom_call.1} parent=67 // pred_check
          %p3773 = pneg %p180
        $region70: #{tpu_custom_call.1} parent=67 // pred_check_branch
          %3775 = sbr.rel (%p3773) target = $region72
        $region71: #{tpu_custom_call.1} parent=67 // pred_region
          %s3776 = sand.u32 %s165, 1
          %s3777 = scalar_lea.sflag [#allocation4], %s3776
          %s3778 = sand.u32 %s165, 1
          %s3779 = smul.addr %s3778, 128
          %s3780 = scalar_lea.vmem [#allocation10], %s3779
          %3781 = dma.done %s3777, 2048
        $region72: #{tpu_custom_call.1} parent=67 // pred_fallthru
          _
      $region68: #{tpu_custom_call.1} parent=5 // pred_fallthru
        _
    $region6: #{tpu_custom_call.1} parent=1 // loop_footer
      %s24 = sadd.s32 1, %s20
    $region7: #{tpu_custom_call.1} parent=1 // loop_footer_branch
      %19 = sbr.rel target = $region3
    $region8: #{tpu_custom_call.1} parent=1 // loop_exit
      _
    %3782 = vsyncpa [#allocation3], 1
    %s3783 = scalar_lea.sflag [#allocation3], 1
    %3784 = vsyncpa %s3783, 1
    %3785 = vsyncpa [#allocation6], 1
    %3786 = vsyncpa [#allocation9], 1
    %3787 = vsyncpa [#allocation4], 1
    %s3788 = scalar_lea.sflag [#allocation4], 1
    %3789 = vsyncpa %s3788, 1

// kernel: tpu_custom_call.1
$region0: #{tpu_custom_call.1}
  #allocation0 [shape = 'u32[]', space=smem, size = 0x4, offset = 0x4, fixed_abs, tag = 'smem constant byte address 0x4 - core index']
  #allocation1 [shape = 'u32[144,128]{1,0:T(1,128)}', space=vmem, size = 0x12000, scoped, tag = 'internal scratch']
  %s0 = inlined_call_operand.hbm [shape: f32[8,32,32], index: 0, kind: input, shape index: {}]
  %s1 = inlined_call_operand.hbm [shape: bf16[32,96], index: 1, kind: input, shape index: {}]
  %s2 = inlined_call_operand.vmem [shape: f32[1,96], index: 2, kind: input, shape index: {}]
  %s3 = inlined_call_operand.hbm [shape: bf16[32,32], index: 3, kind: input, shape index: {}]
  %s4 = inlined_call_operand.vmem [shape: f32[1,32], index: 4, kind: input, shape index: {}]
  %s5 = inlined_call_operand.hbm [shape: f32[4,4,32,32], index: 5, kind: input, shape index: {}]
  %s6 = inlined_call_operand.hbm [shape: f32[8,32,32], index: 6, kind: output, shape index: {}]
  %s7 = sld [smem:[#allocation0]]
  $region73: #{tpu_custom_call.1} parent=0
    _
  %s9 = ssub.s32 1, %s7
  %s10 = scalar_select 0, %s9, %s7
  $region1: #{tpu_custom_call.1} parent=0
    #allocation2 [shape = 'u8[131072]{0}', space=vmem, size = 0x20000, scoped, tag = 'input window, operand 0']
    #allocation3 [shape = 's32[2]{0}', space=sflag, size = 0x8, scoped, tag = 'scoped memory for tpu_custom_call.1']
    #allocation4 [shape = 's32[2]{0}', space=sflag, size = 0x8, scoped, tag = 'scoped memory for tpu_custom_call.1']
    #allocation5 [shape = 'u8[8192]{0}', space=vmem, size = 0x2000, scoped, tag = 'input window, operand 1, single buffered']
    #allocation6 [shape = 's32[1]{0}', space=sflag, size = 0x4, scoped, tag = 'scoped memory for tpu_custom_call.1']
    #allocation7 [shape = 'u8[8192]{0}', space=vmem, size = 0x2000, scoped, tag = 'input window, operand 3, single buffered']
    #allocation8 [shape = 'u8[262144]{0}', space=vmem, size = 0x40000, scoped, tag = 'input window, operand 5, single buffered']
    #allocation9 [shape = 's32[1]{0}', space=sflag, size = 0x4, scoped, tag = 'scoped memory for tpu_custom_call.1']
    #allocation10 [shape = 'u8[131072]{0}', space=vmem, size = 0x20000, scoped, tag = 'output window, operand 0']
    %11 = vsyncpa [#allocation3], 0
    %s12 = scalar_lea.sflag [#allocation3], 1
    %13 = vsyncpa %s12, 0
    %14 = vsyncpa [#allocation6], 0
    %15 = vsyncpa [#allocation9], 0
    %16 = vsyncpa [#allocation4], 0
    %s17 = scalar_lea.sflag [#allocation4], 1
    %18 = vsyncpa %s17, 0
    loop: start=0, step=1, limit=4
    $region2: #{tpu_custom_call.1} parent=1 // loop_pre_header
      _
    $region3: #{tpu_custom_call.1} parent=1 // loop_header
      %s20 = sphi 0, %s24
      %p21 = scmp.ge.s32.totalorder %s20, 4
      %s30 = sphi 0, %s32
      %s33 = sphi 0, %s30
      %s34 = sphi 0, %s33
      %s50 = sphi 0, %s34
      %s54 = sphi 0, %s54
      %s56 = sphi 0, %s54
      %s57 = sphi 0, %s56
      %s71 = sphi 0, %s57
      %s75 = sphi 0, %s75
      %s77 = sphi 0, %s75
      %s78 = sphi 0, %s77
      %s92 = sphi 0, %s78
      %s96 = sphi 0, %s96
      %s98 = sphi 0, %s96
      %s99 = sphi 0, %s98
      %s113 = sphi 0, %s99
      %s117 = sphi 0, %s117
      %s119 = sphi 0, %s117
      %s120 = sphi 0, %s119
      %s134 = sphi 0, %s120
      %s138 = sphi 0, %s138
      %s140 = sphi 0, %s138
      %s141 = sphi 0, %s140
      %s155 = sphi 0, %s141
      %s161 = sphi 0, %s163
      %s164 = sphi 0, %s161
      %s165 = sphi 0, %s164
      %s181 = sphi 0, %s165
    $region4: #{tpu_custom_call.1} parent=1 // loop_header_branch
      %23 = sbr.rel (%p21) target = $region8
    $region5: #{tpu_custom_call.1} parent=1 // loop_body
      %s25 = ssub.s32 %s20, 1
      %s26 = ssub.s32 %s20, 2
      %s27 = sadd.s32 %s20, 1
      %s28 = ssub.s32 %s20, %s27
      %p29 = scmp.eq.s32.totalorder %s28, 0
      %s31 = sadd.s32 %s30, 1
      %s32 = scalar_select %p29, %s30, %s31
      %p35 = pneg %p29
      %p36 = scmp.eq.s32.totalorder %s20, 1
      %p37 = por %p35, %p36
      %p38 = scmp.ne.s32.totalorder %s30, %s33
      %p39 = scmp.eq.s32.totalorder %s20, 0
      %p40 = por %p38, %p39
      %p41 = scmp.ne.s32.totalorder %s30, %s33
      %p42 = scmp.eq.s32.totalorder %s25, 1
      %p43 = por %p41, %p42
      %p44 = scmp.ne.s32.totalorder %s33, %s34
      %p45 = scmp.eq.s32.totalorder %s25, 0
      %p46 = por %p44, %p45
      %p47 = scmp.ne.s32.totalorder %s33, %s34
      %p48 = scmp.eq.s32.totalorder %s26, 1
      %p49 = por %p47, %p48
      %p51 = scmp.ne.s32.totalorder %s34, %s50
      %p52 = scmp.eq.s32.totalorder %s26, 0
      %p53 = por %p51, %p52
      %s55 = sadd.s32 %s54, 1
      %p58 = scmp.eq.s32.totalorder %s20, 1
      %p59 = scmp.ne.s32.totalorder %s54, %s56
      %p60 = scmp.eq.s32.totalorder %s20, 0
      %p61 = por %p59, %p60
      %p62 = scmp.ne.s32.totalorder %s54, %s56
      %p63 = scmp.eq.s32.totalorder %s25, 1
      %p64 = por %p62, %p63
      %p65 = scmp.ne.s32.totalorder %s56, %s57
      %p66 = scmp.eq.s32.totalorder %s25, 0
      %p67 = por %p65, %p66
      %p68 = scmp.ne.s32.totalorder %s56, %s57
      %p69 = scmp.eq.s32.totalorder %s26, 1
      %p70 = por %p68, %p69
      %p72 = scmp.ne.s32.totalorder %s57, %s71
      %p73 = scmp.eq.s32.totalorder %s26, 0
      %p74 = por %p72, %p73
      %s76 = sadd.s32 %s75, 1
      %p79 = scmp.eq.s32.totalorder %s20, 1
      %p80 = scmp.ne.s32.totalorder %s75, %s77
      %p81 = scmp.eq.s32.totalorder %s20, 0
      %p82 = por %p80, %p81
      %p83 = scmp.ne.s32.totalorder %s75, %s77
      %p84 = scmp.eq.s32.totalorder %s25, 1
      %p85 = por %p83, %p84
      %p86 = scmp.ne.s32.totalorder %s77, %s78
      %p87 = scmp.eq.s32.totalorder %s25, 0
      %p88 = por %p86, %p87
      %p89 = scmp.ne.s32.totalorder %s77, %s78
      %p90 = scmp.eq.s32.totalorder %s26, 1
      %p91 = por %p89, %p90
      %p93 = scmp.ne.s32.totalorder %s78, %s92
      %p94 = scmp.eq.s32.totalorder %s26, 0
      %p95 = por %p93, %p94
      %s97 = sadd.s32 %s96, 1
      %p100 = scmp.eq.s32.totalorder %s20, 1
      %p101 = scmp.ne.s32.totalorder %s96, %s98
      %p102 = scmp.eq.s32.totalorder %s20, 0
      %p103 = por %p101, %p102
      %p104 = scmp.ne.s32.totalorder %s96, %s98
      %p105 = scmp.eq.s32.totalorder %s25, 1
      %p106 = por %p104, %p105
      %p107 = scmp.ne.s32.totalorder %s98, %s99
      %p108 = scmp.eq.s32.totalorder %s25, 0
      %p109 = por %p107, %p108
      %p110 = scmp.ne.s32.totalorder %s98, %s99
      %p111 = scmp.eq.s32.totalorder %s26, 1
      %p112 = por %p110, %p111
      %p114 = scmp.ne.s32.totalorder %s99, %s113
      %p115 = scmp.eq.s32.totalorder %s26, 0
      %p116 = por %p114, %p115
      %s118 = sadd.s32 %s117, 1
      %p121 = scmp.eq.s32.totalorder %s20, 1
      %p122 = scmp.ne.s32.totalorder %s117, %s119
      %p123 = scmp.eq.s32.totalorder %s20, 0
      %p124 = por %p122, %p123
      %p125 = scmp.ne.s32.totalorder %s117, %s119
      %p126 = scmp.eq.s32.totalorder %s25, 1
      %p127 = por %p125, %p126
      %p128 = scmp.ne.s32.totalorder %s119, %s120
      %p129 = scmp.eq.s32.totalorder %s25, 0
      %p130 = por %p128, %p129
      %p131 = scmp.ne.s32.totalorder %s119, %s120
      %p132 = scmp.eq.s32.totalorder %s26, 1
      %p133 = por %p131, %p132
      %p135 = scmp.ne.s32.totalorder %s120, %s134
      %p136 = scmp.eq.s32.totalorder %s26, 0
      %p137 = por %p135, %p136
      %s139 = sadd.s32 %s138, 1
      %p142 = scmp.eq.s32.totalorder %s20, 1
      %p143 = scmp.ne.s32.totalorder %s138, %s140
      %p144 = scmp.eq.s32.totalorder %s20, 0
      %p145 = por %p143, %p144
      %p146 = scmp.ne.s32.totalorder %s138, %s140
      %p147 = scmp.eq.s32.totalorder %s25, 1
      %p148 = por %p146, %p147
      %p149 = scmp.ne.s32.totalorder %s140, %s141
      %p150 = scmp.eq.s32.totalorder %s25, 0
      %p151 = por %p149, %p150
      %p152 = scmp.ne.s32.totalorder %s140, %s141
      %p153 = scmp.eq.s32.totalorder %s26, 1
      %p154 = por %p152, %p153
      %p156 = scmp.ne.s32.totalorder %s141, %s155
      %p157 = scmp.eq.s32.totalorder %s26, 0
      %p158 = por %p156, %p157
      %s159 = ssub.s32 %s20, %s27
      %p160 = scmp.eq.s32.totalorder %s159, 0
      %s162 = sadd.s32 %s161, 1
      %s163 = scalar_select %p160, %s161, %s162
      %p166 = pneg %p160
      %p167 = scmp.eq.s32.totalorder %s20, 1
      %p168 = por %p166, %p167
      %p169 = scmp.ne.s32.totalorder %s161, %s164
      %p170 = scmp.eq.s32.totalorder %s20, 0
      %p171 = por %p169, %p170
      %p172 = scmp.ne.s32.totalorder %s161, %s164
      %p173 = scmp.eq.s32.totalorder %s25, 1
      %p174 = por %p172, %p173
      %p175 = scmp.ne.s32.totalorder %s164, %s165
      %p176 = scmp.eq.s32.totalorder %s25, 0
      %p177 = por %p175, %p176
      %p178 = scmp.ne.s32.totalorder %s164, %s165
      %p179 = scmp.eq.s32.totalorder %s26, 1
      %p180 = por %p178, %p179
      %p182 = scmp.ne.s32.totalorder %s165, %s181
      %p183 = scmp.eq.s32.totalorder %s26, 0
      %p184 = por %p182, %p183
      %p185 = scmp.le.s32.totalorder 1, %s20
      %p186 = scmp.lt.s32.totalorder %s20, 3
      %p187 = pnand %p185, %p186
      %p188 = pneg %p187
      // Predicated region
      $region9: #{tpu_custom_call.1} parent=5 // pred_check
        _
      $region10: #{tpu_custom_call.1} parent=5 // pred_check_branch
        %190 = sbr.rel (%p187) target = $region12
      $region11: #{tpu_custom_call.1} parent=5 // pred_region
        %s191 = ssub.s32 %s20, 1
        // Predicated region
        $region13: #{tpu_custom_call.1} parent=11 // pred_check
          %p192 = pneg %p67
        $region14: #{tpu_custom_call.1} parent=11 // pred_check_branch
          %194 = sbr.rel (%p192) target = $region16
        $region15: #{tpu_custom_call.1} parent=11 // pred_region
          %s196 = ssub.s32 256, 256
          %197 = vsyncadd [#allocation6], %s196
          %s198 = sshll.u32 [#allocation5], 4
          %s199 = int_to_ptr.vmem [resolvable:$true] %s198
          %204 = dma.hbm_to_vmem [thread:$0]  %s1, 256, %s199, [#allocation6], 64, 64, 4
        $region16: #{tpu_custom_call.1} parent=11 // pred_fallthru
          _
        // Predicated region
        $region17: #{tpu_custom_call.1} parent=11 // pred_check
          %p205 = pneg %p88
        $region18: #{tpu_custom_call.1} parent=11 // pred_check_branch
          %207 = sbr.rel (%p205) target = $region20
        $region19: #{tpu_custom_call.1} parent=11 // pred_region
          _
        $region20: #{tpu_custom_call.1} parent=11 // pred_fallthru
          _
        // Predicated region
        $region21: #{tpu_custom_call.1} parent=11 // pred_check
          %p208 = pneg %p109
        $region22: #{tpu_custom_call.1} parent=11 // pred_check_branch
          %210 = sbr.rel (%p208) target = $region24
        $region23: #{tpu_custom_call.1} parent=11 // pred_region
          %s212 = ssub.s32 256, 256
          %213 = vsyncadd [#allocation6], %s212
          %s214 = sshll.u32 [#allocation7], 4
          %s215 = int_to_ptr.vmem [resolvable:$true] %s214
          %220 = dma.hbm_to_vmem [thread:$0]  %s3, 256, %s215, [#allocation6], 64, 64, 4
        $region24: #{tpu_custom_call.1} parent=11 // pred_fallthru
          _
        // Predicated region
        $region25: #{tpu_custom_call.1} parent=11 // pred_check
          %p221 = pneg %p130
        $region26: #{tpu_custom_call.1} parent=11 // pred_check_branch
          %223 = sbr.rel (%p221) target = $region28
        $region27: #{tpu_custom_call.1} parent=11 // pred_region
          _
        $region28: #{tpu_custom_call.1} parent=11 // pred_fallthru
          _
        // Predicated region
        $region29: #{tpu_custom_call.1} parent=11 // pred_check
          %p224 = pneg %p151
        $region30: #{tpu_custom_call.1} parent=11 // pred_check_branch
          %226 = sbr.rel (%p224) target = $region32
        $region31: #{tpu_custom_call.1} parent=11 // pred_region
          %s228 = ssub.s32 8192, 8192
          %229 = vsyncadd [#allocation9], %s228
          %s230 = sshll.u32 [#allocation8], 4
          %s231 = int_to_ptr.vmem [resolvable:$true] %s230
          %236 = dma.hbm_to_vmem [thread:$0]  %s5, 8192, %s231, [#allocation9], 128, 128, 8
        $region32: #{tpu_custom_call.1} parent=11 // pred_fallthru
          _
      $region12: #{tpu_custom_call.1} parent=5 // pred_fallthru
        _
      %p237 = scmp.lt.s32.totalorder %s20, 2
      // Predicated region
      $region33: #{tpu_custom_call.1} parent=5 // pred_check
        %p238 = pneg %p237
      $region34: #{tpu_custom_call.1} parent=5 // pred_check_branch
        %240 = sbr.rel (%p238) target = $region36
      $region35: #{tpu_custom_call.1} parent=5 // pred_region
        // Predicated region
        $region37: #{tpu_custom_call.1} parent=35 // pred_check
          %p241 = pneg %p40
        $region38: #{tpu_custom_call.1} parent=35 // pred_check_branch
          %243 = sbr.rel (%p241) target = $region40
        $region39: #{tpu_custom_call.1} parent=35 // pred_region
          %s244 = sand.u32 %s30, 1
          %s245 = scalar_lea.sflag [#allocation3], %s244
          %s246 = sand.u32 %s30, 1
          %s247 = smul.addr %s246, 128
          %s248 = scalar_lea.vmem [#allocation2], %s247
          %s249 = smul.u32 4, %s20
          %s251 = ssub.s32 2048, 2048
          %252 = vsyncadd %s245, %s251
          %s253 = smul.addr %s249, 4
          %s254 = smul.addr %s253, 128
          %s255 = scalar_lea.hbm %s0, %s254
          %s256 = sshll.u32 %s248, 4
          %s257 = int_to_ptr.vmem [resolvable:$true] %s256
          %262 = dma.hbm_to_vmem [thread:$0]  %s255, 2048, %s257, %s245, 128, 128, 8
        $region40: #{tpu_custom_call.1} parent=35 // pred_fallthru
          _
      $region36: #{tpu_custom_call.1} parent=5 // pred_fallthru
        _
      %p263 = scmp.le.s32.totalorder 1, %s20
      %p264 = scmp.lt.s32.totalorder %s20, 3
      %p265 = pnand %p263, %p264
      %p266 = pneg %p265
      // Predicated region
      $region41: #{tpu_custom_call.1} parent=5 // pred_check
        _
      $region42: #{tpu_custom_call.1} parent=5 // pred_check_branch
        %268 = sbr.rel (%p265) target = $region44
      $region43: #{tpu_custom_call.1} parent=5 // pred_region
        %s269 = ssub.s32 %s20, 1
        %s270 = sand.u32 %s33, 1
        %s271 = scalar_lea.sflag [#allocation3], %s270
        %s272 = sand.u32 %s33, 1
        %s273 = smul.addr %s272, 128
        %s274 = scalar_lea.vmem [#allocation2], %s273
        // Predicated region
        $region45: #{tpu_custom_call.1} parent=43 // pred_check
          %p275 = pneg %p46
        $region46: #{tpu_custom_call.1} parent=43 // pred_check_branch
          %277 = sbr.rel (%p275) target = $region48
        $region47: #{tpu_custom_call.1} parent=43 // pred_region
          %278 = dma.done %s271, 2048
        $region48: #{tpu_custom_call.1} parent=43 // pred_fallthru
          _
        // Predicated region
        $region49: #{tpu_custom_call.1} parent=43 // pred_check
          %p279 = pneg %p67
        $region50: #{tpu_custom_call.1} parent=43 // pred_check_branch
          %281 = sbr.rel (%p279) target = $region52
        $region51: #{tpu_custom_call.1} parent=43 // pred_region
          %282 = dma.done [#allocation6], 256
        $region52: #{tpu_custom_call.1} parent=43 // pred_fallthru
          _
        // Predicated region
        $region53: #{tpu_custom_call.1} parent=43 // pred_check
          %p283 = pneg %p109
        $region54: #{tpu_custom_call.1} parent=43 // pred_check_branch
          %285 = sbr.rel (%p283) target = $region56
        $region55: #{tpu_custom_call.1} parent=43 // pred_region
          %286 = dma.done [#allocation6], 256
        $region56: #{tpu_custom_call.1} parent=43 // pred_fallthru
          _
        // Predicated region
        $region57: #{tpu_custom_call.1} parent=43 // pred_check
          %p287 = pneg %p151
        $region58: #{tpu_custom_call.1} parent=43 // pred_check_branch
          %289 = sbr.rel (%p287) target = $region60
        $region59: #{tpu_custom_call.1} parent=43 // pred_region
          %290 = dma.done [#allocation9], 8192
        $region60: #{tpu_custom_call.1} parent=43 // pred_fallthru
          _
        %s291 = sand.u32 %s33, 1
        %s292 = scalar_lea.sflag [#allocation3], %s291
        %s293 = sand.u32 %s33, 1
        %s294 = smul.addr %s293, 128
        %s295 = scalar_lea.vmem [#allocation2], %s294
        %p296 = pneg %p46
        %p297 = pneg %p43
        %p298 = pneg %p67
        %p299 = pneg %p64
        %p300 = pneg %p88
        %p301 = pneg %p85
        %p302 = pneg %p109
        %p303 = pneg %p106
        %p304 = pneg %p130
        %p305 = pneg %p127
        %p306 = pneg %p151
        %p307 = pneg %p148
        %p308 = pneg %p177
        %p309 = pneg %p174
        %s310 = sand.u32 %s164, 1
        %s311 = scalar_lea.sflag [#allocation4], %s310
        %s312 = sand.u32 %s164, 1
        %s313 = smul.addr %s312, 128
        %s314 = scalar_lea.vmem [#allocation10], %s313
        %s315 = smul.u32 4, %s25
        %s316 = smul.u32 4, %s25
        %v318 = vld [vmem:[%s274] sm:$0xff]
        %v319 = vld [vmem:[%s274 + $0x8] sm:$0xff]
        %v320 = vld [vmem:[%s274 + $0x10] sm:$0xff]
        %v321 = vld [vmem:[%s274 + $0x18] sm:$0xff]
        %v322 = vld [vmem:[%s274 + $0x20] sm:$0xff]
        %v323 = vld [vmem:[%s274 + $0x28] sm:$0xff]
        %v324 = vld [vmem:[%s274 + $0x30] sm:$0xff]
        %v325 = vld [vmem:[%s274 + $0x38] sm:$0xff]
        %v326 = vld [vmem:[%s274 + $0x40] sm:$0xff]
        %v327 = vld [vmem:[%s274 + $0x48] sm:$0xff]
        %v328 = vld [vmem:[%s274 + $0x50] sm:$0xff]
        %v329 = vld [vmem:[%s274 + $0x58] sm:$0xff]
        %v330 = vld [vmem:[%s274 + $0x60] sm:$0xff]
        %v331 = vld [vmem:[%s274 + $0x68] sm:$0xff]
        %v332 = vld [vmem:[%s274 + $0x70] sm:$0xff]
        %v333 = vld [vmem:[%s274 + $0x78] sm:$0xff]
        %v334 = vpack.c.bf16 %v319, %v318
        %v335 = vpack.c.bf16 %v321, %v320
        %v336 = vpack.c.bf16 %v323, %v322
        %v337 = vpack.c.bf16 %v325, %v324
        %v338 = vpack.c.bf16 %v327, %v326
        %v339 = vpack.c.bf16 %v329, %v328
        %v340 = vpack.c.bf16 %v331, %v330
        %v341 = vpack.c.bf16 %v333, %v332
        %v342 = vld [vmem:[#allocation5] sm:$0xf]
        %v343 = vld [vmem:[#allocation5 + $0x4] sm:$0xf]
        %v344 = vld [vmem:[#allocation5 + $0x8] sm:$0xf]
        %v345 = vld [vmem:[#allocation5 + $0xc] sm:$0xf]
        %v346 = vld [vmem:[%s2] sm:$0x1]
        %v348 = vlaneseq
        %v349 = vshrl.u32 %v348, 7
        %v350 = vsub.s32 0, %v349
        %v351 = vrot.slane %v346, %v350
        %v357 = vunpack.c.l.b16 %v342
        %v358 = vunpack.c.l.b16 %v343
        %v359 = vunpack.c.l.b16 %v344
        %v360 = vunpack.c.l.b16 %v345
        %v361 = vpack.c.b16 %v358, %v357
        %v362 = vpack.c.b16 %v360, %v359
        %vm365 = vcmask 261120
        %v367 = vsel %vm365, %v334, 0
        %v370 = vsel %vm365, %v335, 0
        %v373 = vsel %vm365, %v336, 0
        %v376 = vsel %vm365, %v337, 0
        %v379 = vsel %vm365, %v338, 0
        %v382 = vsel %vm365, %v339, 0
        %v385 = vsel %vm365, %v340, 0
        %v388 = vsel %vm365, %v341, 0
        %390 = vmatprep.subr.bf16.mxu0 0
        %391 = vmatpush1.bf16.msra.mxu0 %v361
        %392 = vmatprep.subr.bf16.mxu0 0
        %393 = vmatpush1.bf16.msra.mxu0 %v362
        %394 = vmatprep.subr.bf16.mxu0 0
        %395 = vmatpush1.bf16.msra.mxu0 0
        %396 = vmatprep.subr.bf16.mxu0 0
        %397 = vmatpush1.bf16.msra.mxu0 0
        %398 = vmatprep.subr.bf16.mxu0 0
        %399 = vmatpush1.bf16.msra.mxu0 0
        %400 = vmatprep.subr.bf16.mxu0 0
        %401 = vmatpush1.bf16.msra.mxu0 0
        %402 = vmatprep.subr.bf16.mxu0 0
        %403 = vmatpush1.bf16.msra.mxu0 0
        %404 = vmatprep.subr.bf16.mxu0 0
        %405 = vmatpush1.bf16.msra.mxu0 0
        %406 = vmatprep.subr.bf16.mxu0 0
        %407 = vmatpush1.bf16.msra.mxu0 0
        %408 = vmatprep.subr.bf16.mxu0 0
        %409 = vmatpush1.bf16.msra.mxu0 0
        %410 = vmatprep.subr.bf16.mxu0 0
        %411 = vmatpush1.bf16.msra.mxu0 0
        %412 = vmatprep.subr.bf16.mxu0 0
        %413 = vmatpush1.bf16.msra.mxu0 0
        %414 = vmatprep.subr.bf16.mxu0 0
        %415 = vmatpush1.bf16.msra.mxu0 0
        %416 = vmatprep.subr.bf16.mxu0 0
        %417 = vmatpush1.bf16.msra.mxu0 0
        %418 = vmatprep.subr.bf16.mxu0 0
        %419 = vmatpush1.bf16.msra.mxu0 0
        %420 = vmatprep.subr.bf16.mxu0 0
        %421 = vmatpush1.bf16.msra.mxu0 0
        %422 = vmatprep.mubr.bf16.mxu0 0
        %423 = vmatmul.mubr.bf16.gmra.mrb[0].mxu0 %v367
        %v424 = vpop.f32.mrb[0].mxu0
        %v425 = vadd.f32 %v351, %v424
        %v426 = vpop.f32.mrb[0].mxu0
        %v427 = vpop.f32.mrb[0].mxu0
        %v428 = vadd.f32 %v351, %v427
        %v429 = vpop.f32.mrb[0].mxu0
        %430 = vmatprep.mubr.bf16.mxu0 0
        %431 = vmatmul.mubr.bf16.gmra.mrb[0].mxu0 %v370
        %v432 = vpop.f32.mrb[0].mxu0
        %v433 = vadd.f32 %v351, %v432
        %v434 = vpop.f32.mrb[0].mxu0
        %v435 = vpop.f32.mrb[0].mxu0
        %v436 = vadd.f32 %v351, %v435
        %v437 = vpop.f32.mrb[0].mxu0
        %438 = vmatprep.mubr.bf16.mxu0 0
        %439 = vmatmul.mubr.bf16.gmra.mrb[0].mxu0 %v373
        %v440 = vpop.f32.mrb[0].mxu0
        %v441 = vadd.f32 %v351, %v440
        %v442 = vpop.f32.mrb[0].mxu0
        %v443 = vpop.f32.mrb[0].mxu0
        %v444 = vadd.f32 %v351, %v443
        %v445 = vpop.f32.mrb[0].mxu0
        %446 = vmatprep.mubr.bf16.mxu0 0
        %447 = vmatmul.mubr.bf16.gmra.mrb[0].mxu0 %v376
        %v448 = vpop.f32.mrb[0].mxu0
        %v449 = vadd.f32 %v351, %v448
        %v450 = vpop.f32.mrb[0].mxu0
        %v451 = vpop.f32.mrb[0].mxu0
        %v452 = vadd.f32 %v351, %v451
        %v453 = vpop.f32.mrb[0].mxu0
        %454 = vmatprep.mubr.bf16.mxu0 0
        %455 = vmatmul.mubr.bf16.gmra.mrb[0].mxu0 %v379
        %v456 = vpop.f32.mrb[0].mxu0
        %v457 = vadd.f32 %v351, %v456
        %v458 = vpop.f32.mrb[0].mxu0
        %v459 = vpop.f32.mrb[0].mxu0
        %v460 = vadd.f32 %v351, %v459
        %v461 = vpop.f32.mrb[0].mxu0
        %462 = vmatprep.mubr.bf16.mxu0 0
        %463 = vmatmul.mubr.bf16.gmra.mrb[0].mxu0 %v382
        %v464 = vpop.f32.mrb[0].mxu0
        %v465 = vadd.f32 %v351, %v464
        %v466 = vpop.f32.mrb[0].mxu0
        %v467 = vpop.f32.mrb[0].mxu0
        %v468 = vadd.f32 %v351, %v467
        %v469 = vpop.f32.mrb[0].mxu0
        %470 = vmatprep.mubr.bf16.mxu0 0
        %471 = vmatmul.mubr.bf16.gmra.mrb[0].mxu0 %v385
        %v472 = vpop.f32.mrb[0].mxu0
        %v473 = vadd.f32 %v351, %v472
        %v474 = vpop.f32.mrb[0].mxu0
        %v475 = vpop.f32.mrb[0].mxu0
        %v476 = vadd.f32 %v351, %v475
        %v477 = vpop.f32.mrb[0].mxu0
        %478 = vmatprep.mubr.bf16.mxu0 0
        %479 = vmatmul.mubr.bf16.gmra.mrb[0].mxu0 %v388
        %v480 = vpop.f32.mrb[0].mxu0
        %v481 = vadd.f32 %v351, %v480
        %v482 = vpop.f32.mrb[0].mxu0
        %v483 = vpop.f32.mrb[0].mxu0
        %v484 = vadd.f32 %v351, %v483
        %v485 = vpop.f32.mrb[0].mxu0
        %486 = vdwg.mxu0
        %v487 = vpack.c.bf16 %v428, %v425
        %v488 = vpack.c.bf16 %v436, %v433
        %v489 = vpack.c.bf16 %v444, %v441
        %v490 = vpack.c.bf16 %v452, %v449
        %v491 = vpack.c.bf16 %v460, %v457
        %v492 = vpack.c.bf16 %v468, %v465
        %v493 = vpack.c.bf16 %v476, %v473
        %v494 = vpack.c.bf16 %v484, %v481
        %503 = vrot.lane.b32.xlu0 %v487, 120
        %v504 = vpop.permute.xlu0 %503
        %505 = vrot.lane.b32.xlu0 %v488, 120
        %v506 = vpop.permute.xlu0 %505
        %507 = vrot.lane.b32.xlu0 %v489, 120
        %v508 = vpop.permute.xlu0 %507
        %509 = vrot.lane.b32.xlu0 %v490, 120
        %v510 = vpop.permute.xlu0 %509
        %511 = vrot.lane.b32.xlu0 %v491, 120
        %v512 = vpop.permute.xlu0 %511
        %513 = vrot.lane.b32.xlu0 %v492, 120
        %v514 = vpop.permute.xlu0 %513
        %515 = vrot.lane.b32.xlu0 %v493, 120
        %v516 = vpop.permute.xlu0 %515
        %517 = vrot.lane.b32.xlu0 %v494, 120
        %v518 = vpop.permute.xlu0 %517
        %519 = vrot.lane.b32.xlu0 %v487, 112
        %v520 = vpop.permute.xlu0 %519
        %521 = vrot.lane.b32.xlu0 %v488, 112
        %v522 = vpop.permute.xlu0 %521
        %523 = vrot.lane.b32.xlu0 %v489, 112
        %v524 = vpop.permute.xlu0 %523
        %525 = vrot.lane.b32.xlu0 %v490, 112
        %v526 = vpop.permute.xlu0 %525
        %527 = vrot.lane.b32.xlu0 %v491, 112
        %v528 = vpop.permute.xlu0 %527
        %529 = vrot.lane.b32.xlu0 %v492, 112
        %v530 = vpop.permute.xlu0 %529
        %531 = vrot.lane.b32.xlu0 %v493, 112
        %v532 = vpop.permute.xlu0 %531
        %533 = vrot.lane.b32.xlu0 %v494, 112
        %v534 = vpop.permute.xlu0 %533
        %535 = vrot.lane.b32.xlu0 %v487, 104
        %v536 = vpop.permute.xlu0 %535
        %537 = vrot.lane.b32.xlu0 %v488, 104
        %v538 = vpop.permute.xlu0 %537
        %539 = vrot.lane.b32.xlu0 %v489, 104
        %v540 = vpop.permute.xlu0 %539
        %541 = vrot.lane.b32.xlu0 %v490, 104
        %v542 = vpop.permute.xlu0 %541
        %543 = vrot.lane.b32.xlu0 %v491, 104
        %v544 = vpop.permute.xlu0 %543
        %545 = vrot.lane.b32.xlu0 %v492, 104
        %v546 = vpop.permute.xlu0 %545
        %547 = vrot.lane.b32.xlu0 %v493, 104
        %v548 = vpop.permute.xlu0 %547
        %549 = vrot.lane.b32.xlu0 %v494, 104
        %v550 = vpop.permute.xlu0 %549
        %551 = vrot.lane.b32.xlu0 %v487, 96
        %v552 = vpop.permute.xlu0 %551
        %553 = vrot.lane.b32.xlu0 %v488, 96
        %v554 = vpop.permute.xlu0 %553
        %vm555 = vcmask 64512
        %v557 = vsel %vm555, %v487, 0
        %v560 = vsel %vm555, %v488, 0
        %v563 = vsel %vm555, %v552, 0
        %v566 = vsel %vm555, %v554, 0
        %568 = vmatprep.subr.bf16.mxu0 0
        %569 = vmatpush1.bf16.xpose.msra.mxu0 %v563
        %570 = vmatprep.subr.bf16.mxu0 0
        %571 = vmatpush1.bf16.xpose.msra.mxu0 %v566
        %572 = vmatprep.subr.bf16.mxu0 0
        %573 = vmatpush1.bf16.xpose.msra.mxu0 0
        %574 = vmatprep.subr.bf16.mxu0 0
        %575 = vmatpush1.bf16.xpose.msra.mxu0 0
        %576 = vmatprep.subr.bf16.mxu0 0
        %577 = vmatpush1.bf16.xpose.msra.mxu0 0
        %578 = vmatprep.subr.bf16.mxu0 0
        %579 = vmatpush1.bf16.xpose.msra.mxu0 0
        %580 = vmatprep.subr.bf16.mxu0 0
        %581 = vmatpush1.bf16.xpose.msra.mxu0 0
        %582 = vmatprep.subr.bf16.mxu0 0
        %583 = vmatpush1.bf16.xpose.msra.mxu0 0
        %584 = vmatprep.subr.bf16.mxu0 0
        %585 = vmatpush1.bf16.xpose.msra.mxu0 0
        %586 = vmatprep.subr.bf16.mxu0 0
        %587 = vmatpush1.bf16.xpose.msra.mxu0 0
        %588 = vmatprep.subr.bf16.mxu0 0
        %589 = vmatpush1.bf16.xpose.msra.mxu0 0
        %590 = vmatprep.subr.bf16.mxu0 0
        %591 = vmatpush1.bf16.xpose.msra.mxu0 0
        %592 = vmatprep.subr.bf16.mxu0 0
        %593 = vmatpush1.bf16.xpose.msra.mxu0 0
        %594 = vmatprep.subr.bf16.mxu0 0
        %595 = vmatpush1.bf16.xpose.msra.mxu0 0
        %596 = vmatprep.subr.bf16.mxu0 0
        %597 = vmatpush1.bf16.xpose.msra.mxu0 0
        %598 = vmatprep.subr.bf16.mxu0 0
        %599 = vmatpush1.bf16.xpose.msra.mxu0 0
        %600 = vmatprep.mubr.bf16.mxu0 0
        %601 = vmatmul.mubr.bf16.gmra.mrb[0].mxu0 %v557
        %v602 = vpop.f32.mrb[0].mxu0
        %v603 = vadd.f32 0.0, %v602
        %v604 = vpop.f32.mrb[0].mxu0
        %v605 = vpop.f32.mrb[0].mxu0
        %v606 = vadd.f32 0.0, %v605
        %v607 = vpop.f32.mrb[0].mxu0
        %608 = vmatprep.mubr.bf16.mxu0 0
        %609 = vmatmul.mubr.bf16.gmra.mrb[0].mxu0 %v560
        %v610 = vpop.f32.mrb[0].mxu0
        %v611 = vadd.f32 0.0, %v610
        %v612 = vpop.f32.mrb[0].mxu0
        %v613 = vpop.f32.mrb[0].mxu0
        %v614 = vadd.f32 0.0, %v613
        %v615 = vpop.f32.mrb[0].mxu0
        %616 = vdwg.mxu0
        %617 = vrot.lane.b32.xlu0 %v489, 96
        %v618 = vpop.permute.xlu0 %617
        %619 = vrot.lane.b32.xlu0 %v490, 96
        %v620 = vpop.permute.xlu0 %619
        %v622 = vsel %vm555, %v489, 0
        %v625 = vsel %vm555, %v490, 0
        %v628 = vsel %vm555, %v618, 0
        %v631 = vsel %vm555, %v620, 0
        %633 = vmatprep.subr.bf16.mxu0 0
        %634 = vmatpush1.bf16.xpose.msra.mxu0 %v628
        %635 = vmatprep.subr.bf16.mxu0 0
        %636 = vmatpush1.bf16.xpose.msra.mxu0 %v631
        %637 = vmatprep.subr.bf16.mxu0 0
        %638 = vmatpush1.bf16.xpose.msra.mxu0 0
        %639 = vmatprep.subr.bf16.mxu0 0
        %640 = vmatpush1.bf16.xpose.msra.mxu0 0
        %641 = vmatprep.subr.bf16.mxu0 0
        %642 = vmatpush1.bf16.xpose.msra.mxu0 0
        %643 = vmatprep.subr.bf16.mxu0 0
        %644 = vmatpush1.bf16.xpose.msra.mxu0 0
        %645 = vmatprep.subr.bf16.mxu0 0
        %646 = vmatpush1.bf16.xpose.msra.mxu0 0
        %647 = vmatprep.subr.bf16.mxu0 0
        %648 = vmatpush1.bf16.xpose.msra.mxu0 0
        %649 = vmatprep.subr.bf16.mxu0 0
        %650 = vmatpush1.bf16.xpose.msra.mxu0 0
        %651 = vmatprep.subr.bf16.mxu0 0
        %652 = vmatpush1.bf16.xpose.msra.mxu0 0
        %653 = vmatprep.subr.bf16.mxu0 0
        %654 = vmatpush1.bf16.xpose.msra.mxu0 0
        %655 = vmatprep.subr.bf16.mxu0 0
        %656 = vmatpush1.bf16.xpose.msra.mxu0 0
        %657 = vmatprep.subr.bf16.mxu0 0
        %658 = vmatpush1.bf16.xpose.msra.mxu0 0
        %659 = vmatprep.subr.bf16.mxu0 0
        %660 = vmatpush1.bf16.xpose.msra.mxu0 0
        %661 = vmatprep.subr.bf16.mxu0 0
        %662 = vmatpush1.bf16.xpose.msra.mxu0 0
        %663 = vmatprep.subr.bf16.mxu0 0
        %664 = vmatpush1.bf16.xpose.msra.mxu0 0
        %665 = vmatprep.mubr.bf16.mxu0 0
        %666 = vmatmul.mubr.bf16.gmra.mrb[0].mxu0 %v622
        %v667 = vpop.f32.mrb[0].mxu0
        %v668 = vadd.f32 0.0, %v667
        %v669 = vpop.f32.mrb[0].mxu0
        %v670 = vpop.f32.mrb[0].mxu0
        %v671 = vadd.f32 0.0, %v670
        %v672 = vpop.f32.mrb[0].mxu0
        %673 = vmatprep.mubr.bf16.mxu0 0
        %674 = vmatmul.mubr.bf16.gmra.mrb[0].mxu0 %v625
        %v675 = vpop.f32.mrb[0].mxu0
        %v676 = vadd.f32 0.0, %v675
        %v677 = vpop.f32.mrb[0].mxu0
        %v678 = vpop.f32.mrb[0].mxu0
        %v679 = vadd.f32 0.0, %v678
        %v680 = vpop.f32.mrb[0].mxu0
        %681 = vdwg.mxu0
        %682 = vrot.lane.b32.xlu0 %v491, 96
        %v683 = vpop.permute.xlu0 %682
        %684 = vrot.lane.b32.xlu0 %v492, 96
        %v685 = vpop.permute.xlu0 %684
        %v687 = vsel %vm555, %v491, 0
        %v690 = vsel %vm555, %v492, 0
        %v693 = vsel %vm555, %v683, 0
        %v696 = vsel %vm555, %v685, 0
        %698 = vmatprep.subr.bf16.mxu0 0
        %699 = vmatpush1.bf16.xpose.msra.mxu0 %v693
        %700 = vmatprep.subr.bf16.mxu0 0
        %701 = vmatpush1.bf16.xpose.msra.mxu0 %v696
        %702 = vmatprep.subr.bf16.mxu0 0
        %703 = vmatpush1.bf16.xpose.msra.mxu0 0
        %704 = vmatprep.subr.bf16.mxu0 0
        %705 = vmatpush1.bf16.xpose.msra.mxu0 0
        %706 = vmatprep.subr.bf16.mxu0 0
        %707 = vmatpush1.bf16.xpose.msra.mxu0 0
        %708 = vmatprep.subr.bf16.mxu0 0
        %709 = vmatpush1.bf16.xpose.msra.mxu0 0
        %710 = vmatprep.subr.bf16.mxu0 0
        %711 = vmatpush1.bf16.xpose.msra.mxu0 0
        %712 = vmatprep.subr.bf16.mxu0 0
        %713 = vmatpush1.bf16.xpose.msra.mxu0 0
        %714 = vmatprep.subr.bf16.mxu0 0
        %715 = vmatpush1.bf16.xpose.msra.mxu0 0
        %716 = vmatprep.subr.bf16.mxu0 0
        %717 = vmatpush1.bf16.xpose.msra.mxu0 0
        %718 = vmatprep.subr.bf16.mxu0 0
        %719 = vmatpush1.bf16.xpose.msra.mxu0 0
        %720 = vmatprep.subr.bf16.mxu0 0
        %721 = vmatpush1.bf16.xpose.msra.mxu0 0
        %722 = vmatprep.subr.bf16.mxu0 0
        %723 = vmatpush1.bf16.xpose.msra.mxu0 0
        %724 = vmatprep.subr.bf16.mxu0 0
        %725 = vmatpush1.bf16.xpose.msra.mxu0 0
        %726 = vmatprep.subr.bf16.mxu0 0
        %727 = vmatpush1.bf16.xpose.msra.mxu0 0
        %728 = vmatprep.subr.bf16.mxu0 0
        %729 = vmatpush1.bf16.xpose.msra.mxu0 0
        %730 = vmatprep.mubr.bf16.mxu0 0
        %731 = vmatmul.mubr.bf16.gmra.mrb[0].mxu0 %v687
        %v732 = vpop.f32.mrb[0].mxu0
        %v733 = vadd.f32 0.0, %v732
        %v734 = vpop.f32.mrb[0].mxu0
        %v735 = vpop.f32.mrb[0].mxu0
        %v736 = vadd.f32 0.0, %v735
        %v737 = vpop.f32.mrb[0].mxu0
        %738 = vmatprep.mubr.bf16.mxu0 0
        %739 = vmatmul.mubr.bf16.gmra.mrb[0].mxu0 %v690
        %v740 = vpop.f32.mrb[0].mxu0
        %v741 = vadd.f32 0.0, %v740
        %v742 = vpop.f32.mrb[0].mxu0
        %v743 = vpop.f32.mrb[0].mxu0
        %v744 = vadd.f32 0.0, %v743
        %v745 = vpop.f32.mrb[0].mxu0
        %746 = vdwg.mxu0
        %747 = vrot.lane.b32.xlu0 %v493, 96
        %v748 = vpop.permute.xlu0 %747
        %749 = vrot.lane.b32.xlu0 %v494, 96
        %v750 = vpop.permute.xlu0 %749
        %v752 = vsel %vm555, %v493, 0
        %v755 = vsel %vm555, %v494, 0
        %v758 = vsel %vm555, %v748, 0
        %v761 = vsel %vm555, %v750, 0
        %763 = vmatprep.subr.bf16.mxu0 0
        %764 = vmatpush1.bf16.xpose.msra.mxu0 %v758
        %765 = vmatprep.subr.bf16.mxu0 0
        %766 = vmatpush1.bf16.xpose.msra.mxu0 %v761
        %767 = vmatprep.subr.bf16.mxu0 0
        %768 = vmatpush1.bf16.xpose.msra.mxu0 0
        %769 = vmatprep.subr.bf16.mxu0 0
        %770 = vmatpush1.bf16.xpose.msra.mxu0 0
        %771 = vmatprep.subr.bf16.mxu0 0
        %772 = vmatpush1.bf16.xpose.msra.mxu0 0
        %773 = vmatprep.subr.bf16.mxu0 0
        %774 = vmatpush1.bf16.xpose.msra.mxu0 0
        %775 = vmatprep.subr.bf16.mxu0 0
        %776 = vmatpush1.bf16.xpose.msra.mxu0 0
        %777 = vmatprep.subr.bf16.mxu0 0
        %778 = vmatpush1.bf16.xpose.msra.mxu0 0
        %779 = vmatprep.subr.bf16.mxu0 0
        %780 = vmatpush1.bf16.xpose.msra.mxu0 0
        %781 = vmatprep.subr.bf16.mxu0 0
        %782 = vmatpush1.bf16.xpose.msra.mxu0 0
        %783 = vmatprep.subr.bf16.mxu0 0
        %784 = vmatpush1.bf16.xpose.msra.mxu0 0
        %785 = vmatprep.subr.bf16.mxu0 0
        %786 = vmatpush1.bf16.xpose.msra.mxu0 0
        %787 = vmatprep.subr.bf16.mxu0 0
        %788 = vmatpush1.bf16.xpose.msra.mxu0 0
        %789 = vmatprep.subr.bf16.mxu0 0
        %790 = vmatpush1.bf16.xpose.msra.mxu0 0
        %791 = vmatprep.subr.bf16.mxu0 0
        %792 = vmatpush1.bf16.xpose.msra.mxu0 0
        %793 = vmatprep.subr.bf16.mxu0 0
        %794 = vmatpush1.bf16.xpose.msra.mxu0 0
        %795 = vmatprep.mubr.bf16.mxu0 0
        %796 = vmatmul.mubr.bf16.gmra.mrb[0].mxu0 %v752
        %v797 = vpop.f32.mrb[0].mxu0
        %v798 = vadd.f32 0.0, %v797
        %v799 = vpop.f32.mrb[0].mxu0
        %v800 = vpop.f32.mrb[0].mxu0
        %v801 = vadd.f32 0.0, %v800
        %v802 = vpop.f32.mrb[0].mxu0
        %803 = vmatprep.mubr.bf16.mxu0 0
        %804 = vmatmul.mubr.bf16.gmra.mrb[0].mxu0 %v755
        %v805 = vpop.f32.mrb[0].mxu0
        %v806 = vadd.f32 0.0, %v805
        %v807 = vpop.f32.mrb[0].mxu0
        %v808 = vpop.f32.mrb[0].mxu0
        %v809 = vadd.f32 0.0, %v808
        %v810 = vpop.f32.mrb[0].mxu0
        %811 = vdwg.mxu0
        %812 = vrot.lane.b32.xlu0 %v504, 96
        %v813 = vpop.permute.xlu0 %812
        %814 = vrot.lane.b32.xlu0 %v506, 96
        %v815 = vpop.permute.xlu0 %814
        %v817 = vsel %vm555, %v504, 0
        %v820 = vsel %vm555, %v506, 0
        %v823 = vsel %vm555, %v813, 0
        %v826 = vsel %vm555, %v815, 0
        %828 = vmatprep.subr.bf16.mxu0 0
        %829 = vmatpush1.bf16.xpose.msra.mxu0 %v823
        %830 = vmatprep.subr.bf16.mxu0 0
        %831 = vmatpush1.bf16.xpose.msra.mxu0 %v826
        %832 = vmatprep.subr.bf16.mxu0 0
        %833 = vmatpush1.bf16.xpose.msra.mxu0 0
        %834 = vmatprep.subr.bf16.mxu0 0
        %835 = vmatpush1.bf16.xpose.msra.mxu0 0
        %836 = vmatprep.subr.bf16.mxu0 0
        %837 = vmatpush1.bf16.xpose.msra.mxu0 0
        %838 = vmatprep.subr.bf16.mxu0 0
        %839 = vmatpush1.bf16.xpose.msra.mxu0 0
        %840 = vmatprep.subr.bf16.mxu0 0
        %841 = vmatpush1.bf16.xpose.msra.mxu0 0
        %842 = vmatprep.subr.bf16.mxu0 0
        %843 = vmatpush1.bf16.xpose.msra.mxu0 0
        %844 = vmatprep.subr.bf16.mxu0 0
        %845 = vmatpush1.bf16.xpose.msra.mxu0 0
        %846 = vmatprep.subr.bf16.mxu0 0
        %847 = vmatpush1.bf16.xpose.msra.mxu0 0
        %848 = vmatprep.subr.bf16.mxu0 0
        %849 = vmatpush1.bf16.xpose.msra.mxu0 0
        %850 = vmatprep.subr.bf16.mxu0 0
        %851 = vmatpush1.bf16.xpose.msra.mxu0 0
        %852 = vmatprep.subr.bf16.mxu0 0
        %853 = vmatpush1.bf16.xpose.msra.mxu0 0
        %854 = vmatprep.subr.bf16.mxu0 0
        %855 = vmatpush1.bf16.xpose.msra.mxu0 0
        %856 = vmatprep.subr.bf16.mxu0 0
        %857 = vmatpush1.bf16.xpose.msra.mxu0 0
        %858 = vmatprep.subr.bf16.mxu0 0
        %859 = vmatpush1.bf16.xpose.msra.mxu0 0
        %860 = vmatprep.mubr.bf16.mxu0 0
        %861 = vmatmul.mubr.bf16.gmra.mrb[0].mxu0 %v817
        %v862 = vpop.f32.mrb[0].mxu0
        %v863 = vadd.f32 0.0, %v862
        %v864 = vpop.f32.mrb[0].mxu0
        %v865 = vpop.f32.mrb[0].mxu0
        %v866 = vadd.f32 0.0, %v865
        %v867 = vpop.f32.mrb[0].mxu0
        %868 = vmatprep.mubr.bf16.mxu0 0
        %869 = vmatmul.mubr.bf16.gmra.mrb[0].mxu0 %v820
        %v870 = vpop.f32.mrb[0].mxu0
        %v871 = vadd.f32 0.0, %v870
        %v872 = vpop.f32.mrb[0].mxu0
        %v873 = vpop.f32.mrb[0].mxu0
        %v874 = vadd.f32 0.0, %v873
        %v875 = vpop.f32.mrb[0].mxu0
        %876 = vdwg.mxu0
        %877 = vrot.lane.b32.xlu0 %v508, 96
        %v878 = vpop.permute.xlu0 %877
        %879 = vrot.lane.b32.xlu0 %v510, 96
        %v880 = vpop.permute.xlu0 %879
        %v882 = vsel %vm555, %v508, 0
        %v885 = vsel %vm555, %v510, 0
        %v888 = vsel %vm555, %v878, 0
        %v891 = vsel %vm555, %v880, 0
        %893 = vmatprep.subr.bf16.mxu0 0
        %894 = vmatpush1.bf16.xpose.msra.mxu0 %v888
        %895 = vmatprep.subr.bf16.mxu0 0
        %896 = vmatpush1.bf16.xpose.msra.mxu0 %v891
        %897 = vmatprep.subr.bf16.mxu0 0
        %898 = vmatpush1.bf16.xpose.msra.mxu0 0
        %899 = vmatprep.subr.bf16.mxu0 0
        %900 = vmatpush1.bf16.xpose.msra.mxu0 0
        %901 = vmatprep.subr.bf16.mxu0 0
        %902 = vmatpush1.bf16.xpose.msra.mxu0 0
        %903 = vmatprep.subr.bf16.mxu0 0
        %904 = vmatpush1.bf16.xpose.msra.mxu0 0
        %905 = vmatprep.subr.bf16.mxu0 0
        %906 = vmatpush1.bf16.xpose.msra.mxu0 0
        %907 = vmatprep.subr.bf16.mxu0 0
        %908 = vmatpush1.bf16.xpose.msra.mxu0 0
        %909 = vmatprep.subr.bf16.mxu0 0
        %910 = vmatpush1.bf16.xpose.msra.mxu0 0
        %911 = vmatprep.subr.bf16.mxu0 0
        %912 = vmatpush1.bf16.xpose.msra.mxu0 0
        %913 = vmatprep.subr.bf16.mxu0 0
        %914 = vmatpush1.bf16.xpose.msra.mxu0 0
        %915 = vmatprep.subr.bf16.mxu0 0
        %916 = vmatpush1.bf16.xpose.msra.mxu0 0
        %917 = vmatprep.subr.bf16.mxu0 0
        %918 = vmatpush1.bf16.xpose.msra.mxu0 0
        %919 = vmatprep.subr.bf16.mxu0 0
        %920 = vmatpush1.bf16.xpose.msra.mxu0 0
        %921 = vmatprep.subr.bf16.mxu0 0
        %922 = vmatpush1.bf16.xpose.msra.mxu0 0
        %923 = vmatprep.subr.bf16.mxu0 0
        %924 = vmatpush1.bf16.xpose.msra.mxu0 0
        %925 = vmatprep.mubr.bf16.mxu0 0
        %926 = vmatmul.mubr.bf16.gmra.mrb[0].mxu0 %v882
        %v927 = vpop.f32.mrb[0].mxu0
        %v928 = vadd.f32 0.0, %v927
        %v929 = vpop.f32.mrb[0].mxu0
        %v930 = vpop.f32.mrb[0].mxu0
        %v931 = vadd.f32 0.0, %v930
        %v932 = vpop.f32.mrb[0].mxu0
        %933 = vmatprep.mubr.bf16.mxu0 0
        %934 = vmatmul.mubr.bf16.gmra.mrb[0].mxu0 %v885
        %v935 = vpop.f32.mrb[0].mxu0
        %v936 = vadd.f32 0.0, %v935
        %v937 = vpop.f32.mrb[0].mxu0
        %v938 = vpop.f32.mrb[0].mxu0
        %v939 = vadd.f32 0.0, %v938
        %v940 = vpop.f32.mrb[0].mxu0
        %941 = vdwg.mxu0
        %942 = vrot.lane.b32.xlu0 %v512, 96
        %v943 = vpop.permute.xlu0 %942
        %944 = vrot.lane.b32.xlu0 %v514, 96
        %v945 = vpop.permute.xlu0 %944
        %v947 = vsel %vm555, %v512, 0
        %v950 = vsel %vm555, %v514, 0
        %v953 = vsel %vm555, %v943, 0
        %v956 = vsel %vm555, %v945, 0
        %958 = vmatprep.subr.bf16.mxu0 0
        %959 = vmatpush1.bf16.xpose.msra.mxu0 %v953
        %960 = vmatprep.subr.bf16.mxu0 0
        %961 = vmatpush1.bf16.xpose.msra.mxu0 %v956
        %962 = vmatprep.subr.bf16.mxu0 0
        %963 = vmatpush1.bf16.xpose.msra.mxu0 0
        %964 = vmatprep.subr.bf16.mxu0 0
        %965 = vmatpush1.bf16.xpose.msra.mxu0 0
        %966 = vmatprep.subr.bf16.mxu0 0
        %967 = vmatpush1.bf16.xpose.msra.mxu0 0
        %968 = vmatprep.subr.bf16.mxu0 0
        %969 = vmatpush1.bf16.xpose.msra.mxu0 0
        %970 = vmatprep.subr.bf16.mxu0 0
        %971 = vmatpush1.bf16.xpose.msra.mxu0 0
        %972 = vmatprep.subr.bf16.mxu0 0
        %973 = vmatpush1.bf16.xpose.msra.mxu0 0
        %974 = vmatprep.subr.bf16.mxu0 0
        %975 = vmatpush1.bf16.xpose.msra.mxu0 0
        %976 = vmatprep.subr.bf16.mxu0 0
        %977 = vmatpush1.bf16.xpose.msra.mxu0 0
        %978 = vmatprep.subr.bf16.mxu0 0
        %979 = vmatpush1.bf16.xpose.msra.mxu0 0
        %980 = vmatprep.subr.bf16.mxu0 0
        %981 = vmatpush1.bf16.xpose.msra.mxu0 0
        %982 = vmatprep.subr.bf16.mxu0 0
        %983 = vmatpush1.bf16.xpose.msra.mxu0 0
        %984 = vmatprep.subr.bf16.mxu0 0
        %985 = vmatpush1.bf16.xpose.msra.mxu0 0
        %986 = vmatprep.subr.bf16.mxu0 0
        %987 = vmatpush1.bf16.xpose.msra.mxu0 0
        %988 = vmatprep.subr.bf16.mxu0 0
        %989 = vmatpush1.bf16.xpose.msra.mxu0 0
        %990 = vmatprep.mubr.bf16.mxu0 0
        %991 = vmatmul.mubr.bf16.gmra.mrb[0].mxu0 %v947
        %v992 = vpop.f32.mrb[0].mxu0
        %v993 = vadd.f32 0.0, %v992
        %v994 = vpop.f32.mrb[0].mxu0
        %v995 = vpop.f32.mrb[0].mxu0
        %v996 = vadd.f32 0.0, %v995
        %v997 = vpop.f32.mrb[0].mxu0
        %998 = vmatprep.mubr.bf16.mxu0 0
        %999 = vmatmul.mubr.bf16.gmra.mrb[0].mxu0 %v950
        %v1000 = vpop.f32.mrb[0].mxu0
        %v1001 = vadd.f32 0.0, %v1000
        %v1002 = vpop.f32.mrb[0].mxu0
        %v1003 = vpop.f32.mrb[0].mxu0
        %v1004 = vadd.f32 0.0, %v1003
        %v1005 = vpop.f32.mrb[0].mxu0
        %1006 = vdwg.mxu0
        %1007 = vrot.lane.b32.xlu0 %v516, 96
        %v1008 = vpop.permute.xlu0 %1007
        %1009 = vrot.lane.b32.xlu0 %v518, 96
        %v1010 = vpop.permute.xlu0 %1009
        %v1012 = vsel %vm555, %v516, 0
        %v1015 = vsel %vm555, %v518, 0
        %v1018 = vsel %vm555, %v1008, 0
        %v1021 = vsel %vm555, %v1010, 0
        %1023 = vmatprep.subr.bf16.mxu0 0
        %1024 = vmatpush1.bf16.xpose.msra.mxu0 %v1018
        %1025 = vmatprep.subr.bf16.mxu0 0
        %1026 = vmatpush1.bf16.xpose.msra.mxu0 %v1021
        %1027 = vmatprep.subr.bf16.mxu0 0
        %1028 = vmatpush1.bf16.xpose.msra.mxu0 0
        %1029 = vmatprep.subr.bf16.mxu0 0
        %1030 = vmatpush1.bf16.xpose.msra.mxu0 0
        %1031 = vmatprep.subr.bf16.mxu0 0
        %1032 = vmatpush1.bf16.xpose.msra.mxu0 0
        %1033 = vmatprep.subr.bf16.mxu0 0
        %1034 = vmatpush1.bf16.xpose.msra.mxu0 0
        %1035 = vmatprep.subr.bf16.mxu0 0
        %1036 = vmatpush1.bf16.xpose.msra.mxu0 0
        %1037 = vmatprep.subr.bf16.mxu0 0
        %1038 = vmatpush1.bf16.xpose.msra.mxu0 0
        %1039 = vmatprep.subr.bf16.mxu0 0
        %1040 = vmatpush1.bf16.xpose.msra.mxu0 0
        %1041 = vmatprep.subr.bf16.mxu0 0
        %1042 = vmatpush1.bf16.xpose.msra.mxu0 0
        %1043 = vmatprep.subr.bf16.mxu0 0
        %1044 = vmatpush1.bf16.xpose.msra.mxu0 0
        %1045 = vmatprep.subr.bf16.mxu0 0
        %1046 = vmatpush1.bf16.xpose.msra.mxu0 0
        %1047 = vmatprep.subr.bf16.mxu0 0
        %1048 = vmatpush1.bf16.xpose.msra.mxu0 0
        %1049 = vmatprep.subr.bf16.mxu0 0
        %1050 = vmatpush1.bf16.xpose.msra.mxu0 0
        %1051 = vmatprep.subr.bf16.mxu0 0
        %1052 = vmatpush1.bf16.xpose.msra.mxu0 0
        %1053 = vmatprep.subr.bf16.mxu0 0
        %1054 = vmatpush1.bf16.xpose.msra.mxu0 0
        %1055 = vmatprep.mubr.bf16.mxu0 0
        %1056 = vmatmul.mubr.bf16.gmra.mrb[0].mxu0 %v1012
        %v1057 = vpop.f32.mrb[0].mxu0
        %v1058 = vadd.f32 0.0, %v1057
        %v1059 = vpop.f32.mrb[0].mxu0
        %v1060 = vpop.f32.mrb[0].mxu0
        %v1061 = vadd.f32 0.0, %v1060
        %v1062 = vpop.f32.mrb[0].mxu0
        %1063 = vmatprep.mubr.bf16.mxu0 0
        %1064 = vmatmul.mubr.bf16.gmra.mrb[0].mxu0 %v1015
        %v1065 = vpop.f32.mrb[0].mxu0
        %v1066 = vadd.f32 0.0, %v1065
        %v1067 = vpop.f32.mrb[0].mxu0
        %v1068 = vpop.f32.mrb[0].mxu0
        %v1069 = vadd.f32 0.0, %v1068
        %v1070 = vpop.f32.mrb[0].mxu0
        %1071 = vdwg.mxu0
        %1072 = vrot.lane.b32.xlu0 %v520, 96
        %v1073 = vpop.permute.xlu0 %1072
        %1074 = vrot.lane.b32.xlu0 %v522, 96
        %v1075 = vpop.permute.xlu0 %1074
        %v1077 = vsel %vm555, %v520, 0
        %v1080 = vsel %vm555, %v522, 0
        %v1083 = vsel %vm555, %v1073, 0
        %v1086 = vsel %vm555, %v1075, 0
        %1088 = vmatprep.subr.bf16.mxu0 0
        %1089 = vmatpush1.bf16.xpose.msra.mxu0 %v1083
        %1090 = vmatprep.subr.bf16.mxu0 0
        %1091 = vmatpush1.bf16.xpose.msra.mxu0 %v1086
        %1092 = vmatprep.subr.bf16.mxu0 0
        %1093 = vmatpush1.bf16.xpose.msra.mxu0 0
        %1094 = vmatprep.subr.bf16.mxu0 0
        %1095 = vmatpush1.bf16.xpose.msra.mxu0 0
        %1096 = vmatprep.subr.bf16.mxu0 0
        %1097 = vmatpush1.bf16.xpose.msra.mxu0 0
        %1098 = vmatprep.subr.bf16.mxu0 0
        %1099 = vmatpush1.bf16.xpose.msra.mxu0 0
        %1100 = vmatprep.subr.bf16.mxu0 0
        %1101 = vmatpush1.bf16.xpose.msra.mxu0 0
        %1102 = vmatprep.subr.bf16.mxu0 0
        %1103 = vmatpush1.bf16.xpose.msra.mxu0 0
        %1104 = vmatprep.subr.bf16.mxu0 0
        %1105 = vmatpush1.bf16.xpose.msra.mxu0 0
        %1106 = vmatprep.subr.bf16.mxu0 0
        %1107 = vmatpush1.bf16.xpose.msra.mxu0 0
        %1108 = vmatprep.subr.bf16.mxu0 0
        %1109 = vmatpush1.bf16.xpose.msra.mxu0 0
        %1110 = vmatprep.subr.bf16.mxu0 0
        %1111 = vmatpush1.bf16.xpose.msra.mxu0 0
        %1112 = vmatprep.subr.bf16.mxu0 0
        %1113 = vmatpush1.bf16.xpose.msra.mxu0 0
        %1114 = vmatprep.subr.bf16.mxu0 0
        %1115 = vmatpush1.bf16.xpose.msra.mxu0 0
        %1116 = vmatprep.subr.bf16.mxu0 0
        %1117 = vmatpush1.bf16.xpose.msra.mxu0 0
        %1118 = vmatprep.subr.bf16.mxu0 0
        %1119 = vmatpush1.bf16.xpose.msra.mxu0 0
        %1120 = vmatprep.mubr.bf16.mxu0 0
        %1121 = vmatmul.mubr.bf16.gmra.mrb[0].mxu0 %v1077
        %v1122 = vpop.f32.mrb[0].mxu0
        %v1123 = vadd.f32 0.0, %v1122
        %v1124 = vpop.f32.mrb[0].mxu0
        %v1125 = vpop.f32.mrb[0].mxu0
        %v1126 = vadd.f32 0.0, %v1125
        %v1127 = vpop.f32.mrb[0].mxu0
        %1128 = vmatprep.mubr.bf16.mxu0 0
        %1129 = vmatmul.mubr.bf16.gmra.mrb[0].mxu0 %v1080
        %v1130 = vpop.f32.mrb[0].mxu0
        %v1131 = vadd.f32 0.0, %v1130
        %v1132 = vpop.f32.mrb[0].mxu0
        %v1133 = vpop.f32.mrb[0].mxu0
        %v1134 = vadd.f32 0.0, %v1133
        %v1135 = vpop.f32.mrb[0].mxu0
        %1136 = vdwg.mxu0
        %1137 = vrot.lane.b32.xlu0 %v524, 96
        %v1138 = vpop.permute.xlu0 %1137
        %1139 = vrot.lane.b32.xlu0 %v526, 96
        %v1140 = vpop.permute.xlu0 %1139
        %v1142 = vsel %vm555, %v524, 0
        %v1145 = vsel %vm555, %v526, 0
        %v1148 = vsel %vm555, %v1138, 0
        %v1151 = vsel %vm555, %v1140, 0
        %1153 = vmatprep.subr.bf16.mxu0 0
        %1154 = vmatpush1.bf16.xpose.msra.mxu0 %v1148
        %1155 = vmatprep.subr.bf16.mxu0 0
        %1156 = vmatpush1.bf16.xpose.msra.mxu0 %v1151
        %1157 = vmatprep.subr.bf16.mxu0 0
        %1158 = vmatpush1.bf16.xpose.msra.mxu0 0
        %1159 = vmatprep.subr.bf16.mxu0 0
        %1160 = vmatpush1.bf16.xpose.msra.mxu0 0
        %1161 = vmatprep.subr.bf16.mxu0 0
        %1162 = vmatpush1.bf16.xpose.msra.mxu0 0
        %1163 = vmatprep.subr.bf16.mxu0 0
        %1164 = vmatpush1.bf16.xpose.msra.mxu0 0
        %1165 = vmatprep.subr.bf16.mxu0 0
        %1166 = vmatpush1.bf16.xpose.msra.mxu0 0
        %1167 = vmatprep.subr.bf16.mxu0 0
        %1168 = vmatpush1.bf16.xpose.msra.mxu0 0
        %1169 = vmatprep.subr.bf16.mxu0 0
        %1170 = vmatpush1.bf16.xpose.msra.mxu0 0
        %1171 = vmatprep.subr.bf16.mxu0 0
        %1172 = vmatpush1.bf16.xpose.msra.mxu0 0
        %1173 = vmatprep.subr.bf16.mxu0 0
        %1174 = vmatpush1.bf16.xpose.msra.mxu0 0
        %1175 = vmatprep.subr.bf16.mxu0 0
        %1176 = vmatpush1.bf16.xpose.msra.mxu0 0
        %1177 = vmatprep.subr.bf16.mxu0 0
        %1178 = vmatpush1.bf16.xpose.msra.mxu0 0
        %1179 = vmatprep.subr.bf16.mxu0 0
        %1180 = vmatpush1.bf16.xpose.msra.mxu0 0
        %1181 = vmatprep.subr.bf16.mxu0 0
        %1182 = vmatpush1.bf16.xpose.msra.mxu0 0
        %1183 = vmatprep.subr.bf16.mxu0 0
        %1184 = vmatpush1.bf16.xpose.msra.mxu0 0
        %1185 = vmatprep.mubr.bf16.mxu0 0
        %1186 = vmatmul.mubr.bf16.gmra.mrb[0].mxu0 %v1142
        %v1187 = vpop.f32.mrb[0].mxu0
        %v1188 = vadd.f32 0.0, %v1187
        %v1189 = vpop.f32.mrb[0].mxu0
        %v1190 = vpop.f32.mrb[0].mxu0
        %v1191 = vadd.f32 0.0, %v1190
        %v1192 = vpop.f32.mrb[0].mxu0
        %1193 = vmatprep.mubr.bf16.mxu0 0
        %1194 = vmatmul.mubr.bf16.gmra.mrb[0].mxu0 %v1145
        %v1195 = vpop.f32.mrb[0].mxu0
        %v1196 = vadd.f32 0.0, %v1195
        %v1197 = vpop.f32.mrb[0].mxu0
        %v1198 = vpop.f32.mrb[0].mxu0
        %v1199 = vadd.f32 0.0, %v1198
        %v1200 = vpop.f32.mrb[0].mxu0
        %1201 = vdwg.mxu0
        %1202 = vrot.lane.b32.xlu0 %v528, 96
        %v1203 = vpop.permute.xlu0 %1202
        %1204 = vrot.lane.b32.xlu0 %v530, 96
        %v1205 = vpop.permute.xlu0 %1204
        %v1207 = vsel %vm555, %v528, 0
        %v1210 = vsel %vm555, %v530, 0
        %v1213 = vsel %vm555, %v1203, 0
        %v1216 = vsel %vm555, %v1205, 0
        %1218 = vmatprep.subr.bf16.mxu0 0
        %1219 = vmatpush1.bf16.xpose.msra.mxu0 %v1213
        %1220 = vmatprep.subr.bf16.mxu0 0
        %1221 = vmatpush1.bf16.xpose.msra.mxu0 %v1216
        %1222 = vmatprep.subr.bf16.mxu0 0
        %1223 = vmatpush1.bf16.xpose.msra.mxu0 0
        %1224 = vmatprep.subr.bf16.mxu0 0
        %1225 = vmatpush1.bf16.xpose.msra.mxu0 0
        %1226 = vmatprep.subr.bf16.mxu0 0
        %1227 = vmatpush1.bf16.xpose.msra.mxu0 0
        %1228 = vmatprep.subr.bf16.mxu0 0
        %1229 = vmatpush1.bf16.xpose.msra.mxu0 0
        %1230 = vmatprep.subr.bf16.mxu0 0
        %1231 = vmatpush1.bf16.xpose.msra.mxu0 0
        %1232 = vmatprep.subr.bf16.mxu0 0
        %1233 = vmatpush1.bf16.xpose.msra.mxu0 0
        %1234 = vmatprep.subr.bf16.mxu0 0
        %1235 = vmatpush1.bf16.xpose.msra.mxu0 0
        %1236 = vmatprep.subr.bf16.mxu0 0
        %1237 = vmatpush1.bf16.xpose.msra.mxu0 0
        %1238 = vmatprep.subr.bf16.mxu0 0
        %1239 = vmatpush1.bf16.xpose.msra.mxu0 0
        %1240 = vmatprep.subr.bf16.mxu0 0
        %1241 = vmatpush1.bf16.xpose.msra.mxu0 0
        %1242 = vmatprep.subr.bf16.mxu0 0
        %1243 = vmatpush1.bf16.xpose.msra.mxu0 0
        %1244 = vmatprep.subr.bf16.mxu0 0
        %1245 = vmatpush1.bf16.xpose.msra.mxu0 0
        %1246 = vmatprep.subr.bf16.mxu0 0
        %1247 = vmatpush1.bf16.xpose.msra.mxu0 0
        %1248 = vmatprep.subr.bf16.mxu0 0
        %1249 = vmatpush1.bf16.xpose.msra.mxu0 0
        %1250 = vmatprep.mubr.bf16.mxu0 0
        %1251 = vmatmul.mubr.bf16.gmra.mrb[0].mxu0 %v1207
        %v1252 = vpop.f32.mrb[0].mxu0
        %v1253 = vadd.f32 0.0, %v1252
        %v1254 = vpop.f32.mrb[0].mxu0
        %v1255 = vpop.f32.mrb[0].mxu0
        %v1256 = vadd.f32 0.0, %v1255
        %v1257 = vpop.f32.mrb[0].mxu0
        %1258 = vmatprep.mubr.bf16.mxu0 0
        %1259 = vmatmul.mubr.bf16.gmra.mrb[0].mxu0 %v1210
        %v1260 = vpop.f32.mrb[0].mxu0
        %v1261 = vadd.f32 0.0, %v1260
        %v1262 = vpop.f32.mrb[0].mxu0
        %v1263 = vpop.f32.mrb[0].mxu0
        %v1264 = vadd.f32 0.0, %v1263
        %v1265 = vpop.f32.mrb[0].mxu0
        %1266 = vdwg.mxu0
        %1267 = vrot.lane.b32.xlu0 %v532, 96
        %v1268 = vpop.permute.xlu0 %1267
        %1269 = vrot.lane.b32.xlu0 %v534, 96
        %v1270 = vpop.permute.xlu0 %1269
        %v1272 = vsel %vm555, %v532, 0
        %v1275 = vsel %vm555, %v534, 0
        %v1278 = vsel %vm555, %v1268, 0
        %v1281 = vsel %vm555, %v1270, 0
        %1283 = vmatprep.subr.bf16.mxu0 0
        %1284 = vmatpush1.bf16.xpose.msra.mxu0 %v1278
        %1285 = vmatprep.subr.bf16.mxu0 0
        %1286 = vmatpush1.bf16.xpose.msra.mxu0 %v1281
        %1287 = vmatprep.subr.bf16.mxu0 0
        %1288 = vmatpush1.bf16.xpose.msra.mxu0 0
        %1289 = vmatprep.subr.bf16.mxu0 0
        %1290 = vmatpush1.bf16.xpose.msra.mxu0 0
        %1291 = vmatprep.subr.bf16.mxu0 0
        %1292 = vmatpush1.bf16.xpose.msra.mxu0 0
        %1293 = vmatprep.subr.bf16.mxu0 0
        %1294 = vmatpush1.bf16.xpose.msra.mxu0 0
        %1295 = vmatprep.subr.bf16.mxu0 0
        %1296 = vmatpush1.bf16.xpose.msra.mxu0 0
        %1297 = vmatprep.subr.bf16.mxu0 0
        %1298 = vmatpush1.bf16.xpose.msra.mxu0 0
        %1299 = vmatprep.subr.bf16.mxu0 0
        %1300 = vmatpush1.bf16.xpose.msra.mxu0 0
        %1301 = vmatprep.subr.bf16.mxu0 0
        %1302 = vmatpush1.bf16.xpose.msra.mxu0 0
        %1303 = vmatprep.subr.bf16.mxu0 0
        %1304 = vmatpush1.bf16.xpose.msra.mxu0 0
        %1305 = vmatprep.subr.bf16.mxu0 0
        %1306 = vmatpush1.bf16.xpose.msra.mxu0 0
        %1307 = vmatprep.subr.bf16.mxu0 0
        %1308 = vmatpush1.bf16.xpose.msra.mxu0 0
        %1309 = vmatprep.subr.bf16.mxu0 0
        %1310 = vmatpush1.bf16.xpose.msra.mxu0 0
        %1311 = vmatprep.subr.bf16.mxu0 0
        %1312 = vmatpush1.bf16.xpose.msra.mxu0 0
        %1313 = vmatprep.subr.bf16.mxu0 0
        %1314 = vmatpush1.bf16.xpose.msra.mxu0 0
        %1315 = vmatprep.mubr.bf16.mxu0 0
        %1316 = vmatmul.mubr.bf16.gmra.mrb[0].mxu0 %v1272
        %v1317 = vpop.f32.mrb[0].mxu0
        %v1318 = vadd.f32 0.0, %v1317
        %v1319 = vpop.f32.mrb[0].mxu0
        %v1320 = vpop.f32.mrb[0].mxu0
        %v1321 = vadd.f32 0.0, %v1320
        %v1322 = vpop.f32.mrb[0].mxu0
        %1323 = vmatprep.mubr.bf16.mxu0 0
        %1324 = vmatmul.mubr.bf16.gmra.mrb[0].mxu0 %v1275
        %v1325 = vpop.f32.mrb[0].mxu0
        %v1326 = vadd.f32 0.0, %v1325
        %v1327 = vpop.f32.mrb[0].mxu0
        %v1328 = vpop.f32.mrb[0].mxu0
        %v1329 = vadd.f32 0.0, %v1328
        %v1330 = vpop.f32.mrb[0].mxu0
        %1331 = vdwg.mxu0
        %1332 = vrot.lane.b32.xlu0 %v536, 96
        %v1333 = vpop.permute.xlu0 %1332
        %1334 = vrot.lane.b32.xlu0 %v538, 96
        %v1335 = vpop.permute.xlu0 %1334
        %v1337 = vsel %vm555, %v536, 0
        %v1340 = vsel %vm555, %v538, 0
        %v1343 = vsel %vm555, %v1333, 0
        %v1346 = vsel %vm555, %v1335, 0
        %1348 = vmatprep.subr.bf16.mxu0 0
        %1349 = vmatpush1.bf16.xpose.msra.mxu0 %v1343
        %1350 = vmatprep.subr.bf16.mxu0 0
        %1351 = vmatpush1.bf16.xpose.msra.mxu0 %v1346
        %1352 = vmatprep.subr.bf16.mxu0 0
        %1353 = vmatpush1.bf16.xpose.msra.mxu0 0
        %1354 = vmatprep.subr.bf16.mxu0 0
        %1355 = vmatpush1.bf16.xpose.msra.mxu0 0
        %1356 = vmatprep.subr.bf16.mxu0 0
        %1357 = vmatpush1.bf16.xpose.msra.mxu0 0
        %1358 = vmatprep.subr.bf16.mxu0 0
        %1359 = vmatpush1.bf16.xpose.msra.mxu0 0
        %1360 = vmatprep.subr.bf16.mxu0 0
        %1361 = vmatpush1.bf16.xpose.msra.mxu0 0
        %1362 = vmatprep.subr.bf16.mxu0 0
        %1363 = vmatpush1.bf16.xpose.msra.mxu0 0
        %1364 = vmatprep.subr.bf16.mxu0 0
        %1365 = vmatpush1.bf16.xpose.msra.mxu0 0
        %1366 = vmatprep.subr.bf16.mxu0 0
        %1367 = vmatpush1.bf16.xpose.msra.mxu0 0
        %1368 = vmatprep.subr.bf16.mxu0 0
        %1369 = vmatpush1.bf16.xpose.msra.mxu0 0
        %1370 = vmatprep.subr.bf16.mxu0 0
        %1371 = vmatpush1.bf16.xpose.msra.mxu0 0
        %1372 = vmatprep.subr.bf16.mxu0 0
        %1373 = vmatpush1.bf16.xpose.msra.mxu0 0
        %1374 = vmatprep.subr.bf16.mxu0 0
        %1375 = vmatpush1.bf16.xpose.msra.mxu0 0
        %1376 = vmatprep.subr.bf16.mxu0 0
        %1377 = vmatpush1.bf16.xpose.msra.mxu0 0
        %1378 = vmatprep.subr.bf16.mxu0 0
        %1379 = vmatpush1.bf16.xpose.msra.mxu0 0
        %1380 = vmatprep.mubr.bf16.mxu0 0
        %1381 = vmatmul.mubr.bf16.gmra.mrb[0].mxu0 %v1337
        %v1382 = vpop.f32.mrb[0].mxu0
        %v1383 = vadd.f32 0.0, %v1382
        %v1384 = vpop.f32.mrb[0].mxu0
        %v1385 = vpop.f32.mrb[0].mxu0
        %v1386 = vadd.f32 0.0, %v1385
        %v1387 = vpop.f32.mrb[0].mxu0
        %1388 = vmatprep.mubr.bf16.mxu0 0
        %1389 = vmatmul.mubr.bf16.gmra.mrb[0].mxu0 %v1340
        %v1390 = vpop.f32.mrb[0].mxu0
        %v1391 = vadd.f32 0.0, %v1390
        %v1392 = vpop.f32.mrb[0].mxu0
        %v1393 = vpop.f32.mrb[0].mxu0
        %v1394 = vadd.f32 0.0, %v1393
        %v1395 = vpop.f32.mrb[0].mxu0
        %1396 = vdwg.mxu0
        %1397 = vrot.lane.b32.xlu0 %v540, 96
        %v1398 = vpop.permute.xlu0 %1397
        %1399 = vrot.lane.b32.xlu0 %v542, 96
        %v1400 = vpop.permute.xlu0 %1399
        %v1402 = vsel %vm555, %v540, 0
        %v1405 = vsel %vm555, %v542, 0
        %v1408 = vsel %vm555, %v1398, 0
        %v1411 = vsel %vm555, %v1400, 0
        %1413 = vmatprep.subr.bf16.mxu0 0
        %1414 = vmatpush1.bf16.xpose.msra.mxu0 %v1408
        %1415 = vmatprep.subr.bf16.mxu0 0
        %1416 = vmatpush1.bf16.xpose.msra.mxu0 %v1411
        %1417 = vmatprep.subr.bf16.mxu0 0
        %1418 = vmatpush1.bf16.xpose.msra.mxu0 0
        %1419 = vmatprep.subr.bf16.mxu0 0
        %1420 = vmatpush1.bf16.xpose.msra.mxu0 0
        %1421 = vmatprep.subr.bf16.mxu0 0
        %1422 = vmatpush1.bf16.xpose.msra.mxu0 0
        %1423 = vmatprep.subr.bf16.mxu0 0
        %1424 = vmatpush1.bf16.xpose.msra.mxu0 0
        %1425 = vmatprep.subr.bf16.mxu0 0
        %1426 = vmatpush1.bf16.xpose.msra.mxu0 0
        %1427 = vmatprep.subr.bf16.mxu0 0
        %1428 = vmatpush1.bf16.xpose.msra.mxu0 0
        %1429 = vmatprep.subr.bf16.mxu0 0
        %1430 = vmatpush1.bf16.xpose.msra.mxu0 0
        %1431 = vmatprep.subr.bf16.mxu0 0
        %1432 = vmatpush1.bf16.xpose.msra.mxu0 0
        %1433 = vmatprep.subr.bf16.mxu0 0
        %1434 = vmatpush1.bf16.xpose.msra.mxu0 0
        %1435 = vmatprep.subr.bf16.mxu0 0
        %1436 = vmatpush1.bf16.xpose.msra.mxu0 0
        %1437 = vmatprep.subr.bf16.mxu0 0
        %1438 = vmatpush1.bf16.xpose.msra.mxu0 0
        %1439 = vmatprep.subr.bf16.mxu0 0
        %1440 = vmatpush1.bf16.xpose.msra.mxu0 0
        %1441 = vmatprep.subr.bf16.mxu0 0
        %1442 = vmatpush1.bf16.xpose.msra.mxu0 0
        %1443 = vmatprep.subr.bf16.mxu0 0
        %1444 = vmatpush1.bf16.xpose.msra.mxu0 0
        %1445 = vmatprep.mubr.bf16.mxu0 0
        %1446 = vmatmul.mubr.bf16.gmra.mrb[0].mxu0 %v1402
        %v1447 = vpop.f32.mrb[0].mxu0
        %v1448 = vadd.f32 0.0, %v1447
        %v1449 = vpop.f32.mrb[0].mxu0
        %v1450 = vpop.f32.mrb[0].mxu0
        %v1451 = vadd.f32 0.0, %v1450
        %v1452 = vpop.f32.mrb[0].mxu0
        %1453 = vmatprep.mubr.bf16.mxu0 0
        %1454 = vmatmul.mubr.bf16.gmra.mrb[0].mxu0 %v1405
        %v1455 = vpop.f32.mrb[0].mxu0
        %v1456 = vadd.f32 0.0, %v1455
        %v1457 = vpop.f32.mrb[0].mxu0
        %v1458 = vpop.f32.mrb[0].mxu0
        %v1459 = vadd.f32 0.0, %v1458
        %v1460 = vpop.f32.mrb[0].mxu0
        %1461 = vdwg.mxu0
        %1462 = vrot.lane.b32.xlu0 %v544, 96
        %v1463 = vpop.permute.xlu0 %1462
        %1464 = vrot.lane.b32.xlu0 %v546, 96
        %v1465 = vpop.permute.xlu0 %1464
        %v1467 = vsel %vm555, %v544, 0
        %v1470 = vsel %vm555, %v546, 0
        %v1473 = vsel %vm555, %v1463, 0
        %v1476 = vsel %vm555, %v1465, 0
        %1478 = vmatprep.subr.bf16.mxu0 0
        %1479 = vmatpush1.bf16.xpose.msra.mxu0 %v1473
        %1480 = vmatprep.subr.bf16.mxu0 0
        %1481 = vmatpush1.bf16.xpose.msra.mxu0 %v1476
        %1482 = vmatprep.subr.bf16.mxu0 0
        %1483 = vmatpush1.bf16.xpose.msra.mxu0 0
        %1484 = vmatprep.subr.bf16.mxu0 0
        %1485 = vmatpush1.bf16.xpose.msra.mxu0 0
        %1486 = vmatprep.subr.bf16.mxu0 0
        %1487 = vmatpush1.bf16.xpose.msra.mxu0 0
        %1488 = vmatprep.subr.bf16.mxu0 0
        %1489 = vmatpush1.bf16.xpose.msra.mxu0 0
        %1490 = vmatprep.subr.bf16.mxu0 0
        %1491 = vmatpush1.bf16.xpose.msra.mxu0 0
        %1492 = vmatprep.subr.bf16.mxu0 0
        %1493 = vmatpush1.bf16.xpose.msra.mxu0 0
        %1494 = vmatprep.subr.bf16.mxu0 0
        %1495 = vmatpush1.bf16.xpose.msra.mxu0 0
        %1496 = vmatprep.subr.bf16.mxu0 0
        %1497 = vmatpush1.bf16.xpose.msra.mxu0 0
        %1498 = vmatprep.subr.bf16.mxu0 0
        %1499 = vmatpush1.bf16.xpose.msra.mxu0 0
        %1500 = vmatprep.subr.bf16.mxu0 0
        %1501 = vmatpush1.bf16.xpose.msra.mxu0 0
        %1502 = vmatprep.subr.bf16.mxu0 0
        %1503 = vmatpush1.bf16.xpose.msra.mxu0 0
        %1504 = vmatprep.subr.bf16.mxu0 0
        %1505 = vmatpush1.bf16.xpose.msra.mxu0 0
        %1506 = vmatprep.subr.bf16.mxu0 0
        %1507 = vmatpush1.bf16.xpose.msra.mxu0 0
        %1508 = vmatprep.subr.bf16.mxu0 0
        %1509 = vmatpush1.bf16.xpose.msra.mxu0 0
        %1510 = vmatprep.mubr.bf16.mxu0 0
        %1511 = vmatmul.mubr.bf16.gmra.mrb[0].mxu0 %v1467
        %v1512 = vpop.f32.mrb[0].mxu0
        %v1513 = vadd.f32 0.0, %v1512
        %v1514 = vpop.f32.mrb[0].mxu0
        %v1515 = vpop.f32.mrb[0].mxu0
        %v1516 = vadd.f32 0.0, %v1515
        %v1517 = vpop.f32.mrb[0].mxu0
        %1518 = vmatprep.mubr.bf16.mxu0 0
        %1519 = vmatmul.mubr.bf16.gmra.mrb[0].mxu0 %v1470
        %v1520 = vpop.f32.mrb[0].mxu0
        %v1521 = vadd.f32 0.0, %v1520
        %v1522 = vpop.f32.mrb[0].mxu0
        %v1523 = vpop.f32.mrb[0].mxu0
        %v1524 = vadd.f32 0.0, %v1523
        %v1525 = vpop.f32.mrb[0].mxu0
        %1526 = vdwg.mxu0
        %1527 = vrot.lane.b32.xlu0 %v548, 96
        %v1528 = vpop.permute.xlu0 %1527
        %1529 = vrot.lane.b32.xlu0 %v550, 96
        %v1530 = vpop.permute.xlu0 %1529
        %v1532 = vsel %vm555, %v548, 0
        %v1535 = vsel %vm555, %v550, 0
        %v1538 = vsel %vm555, %v1528, 0
        %v1541 = vsel %vm555, %v1530, 0
        %1543 = vmatprep.subr.bf16.mxu0 0
        %1544 = vmatpush1.bf16.xpose.msra.mxu0 %v1538
        %1545 = vmatprep.subr.bf16.mxu0 0
        %1546 = vmatpush1.bf16.xpose.msra.mxu0 %v1541
        %1547 = vmatprep.subr.bf16.mxu0 0
        %1548 = vmatpush1.bf16.xpose.msra.mxu0 0
        %1549 = vmatprep.subr.bf16.mxu0 0
        %1550 = vmatpush1.bf16.xpose.msra.mxu0 0
        %1551 = vmatprep.subr.bf16.mxu0 0
        %1552 = vmatpush1.bf16.xpose.msra.mxu0 0
        %1553 = vmatprep.subr.bf16.mxu0 0
        %1554 = vmatpush1.bf16.xpose.msra.mxu0 0
        %1555 = vmatprep.subr.bf16.mxu0 0
        %1556 = vmatpush1.bf16.xpose.msra.mxu0 0
        %1557 = vmatprep.subr.bf16.mxu0 0
        %1558 = vmatpush1.bf16.xpose.msra.mxu0 0
        %1559 = vmatprep.subr.bf16.mxu0 0
        %1560 = vmatpush1.bf16.xpose.msra.mxu0 0
        %1561 = vmatprep.subr.bf16.mxu0 0
        %1562 = vmatpush1.bf16.xpose.msra.mxu0 0
        %1563 = vmatprep.subr.bf16.mxu0 0
        %1564 = vmatpush1.bf16.xpose.msra.mxu0 0
        %1565 = vmatprep.subr.bf16.mxu0 0
        %1566 = vmatpush1.bf16.xpose.msra.mxu0 0
        %1567 = vmatprep.subr.bf16.mxu0 0
        %1568 = vmatpush1.bf16.xpose.msra.mxu0 0
        %1569 = vmatprep.subr.bf16.mxu0 0
        %1570 = vmatpush1.bf16.xpose.msra.mxu0 0
        %1571 = vmatprep.subr.bf16.mxu0 0
        %1572 = vmatpush1.bf16.xpose.msra.mxu0 0
        %1573 = vmatprep.subr.bf16.mxu0 0
        %1574 = vmatpush1.bf16.xpose.msra.mxu0 0
        %1575 = vmatprep.mubr.bf16.mxu0 0
        %1576 = vmatmul.mubr.bf16.gmra.mrb[0].mxu0 %v1532
        %v1577 = vpop.f32.mrb[0].mxu0
        %v1578 = vadd.f32 0.0, %v1577
        %v1579 = vpop.f32.mrb[0].mxu0
        %v1580 = vpop.f32.mrb[0].mxu0
        %v1581 = vadd.f32 0.0, %v1580
        %v1582 = vpop.f32.mrb[0].mxu0
        %1583 = vmatprep.mubr.bf16.mxu0 0
        %1584 = vmatmul.mubr.bf16.gmra.mrb[0].mxu0 %v1535
        %v1585 = vpop.f32.mrb[0].mxu0
        %v1586 = vadd.f32 0.0, %v1585
        %v1587 = vpop.f32.mrb[0].mxu0
        %v1588 = vpop.f32.mrb[0].mxu0
        %v1589 = vadd.f32 0.0, %v1588
        %v1590 = vpop.f32.mrb[0].mxu0
        %1591 = vdwg.mxu0
        %v1592 = vld [vmem:[#allocation8] sm:$0xff]
        %v1593 = vld [vmem:[#allocation8 + $0x8] sm:$0xff]
        %v1594 = vld [vmem:[#allocation8 + $0x10] sm:$0xff]
        %v1595 = vld [vmem:[#allocation8 + $0x18] sm:$0xff]
        %v1596 = vld [vmem:[#allocation8 + $0x20] sm:$0xff]
        %v1597 = vld [vmem:[#allocation8 + $0x28] sm:$0xff]
        %v1598 = vld [vmem:[#allocation8 + $0x30] sm:$0xff]
        %v1599 = vld [vmem:[#allocation8 + $0x38] sm:$0xff]
        %v1600 = vld [vmem:[#allocation8 + $0x40] sm:$0xff]
        %v1601 = vld [vmem:[#allocation8 + $0x48] sm:$0xff]
        %v1602 = vld [vmem:[#allocation8 + $0x50] sm:$0xff]
        %v1603 = vld [vmem:[#allocation8 + $0x58] sm:$0xff]
        %v1604 = vld [vmem:[#allocation8 + $0x60] sm:$0xff]
        %v1605 = vld [vmem:[#allocation8 + $0x68] sm:$0xff]
        %v1606 = vld [vmem:[#allocation8 + $0x70] sm:$0xff]
        %v1607 = vld [vmem:[#allocation8 + $0x78] sm:$0xff]
        %v1608 = vld [vmem:[#allocation8 + $0x80] sm:$0xff]
        %v1609 = vld [vmem:[#allocation8 + $0x88] sm:$0xff]
        %v1610 = vld [vmem:[#allocation8 + $0x90] sm:$0xff]
        %v1611 = vld [vmem:[#allocation8 + $0x98] sm:$0xff]
        %v1612 = vld [vmem:[#allocation8 + $0xa0] sm:$0xff]
        %v1613 = vld [vmem:[#allocation8 + $0xa8] sm:$0xff]
        %v1614 = vld [vmem:[#allocation8 + $0xb0] sm:$0xff]
        %v1615 = vld [vmem:[#allocation8 + $0xb8] sm:$0xff]
        %v1616 = vld [vmem:[#allocation8 + $0xc0] sm:$0xff]
        %v1617 = vld [vmem:[#allocation8 + $0xc8] sm:$0xff]
        %v1618 = vld [vmem:[#allocation8 + $0xd0] sm:$0xff]
        %v1619 = vld [vmem:[#allocation8 + $0xd8] sm:$0xff]
        %v1620 = vld [vmem:[#allocation8 + $0xe0] sm:$0xff]
        %v1621 = vld [vmem:[#allocation8 + $0xe8] sm:$0xff]
        %v1622 = vld [vmem:[#allocation8 + $0xf0] sm:$0xff]
        %v1623 = vld [vmem:[#allocation8 + $0xf8] sm:$0xff]
        %v1624 = vld [vmem:[#allocation8 + $0x100] sm:$0xff]
        %v1625 = vld [vmem:[#allocation8 + $0x108] sm:$0xff]
        %v1626 = vld [vmem:[#allocation8 + $0x110] sm:$0xff]
        %v1627 = vld [vmem:[#allocation8 + $0x118] sm:$0xff]
        %v1628 = vld [vmem:[#allocation8 + $0x120] sm:$0xff]
        %v1629 = vld [vmem:[#allocation8 + $0x128] sm:$0xff]
        %v1630 = vld [vmem:[#allocation8 + $0x130] sm:$0xff]
        %v1631 = vld [vmem:[#allocation8 + $0x138] sm:$0xff]
        %v1632 = vld [vmem:[#allocation8 + $0x140] sm:$0xff]
        %v1633 = vld [vmem:[#allocation8 + $0x148] sm:$0xff]
        %v1634 = vld [vmem:[#allocation8 + $0x150] sm:$0xff]
        %v1635 = vld [vmem:[#allocation8 + $0x158] sm:$0xff]
        %v1636 = vld [vmem:[#allocation8 + $0x160] sm:$0xff]
        %v1637 = vld [vmem:[#allocation8 + $0x168] sm:$0xff]
        %v1638 = vld [vmem:[#allocation8 + $0x170] sm:$0xff]
        %v1639 = vld [vmem:[#allocation8 + $0x178] sm:$0xff]
        %v1640 = vld [vmem:[#allocation8 + $0x180] sm:$0xff]
        %v1641 = vld [vmem:[#allocation8 + $0x188] sm:$0xff]
        %v1642 = vld [vmem:[#allocation8 + $0x190] sm:$0xff]
        %v1643 = vld [vmem:[#allocation8 + $0x198] sm:$0xff]
        %v1644 = vld [vmem:[#allocation8 + $0x1a0] sm:$0xff]
        %v1645 = vld [vmem:[#allocation8 + $0x1a8] sm:$0xff]
        %v1646 = vld [vmem:[#allocation8 + $0x1b0] sm:$0xff]
        %v1647 = vld [vmem:[#allocation8 + $0x1b8] sm:$0xff]
        %v1648 = vld [vmem:[#allocation8 + $0x1c0] sm:$0xff]
        %v1649 = vld [vmem:[#allocation8 + $0x1c8] sm:$0xff]
        %v1650 = vld [vmem:[#allocation8 + $0x1d0] sm:$0xff]
        %v1651 = vld [vmem:[#allocation8 + $0x1d8] sm:$0xff]
        %v1652 = vld [vmem:[#allocation8 + $0x1e0] sm:$0xff]
        %v1653 = vld [vmem:[#allocation8 + $0x1e8] sm:$0xff]
        %v1654 = vld [vmem:[#allocation8 + $0x1f0] sm:$0xff]
        %v1655 = vld [vmem:[#allocation8 + $0x1f8] sm:$0xff]
        %v1656 = vadd.f32 %v603, %v1592
        %v1657 = vadd.f32 %v606, %v1593
        %v1658 = vadd.f32 %v611, %v1594
        %v1659 = vadd.f32 %v614, %v1595
        %v1660 = vadd.f32 %v668, %v1596
        %v1661 = vadd.f32 %v671, %v1597
        %v1662 = vadd.f32 %v676, %v1598
        %v1663 = vadd.f32 %v679, %v1599
        %v1664 = vadd.f32 %v733, %v1600
        %v1665 = vadd.f32 %v736, %v1601
        %v1666 = vadd.f32 %v741, %v1602
        %v1667 = vadd.f32 %v744, %v1603
        %v1668 = vadd.f32 %v798, %v1604
        %v1669 = vadd.f32 %v801, %v1605
        %v1670 = vadd.f32 %v806, %v1606
        %v1671 = vadd.f32 %v809, %v1607
        %v1672 = vadd.f32 %v863, %v1608
        %v1673 = vadd.f32 %v866, %v1609
        %v1674 = vadd.f32 %v871, %v1610
        %v1675 = vadd.f32 %v874, %v1611
        %v1676 = vadd.f32 %v928, %v1612
        %v1677 = vadd.f32 %v931, %v1613
        %v1678 = vadd.f32 %v936, %v1614
        %v1679 = vadd.f32 %v939, %v1615
        %v1680 = vadd.f32 %v993, %v1616
        %v1681 = vadd.f32 %v996, %v1617
        %v1682 = vadd.f32 %v1001, %v1618
        %v1683 = vadd.f32 %v1004, %v1619
        %v1684 = vadd.f32 %v1058, %v1620
        %v1685 = vadd.f32 %v1061, %v1621
        %v1686 = vadd.f32 %v1066, %v1622
        %v1687 = vadd.f32 %v1069, %v1623
        %v1688 = vadd.f32 %v1123, %v1624
        %v1689 = vadd.f32 %v1126, %v1625
        %v1690 = vadd.f32 %v1131, %v1626
        %v1691 = vadd.f32 %v1134, %v1627
        %v1692 = vadd.f32 %v1188, %v1628
        %v1693 = vadd.f32 %v1191, %v1629
        %v1694 = vadd.f32 %v1196, %v1630
        %v1695 = vadd.f32 %v1199, %v1631
        %v1696 = vadd.f32 %v1253, %v1632
        %v1697 = vadd.f32 %v1256, %v1633
        %v1698 = vadd.f32 %v1261, %v1634
        %v1699 = vadd.f32 %v1264, %v1635
        %v1700 = vadd.f32 %v1318, %v1636
        %v1701 = vadd.f32 %v1321, %v1637
        %v1702 = vadd.f32 %v1326, %v1638
        %v1703 = vadd.f32 %v1329, %v1639
        %v1704 = vadd.f32 %v1383, %v1640
        %v1705 = vadd.f32 %v1386, %v1641
        %v1706 = vadd.f32 %v1391, %v1642
        %v1707 = vadd.f32 %v1394, %v1643
        %v1708 = vadd.f32 %v1448, %v1644
        %v1709 = vadd.f32 %v1451, %v1645
        %v1710 = vadd.f32 %v1456, %v1646
        %v1711 = vadd.f32 %v1459, %v1647
        %v1712 = vadd.f32 %v1513, %v1648
        %v1713 = vadd.f32 %v1516, %v1649
        %v1714 = vadd.f32 %v1521, %v1650
        %v1715 = vadd.f32 %v1524, %v1651
        %v1716 = vadd.f32 %v1578, %v1652
        %v1717 = vadd.f32 %v1581, %v1653
        %v1718 = vadd.f32 %v1586, %v1654
        %v1719 = vadd.f32 %v1589, %v1655
        %v1720 = vsel %vm365, %v1656, -inf
        %1721 = vmax.xlane.f32.xlu0 %v1720
        %v1722 = vpop.xlane.xlu0 %1721
        %v1723 = vsel %vm365, %v1657, -inf
        %1724 = vmax.xlane.f32.xlu0 %v1723
        %v1725 = vpop.xlane.xlu0 %1724
        %v1726 = vsel %vm365, %v1658, -inf
        %1727 = vmax.xlane.f32.xlu0 %v1726
        %v1728 = vpop.xlane.xlu0 %1727
        %v1729 = vsel %vm365, %v1659, -inf
        %1730 = vmax.xlane.f32.xlu0 %v1729
        %v1731 = vpop.xlane.xlu0 %1730
        %v1732 = vsel %vm365, %v1660, -inf
        %1733 = vmax.xlane.f32.xlu0 %v1732
        %v1734 = vpop.xlane.xlu0 %1733
        %v1735 = vsel %vm365, %v1661, -inf
        %1736 = vmax.xlane.f32.xlu0 %v1735
        %v1737 = vpop.xlane.xlu0 %1736
        %v1738 = vsel %vm365, %v1662, -inf
        %1739 = vmax.xlane.f32.xlu0 %v1738
        %v1740 = vpop.xlane.xlu0 %1739
        %v1741 = vsel %vm365, %v1663, -inf
        %1742 = vmax.xlane.f32.xlu0 %v1741
        %v1743 = vpop.xlane.xlu0 %1742
        %v1744 = vsel %vm365, %v1664, -inf
        %1745 = vmax.xlane.f32.xlu0 %v1744
        %v1746 = vpop.xlane.xlu0 %1745
        %v1747 = vsel %vm365, %v1665, -inf
        %1748 = vmax.xlane.f32.xlu0 %v1747
        %v1749 = vpop.xlane.xlu0 %1748
        %v1750 = vsel %vm365, %v1666, -inf
        %1751 = vmax.xlane.f32.xlu0 %v1750
        %v1752 = vpop.xlane.xlu0 %1751
        %v1753 = vsel %vm365, %v1667, -inf
        %1754 = vmax.xlane.f32.xlu0 %v1753
        %v1755 = vpop.xlane.xlu0 %1754
        %v1756 = vsel %vm365, %v1668, -inf
        %1757 = vmax.xlane.f32.xlu0 %v1756
        %v1758 = vpop.xlane.xlu0 %1757
        %v1759 = vsel %vm365, %v1669, -inf
        %1760 = vmax.xlane.f32.xlu0 %v1759
        %v1761 = vpop.xlane.xlu0 %1760
        %v1762 = vsel %vm365, %v1670, -inf
        %1763 = vmax.xlane.f32.xlu0 %v1762
        %v1764 = vpop.xlane.xlu0 %1763
        %v1765 = vsel %vm365, %v1671, -inf
        %1766 = vmax.xlane.f32.xlu0 %v1765
        %v1767 = vpop.xlane.xlu0 %1766
        %v1768 = vsel %vm365, %v1672, -inf
        %1769 = vmax.xlane.f32.xlu0 %v1768
        %v1770 = vpop.xlane.xlu0 %1769
        %v1771 = vsel %vm365, %v1673, -inf
        %1772 = vmax.xlane.f32.xlu0 %v1771
        %v1773 = vpop.xlane.xlu0 %1772
        %v1774 = vsel %vm365, %v1674, -inf
        %1775 = vmax.xlane.f32.xlu0 %v1774
        %v1776 = vpop.xlane.xlu0 %1775
        %v1777 = vsel %vm365, %v1675, -inf
        %1778 = vmax.xlane.f32.xlu0 %v1777
        %v1779 = vpop.xlane.xlu0 %1778
        %v1780 = vsel %vm365, %v1676, -inf
        %1781 = vmax.xlane.f32.xlu0 %v1780
        %v1782 = vpop.xlane.xlu0 %1781
        %v1783 = vsel %vm365, %v1677, -inf
        %1784 = vmax.xlane.f32.xlu0 %v1783
        %v1785 = vpop.xlane.xlu0 %1784
        %v1786 = vsel %vm365, %v1678, -inf
        %1787 = vmax.xlane.f32.xlu0 %v1786
        %v1788 = vpop.xlane.xlu0 %1787
        %v1789 = vsel %vm365, %v1679, -inf
        %1790 = vmax.xlane.f32.xlu0 %v1789
        %v1791 = vpop.xlane.xlu0 %1790
        %v1792 = vsel %vm365, %v1680, -inf
        %1793 = vmax.xlane.f32.xlu0 %v1792
        %v1794 = vpop.xlane.xlu0 %1793
        %v1795 = vsel %vm365, %v1681, -inf
        %1796 = vmax.xlane.f32.xlu0 %v1795
        %v1797 = vpop.xlane.xlu0 %1796
        %v1798 = vsel %vm365, %v1682, -inf
        %1799 = vmax.xlane.f32.xlu0 %v1798
        %v1800 = vpop.xlane.xlu0 %1799
        %v1801 = vsel %vm365, %v1683, -inf
        %1802 = vmax.xlane.f32.xlu0 %v1801
        %v1803 = vpop.xlane.xlu0 %1802
        %v1804 = vsel %vm365, %v1684, -inf
        %1805 = vmax.xlane.f32.xlu0 %v1804
        %v1806 = vpop.xlane.xlu0 %1805
        %v1807 = vsel %vm365, %v1685, -inf
        %1808 = vmax.xlane.f32.xlu0 %v1807
        %v1809 = vpop.xlane.xlu0 %1808
        %v1810 = vsel %vm365, %v1686, -inf
        %1811 = vmax.xlane.f32.xlu0 %v1810
        %v1812 = vpop.xlane.xlu0 %1811
        %v1813 = vsel %vm365, %v1687, -inf
        %1814 = vmax.xlane.f32.xlu0 %v1813
        %v1815 = vpop.xlane.xlu0 %1814
        %v1816 = vsel %vm365, %v1688, -inf
        %1817 = vmax.xlane.f32.xlu0 %v1816
        %v1818 = vpop.xlane.xlu0 %1817
        %v1819 = vsel %vm365, %v1689, -inf
        %1820 = vmax.xlane.f32.xlu0 %v1819
        %v1821 = vpop.xlane.xlu0 %1820
        %v1822 = vsel %vm365, %v1690, -inf
        %1823 = vmax.xlane.f32.xlu0 %v1822
        %v1824 = vpop.xlane.xlu0 %1823
        %v1825 = vsel %vm365, %v1691, -inf
        %1826 = vmax.xlane.f32.xlu0 %v1825
        %v1827 = vpop.xlane.xlu0 %1826
        %v1828 = vsel %vm365, %v1692, -inf
        %1829 = vmax.xlane.f32.xlu0 %v1828
        %v1830 = vpop.xlane.xlu0 %1829
        %v1831 = vsel %vm365, %v1693, -inf
        %1832 = vmax.xlane.f32.xlu0 %v1831
        %v1833 = vpop.xlane.xlu0 %1832
        %v1834 = vsel %vm365, %v1694, -inf
        %1835 = vmax.xlane.f32.xlu0 %v1834
        %v1836 = vpop.xlane.xlu0 %1835
        %v1837 = vsel %vm365, %v1695, -inf
        %1838 = vmax.xlane.f32.xlu0 %v1837
        %v1839 = vpop.xlane.xlu0 %1838
        %v1840 = vsel %vm365, %v1696, -inf
        %1841 = vmax.xlane.f32.xlu0 %v1840
        %v1842 = vpop.xlane.xlu0 %1841
        %v1843 = vsel %vm365, %v1697, -inf
        %1844 = vmax.xlane.f32.xlu0 %v1843
        %v1845 = vpop.xlane.xlu0 %1844
        %v1846 = vsel %vm365, %v1698, -inf
        %1847 = vmax.xlane.f32.xlu0 %v1846
        %v1848 = vpop.xlane.xlu0 %1847
        %v1849 = vsel %vm365, %v1699, -inf
        %1850 = vmax.xlane.f32.xlu0 %v1849
        %v1851 = vpop.xlane.xlu0 %1850
        %v1852 = vsel %vm365, %v1700, -inf
        %1853 = vmax.xlane.f32.xlu0 %v1852
        %v1854 = vpop.xlane.xlu0 %1853
        %v1855 = vsel %vm365, %v1701, -inf
        %1856 = vmax.xlane.f32.xlu0 %v1855
        %v1857 = vpop.xlane.xlu0 %1856
        %v1858 = vsel %vm365, %v1702, -inf
        %1859 = vmax.xlane.f32.xlu0 %v1858
        %v1860 = vpop.xlane.xlu0 %1859
        %v1861 = vsel %vm365, %v1703, -inf
        %1862 = vmax.xlane.f32.xlu0 %v1861
        %v1863 = vpop.xlane.xlu0 %1862
        %v1864 = vsel %vm365, %v1704, -inf
        %1865 = vmax.xlane.f32.xlu0 %v1864
        %v1866 = vpop.xlane.xlu0 %1865
        %v1867 = vsel %vm365, %v1705, -inf
        %1868 = vmax.xlane.f32.xlu0 %v1867
        %v1869 = vpop.xlane.xlu0 %1868
        %v1870 = vsel %vm365, %v1706, -inf
        %1871 = vmax.xlane.f32.xlu0 %v1870
        %v1872 = vpop.xlane.xlu0 %1871
        %v1873 = vsel %vm365, %v1707, -inf
        %1874 = vmax.xlane.f32.xlu0 %v1873
        %v1875 = vpop.xlane.xlu0 %1874
        %v1876 = vsel %vm365, %v1708, -inf
        %1877 = vmax.xlane.f32.xlu0 %v1876
        %v1878 = vpop.xlane.xlu0 %1877
        %v1879 = vsel %vm365, %v1709, -inf
        %1880 = vmax.xlane.f32.xlu0 %v1879
        %v1881 = vpop.xlane.xlu0 %1880
        %v1882 = vsel %vm365, %v1710, -inf
        %1883 = vmax.xlane.f32.xlu0 %v1882
        %v1884 = vpop.xlane.xlu0 %1883
        %v1885 = vsel %vm365, %v1711, -inf
        %1886 = vmax.xlane.f32.xlu0 %v1885
        %v1887 = vpop.xlane.xlu0 %1886
        %v1888 = vsel %vm365, %v1712, -inf
        %1889 = vmax.xlane.f32.xlu0 %v1888
        %v1890 = vpop.xlane.xlu0 %1889
        %v1891 = vsel %vm365, %v1713, -inf
        %1892 = vmax.xlane.f32.xlu0 %v1891
        %v1893 = vpop.xlane.xlu0 %1892
        %v1894 = vsel %vm365, %v1714, -inf
        %1895 = vmax.xlane.f32.xlu0 %v1894
        %v1896 = vpop.xlane.xlu0 %1895
        %v1897 = vsel %vm365, %v1715, -inf
        %1898 = vmax.xlane.f32.xlu0 %v1897
        %v1899 = vpop.xlane.xlu0 %1898
        %v1900 = vsel %vm365, %v1716, -inf
        %1901 = vmax.xlane.f32.xlu0 %v1900
        %v1902 = vpop.xlane.xlu0 %1901
        %v1903 = vsel %vm365, %v1717, -inf
        %1904 = vmax.xlane.f32.xlu0 %v1903
        %v1905 = vpop.xlane.xlu0 %1904
        %v1906 = vsel %vm365, %v1718, -inf
        %1907 = vmax.xlane.f32.xlu0 %v1906
        %v1908 = vpop.xlane.xlu0 %1907
        %v1909 = vsel %vm365, %v1719, -inf
        %1910 = vmax.xlane.f32.xlu0 %v1909
        %v1911 = vpop.xlane.xlu0 %1910
        %v1912 = vsub.f32 %v1656, %v1722
        %v1913 = vsub.f32 %v1657, %v1725
        %v1914 = vsub.f32 %v1658, %v1728
        %v1915 = vsub.f32 %v1659, %v1731
        %v1916 = vsub.f32 %v1660, %v1734
        %v1917 = vsub.f32 %v1661, %v1737
        %v1918 = vsub.f32 %v1662, %v1740
        %v1919 = vsub.f32 %v1663, %v1743
        %v1920 = vsub.f32 %v1664, %v1746
        %v1921 = vsub.f32 %v1665, %v1749
        %v1922 = vsub.f32 %v1666, %v1752
        %v1923 = vsub.f32 %v1667, %v1755
        %v1924 = vsub.f32 %v1668, %v1758
        %v1925 = vsub.f32 %v1669, %v1761
        %v1926 = vsub.f32 %v1670, %v1764
        %v1927 = vsub.f32 %v1671, %v1767
        %v1928 = vsub.f32 %v1672, %v1770
        %v1929 = vsub.f32 %v1673, %v1773
        %v1930 = vsub.f32 %v1674, %v1776
        %v1931 = vsub.f32 %v1675, %v1779
        %v1932 = vsub.f32 %v1676, %v1782
        %v1933 = vsub.f32 %v1677, %v1785
        %v1934 = vsub.f32 %v1678, %v1788
        %v1935 = vsub.f32 %v1679, %v1791
        %v1936 = vsub.f32 %v1680, %v1794
        %v1937 = vsub.f32 %v1681, %v1797
        %v1938 = vsub.f32 %v1682, %v1800
        %v1939 = vsub.f32 %v1683, %v1803
        %v1940 = vsub.f32 %v1684, %v1806
        %v1941 = vsub.f32 %v1685, %v1809
        %v1942 = vsub.f32 %v1686, %v1812
        %v1943 = vsub.f32 %v1687, %v1815
        %v1944 = vsub.f32 %v1688, %v1818
        %v1945 = vsub.f32 %v1689, %v1821
        %v1946 = vsub.f32 %v1690, %v1824
        %v1947 = vsub.f32 %v1691, %v1827
        %v1948 = vsub.f32 %v1692, %v1830
        %v1949 = vsub.f32 %v1693, %v1833
        %v1950 = vsub.f32 %v1694, %v1836
        %v1951 = vsub.f32 %v1695, %v1839
        %v1952 = vsub.f32 %v1696, %v1842
        %v1953 = vsub.f32 %v1697, %v1845
        %v1954 = vsub.f32 %v1698, %v1848
        %v1955 = vsub.f32 %v1699, %v1851
        %v1956 = vsub.f32 %v1700, %v1854
        %v1957 = vsub.f32 %v1701, %v1857
        %v1958 = vsub.f32 %v1702, %v1860
        %v1959 = vsub.f32 %v1703, %v1863
        %v1960 = vsub.f32 %v1704, %v1866
        %v1961 = vsub.f32 %v1705, %v1869
        %v1962 = vsub.f32 %v1706, %v1872
        %v1963 = vsub.f32 %v1707, %v1875
        %v1964 = vsub.f32 %v1708, %v1878
        %v1965 = vsub.f32 %v1709, %v1881
        %v1966 = vsub.f32 %v1710, %v1884
        %v1967 = vsub.f32 %v1711, %v1887
        %v1968 = vsub.f32 %v1712, %v1890
        %v1969 = vsub.f32 %v1713, %v1893
        %v1970 = vsub.f32 %v1714, %v1896
        %v1971 = vsub.f32 %v1715, %v1899
        %v1972 = vsub.f32 %v1716, %v1902
        %v1973 = vsub.f32 %v1717, %v1905
        %v1974 = vsub.f32 %v1718, %v1908
        %v1975 = vsub.f32 %v1719, %v1911
        %v1976 = vmul.f32 %v1912, 1.442695
        %v1977 = vpow.pop %v1976
        %v1978 = vmul.f32 %v1913, 1.442695
        %v1979 = vpow.pop %v1978
        %v1980 = vmul.f32 %v1914, 1.442695
        %v1981 = vpow.pop %v1980
        %v1982 = vmul.f32 %v1915, 1.442695
        %v1983 = vpow.pop %v1982
        %v1984 = vmul.f32 %v1916, 1.442695
        %v1985 = vpow.pop %v1984
        %v1986 = vmul.f32 %v1917, 1.442695
        %v1987 = vpow.pop %v1986
        %v1988 = vmul.f32 %v1918, 1.442695
        %v1989 = vpow.pop %v1988
        %v1990 = vmul.f32 %v1919, 1.442695
        %v1991 = vpow.pop %v1990
        %v1992 = vmul.f32 %v1920, 1.442695
        %v1993 = vpow.pop %v1992
        %v1994 = vmul.f32 %v1921, 1.442695
        %v1995 = vpow.pop %v1994
        %v1996 = vmul.f32 %v1922, 1.442695
        %v1997 = vpow.pop %v1996
        %v1998 = vmul.f32 %v1923, 1.442695
        %v1999 = vpow.pop %v1998
        %v2000 = vmul.f32 %v1924, 1.442695
        %v2001 = vpow.pop %v2000
        %v2002 = vmul.f32 %v1925, 1.442695
        %v2003 = vpow.pop %v2002
        %v2004 = vmul.f32 %v1926, 1.442695
        %v2005 = vpow.pop %v2004
        %v2006 = vmul.f32 %v1927, 1.442695
        %v2007 = vpow.pop %v2006
        %v2008 = vmul.f32 %v1928, 1.442695
        %v2009 = vpow.pop %v2008
        %v2010 = vmul.f32 %v1929, 1.442695
        %v2011 = vpow.pop %v2010
        %v2012 = vmul.f32 %v1930, 1.442695
        %v2013 = vpow.pop %v2012
        %v2014 = vmul.f32 %v1931, 1.442695
        %v2015 = vpow.pop %v2014
        %v2016 = vmul.f32 %v1932, 1.442695
        %v2017 = vpow.pop %v2016
        %v2018 = vmul.f32 %v1933, 1.442695
        %v2019 = vpow.pop %v2018
        %v2020 = vmul.f32 %v1934, 1.442695
        %v2021 = vpow.pop %v2020
        %v2022 = vmul.f32 %v1935, 1.442695
        %v2023 = vpow.pop %v2022
        %v2024 = vmul.f32 %v1936, 1.442695
        %v2025 = vpow.pop %v2024
        %v2026 = vmul.f32 %v1937, 1.442695
        %v2027 = vpow.pop %v2026
        %v2028 = vmul.f32 %v1938, 1.442695
        %v2029 = vpow.pop %v2028
        %v2030 = vmul.f32 %v1939, 1.442695
        %v2031 = vpow.pop %v2030
        %v2032 = vmul.f32 %v1940, 1.442695
        %v2033 = vpow.pop %v2032
        %v2034 = vmul.f32 %v1941, 1.442695
        %v2035 = vpow.pop %v2034
        %v2036 = vmul.f32 %v1942, 1.442695
        %v2037 = vpow.pop %v2036
        %v2038 = vmul.f32 %v1943, 1.442695
        %v2039 = vpow.pop %v2038
        %v2040 = vmul.f32 %v1944, 1.442695
        %v2041 = vpow.pop %v2040
        %v2042 = vmul.f32 %v1945, 1.442695
        %v2043 = vpow.pop %v2042
        %v2044 = vmul.f32 %v1946, 1.442695
        %v2045 = vpow.pop %v2044
        %v2046 = vmul.f32 %v1947, 1.442695
        %v2047 = vpow.pop %v2046
        %v2048 = vmul.f32 %v1948, 1.442695
        %v2049 = vpow.pop %v2048
        %v2050 = vmul.f32 %v1949, 1.442695
        %v2051 = vpow.pop %v2050
        %v2052 = vmul.f32 %v1950, 1.442695
        %v2053 = vpow.pop %v2052
        %v2054 = vmul.f32 %v1951, 1.442695
        %v2055 = vpow.pop %v2054
        %v2056 = vmul.f32 %v1952, 1.442695
        %v2057 = vpow.pop %v2056
        %v2058 = vmul.f32 %v1953, 1.442695
        %v2059 = vpow.pop %v2058
        %v2060 = vmul.f32 %v1954, 1.442695
        %v2061 = vpow.pop %v2060
        %v2062 = vmul.f32 %v1955, 1.442695
        %v2063 = vpow.pop %v2062
        %v2064 = vmul.f32 %v1956, 1.442695
        %v2065 = vpow.pop %v2064
        %v2066 = vmul.f32 %v1957, 1.442695
        %v2067 = vpow.pop %v2066
        %v2068 = vmul.f32 %v1958, 1.442695
        %v2069 = vpow.pop %v2068
        %v2070 = vmul.f32 %v1959, 1.442695
        %v2071 = vpow.pop %v2070
        %v2072 = vmul.f32 %v1960, 1.442695
        %v2073 = vpow.pop %v2072
        %v2074 = vmul.f32 %v1961, 1.442695
        %v2075 = vpow.pop %v2074
        %v2076 = vmul.f32 %v1962, 1.442695
        %v2077 = vpow.pop %v2076
        %v2078 = vmul.f32 %v1963, 1.442695
        %v2079 = vpow.pop %v2078
        %v2080 = vmul.f32 %v1964, 1.442695
        %v2081 = vpow.pop %v2080
        %v2082 = vmul.f32 %v1965, 1.442695
        %v2083 = vpow.pop %v2082
        %v2084 = vmul.f32 %v1966, 1.442695
        %v2085 = vpow.pop %v2084
        %v2086 = vmul.f32 %v1967, 1.442695
        %v2087 = vpow.pop %v2086
        %v2088 = vmul.f32 %v1968, 1.442695
        %v2089 = vpow.pop %v2088
        %v2090 = vmul.f32 %v1969, 1.442695
        %v2091 = vpow.pop %v2090
        %v2092 = vmul.f32 %v1970, 1.442695
        %v2093 = vpow.pop %v2092
        %v2094 = vmul.f32 %v1971, 1.442695
        %v2095 = vpow.pop %v2094
        %v2096 = vmul.f32 %v1972, 1.442695
        %v2097 = vpow.pop %v2096
        %v2098 = vmul.f32 %v1973, 1.442695
        %v2099 = vpow.pop %v2098
        %v2100 = vmul.f32 %v1974, 1.442695
        %v2101 = vpow.pop %v2100
        %v2102 = vmul.f32 %v1975, 1.442695
        %v2103 = vpow.pop %v2102
        %v2104 = vsel %vm365, %v1977, 0.0
        %2105 = vadd.xlane.f32.xlu0 %v2104
        %v2106 = vpop.xlane.xlu0 %2105
        %v2107 = vsel %vm365, %v1979, 0.0
        %2108 = vadd.xlane.f32.xlu0 %v2107
        %v2109 = vpop.xlane.xlu0 %2108
        %v2110 = vsel %vm365, %v1981, 0.0
        %2111 = vadd.xlane.f32.xlu0 %v2110
        %v2112 = vpop.xlane.xlu0 %2111
        %v2113 = vsel %vm365, %v1983, 0.0
        %2114 = vadd.xlane.f32.xlu0 %v2113
        %v2115 = vpop.xlane.xlu0 %2114
        %v2116 = vsel %vm365, %v1985, 0.0
        %2117 = vadd.xlane.f32.xlu0 %v2116
        %v2118 = vpop.xlane.xlu0 %2117
        %v2119 = vsel %vm365, %v1987, 0.0
        %2120 = vadd.xlane.f32.xlu0 %v2119
        %v2121 = vpop.xlane.xlu0 %2120
        %v2122 = vsel %vm365, %v1989, 0.0
        %2123 = vadd.xlane.f32.xlu0 %v2122
        %v2124 = vpop.xlane.xlu0 %2123
        %v2125 = vsel %vm365, %v1991, 0.0
        %2126 = vadd.xlane.f32.xlu0 %v2125
        %v2127 = vpop.xlane.xlu0 %2126
        %v2128 = vsel %vm365, %v1993, 0.0
        %2129 = vadd.xlane.f32.xlu0 %v2128
        %v2130 = vpop.xlane.xlu0 %2129
        %v2131 = vsel %vm365, %v1995, 0.0
        %2132 = vadd.xlane.f32.xlu0 %v2131
        %v2133 = vpop.xlane.xlu0 %2132
        %v2134 = vsel %vm365, %v1997, 0.0
        %2135 = vadd.xlane.f32.xlu0 %v2134
        %v2136 = vpop.xlane.xlu0 %2135
        %v2137 = vsel %vm365, %v1999, 0.0
        %2138 = vadd.xlane.f32.xlu0 %v2137
        %v2139 = vpop.xlane.xlu0 %2138
        %v2140 = vsel %vm365, %v2001, 0.0
        %2141 = vadd.xlane.f32.xlu0 %v2140
        %v2142 = vpop.xlane.xlu0 %2141
        %v2143 = vsel %vm365, %v2003, 0.0
        %2144 = vadd.xlane.f32.xlu0 %v2143
        %v2145 = vpop.xlane.xlu0 %2144
        %v2146 = vsel %vm365, %v2005, 0.0
        %2147 = vadd.xlane.f32.xlu0 %v2146
        %v2148 = vpop.xlane.xlu0 %2147
        %v2149 = vsel %vm365, %v2007, 0.0
        %2150 = vadd.xlane.f32.xlu0 %v2149
        %v2151 = vpop.xlane.xlu0 %2150
        %v2152 = vsel %vm365, %v2009, 0.0
        %2153 = vadd.xlane.f32.xlu0 %v2152
        %v2154 = vpop.xlane.xlu0 %2153
        %v2155 = vsel %vm365, %v2011, 0.0
        %2156 = vadd.xlane.f32.xlu0 %v2155
        %v2157 = vpop.xlane.xlu0 %2156
        %v2158 = vsel %vm365, %v2013, 0.0
        %2159 = vadd.xlane.f32.xlu0 %v2158
        %v2160 = vpop.xlane.xlu0 %2159
        %v2161 = vsel %vm365, %v2015, 0.0
        %2162 = vadd.xlane.f32.xlu0 %v2161
        %v2163 = vpop.xlane.xlu0 %2162
        %v2164 = vsel %vm365, %v2017, 0.0
        %2165 = vadd.xlane.f32.xlu0 %v2164
        %v2166 = vpop.xlane.xlu0 %2165
        %v2167 = vsel %vm365, %v2019, 0.0
        %2168 = vadd.xlane.f32.xlu0 %v2167
        %v2169 = vpop.xlane.xlu0 %2168
        %v2170 = vsel %vm365, %v2021, 0.0
        %2171 = vadd.xlane.f32.xlu0 %v2170
        %v2172 = vpop.xlane.xlu0 %2171
        %v2173 = vsel %vm365, %v2023, 0.0
        %2174 = vadd.xlane.f32.xlu0 %v2173
        %v2175 = vpop.xlane.xlu0 %2174
        %v2176 = vsel %vm365, %v2025, 0.0
        %2177 = vadd.xlane.f32.xlu0 %v2176
        %v2178 = vpop.xlane.xlu0 %2177
        %v2179 = vsel %vm365, %v2027, 0.0
        %2180 = vadd.xlane.f32.xlu0 %v2179
        %v2181 = vpop.xlane.xlu0 %2180
        %v2182 = vsel %vm365, %v2029, 0.0
        %2183 = vadd.xlane.f32.xlu0 %v2182
        %v2184 = vpop.xlane.xlu0 %2183
        %v2185 = vsel %vm365, %v2031, 0.0
        %2186 = vadd.xlane.f32.xlu0 %v2185
        %v2187 = vpop.xlane.xlu0 %2186
        %v2188 = vsel %vm365, %v2033, 0.0
        %2189 = vadd.xlane.f32.xlu0 %v2188
        %v2190 = vpop.xlane.xlu0 %2189
        %v2191 = vsel %vm365, %v2035, 0.0
        %2192 = vadd.xlane.f32.xlu0 %v2191
        %v2193 = vpop.xlane.xlu0 %2192
        %v2194 = vsel %vm365, %v2037, 0.0
        %2195 = vadd.xlane.f32.xlu0 %v2194
        %v2196 = vpop.xlane.xlu0 %2195
        %v2197 = vsel %vm365, %v2039, 0.0
        %2198 = vadd.xlane.f32.xlu0 %v2197
        %v2199 = vpop.xlane.xlu0 %2198
        %v2200 = vsel %vm365, %v2041, 0.0
        %2201 = vadd.xlane.f32.xlu0 %v2200
        %v2202 = vpop.xlane.xlu0 %2201
        %v2203 = vsel %vm365, %v2043, 0.0
        %2204 = vadd.xlane.f32.xlu0 %v2203
        %v2205 = vpop.xlane.xlu0 %2204
        %v2206 = vsel %vm365, %v2045, 0.0
        %2207 = vadd.xlane.f32.xlu0 %v2206
        %v2208 = vpop.xlane.xlu0 %2207
        %v2209 = vsel %vm365, %v2047, 0.0
        %2210 = vadd.xlane.f32.xlu0 %v2209
        %v2211 = vpop.xlane.xlu0 %2210
        %v2212 = vsel %vm365, %v2049, 0.0
        %2213 = vadd.xlane.f32.xlu0 %v2212
        %v2214 = vpop.xlane.xlu0 %2213
        %v2215 = vsel %vm365, %v2051, 0.0
        %2216 = vadd.xlane.f32.xlu0 %v2215
        %v2217 = vpop.xlane.xlu0 %2216
        %v2218 = vsel %vm365, %v2053, 0.0
        %2219 = vadd.xlane.f32.xlu0 %v2218
        %v2220 = vpop.xlane.xlu0 %2219
        %v2221 = vsel %vm365, %v2055, 0.0
        %2222 = vadd.xlane.f32.xlu0 %v2221
        %v2223 = vpop.xlane.xlu0 %2222
        %v2224 = vsel %vm365, %v2057, 0.0
        %2225 = vadd.xlane.f32.xlu0 %v2224
        %v2226 = vpop.xlane.xlu0 %2225
        %v2227 = vsel %vm365, %v2059, 0.0
        %2228 = vadd.xlane.f32.xlu0 %v2227
        %v2229 = vpop.xlane.xlu0 %2228
        %v2230 = vsel %vm365, %v2061, 0.0
        %2231 = vadd.xlane.f32.xlu0 %v2230
        %v2232 = vpop.xlane.xlu0 %2231
        %v2233 = vsel %vm365, %v2063, 0.0
        %2234 = vadd.xlane.f32.xlu0 %v2233
        %v2235 = vpop.xlane.xlu0 %2234
        %v2236 = vsel %vm365, %v2065, 0.0
        %2237 = vadd.xlane.f32.xlu0 %v2236
        %v2238 = vpop.xlane.xlu0 %2237
        %v2239 = vsel %vm365, %v2067, 0.0
        %2240 = vadd.xlane.f32.xlu0 %v2239
        %v2241 = vpop.xlane.xlu0 %2240
        %v2242 = vsel %vm365, %v2069, 0.0
        %2243 = vadd.xlane.f32.xlu0 %v2242
        %v2244 = vpop.xlane.xlu0 %2243
        %v2245 = vsel %vm365, %v2071, 0.0
        %2246 = vadd.xlane.f32.xlu0 %v2245
        %v2247 = vpop.xlane.xlu0 %2246
        %v2248 = vsel %vm365, %v2073, 0.0
        %2249 = vadd.xlane.f32.xlu0 %v2248
        %v2250 = vpop.xlane.xlu0 %2249
        %v2251 = vsel %vm365, %v2075, 0.0
        %2252 = vadd.xlane.f32.xlu0 %v2251
        %v2253 = vpop.xlane.xlu0 %2252
        %v2254 = vsel %vm365, %v2077, 0.0
        %2255 = vadd.xlane.f32.xlu0 %v2254
        %v2256 = vpop.xlane.xlu0 %2255
        %v2257 = vsel %vm365, %v2079, 0.0
        %2258 = vadd.xlane.f32.xlu0 %v2257
        %v2259 = vpop.xlane.xlu0 %2258
        %v2260 = vsel %vm365, %v2081, 0.0
        %2261 = vadd.xlane.f32.xlu0 %v2260
        %v2262 = vpop.xlane.xlu0 %2261
        %v2263 = vsel %vm365, %v2083, 0.0
        %2264 = vadd.xlane.f32.xlu0 %v2263
        %v2265 = vpop.xlane.xlu0 %2264
        %v2266 = vsel %vm365, %v2085, 0.0
        %2267 = vadd.xlane.f32.xlu0 %v2266
        %v2268 = vpop.xlane.xlu0 %2267
        %v2269 = vsel %vm365, %v2087, 0.0
        %2270 = vadd.xlane.f32.xlu0 %v2269
        %v2271 = vpop.xlane.xlu0 %2270
        %v2272 = vsel %vm365, %v2089, 0.0
        %2273 = vadd.xlane.f32.xlu0 %v2272
        %v2274 = vpop.xlane.xlu0 %2273
        %v2275 = vsel %vm365, %v2091, 0.0
        %2276 = vadd.xlane.f32.xlu0 %v2275
        %v2277 = vpop.xlane.xlu0 %2276
        %v2278 = vsel %vm365, %v2093, 0.0
        %2279 = vadd.xlane.f32.xlu0 %v2278
        %v2280 = vpop.xlane.xlu0 %2279
        %v2281 = vsel %vm365, %v2095, 0.0
        %2282 = vadd.xlane.f32.xlu0 %v2281
        %v2283 = vpop.xlane.xlu0 %2282
        %v2284 = vsel %vm365, %v2097, 0.0
        %2285 = vadd.xlane.f32.xlu0 %v2284
        %v2286 = vpop.xlane.xlu0 %2285
        %v2287 = vsel %vm365, %v2099, 0.0
        %2288 = vadd.xlane.f32.xlu0 %v2287
        %v2289 = vpop.xlane.xlu0 %2288
        %v2290 = vsel %vm365, %v2101, 0.0
        %2291 = vadd.xlane.f32.xlu0 %v2290
        %v2292 = vpop.xlane.xlu0 %2291
        %v2293 = vsel %vm365, %v2103, 0.0
        %2294 = vadd.xlane.f32.xlu0 %v2293
        %v2295 = vpop.xlane.xlu0 %2294
        %v2296 = vrcp.pop %v2106
        %v2297 = vrcp.pop %v2109
        %v2298 = vrcp.pop %v2112
        %v2299 = vrcp.pop %v2115
        %v2300 = vrcp.pop %v2118
        %v2301 = vrcp.pop %v2121
        %v2302 = vrcp.pop %v2124
        %v2303 = vrcp.pop %v2127
        %v2304 = vrcp.pop %v2130
        %v2305 = vrcp.pop %v2133
        %v2306 = vrcp.pop %v2136
        %v2307 = vrcp.pop %v2139
        %v2308 = vrcp.pop %v2142
        %v2309 = vrcp.pop %v2145
        %v2310 = vrcp.pop %v2148
        %v2311 = vrcp.pop %v2151
        %v2312 = vrcp.pop %v2154
        %v2313 = vrcp.pop %v2157
        %v2314 = vrcp.pop %v2160
        %v2315 = vrcp.pop %v2163
        %v2316 = vrcp.pop %v2166
        %v2317 = vrcp.pop %v2169
        %v2318 = vrcp.pop %v2172
        %v2319 = vrcp.pop %v2175
        %v2320 = vrcp.pop %v2178
        %v2321 = vrcp.pop %v2181
        %v2322 = vrcp.pop %v2184
        %v2323 = vrcp.pop %v2187
        %v2324 = vrcp.pop %v2190
        %v2325 = vrcp.pop %v2193
        %v2326 = vrcp.pop %v2196
        %v2327 = vrcp.pop %v2199
        %v2328 = vrcp.pop %v2202
        %v2329 = vrcp.pop %v2205
        %v2330 = vrcp.pop %v2208
        %v2331 = vrcp.pop %v2211
        %v2332 = vrcp.pop %v2214
        %v2333 = vrcp.pop %v2217
        %v2334 = vrcp.pop %v2220
        %v2335 = vrcp.pop %v2223
        %v2336 = vrcp.pop %v2226
        %v2337 = vrcp.pop %v2229
        %v2338 = vrcp.pop %v2232
        %v2339 = vrcp.pop %v2235
        %v2340 = vrcp.pop %v2238
        %v2341 = vrcp.pop %v2241
        %v2342 = vrcp.pop %v2244
        %v2343 = vrcp.pop %v2247
        %v2344 = vrcp.pop %v2250
        %v2345 = vrcp.pop %v2253
        %v2346 = vrcp.pop %v2256
        %v2347 = vrcp.pop %v2259
        %v2348 = vrcp.pop %v2262
        %v2349 = vrcp.pop %v2265
        %v2350 = vrcp.pop %v2268
        %v2351 = vrcp.pop %v2271
        %v2352 = vrcp.pop %v2274
        %v2353 = vrcp.pop %v2277
        %v2354 = vrcp.pop %v2280
        %v2355 = vrcp.pop %v2283
        %v2356 = vrcp.pop %v2286
        %v2357 = vrcp.pop %v2289
        %v2358 = vrcp.pop %v2292
        %v2359 = vrcp.pop %v2295
        %v2360 = vmul.f32 %v1977, %v2296
        %v2361 = vmul.f32 %v1979, %v2297
        %v2362 = vmul.f32 %v1981, %v2298
        %v2363 = vmul.f32 %v1983, %v2299
        %v2364 = vmul.f32 %v1985, %v2300
        %v2365 = vmul.f32 %v1987, %v2301
        %v2366 = vmul.f32 %v1989, %v2302
        %v2367 = vmul.f32 %v1991, %v2303
        %v2368 = vmul.f32 %v1993, %v2304
        %v2369 = vmul.f32 %v1995, %v2305
        %v2370 = vmul.f32 %v1997, %v2306
        %v2371 = vmul.f32 %v1999, %v2307
        %v2372 = vmul.f32 %v2001, %v2308
        %v2373 = vmul.f32 %v2003, %v2309
        %v2374 = vmul.f32 %v2005, %v2310
        %v2375 = vmul.f32 %v2007, %v2311
        %v2376 = vmul.f32 %v2009, %v2312
        %v2377 = vmul.f32 %v2011, %v2313
        %v2378 = vmul.f32 %v2013, %v2314
        %v2379 = vmul.f32 %v2015, %v2315
        %v2380 = vmul.f32 %v2017, %v2316
        %v2381 = vmul.f32 %v2019, %v2317
        %v2382 = vmul.f32 %v2021, %v2318
        %v2383 = vmul.f32 %v2023, %v2319
        %v2384 = vmul.f32 %v2025, %v2320
        %v2385 = vmul.f32 %v2027, %v2321
        %v2386 = vmul.f32 %v2029, %v2322
        %v2387 = vmul.f32 %v2031, %v2323
        %v2388 = vmul.f32 %v2033, %v2324
        %v2389 = vmul.f32 %v2035, %v2325
        %v2390 = vmul.f32 %v2037, %v2326
        %v2391 = vmul.f32 %v2039, %v2327
        %v2392 = vmul.f32 %v2041, %v2328
        %v2393 = vmul.f32 %v2043, %v2329
        %v2394 = vmul.f32 %v2045, %v2330
        %v2395 = vmul.f32 %v2047, %v2331
        %v2396 = vmul.f32 %v2049, %v2332
        %v2397 = vmul.f32 %v2051, %v2333
        %v2398 = vmul.f32 %v2053, %v2334
        %v2399 = vmul.f32 %v2055, %v2335
        %v2400 = vmul.f32 %v2057, %v2336
        %v2401 = vmul.f32 %v2059, %v2337
        %v2402 = vmul.f32 %v2061, %v2338
        %v2403 = vmul.f32 %v2063, %v2339
        %v2404 = vmul.f32 %v2065, %v2340
        %v2405 = vmul.f32 %v2067, %v2341
        %v2406 = vmul.f32 %v2069, %v2342
        %v2407 = vmul.f32 %v2071, %v2343
        %v2408 = vmul.f32 %v2073, %v2344
        %v2409 = vmul.f32 %v2075, %v2345
        %v2410 = vmul.f32 %v2077, %v2346
        %v2411 = vmul.f32 %v2079, %v2347
        %v2412 = vmul.f32 %v2081, %v2348
        %v2413 = vmul.f32 %v2083, %v2349
        %v2414 = vmul.f32 %v2085, %v2350
        %v2415 = vmul.f32 %v2087, %v2351
        %v2416 = vmul.f32 %v2089, %v2352
        %v2417 = vmul.f32 %v2091, %v2353
        %v2418 = vmul.f32 %v2093, %v2354
        %v2419 = vmul.f32 %v2095, %v2355
        %v2420 = vmul.f32 %v2097, %v2356
        %v2421 = vmul.f32 %v2099, %v2357
        %v2422 = vmul.f32 %v2101, %v2358
        %v2423 = vmul.f32 %v2103, %v2359
        %v2424 = vpack.c.bf16 %v2361, %v2360
        %v2425 = vpack.c.bf16 %v2363, %v2362
        %v2426 = vpack.c.bf16 %v2365, %v2364
        %v2427 = vpack.c.bf16 %v2367, %v2366
        %v2428 = vpack.c.bf16 %v2369, %v2368
        %v2429 = vpack.c.bf16 %v2371, %v2370
        %v2430 = vpack.c.bf16 %v2373, %v2372
        %v2431 = vpack.c.bf16 %v2375, %v2374
        %v2432 = vpack.c.bf16 %v2377, %v2376
        %v2433 = vpack.c.bf16 %v2379, %v2378
        %v2434 = vpack.c.bf16 %v2381, %v2380
        %v2435 = vpack.c.bf16 %v2383, %v2382
        %v2436 = vpack.c.bf16 %v2385, %v2384
        %v2437 = vpack.c.bf16 %v2387, %v2386
        %v2438 = vpack.c.bf16 %v2389, %v2388
        %v2439 = vpack.c.bf16 %v2391, %v2390
        %v2440 = vpack.c.bf16 %v2393, %v2392
        %v2441 = vpack.c.bf16 %v2395, %v2394
        %v2442 = vpack.c.bf16 %v2397, %v2396
        %v2443 = vpack.c.bf16 %v2399, %v2398
        %v2444 = vpack.c.bf16 %v2401, %v2400
        %v2445 = vpack.c.bf16 %v2403, %v2402
        %v2446 = vpack.c.bf16 %v2405, %v2404
        %v2447 = vpack.c.bf16 %v2407, %v2406
        %v2448 = vpack.c.bf16 %v2409, %v2408
        %v2449 = vpack.c.bf16 %v2411, %v2410
        %v2450 = vpack.c.bf16 %v2413, %v2412
        %v2451 = vpack.c.bf16 %v2415, %v2414
        %v2452 = vpack.c.bf16 %v2417, %v2416
        %v2453 = vpack.c.bf16 %v2419, %v2418
        %v2454 = vpack.c.bf16 %v2421, %v2420
        %v2455 = vpack.c.bf16 %v2423, %v2422
        %2456 = vrot.lane.b32.xlu0 %v487, 64
        %v2457 = vpop.permute.xlu0 %2456
        %2458 = vrot.lane.b32.xlu0 %v488, 64
        %v2459 = vpop.permute.xlu0 %2458
        %v2463 = vsel %vm365, %v2424, 0
        %v2466 = vsel %vm365, %v2425, 0
        %2468 = vmatprep.subr.bf16.mxu0 0
        %2469 = vmatpush1.bf16.msra.mxu0 %v2457
        %2470 = vmatprep.subr.bf16.mxu0 0
        %2471 = vmatpush1.bf16.msra.mxu0 %v2459
        %2472 = vmatprep.subr.bf16.mxu0 0
        %2473 = vmatpush1.bf16.msra.mxu0 0
        %2474 = vmatprep.subr.bf16.mxu0 0
        %2475 = vmatpush1.bf16.msra.mxu0 0
        %2476 = vmatprep.subr.bf16.mxu0 0
        %2477 = vmatpush1.bf16.msra.mxu0 0
        %2478 = vmatprep.subr.bf16.mxu0 0
        %2479 = vmatpush1.bf16.msra.mxu0 0
        %2480 = vmatprep.subr.bf16.mxu0 0
        %2481 = vmatpush1.bf16.msra.mxu0 0
        %2482 = vmatprep.subr.bf16.mxu0 0
        %2483 = vmatpush1.bf16.msra.mxu0 0
        %2484 = vmatprep.subr.bf16.mxu0 0
        %2485 = vmatpush1.bf16.msra.mxu0 0
        %2486 = vmatprep.subr.bf16.mxu0 0
        %2487 = vmatpush1.bf16.msra.mxu0 0
        %2488 = vmatprep.subr.bf16.mxu0 0
        %2489 = vmatpush1.bf16.msra.mxu0 0
        %2490 = vmatprep.subr.bf16.mxu0 0
        %2491 = vmatpush1.bf16.msra.mxu0 0
        %2492 = vmatprep.subr.bf16.mxu0 0
        %2493 = vmatpush1.bf16.msra.mxu0 0
        %2494 = vmatprep.subr.bf16.mxu0 0
        %2495 = vmatpush1.bf16.msra.mxu0 0
        %2496 = vmatprep.subr.bf16.mxu0 0
        %2497 = vmatpush1.bf16.msra.mxu0 0
        %2498 = vmatprep.subr.bf16.mxu0 0
        %2499 = vmatpush1.bf16.msra.mxu0 0
        %2500 = vmatprep.mubr.bf16.mxu0 0
        %2501 = vmatmul.mubr.bf16.gmra.mrb[0].mxu0 %v2463
        %v2502 = vpop.f32.mrb[0].mxu0
        %v2503 = vadd.f32 0.0, %v2502
        %v2504 = vpop.f32.mrb[0].mxu0
        %v2505 = vpop.f32.mrb[0].mxu0
        %v2506 = vadd.f32 0.0, %v2505
        %v2507 = vpop.f32.mrb[0].mxu0
        %2508 = vmatprep.mubr.bf16.mxu0 0
        %2509 = vmatmul.mubr.bf16.gmra.mrb[0].mxu0 %v2466
        %v2510 = vpop.f32.mrb[0].mxu0
        %v2511 = vadd.f32 0.0, %v2510
        %v2512 = vpop.f32.mrb[0].mxu0
        %v2513 = vpop.f32.mrb[0].mxu0
        %v2514 = vadd.f32 0.0, %v2513
        %v2515 = vpop.f32.mrb[0].mxu0
        %2516 = vdwg.mxu0
        %2517 = vrot.lane.b32.xlu0 %v489, 64
        %v2518 = vpop.permute.xlu0 %2517
        %2519 = vrot.lane.b32.xlu0 %v490, 64
        %v2520 = vpop.permute.xlu0 %2519
        %v2524 = vsel %vm365, %v2426, 0
        %v2527 = vsel %vm365, %v2427, 0
        %2529 = vmatprep.subr.bf16.mxu0 0
        %2530 = vmatpush1.bf16.msra.mxu0 %v2518
        %2531 = vmatprep.subr.bf16.mxu0 0
        %2532 = vmatpush1.bf16.msra.mxu0 %v2520
        %2533 = vmatprep.subr.bf16.mxu0 0
        %2534 = vmatpush1.bf16.msra.mxu0 0
        %2535 = vmatprep.subr.bf16.mxu0 0
        %2536 = vmatpush1.bf16.msra.mxu0 0
        %2537 = vmatprep.subr.bf16.mxu0 0
        %2538 = vmatpush1.bf16.msra.mxu0 0
        %2539 = vmatprep.subr.bf16.mxu0 0
        %2540 = vmatpush1.bf16.msra.mxu0 0
        %2541 = vmatprep.subr.bf16.mxu0 0
        %2542 = vmatpush1.bf16.msra.mxu0 0
        %2543 = vmatprep.subr.bf16.mxu0 0
        %2544 = vmatpush1.bf16.msra.mxu0 0
        %2545 = vmatprep.subr.bf16.mxu0 0
        %2546 = vmatpush1.bf16.msra.mxu0 0
        %2547 = vmatprep.subr.bf16.mxu0 0
        %2548 = vmatpush1.bf16.msra.mxu0 0
        %2549 = vmatprep.subr.bf16.mxu0 0
        %2550 = vmatpush1.bf16.msra.mxu0 0
        %2551 = vmatprep.subr.bf16.mxu0 0
        %2552 = vmatpush1.bf16.msra.mxu0 0
        %2553 = vmatprep.subr.bf16.mxu0 0
        %2554 = vmatpush1.bf16.msra.mxu0 0
        %2555 = vmatprep.subr.bf16.mxu0 0
        %2556 = vmatpush1.bf16.msra.mxu0 0
        %2557 = vmatprep.subr.bf16.mxu0 0
        %2558 = vmatpush1.bf16.msra.mxu0 0
        %2559 = vmatprep.subr.bf16.mxu0 0
        %2560 = vmatpush1.bf16.msra.mxu0 0
        %2561 = vmatprep.mubr.bf16.mxu0 0
        %2562 = vmatmul.mubr.bf16.gmra.mrb[0].mxu0 %v2524
        %v2563 = vpop.f32.mrb[0].mxu0
        %v2564 = vadd.f32 0.0, %v2563
        %v2565 = vpop.f32.mrb[0].mxu0
        %v2566 = vpop.f32.mrb[0].mxu0
        %v2567 = vadd.f32 0.0, %v2566
        %v2568 = vpop.f32.mrb[0].mxu0
        %2569 = vmatprep.mubr.bf16.mxu0 0
        %2570 = vmatmul.mubr.bf16.gmra.mrb[0].mxu0 %v2527
        %v2571 = vpop.f32.mrb[0].mxu0
        %v2572 = vadd.f32 0.0, %v2571
        %v2573 = vpop.f32.mrb[0].mxu0
        %v2574 = vpop.f32.mrb[0].mxu0
        %v2575 = vadd.f32 0.0, %v2574
        %v2576 = vpop.f32.mrb[0].mxu0
        %2577 = vdwg.mxu0
        %2578 = vrot.lane.b32.xlu0 %v491, 64
        %v2579 = vpop.permute.xlu0 %2578
        %2580 = vrot.lane.b32.xlu0 %v492, 64
        %v2581 = vpop.permute.xlu0 %2580
        %v2585 = vsel %vm365, %v2428, 0
        %v2588 = vsel %vm365, %v2429, 0
        %2590 = vmatprep.subr.bf16.mxu0 0
        %2591 = vmatpush1.bf16.msra.mxu0 %v2579
        %2592 = vmatprep.subr.bf16.mxu0 0
        %2593 = vmatpush1.bf16.msra.mxu0 %v2581
        %2594 = vmatprep.subr.bf16.mxu0 0
        %2595 = vmatpush1.bf16.msra.mxu0 0
        %2596 = vmatprep.subr.bf16.mxu0 0
        %2597 = vmatpush1.bf16.msra.mxu0 0
        %2598 = vmatprep.subr.bf16.mxu0 0
        %2599 = vmatpush1.bf16.msra.mxu0 0
        %2600 = vmatprep.subr.bf16.mxu0 0
        %2601 = vmatpush1.bf16.msra.mxu0 0
        %2602 = vmatprep.subr.bf16.mxu0 0
        %2603 = vmatpush1.bf16.msra.mxu0 0
        %2604 = vmatprep.subr.bf16.mxu0 0
        %2605 = vmatpush1.bf16.msra.mxu0 0
        %2606 = vmatprep.subr.bf16.mxu0 0
        %2607 = vmatpush1.bf16.msra.mxu0 0
        %2608 = vmatprep.subr.bf16.mxu0 0
        %2609 = vmatpush1.bf16.msra.mxu0 0
        %2610 = vmatprep.subr.bf16.mxu0 0
        %2611 = vmatpush1.bf16.msra.mxu0 0
        %2612 = vmatprep.subr.bf16.mxu0 0
        %2613 = vmatpush1.bf16.msra.mxu0 0
        %2614 = vmatprep.subr.bf16.mxu0 0
        %2615 = vmatpush1.bf16.msra.mxu0 0
        %2616 = vmatprep.subr.bf16.mxu0 0
        %2617 = vmatpush1.bf16.msra.mxu0 0
        %2618 = vmatprep.subr.bf16.mxu0 0
        %2619 = vmatpush1.bf16.msra.mxu0 0
        %2620 = vmatprep.subr.bf16.mxu0 0
        %2621 = vmatpush1.bf16.msra.mxu0 0
        %2622 = vmatprep.mubr.bf16.mxu0 0
        %2623 = vmatmul.mubr.bf16.gmra.mrb[0].mxu0 %v2585
        %v2624 = vpop.f32.mrb[0].mxu0
        %v2625 = vadd.f32 0.0, %v2624
        %v2626 = vpop.f32.mrb[0].mxu0
        %v2627 = vpop.f32.mrb[0].mxu0
        %v2628 = vadd.f32 0.0, %v2627
        %v2629 = vpop.f32.mrb[0].mxu0
        %2630 = vmatprep.mubr.bf16.mxu0 0
        %2631 = vmatmul.mubr.bf16.gmra.mrb[0].mxu0 %v2588
        %v2632 = vpop.f32.mrb[0].mxu0
        %v2633 = vadd.f32 0.0, %v2632
        %v2634 = vpop.f32.mrb[0].mxu0
        %v2635 = vpop.f32.mrb[0].mxu0
        %v2636 = vadd.f32 0.0, %v2635
        %v2637 = vpop.f32.mrb[0].mxu0
        %2638 = vdwg.mxu0
        %2639 = vrot.lane.b32.xlu0 %v493, 64
        %v2640 = vpop.permute.xlu0 %2639
        %2641 = vrot.lane.b32.xlu0 %v494, 64
        %v2642 = vpop.permute.xlu0 %2641
        %v2646 = vsel %vm365, %v2430, 0
        %v2649 = vsel %vm365, %v2431, 0
        %2651 = vmatprep.subr.bf16.mxu0 0
        %2652 = vmatpush1.bf16.msra.mxu0 %v2640
        %2653 = vmatprep.subr.bf16.mxu0 0
        %2654 = vmatpush1.bf16.msra.mxu0 %v2642
        %2655 = vmatprep.subr.bf16.mxu0 0
        %2656 = vmatpush1.bf16.msra.mxu0 0
        %2657 = vmatprep.subr.bf16.mxu0 0
        %2658 = vmatpush1.bf16.msra.mxu0 0
        %2659 = vmatprep.subr.bf16.mxu0 0
        %2660 = vmatpush1.bf16.msra.mxu0 0
        %2661 = vmatprep.subr.bf16.mxu0 0
        %2662 = vmatpush1.bf16.msra.mxu0 0
        %2663 = vmatprep.subr.bf16.mxu0 0
        %2664 = vmatpush1.bf16.msra.mxu0 0
        %2665 = vmatprep.subr.bf16.mxu0 0
        %2666 = vmatpush1.bf16.msra.mxu0 0
        %2667 = vmatprep.subr.bf16.mxu0 0
        %2668 = vmatpush1.bf16.msra.mxu0 0
        %2669 = vmatprep.subr.bf16.mxu0 0
        %2670 = vmatpush1.bf16.msra.mxu0 0
        %2671 = vmatprep.subr.bf16.mxu0 0
        %2672 = vmatpush1.bf16.msra.mxu0 0
        %2673 = vmatprep.subr.bf16.mxu0 0
        %2674 = vmatpush1.bf16.msra.mxu0 0
        %2675 = vmatprep.subr.bf16.mxu0 0
        %2676 = vmatpush1.bf16.msra.mxu0 0
        %2677 = vmatprep.subr.bf16.mxu0 0
        %2678 = vmatpush1.bf16.msra.mxu0 0
        %2679 = vmatprep.subr.bf16.mxu0 0
        %2680 = vmatpush1.bf16.msra.mxu0 0
        %2681 = vmatprep.subr.bf16.mxu0 0
        %2682 = vmatpush1.bf16.msra.mxu0 0
        %2683 = vmatprep.mubr.bf16.mxu0 0
        %2684 = vmatmul.mubr.bf16.gmra.mrb[0].mxu0 %v2646
        %v2685 = vpop.f32.mrb[0].mxu0
        %v2686 = vadd.f32 0.0, %v2685
        %v2687 = vpop.f32.mrb[0].mxu0
        %v2688 = vpop.f32.mrb[0].mxu0
        %v2689 = vadd.f32 0.0, %v2688
        %v2690 = vpop.f32.mrb[0].mxu0
        %2691 = vmatprep.mubr.bf16.mxu0 0
        %2692 = vmatmul.mubr.bf16.gmra.mrb[0].mxu0 %v2649
        %v2693 = vpop.f32.mrb[0].mxu0
        %v2694 = vadd.f32 0.0, %v2693
        %v2695 = vpop.f32.mrb[0].mxu0
        %v2696 = vpop.f32.mrb[0].mxu0
        %v2697 = vadd.f32 0.0, %v2696
        %v2698 = vpop.f32.mrb[0].mxu0
        %2699 = vdwg.mxu0
        %2700 = vrot.lane.b32.xlu0 %v504, 64
        %v2701 = vpop.permute.xlu0 %2700
        %2702 = vrot.lane.b32.xlu0 %v506, 64
        %v2703 = vpop.permute.xlu0 %2702
        %v2707 = vsel %vm365, %v2432, 0
        %v2710 = vsel %vm365, %v2433, 0
        %2712 = vmatprep.subr.bf16.mxu0 0
        %2713 = vmatpush1.bf16.msra.mxu0 %v2701
        %2714 = vmatprep.subr.bf16.mxu0 0
        %2715 = vmatpush1.bf16.msra.mxu0 %v2703
        %2716 = vmatprep.subr.bf16.mxu0 0
        %2717 = vmatpush1.bf16.msra.mxu0 0
        %2718 = vmatprep.subr.bf16.mxu0 0
        %2719 = vmatpush1.bf16.msra.mxu0 0
        %2720 = vmatprep.subr.bf16.mxu0 0
        %2721 = vmatpush1.bf16.msra.mxu0 0
        %2722 = vmatprep.subr.bf16.mxu0 0
        %2723 = vmatpush1.bf16.msra.mxu0 0
        %2724 = vmatprep.subr.bf16.mxu0 0
        %2725 = vmatpush1.bf16.msra.mxu0 0
        %2726 = vmatprep.subr.bf16.mxu0 0
        %2727 = vmatpush1.bf16.msra.mxu0 0
        %2728 = vmatprep.subr.bf16.mxu0 0
        %2729 = vmatpush1.bf16.msra.mxu0 0
        %2730 = vmatprep.subr.bf16.mxu0 0
        %2731 = vmatpush1.bf16.msra.mxu0 0
        %2732 = vmatprep.subr.bf16.mxu0 0
        %2733 = vmatpush1.bf16.msra.mxu0 0
        %2734 = vmatprep.subr.bf16.mxu0 0
        %2735 = vmatpush1.bf16.msra.mxu0 0
        %2736 = vmatprep.subr.bf16.mxu0 0
        %2737 = vmatpush1.bf16.msra.mxu0 0
        %2738 = vmatprep.subr.bf16.mxu0 0
        %2739 = vmatpush1.bf16.msra.mxu0 0
        %2740 = vmatprep.subr.bf16.mxu0 0
        %2741 = vmatpush1.bf16.msra.mxu0 0
        %2742 = vmatprep.subr.bf16.mxu0 0
        %2743 = vmatpush1.bf16.msra.mxu0 0
        %2744 = vmatprep.mubr.bf16.mxu0 0
        %2745 = vmatmul.mubr.bf16.gmra.mrb[0].mxu0 %v2707
        %v2746 = vpop.f32.mrb[0].mxu0
        %v2747 = vadd.f32 0.0, %v2746
        %v2748 = vpop.f32.mrb[0].mxu0
        %v2749 = vpop.f32.mrb[0].mxu0
        %v2750 = vadd.f32 0.0, %v2749
        %v2751 = vpop.f32.mrb[0].mxu0
        %2752 = vmatprep.mubr.bf16.mxu0 0
        %2753 = vmatmul.mubr.bf16.gmra.mrb[0].mxu0 %v2710
        %v2754 = vpop.f32.mrb[0].mxu0
        %v2755 = vadd.f32 0.0, %v2754
        %v2756 = vpop.f32.mrb[0].mxu0
        %v2757 = vpop.f32.mrb[0].mxu0
        %v2758 = vadd.f32 0.0, %v2757
        %v2759 = vpop.f32.mrb[0].mxu0
        %2760 = vdwg.mxu0
        %2761 = vrot.lane.b32.xlu0 %v508, 64
        %v2762 = vpop.permute.xlu0 %2761
        %2763 = vrot.lane.b32.xlu0 %v510, 64
        %v2764 = vpop.permute.xlu0 %2763
        %v2768 = vsel %vm365, %v2434, 0
        %v2771 = vsel %vm365, %v2435, 0
        %2773 = vmatprep.subr.bf16.mxu0 0
        %2774 = vmatpush1.bf16.msra.mxu0 %v2762
        %2775 = vmatprep.subr.bf16.mxu0 0
        %2776 = vmatpush1.bf16.msra.mxu0 %v2764
        %2777 = vmatprep.subr.bf16.mxu0 0
        %2778 = vmatpush1.bf16.msra.mxu0 0
        %2779 = vmatprep.subr.bf16.mxu0 0
        %2780 = vmatpush1.bf16.msra.mxu0 0
        %2781 = vmatprep.subr.bf16.mxu0 0
        %2782 = vmatpush1.bf16.msra.mxu0 0
        %2783 = vmatprep.subr.bf16.mxu0 0
        %2784 = vmatpush1.bf16.msra.mxu0 0
        %2785 = vmatprep.subr.bf16.mxu0 0
        %2786 = vmatpush1.bf16.msra.mxu0 0
        %2787 = vmatprep.subr.bf16.mxu0 0
        %2788 = vmatpush1.bf16.msra.mxu0 0
        %2789 = vmatprep.subr.bf16.mxu0 0
        %2790 = vmatpush1.bf16.msra.mxu0 0
        %2791 = vmatprep.subr.bf16.mxu0 0
        %2792 = vmatpush1.bf16.msra.mxu0 0
        %2793 = vmatprep.subr.bf16.mxu0 0
        %2794 = vmatpush1.bf16.msra.mxu0 0
        %2795 = vmatprep.subr.bf16.mxu0 0
        %2796 = vmatpush1.bf16.msra.mxu0 0
        %2797 = vmatprep.subr.bf16.mxu0 0
        %2798 = vmatpush1.bf16.msra.mxu0 0
        %2799 = vmatprep.subr.bf16.mxu0 0
        %2800 = vmatpush1.bf16.msra.mxu0 0
        %2801 = vmatprep.subr.bf16.mxu0 0
        %2802 = vmatpush1.bf16.msra.mxu0 0
        %2803 = vmatprep.subr.bf16.mxu0 0
        %2804 = vmatpush1.bf16.msra.mxu0 0
        %2805 = vmatprep.mubr.bf16.mxu0 0
        %2806 = vmatmul.mubr.bf16.gmra.mrb[0].mxu0 %v2768
        %v2807 = vpop.f32.mrb[0].mxu0
        %v2808 = vadd.f32 0.0, %v2807
        %v2809 = vpop.f32.mrb[0].mxu0
        %v2810 = vpop.f32.mrb[0].mxu0
        %v2811 = vadd.f32 0.0, %v2810
        %v2812 = vpop.f32.mrb[0].mxu0
        %2813 = vmatprep.mubr.bf16.mxu0 0
        %2814 = vmatmul.mubr.bf16.gmra.mrb[0].mxu0 %v2771
        %v2815 = vpop.f32.mrb[0].mxu0
        %v2816 = vadd.f32 0.0, %v2815
        %v2817 = vpop.f32.mrb[0].mxu0
        %v2818 = vpop.f32.mrb[0].mxu0
        %v2819 = vadd.f32 0.0, %v2818
        %v2820 = vpop.f32.mrb[0].mxu0
        %2821 = vdwg.mxu0
        %2822 = vrot.lane.b32.xlu0 %v512, 64
        %v2823 = vpop.permute.xlu0 %2822
        %2824 = vrot.lane.b32.xlu0 %v514, 64
        %v2825 = vpop.permute.xlu0 %2824
        %v2829 = vsel %vm365, %v2436, 0
        %v2832 = vsel %vm365, %v2437, 0
        %2834 = vmatprep.subr.bf16.mxu0 0
        %2835 = vmatpush1.bf16.msra.mxu0 %v2823
        %2836 = vmatprep.subr.bf16.mxu0 0
        %2837 = vmatpush1.bf16.msra.mxu0 %v2825
        %2838 = vmatprep.subr.bf16.mxu0 0
        %2839 = vmatpush1.bf16.msra.mxu0 0
        %2840 = vmatprep.subr.bf16.mxu0 0
        %2841 = vmatpush1.bf16.msra.mxu0 0
        %2842 = vmatprep.subr.bf16.mxu0 0
        %2843 = vmatpush1.bf16.msra.mxu0 0
        %2844 = vmatprep.subr.bf16.mxu0 0
        %2845 = vmatpush1.bf16.msra.mxu0 0
        %2846 = vmatprep.subr.bf16.mxu0 0
        %2847 = vmatpush1.bf16.msra.mxu0 0
        %2848 = vmatprep.subr.bf16.mxu0 0
        %2849 = vmatpush1.bf16.msra.mxu0 0
        %2850 = vmatprep.subr.bf16.mxu0 0
        %2851 = vmatpush1.bf16.msra.mxu0 0
        %2852 = vmatprep.subr.bf16.mxu0 0
        %2853 = vmatpush1.bf16.msra.mxu0 0
        %2854 = vmatprep.subr.bf16.mxu0 0
        %2855 = vmatpush1.bf16.msra.mxu0 0
        %2856 = vmatprep.subr.bf16.mxu0 0
        %2857 = vmatpush1.bf16.msra.mxu0 0
        %2858 = vmatprep.subr.bf16.mxu0 0
        %2859 = vmatpush1.bf16.msra.mxu0 0
        %2860 = vmatprep.subr.bf16.mxu0 0
        %2861 = vmatpush1.bf16.msra.mxu0 0
        %2862 = vmatprep.subr.bf16.mxu0 0
        %2863 = vmatpush1.bf16.msra.mxu0 0
        %2864 = vmatprep.subr.bf16.mxu0 0
        %2865 = vmatpush1.bf16.msra.mxu0 0
        %2866 = vmatprep.mubr.bf16.mxu0 0
        %2867 = vmatmul.mubr.bf16.gmra.mrb[0].mxu0 %v2829
        %v2868 = vpop.f32.mrb[0].mxu0
        %v2869 = vadd.f32 0.0, %v2868
        %v2870 = vpop.f32.mrb[0].mxu0
        %v2871 = vpop.f32.mrb[0].mxu0
        %v2872 = vadd.f32 0.0, %v2871
        %v2873 = vpop.f32.mrb[0].mxu0
        %2874 = vmatprep.mubr.bf16.mxu0 0
        %2875 = vmatmul.mubr.bf16.gmra.mrb[0].mxu0 %v2832
        %v2876 = vpop.f32.mrb[0].mxu0
        %v2877 = vadd.f32 0.0, %v2876
        %v2878 = vpop.f32.mrb[0].mxu0
        %v2879 = vpop.f32.mrb[0].mxu0
        %v2880 = vadd.f32 0.0, %v2879
        %v2881 = vpop.f32.mrb[0].mxu0
        %2882 = vdwg.mxu0
        %2883 = vrot.lane.b32.xlu0 %v516, 64
        %v2884 = vpop.permute.xlu0 %2883
        %2885 = vrot.lane.b32.xlu0 %v518, 64
        %v2886 = vpop.permute.xlu0 %2885
        %v2890 = vsel %vm365, %v2438, 0
        %v2893 = vsel %vm365, %v2439, 0
        %2895 = vmatprep.subr.bf16.mxu0 0
        %2896 = vmatpush1.bf16.msra.mxu0 %v2884
        %2897 = vmatprep.subr.bf16.mxu0 0
        %2898 = vmatpush1.bf16.msra.mxu0 %v2886
        %2899 = vmatprep.subr.bf16.mxu0 0
        %2900 = vmatpush1.bf16.msra.mxu0 0
        %2901 = vmatprep.subr.bf16.mxu0 0
        %2902 = vmatpush1.bf16.msra.mxu0 0
        %2903 = vmatprep.subr.bf16.mxu0 0
        %2904 = vmatpush1.bf16.msra.mxu0 0
        %2905 = vmatprep.subr.bf16.mxu0 0
        %2906 = vmatpush1.bf16.msra.mxu0 0
        %2907 = vmatprep.subr.bf16.mxu0 0
        %2908 = vmatpush1.bf16.msra.mxu0 0
        %2909 = vmatprep.subr.bf16.mxu0 0
        %2910 = vmatpush1.bf16.msra.mxu0 0
        %2911 = vmatprep.subr.bf16.mxu0 0
        %2912 = vmatpush1.bf16.msra.mxu0 0
        %2913 = vmatprep.subr.bf16.mxu0 0
        %2914 = vmatpush1.bf16.msra.mxu0 0
        %2915 = vmatprep.subr.bf16.mxu0 0
        %2916 = vmatpush1.bf16.msra.mxu0 0
        %2917 = vmatprep.subr.bf16.mxu0 0
        %2918 = vmatpush1.bf16.msra.mxu0 0
        %2919 = vmatprep.subr.bf16.mxu0 0
        %2920 = vmatpush1.bf16.msra.mxu0 0
        %2921 = vmatprep.subr.bf16.mxu0 0
        %2922 = vmatpush1.bf16.msra.mxu0 0
        %2923 = vmatprep.subr.bf16.mxu0 0
        %2924 = vmatpush1.bf16.msra.mxu0 0
        %2925 = vmatprep.subr.bf16.mxu0 0
        %2926 = vmatpush1.bf16.msra.mxu0 0
        %2927 = vmatprep.mubr.bf16.mxu0 0
        %2928 = vmatmul.mubr.bf16.gmra.mrb[0].mxu0 %v2890
        %v2929 = vpop.f32.mrb[0].mxu0
        %v2930 = vadd.f32 0.0, %v2929
        %v2931 = vpop.f32.mrb[0].mxu0
        %v2932 = vpop.f32.mrb[0].mxu0
        %v2933 = vadd.f32 0.0, %v2932
        %v2934 = vpop.f32.mrb[0].mxu0
        %2935 = vmatprep.mubr.bf16.mxu0 0
        %2936 = vmatmul.mubr.bf16.gmra.mrb[0].mxu0 %v2893
        %v2937 = vpop.f32.mrb[0].mxu0
        %v2938 = vadd.f32 0.0, %v2937
        %v2939 = vpop.f32.mrb[0].mxu0
        %v2940 = vpop.f32.mrb[0].mxu0
        %v2941 = vadd.f32 0.0, %v2940
        %v2942 = vpop.f32.mrb[0].mxu0
        %2943 = vdwg.mxu0
        %2944 = vrot.lane.b32.xlu0 %v520, 64
        %v2945 = vpop.permute.xlu0 %2944
        %2946 = vrot.lane.b32.xlu0 %v522, 64
        %v2947 = vpop.permute.xlu0 %2946
        %v2951 = vsel %vm365, %v2440, 0
        %v2954 = vsel %vm365, %v2441, 0
        %2956 = vmatprep.subr.bf16.mxu0 0
        %2957 = vmatpush1.bf16.msra.mxu0 %v2945
        %2958 = vmatprep.subr.bf16.mxu0 0
        %2959 = vmatpush1.bf16.msra.mxu0 %v2947
        %2960 = vmatprep.subr.bf16.mxu0 0
        %2961 = vmatpush1.bf16.msra.mxu0 0
        %2962 = vmatprep.subr.bf16.mxu0 0
        %2963 = vmatpush1.bf16.msra.mxu0 0
        %2964 = vmatprep.subr.bf16.mxu0 0
        %2965 = vmatpush1.bf16.msra.mxu0 0
        %2966 = vmatprep.subr.bf16.mxu0 0
        %2967 = vmatpush1.bf16.msra.mxu0 0
        %2968 = vmatprep.subr.bf16.mxu0 0
        %2969 = vmatpush1.bf16.msra.mxu0 0
        %2970 = vmatprep.subr.bf16.mxu0 0
        %2971 = vmatpush1.bf16.msra.mxu0 0
        %2972 = vmatprep.subr.bf16.mxu0 0
        %2973 = vmatpush1.bf16.msra.mxu0 0
        %2974 = vmatprep.subr.bf16.mxu0 0
        %2975 = vmatpush1.bf16.msra.mxu0 0
        %2976 = vmatprep.subr.bf16.mxu0 0
        %2977 = vmatpush1.bf16.msra.mxu0 0
        %2978 = vmatprep.subr.bf16.mxu0 0
        %2979 = vmatpush1.bf16.msra.mxu0 0
        %2980 = vmatprep.subr.bf16.mxu0 0
        %2981 = vmatpush1.bf16.msra.mxu0 0
        %2982 = vmatprep.subr.bf16.mxu0 0
        %2983 = vmatpush1.bf16.msra.mxu0 0
        %2984 = vmatprep.subr.bf16.mxu0 0
        %2985 = vmatpush1.bf16.msra.mxu0 0
        %2986 = vmatprep.subr.bf16.mxu0 0
        %2987 = vmatpush1.bf16.msra.mxu0 0
        %2988 = vmatprep.mubr.bf16.mxu0 0
        %2989 = vmatmul.mubr.bf16.gmra.mrb[0].mxu0 %v2951
        %v2990 = vpop.f32.mrb[0].mxu0
        %v2991 = vadd.f32 0.0, %v2990
        %v2992 = vpop.f32.mrb[0].mxu0
        %v2993 = vpop.f32.mrb[0].mxu0
        %v2994 = vadd.f32 0.0, %v2993
        %v2995 = vpop.f32.mrb[0].mxu0
        %2996 = vmatprep.mubr.bf16.mxu0 0
        %2997 = vmatmul.mubr.bf16.gmra.mrb[0].mxu0 %v2954
        %v2998 = vpop.f32.mrb[0].mxu0
        %v2999 = vadd.f32 0.0, %v2998
        %v3000 = vpop.f32.mrb[0].mxu0
        %v3001 = vpop.f32.mrb[0].mxu0
        %v3002 = vadd.f32 0.0, %v3001
        %v3003 = vpop.f32.mrb[0].mxu0
        %3004 = vdwg.mxu0
        %3005 = vrot.lane.b32.xlu0 %v524, 64
        %v3006 = vpop.permute.xlu0 %3005
        %3007 = vrot.lane.b32.xlu0 %v526, 64
        %v3008 = vpop.permute.xlu0 %3007
        %v3012 = vsel %vm365, %v2442, 0
        %v3015 = vsel %vm365, %v2443, 0
        %3017 = vmatprep.subr.bf16.mxu0 0
        %3018 = vmatpush1.bf16.msra.mxu0 %v3006
        %3019 = vmatprep.subr.bf16.mxu0 0
        %3020 = vmatpush1.bf16.msra.mxu0 %v3008
        %3021 = vmatprep.subr.bf16.mxu0 0
        %3022 = vmatpush1.bf16.msra.mxu0 0
        %3023 = vmatprep.subr.bf16.mxu0 0
        %3024 = vmatpush1.bf16.msra.mxu0 0
        %3025 = vmatprep.subr.bf16.mxu0 0
        %3026 = vmatpush1.bf16.msra.mxu0 0
        %3027 = vmatprep.subr.bf16.mxu0 0
        %3028 = vmatpush1.bf16.msra.mxu0 0
        %3029 = vmatprep.subr.bf16.mxu0 0
        %3030 = vmatpush1.bf16.msra.mxu0 0
        %3031 = vmatprep.subr.bf16.mxu0 0
        %3032 = vmatpush1.bf16.msra.mxu0 0
        %3033 = vmatprep.subr.bf16.mxu0 0
        %3034 = vmatpush1.bf16.msra.mxu0 0
        %3035 = vmatprep.subr.bf16.mxu0 0
        %3036 = vmatpush1.bf16.msra.mxu0 0
        %3037 = vmatprep.subr.bf16.mxu0 0
        %3038 = vmatpush1.bf16.msra.mxu0 0
        %3039 = vmatprep.subr.bf16.mxu0 0
        %3040 = vmatpush1.bf16.msra.mxu0 0
        %3041 = vmatprep.subr.bf16.mxu0 0
        %3042 = vmatpush1.bf16.msra.mxu0 0
        %3043 = vmatprep.subr.bf16.mxu0 0
        %3044 = vmatpush1.bf16.msra.mxu0 0
        %3045 = vmatprep.subr.bf16.mxu0 0
        %3046 = vmatpush1.bf16.msra.mxu0 0
        %3047 = vmatprep.subr.bf16.mxu0 0
        %3048 = vmatpush1.bf16.msra.mxu0 0
        %3049 = vmatprep.mubr.bf16.mxu0 0
        %3050 = vmatmul.mubr.bf16.gmra.mrb[0].mxu0 %v3012
        %v3051 = vpop.f32.mrb[0].mxu0
        %v3052 = vadd.f32 0.0, %v3051
        %v3053 = vpop.f32.mrb[0].mxu0
        %v3054 = vpop.f32.mrb[0].mxu0
        %v3055 = vadd.f32 0.0, %v3054
        %v3056 = vpop.f32.mrb[0].mxu0
        %3057 = vmatprep.mubr.bf16.mxu0 0
        %3058 = vmatmul.mubr.bf16.gmra.mrb[0].mxu0 %v3015
        %v3059 = vpop.f32.mrb[0].mxu0
        %v3060 = vadd.f32 0.0, %v3059
        %v3061 = vpop.f32.mrb[0].mxu0
        %v3062 = vpop.f32.mrb[0].mxu0
        %v3063 = vadd.f32 0.0, %v3062
        %v3064 = vpop.f32.mrb[0].mxu0
        %3065 = vdwg.mxu0
        %3066 = vrot.lane.b32.xlu0 %v528, 64
        %v3067 = vpop.permute.xlu0 %3066
        %3068 = vrot.lane.b32.xlu0 %v530, 64
        %v3069 = vpop.permute.xlu0 %3068
        %v3073 = vsel %vm365, %v2444, 0
        %v3076 = vsel %vm365, %v2445, 0
        %3078 = vmatprep.subr.bf16.mxu0 0
        %3079 = vmatpush1.bf16.msra.mxu0 %v3067
        %3080 = vmatprep.subr.bf16.mxu0 0
        %3081 = vmatpush1.bf16.msra.mxu0 %v3069
        %3082 = vmatprep.subr.bf16.mxu0 0
        %3083 = vmatpush1.bf16.msra.mxu0 0
        %3084 = vmatprep.subr.bf16.mxu0 0
        %3085 = vmatpush1.bf16.msra.mxu0 0
        %3086 = vmatprep.subr.bf16.mxu0 0
        %3087 = vmatpush1.bf16.msra.mxu0 0
        %3088 = vmatprep.subr.bf16.mxu0 0
        %3089 = vmatpush1.bf16.msra.mxu0 0
        %3090 = vmatprep.subr.bf16.mxu0 0
        %3091 = vmatpush1.bf16.msra.mxu0 0
        %3092 = vmatprep.subr.bf16.mxu0 0
        %3093 = vmatpush1.bf16.msra.mxu0 0
        %3094 = vmatprep.subr.bf16.mxu0 0
        %3095 = vmatpush1.bf16.msra.mxu0 0
        %3096 = vmatprep.subr.bf16.mxu0 0
        %3097 = vmatpush1.bf16.msra.mxu0 0
        %3098 = vmatprep.subr.bf16.mxu0 0
        %3099 = vmatpush1.bf16.msra.mxu0 0
        %3100 = vmatprep.subr.bf16.mxu0 0
        %3101 = vmatpush1.bf16.msra.mxu0 0
        %3102 = vmatprep.subr.bf16.mxu0 0
        %3103 = vmatpush1.bf16.msra.mxu0 0
        %3104 = vmatprep.subr.bf16.mxu0 0
        %3105 = vmatpush1.bf16.msra.mxu0 0
        %3106 = vmatprep.subr.bf16.mxu0 0
        %3107 = vmatpush1.bf16.msra.mxu0 0
        %3108 = vmatprep.subr.bf16.mxu0 0
        %3109 = vmatpush1.bf16.msra.mxu0 0
        %3110 = vmatprep.mubr.bf16.mxu0 0
        %3111 = vmatmul.mubr.bf16.gmra.mrb[0].mxu0 %v3073
        %v3112 = vpop.f32.mrb[0].mxu0
        %v3113 = vadd.f32 0.0, %v3112
        %v3114 = vpop.f32.mrb[0].mxu0
        %v3115 = vpop.f32.mrb[0].mxu0
        %v3116 = vadd.f32 0.0, %v3115
        %v3117 = vpop.f32.mrb[0].mxu0
        %3118 = vmatprep.mubr.bf16.mxu0 0
        %3119 = vmatmul.mubr.bf16.gmra.mrb[0].mxu0 %v3076
        %v3120 = vpop.f32.mrb[0].mxu0
        %v3121 = vadd.f32 0.0, %v3120
        %v3122 = vpop.f32.mrb[0].mxu0
        %v3123 = vpop.f32.mrb[0].mxu0
        %v3124 = vadd.f32 0.0, %v3123
        %v3125 = vpop.f32.mrb[0].mxu0
        %3126 = vdwg.mxu0
        %3127 = vrot.lane.b32.xlu0 %v532, 64
        %v3128 = vpop.permute.xlu0 %3127
        %3129 = vrot.lane.b32.xlu0 %v534, 64
        %v3130 = vpop.permute.xlu0 %3129
        %v3134 = vsel %vm365, %v2446, 0
        %v3137 = vsel %vm365, %v2447, 0
        %3139 = vmatprep.subr.bf16.mxu0 0
        %3140 = vmatpush1.bf16.msra.mxu0 %v3128
        %3141 = vmatprep.subr.bf16.mxu0 0
        %3142 = vmatpush1.bf16.msra.mxu0 %v3130
        %3143 = vmatprep.subr.bf16.mxu0 0
        %3144 = vmatpush1.bf16.msra.mxu0 0
        %3145 = vmatprep.subr.bf16.mxu0 0
        %3146 = vmatpush1.bf16.msra.mxu0 0
        %3147 = vmatprep.subr.bf16.mxu0 0
        %3148 = vmatpush1.bf16.msra.mxu0 0
        %3149 = vmatprep.subr.bf16.mxu0 0
        %3150 = vmatpush1.bf16.msra.mxu0 0
        %3151 = vmatprep.subr.bf16.mxu0 0
        %3152 = vmatpush1.bf16.msra.mxu0 0
        %3153 = vmatprep.subr.bf16.mxu0 0
        %3154 = vmatpush1.bf16.msra.mxu0 0
        %3155 = vmatprep.subr.bf16.mxu0 0
        %3156 = vmatpush1.bf16.msra.mxu0 0
        %3157 = vmatprep.subr.bf16.mxu0 0
        %3158 = vmatpush1.bf16.msra.mxu0 0
        %3159 = vmatprep.subr.bf16.mxu0 0
        %3160 = vmatpush1.bf16.msra.mxu0 0
        %3161 = vmatprep.subr.bf16.mxu0 0
        %3162 = vmatpush1.bf16.msra.mxu0 0
        %3163 = vmatprep.subr.bf16.mxu0 0
        %3164 = vmatpush1.bf16.msra.mxu0 0
        %3165 = vmatprep.subr.bf16.mxu0 0
        %3166 = vmatpush1.bf16.msra.mxu0 0
        %3167 = vmatprep.subr.bf16.mxu0 0
        %3168 = vmatpush1.bf16.msra.mxu0 0
        %3169 = vmatprep.subr.bf16.mxu0 0
        %3170 = vmatpush1.bf16.msra.mxu0 0
        %3171 = vmatprep.mubr.bf16.mxu0 0
        %3172 = vmatmul.mubr.bf16.gmra.mrb[0].mxu0 %v3134
        %v3173 = vpop.f32.mrb[0].mxu0
        %v3174 = vadd.f32 0.0, %v3173
        %v3175 = vpop.f32.mrb[0].mxu0
        %v3176 = vpop.f32.mrb[0].mxu0
        %v3177 = vadd.f32 0.0, %v3176
        %v3178 = vpop.f32.mrb[0].mxu0
        %3179 = vmatprep.mubr.bf16.mxu0 0
        %3180 = vmatmul.mubr.bf16.gmra.mrb[0].mxu0 %v3137
        %v3181 = vpop.f32.mrb[0].mxu0
        %v3182 = vadd.f32 0.0, %v3181
        %v3183 = vpop.f32.mrb[0].mxu0
        %v3184 = vpop.f32.mrb[0].mxu0
        %v3185 = vadd.f32 0.0, %v3184
        %v3186 = vpop.f32.mrb[0].mxu0
        %3187 = vdwg.mxu0
        %3188 = vrot.lane.b32.xlu0 %v536, 64
        %v3189 = vpop.permute.xlu0 %3188
        %3190 = vrot.lane.b32.xlu0 %v538, 64
        %v3191 = vpop.permute.xlu0 %3190
        %v3195 = vsel %vm365, %v2448, 0
        %v3198 = vsel %vm365, %v2449, 0
        %3200 = vmatprep.subr.bf16.mxu0 0
        %3201 = vmatpush1.bf16.msra.mxu0 %v3189
        %3202 = vmatprep.subr.bf16.mxu0 0
        %3203 = vmatpush1.bf16.msra.mxu0 %v3191
        %3204 = vmatprep.subr.bf16.mxu0 0
        %3205 = vmatpush1.bf16.msra.mxu0 0
        %3206 = vmatprep.subr.bf16.mxu0 0
        %3207 = vmatpush1.bf16.msra.mxu0 0
        %3208 = vmatprep.subr.bf16.mxu0 0
        %3209 = vmatpush1.bf16.msra.mxu0 0
        %3210 = vmatprep.subr.bf16.mxu0 0
        %3211 = vmatpush1.bf16.msra.mxu0 0
        %3212 = vmatprep.subr.bf16.mxu0 0
        %3213 = vmatpush1.bf16.msra.mxu0 0
        %3214 = vmatprep.subr.bf16.mxu0 0
        %3215 = vmatpush1.bf16.msra.mxu0 0
        %3216 = vmatprep.subr.bf16.mxu0 0
        %3217 = vmatpush1.bf16.msra.mxu0 0
        %3218 = vmatprep.subr.bf16.mxu0 0
        %3219 = vmatpush1.bf16.msra.mxu0 0
        %3220 = vmatprep.subr.bf16.mxu0 0
        %3221 = vmatpush1.bf16.msra.mxu0 0
        %3222 = vmatprep.subr.bf16.mxu0 0
        %3223 = vmatpush1.bf16.msra.mxu0 0
        %3224 = vmatprep.subr.bf16.mxu0 0
        %3225 = vmatpush1.bf16.msra.mxu0 0
        %3226 = vmatprep.subr.bf16.mxu0 0
        %3227 = vmatpush1.bf16.msra.mxu0 0
        %3228 = vmatprep.subr.bf16.mxu0 0
        %3229 = vmatpush1.bf16.msra.mxu0 0
        %3230 = vmatprep.subr.bf16.mxu0 0
        %3231 = vmatpush1.bf16.msra.mxu0 0
        %3232 = vmatprep.mubr.bf16.mxu0 0
        %3233 = vmatmul.mubr.bf16.gmra.mrb[0].mxu0 %v3195
        %v3234 = vpop.f32.mrb[0].mxu0
        %v3235 = vadd.f32 0.0, %v3234
        %v3236 = vpop.f32.mrb[0].mxu0
        %v3237 = vpop.f32.mrb[0].mxu0
        %v3238 = vadd.f32 0.0, %v3237
        %v3239 = vpop.f32.mrb[0].mxu0
        %3240 = vmatprep.mubr.bf16.mxu0 0
        %3241 = vmatmul.mubr.bf16.gmra.mrb[0].mxu0 %v3198
        %v3242 = vpop.f32.mrb[0].mxu0
        %v3243 = vadd.f32 0.0, %v3242
        %v3244 = vpop.f32.mrb[0].mxu0
        %v3245 = vpop.f32.mrb[0].mxu0
        %v3246 = vadd.f32 0.0, %v3245
        %v3247 = vpop.f32.mrb[0].mxu0
        %3248 = vdwg.mxu0
        %3249 = vrot.lane.b32.xlu0 %v540, 64
        %v3250 = vpop.permute.xlu0 %3249
        %3251 = vrot.lane.b32.xlu0 %v542, 64
        %v3252 = vpop.permute.xlu0 %3251
        %v3256 = vsel %vm365, %v2450, 0
        %v3259 = vsel %vm365, %v2451, 0
        %3261 = vmatprep.subr.bf16.mxu0 0
        %3262 = vmatpush1.bf16.msra.mxu0 %v3250
        %3263 = vmatprep.subr.bf16.mxu0 0
        %3264 = vmatpush1.bf16.msra.mxu0 %v3252
        %3265 = vmatprep.subr.bf16.mxu0 0
        %3266 = vmatpush1.bf16.msra.mxu0 0
        %3267 = vmatprep.subr.bf16.mxu0 0
        %3268 = vmatpush1.bf16.msra.mxu0 0
        %3269 = vmatprep.subr.bf16.mxu0 0
        %3270 = vmatpush1.bf16.msra.mxu0 0
        %3271 = vmatprep.subr.bf16.mxu0 0
        %3272 = vmatpush1.bf16.msra.mxu0 0
        %3273 = vmatprep.subr.bf16.mxu0 0
        %3274 = vmatpush1.bf16.msra.mxu0 0
        %3275 = vmatprep.subr.bf16.mxu0 0
        %3276 = vmatpush1.bf16.msra.mxu0 0
        %3277 = vmatprep.subr.bf16.mxu0 0
        %3278 = vmatpush1.bf16.msra.mxu0 0
        %3279 = vmatprep.subr.bf16.mxu0 0
        %3280 = vmatpush1.bf16.msra.mxu0 0
        %3281 = vmatprep.subr.bf16.mxu0 0
        %3282 = vmatpush1.bf16.msra.mxu0 0
        %3283 = vmatprep.subr.bf16.mxu0 0
        %3284 = vmatpush1.bf16.msra.mxu0 0
        %3285 = vmatprep.subr.bf16.mxu0 0
        %3286 = vmatpush1.bf16.msra.mxu0 0
        %3287 = vmatprep.subr.bf16.mxu0 0
        %3288 = vmatpush1.bf16.msra.mxu0 0
        %3289 = vmatprep.subr.bf16.mxu0 0
        %3290 = vmatpush1.bf16.msra.mxu0 0
        %3291 = vmatprep.subr.bf16.mxu0 0
        %3292 = vmatpush1.bf16.msra.mxu0 0
        %3293 = vmatprep.mubr.bf16.mxu0 0
        %3294 = vmatmul.mubr.bf16.gmra.mrb[0].mxu0 %v3256
        %v3295 = vpop.f32.mrb[0].mxu0
        %v3296 = vadd.f32 0.0, %v3295
        %v3297 = vpop.f32.mrb[0].mxu0
        %v3298 = vpop.f32.mrb[0].mxu0
        %v3299 = vadd.f32 0.0, %v3298
        %v3300 = vpop.f32.mrb[0].mxu0
        %3301 = vmatprep.mubr.bf16.mxu0 0
        %3302 = vmatmul.mubr.bf16.gmra.mrb[0].mxu0 %v3259
        %v3303 = vpop.f32.mrb[0].mxu0
        %v3304 = vadd.f32 0.0, %v3303
        %v3305 = vpop.f32.mrb[0].mxu0
        %v3306 = vpop.f32.mrb[0].mxu0
        %v3307 = vadd.f32 0.0, %v3306
        %v3308 = vpop.f32.mrb[0].mxu0
        %3309 = vdwg.mxu0
        %3310 = vrot.lane.b32.xlu0 %v544, 64
        %v3311 = vpop.permute.xlu0 %3310
        %3312 = vrot.lane.b32.xlu0 %v546, 64
        %v3313 = vpop.permute.xlu0 %3312
        %v3317 = vsel %vm365, %v2452, 0
        %v3320 = vsel %vm365, %v2453, 0
        %3322 = vmatprep.subr.bf16.mxu0 0
        %3323 = vmatpush1.bf16.msra.mxu0 %v3311
        %3324 = vmatprep.subr.bf16.mxu0 0
        %3325 = vmatpush1.bf16.msra.mxu0 %v3313
        %3326 = vmatprep.subr.bf16.mxu0 0
        %3327 = vmatpush1.bf16.msra.mxu0 0
        %3328 = vmatprep.subr.bf16.mxu0 0
        %3329 = vmatpush1.bf16.msra.mxu0 0
        %3330 = vmatprep.subr.bf16.mxu0 0
        %3331 = vmatpush1.bf16.msra.mxu0 0
        %3332 = vmatprep.subr.bf16.mxu0 0
        %3333 = vmatpush1.bf16.msra.mxu0 0
        %3334 = vmatprep.subr.bf16.mxu0 0
        %3335 = vmatpush1.bf16.msra.mxu0 0
        %3336 = vmatprep.subr.bf16.mxu0 0
        %3337 = vmatpush1.bf16.msra.mxu0 0
        %3338 = vmatprep.subr.bf16.mxu0 0
        %3339 = vmatpush1.bf16.msra.mxu0 0
        %3340 = vmatprep.subr.bf16.mxu0 0
        %3341 = vmatpush1.bf16.msra.mxu0 0
        %3342 = vmatprep.subr.bf16.mxu0 0
        %3343 = vmatpush1.bf16.msra.mxu0 0
        %3344 = vmatprep.subr.bf16.mxu0 0
        %3345 = vmatpush1.bf16.msra.mxu0 0
        %3346 = vmatprep.subr.bf16.mxu0 0
        %3347 = vmatpush1.bf16.msra.mxu0 0
        %3348 = vmatprep.subr.bf16.mxu0 0
        %3349 = vmatpush1.bf16.msra.mxu0 0
        %3350 = vmatprep.subr.bf16.mxu0 0
        %3351 = vmatpush1.bf16.msra.mxu0 0
        %3352 = vmatprep.subr.bf16.mxu0 0
        %3353 = vmatpush1.bf16.msra.mxu0 0
        %3354 = vmatprep.mubr.bf16.mxu0 0
        %3355 = vmatmul.mubr.bf16.gmra.mrb[0].mxu0 %v3317
        %v3356 = vpop.f32.mrb[0].mxu0
        %v3357 = vadd.f32 0.0, %v3356
        %v3358 = vpop.f32.mrb[0].mxu0
        %v3359 = vpop.f32.mrb[0].mxu0
        %v3360 = vadd.f32 0.0, %v3359
        %v3361 = vpop.f32.mrb[0].mxu0
        %3362 = vmatprep.mubr.bf16.mxu0 0
        %3363 = vmatmul.mubr.bf16.gmra.mrb[0].mxu0 %v3320
        %v3364 = vpop.f32.mrb[0].mxu0
        %v3365 = vadd.f32 0.0, %v3364
        %v3366 = vpop.f32.mrb[0].mxu0
        %v3367 = vpop.f32.mrb[0].mxu0
        %v3368 = vadd.f32 0.0, %v3367
        %v3369 = vpop.f32.mrb[0].mxu0
        %3370 = vdwg.mxu0
        %3371 = vrot.lane.b32.xlu0 %v548, 64
        %v3372 = vpop.permute.xlu0 %3371
        %3373 = vrot.lane.b32.xlu0 %v550, 64
        %v3374 = vpop.permute.xlu0 %3373
        %v3378 = vsel %vm365, %v2454, 0
        %v3381 = vsel %vm365, %v2455, 0
        %3383 = vmatprep.subr.bf16.mxu0 0
        %3384 = vmatpush1.bf16.msra.mxu0 %v3372
        %3385 = vmatprep.subr.bf16.mxu0 0
        %3386 = vmatpush1.bf16.msra.mxu0 %v3374
        %3387 = vmatprep.subr.bf16.mxu0 0
        %3388 = vmatpush1.bf16.msra.mxu0 0
        %3389 = vmatprep.subr.bf16.mxu0 0
        %3390 = vmatpush1.bf16.msra.mxu0 0
        %3391 = vmatprep.subr.bf16.mxu0 0
        %3392 = vmatpush1.bf16.msra.mxu0 0
        %3393 = vmatprep.subr.bf16.mxu0 0
        %3394 = vmatpush1.bf16.msra.mxu0 0
        %3395 = vmatprep.subr.bf16.mxu0 0
        %3396 = vmatpush1.bf16.msra.mxu0 0
        %3397 = vmatprep.subr.bf16.mxu0 0
        %3398 = vmatpush1.bf16.msra.mxu0 0
        %3399 = vmatprep.subr.bf16.mxu0 0
        %3400 = vmatpush1.bf16.msra.mxu0 0
        %3401 = vmatprep.subr.bf16.mxu0 0
        %3402 = vmatpush1.bf16.msra.mxu0 0
        %3403 = vmatprep.subr.bf16.mxu0 0
        %3404 = vmatpush1.bf16.msra.mxu0 0
        %3405 = vmatprep.subr.bf16.mxu0 0
        %3406 = vmatpush1.bf16.msra.mxu0 0
        %3407 = vmatprep.subr.bf16.mxu0 0
        %3408 = vmatpush1.bf16.msra.mxu0 0
        %3409 = vmatprep.subr.bf16.mxu0 0
        %3410 = vmatpush1.bf16.msra.mxu0 0
        %3411 = vmatprep.subr.bf16.mxu0 0
        %3412 = vmatpush1.bf16.msra.mxu0 0
        %3413 = vmatprep.subr.bf16.mxu0 0
        %3414 = vmatpush1.bf16.msra.mxu0 0
        %3415 = vmatprep.mubr.bf16.mxu0 0
        %3416 = vmatmul.mubr.bf16.gmra.mrb[0].mxu0 %v3378
        %v3417 = vpop.f32.mrb[0].mxu0
        %v3418 = vadd.f32 0.0, %v3417
        %v3419 = vpop.f32.mrb[0].mxu0
        %v3420 = vpop.f32.mrb[0].mxu0
        %v3421 = vadd.f32 0.0, %v3420
        %v3422 = vpop.f32.mrb[0].mxu0
        %3423 = vmatprep.mubr.bf16.mxu0 0
        %3424 = vmatmul.mubr.bf16.gmra.mrb[0].mxu0 %v3381
        %v3425 = vpop.f32.mrb[0].mxu0
        %v3426 = vadd.f32 0.0, %v3425
        %v3427 = vpop.f32.mrb[0].mxu0
        %v3428 = vpop.f32.mrb[0].mxu0
        %v3429 = vadd.f32 0.0, %v3428
        %v3430 = vpop.f32.mrb[0].mxu0
        %3431 = vdwg.mxu0
        %v3432 = vpack.c.bf16 %v2506, %v2503
        %v3433 = vpack.c.bf16 %v2514, %v2511
        %v3434 = vpack.c.bf16 %v2567, %v2564
        %v3435 = vpack.c.bf16 %v2575, %v2572
        %v3436 = vpack.c.bf16 %v2628, %v2625
        %v3437 = vpack.c.bf16 %v2636, %v2633
        %v3438 = vpack.c.bf16 %v2689, %v2686
        %v3439 = vpack.c.bf16 %v2697, %v2694
        %v3440 = vpack.c.bf16 %v2750, %v2747
        %v3441 = vpack.c.bf16 %v2758, %v2755
        %v3442 = vpack.c.bf16 %v2811, %v2808
        %v3443 = vpack.c.bf16 %v2819, %v2816
        %v3444 = vpack.c.bf16 %v2872, %v2869
        %v3445 = vpack.c.bf16 %v2880, %v2877
        %v3446 = vpack.c.bf16 %v2933, %v2930
        %v3447 = vpack.c.bf16 %v2941, %v2938
        %v3448 = vpack.c.bf16 %v2994, %v2991
        %v3449 = vpack.c.bf16 %v3002, %v2999
        %v3450 = vpack.c.bf16 %v3055, %v3052
        %v3451 = vpack.c.bf16 %v3063, %v3060
        %v3452 = vpack.c.bf16 %v3116, %v3113
        %v3453 = vpack.c.bf16 %v3124, %v3121
        %v3454 = vpack.c.bf16 %v3177, %v3174
        %v3455 = vpack.c.bf16 %v3185, %v3182
        %v3456 = vpack.c.bf16 %v3238, %v3235
        %v3457 = vpack.c.bf16 %v3246, %v3243
        %v3458 = vpack.c.bf16 %v3299, %v3296
        %v3459 = vpack.c.bf16 %v3307, %v3304
        %v3460 = vpack.c.bf16 %v3360, %v3357
        %v3461 = vpack.c.bf16 %v3368, %v3365
        %v3462 = vpack.c.bf16 %v3421, %v3418
        %v3463 = vpack.c.bf16 %v3429, %v3426
        %3472 = vrot.lane.b32.xlu0 %v3440, 8
        %v3473 = vpop.permute.xlu0 %3472
        %3474 = vrot.lane.b32.xlu0 %v3441, 8
        %v3475 = vpop.permute.xlu0 %3474
        %3476 = vrot.lane.b32.xlu0 %v3442, 8
        %v3477 = vpop.permute.xlu0 %3476
        %3478 = vrot.lane.b32.xlu0 %v3443, 8
        %v3479 = vpop.permute.xlu0 %3478
        %3480 = vrot.lane.b32.xlu0 %v3444, 8
        %v3481 = vpop.permute.xlu0 %3480
        %3482 = vrot.lane.b32.xlu0 %v3445, 8
        %v3483 = vpop.permute.xlu0 %3482
        %3484 = vrot.lane.b32.xlu0 %v3446, 8
        %v3485 = vpop.permute.xlu0 %3484
        %3486 = vrot.lane.b32.xlu0 %v3447, 8
        %v3487 = vpop.permute.xlu0 %3486
        %3496 = vrot.lane.b32.xlu0 %v3448, 16
        %v3497 = vpop.permute.xlu0 %3496
        %3498 = vrot.lane.b32.xlu0 %v3449, 16
        %v3499 = vpop.permute.xlu0 %3498
        %3500 = vrot.lane.b32.xlu0 %v3450, 16
        %v3501 = vpop.permute.xlu0 %3500
        %3502 = vrot.lane.b32.xlu0 %v3451, 16
        %v3503 = vpop.permute.xlu0 %3502
        %3504 = vrot.lane.b32.xlu0 %v3452, 16
        %v3505 = vpop.permute.xlu0 %3504
        %3506 = vrot.lane.b32.xlu0 %v3453, 16
        %v3507 = vpop.permute.xlu0 %3506
        %3508 = vrot.lane.b32.xlu0 %v3454, 16
        %v3509 = vpop.permute.xlu0 %3508
        %3510 = vrot.lane.b32.xlu0 %v3455, 16
        %v3511 = vpop.permute.xlu0 %3510
        %3520 = vrot.lane.b32.xlu0 %v3456, 24
        %v3521 = vpop.permute.xlu0 %3520
        %3522 = vrot.lane.b32.xlu0 %v3457, 24
        %v3523 = vpop.permute.xlu0 %3522
        %3524 = vrot.lane.b32.xlu0 %v3458, 24
        %v3525 = vpop.permute.xlu0 %3524
        %3526 = vrot.lane.b32.xlu0 %v3459, 24
        %v3527 = vpop.permute.xlu0 %3526
        %3528 = vrot.lane.b32.xlu0 %v3460, 24
        %v3529 = vpop.permute.xlu0 %3528
        %3530 = vrot.lane.b32.xlu0 %v3461, 24
        %v3531 = vpop.permute.xlu0 %3530
        %3532 = vrot.lane.b32.xlu0 %v3462, 24
        %v3533 = vpop.permute.xlu0 %3532
        %3534 = vrot.lane.b32.xlu0 %v3463, 24
        %v3535 = vpop.permute.xlu0 %3534
        %v3538 = vsel %vm555, %v3432, %v3473
        %v3541 = vsel %vm555, %v3433, %v3475
        %v3544 = vsel %vm555, %v3434, %v3477
        %v3547 = vsel %vm555, %v3435, %v3479
        %v3550 = vsel %vm555, %v3436, %v3481
        %v3553 = vsel %vm555, %v3437, %v3483
        %v3556 = vsel %vm555, %v3438, %v3485
        %v3559 = vsel %vm555, %v3439, %v3487
        %vm3560 = vcmask 130048
        %v3562 = vsel %vm3560, %v3538, %v3497
        %v3564 = vsel %vm3560, %v3541, %v3499
        %v3566 = vsel %vm3560, %v3544, %v3501
        %v3568 = vsel %vm3560, %v3547, %v3503
        %v3570 = vsel %vm3560, %v3550, %v3505
        %v3572 = vsel %vm3560, %v3553, %v3507
        %v3574 = vsel %vm3560, %v3556, %v3509
        %v3576 = vsel %vm3560, %v3559, %v3511
        %vm3577 = vcmask 195584
        %v3579 = vsel %vm3577, %v3562, %v3521
        %v3581 = vsel %vm3577, %v3564, %v3523
        %v3583 = vsel %vm3577, %v3566, %v3525
        %v3585 = vsel %vm3577, %v3568, %v3527
        %v3587 = vsel %vm3577, %v3570, %v3529
        %v3589 = vsel %vm3577, %v3572, %v3531
        %v3591 = vsel %vm3577, %v3574, %v3533
        %v3593 = vsel %vm3577, %v3576, %v3535
        %v3594 = vld [vmem:[#allocation7] sm:$0xf]
        %v3595 = vld [vmem:[#allocation7 + $0x4] sm:$0xf]
        %v3596 = vld [vmem:[#allocation7 + $0x8] sm:$0xf]
        %v3597 = vld [vmem:[#allocation7 + $0xc] sm:$0xf]
        %v3598 = vld [vmem:[%s4] sm:$0x1]
        %v3600 = vlaneseq
        %v3601 = vshrl.u32 %v3600, 7
        %v3602 = vsub.s32 0, %v3601
        %v3603 = vrot.slane %v3598, %v3602
        %v3609 = vunpack.c.l.b16 %v3594
        %v3610 = vunpack.c.l.b16 %v3595
        %v3611 = vunpack.c.l.b16 %v3596
        %v3612 = vunpack.c.l.b16 %v3597
        %v3613 = vpack.c.b16 %v3610, %v3609
        %v3614 = vpack.c.b16 %v3612, %v3611
        %v3617 = vsel %vm365, %v3579, 0
        %v3619 = vsel %vm365, %v3581, 0
        %v3621 = vsel %vm365, %v3583, 0
        %v3623 = vsel %vm365, %v3585, 0
        %v3625 = vsel %vm365, %v3587, 0
        %v3627 = vsel %vm365, %v3589, 0
        %v3629 = vsel %vm365, %v3591, 0
        %v3631 = vsel %vm365, %v3593, 0
        %3633 = vmatprep.subr.bf16.mxu0 0
        %3634 = vmatpush1.bf16.msra.mxu0 %v3613
        %3635 = vmatprep.subr.bf16.mxu0 0
        %3636 = vmatpush1.bf16.msra.mxu0 %v3614
        %3637 = vmatprep.subr.bf16.mxu0 0
        %3638 = vmatpush1.bf16.msra.mxu0 0
        %3639 = vmatprep.subr.bf16.mxu0 0
        %3640 = vmatpush1.bf16.msra.mxu0 0
        %3641 = vmatprep.subr.bf16.mxu0 0
        %3642 = vmatpush1.bf16.msra.mxu0 0
        %3643 = vmatprep.subr.bf16.mxu0 0
        %3644 = vmatpush1.bf16.msra.mxu0 0
        %3645 = vmatprep.subr.bf16.mxu0 0
        %3646 = vmatpush1.bf16.msra.mxu0 0
        %3647 = vmatprep.subr.bf16.mxu0 0
        %3648 = vmatpush1.bf16.msra.mxu0 0
        %3649 = vmatprep.subr.bf16.mxu0 0
        %3650 = vmatpush1.bf16.msra.mxu0 0
        %3651 = vmatprep.subr.bf16.mxu0 0
        %3652 = vmatpush1.bf16.msra.mxu0 0
        %3653 = vmatprep.subr.bf16.mxu0 0
        %3654 = vmatpush1.bf16.msra.mxu0 0
        %3655 = vmatprep.subr.bf16.mxu0 0
        %3656 = vmatpush1.bf16.msra.mxu0 0
        %3657 = vmatprep.subr.bf16.mxu0 0
        %3658 = vmatpush1.bf16.msra.mxu0 0
        %3659 = vmatprep.subr.bf16.mxu0 0
        %3660 = vmatpush1.bf16.msra.mxu0 0
        %3661 = vmatprep.subr.bf16.mxu0 0
        %3662 = vmatpush1.bf16.msra.mxu0 0
        %3663 = vmatprep.subr.bf16.mxu0 0
        %3664 = vmatpush1.bf16.msra.mxu0 0
        %3665 = vmatprep.mubr.bf16.mxu0 0
        %3666 = vmatmul.mubr.bf16.gmra.mrb[0].mxu0 %v3617
        %v3667 = vpop.f32.mrb[0].mxu0
        %v3668 = vadd.f32 %v3603, %v3667
        %v3669 = vpop.f32.mrb[0].mxu0
        %v3670 = vpop.f32.mrb[0].mxu0
        %v3671 = vadd.f32 %v3603, %v3670
        %v3672 = vpop.f32.mrb[0].mxu0
        %3673 = vmatprep.mubr.bf16.mxu0 0
        %3674 = vmatmul.mubr.bf16.gmra.mrb[0].mxu0 %v3619
        %v3675 = vpop.f32.mrb[0].mxu0
        %v3676 = vadd.f32 %v3603, %v3675
        %v3677 = vpop.f32.mrb[0].mxu0
        %v3678 = vpop.f32.mrb[0].mxu0
        %v3679 = vadd.f32 %v3603, %v3678
        %v3680 = vpop.f32.mrb[0].mxu0
        %3681 = vmatprep.mubr.bf16.mxu0 0
        %3682 = vmatmul.mubr.bf16.gmra.mrb[0].mxu0 %v3621
        %v3683 = vpop.f32.mrb[0].mxu0
        %v3684 = vadd.f32 %v3603, %v3683
        %v3685 = vpop.f32.mrb[0].mxu0
        %v3686 = vpop.f32.mrb[0].mxu0
        %v3687 = vadd.f32 %v3603, %v3686
        %v3688 = vpop.f32.mrb[0].mxu0
        %3689 = vmatprep.mubr.bf16.mxu0 0
        %3690 = vmatmul.mubr.bf16.gmra.mrb[0].mxu0 %v3623
        %v3691 = vpop.f32.mrb[0].mxu0
        %v3692 = vadd.f32 %v3603, %v3691
        %v3693 = vpop.f32.mrb[0].mxu0
        %v3694 = vpop.f32.mrb[0].mxu0
        %v3695 = vadd.f32 %v3603, %v3694
        %v3696 = vpop.f32.mrb[0].mxu0
        %3697 = vmatprep.mubr.bf16.mxu0 0
        %3698 = vmatmul.mubr.bf16.gmra.mrb[0].mxu0 %v3625
        %v3699 = vpop.f32.mrb[0].mxu0
        %v3700 = vadd.f32 %v3603, %v3699
        %v3701 = vpop.f32.mrb[0].mxu0
        %v3702 = vpop.f32.mrb[0].mxu0
        %v3703 = vadd.f32 %v3603, %v3702
        %v3704 = vpop.f32.mrb[0].mxu0
        %3705 = vmatprep.mubr.bf16.mxu0 0
        %3706 = vmatmul.mubr.bf16.gmra.mrb[0].mxu0 %v3627
        %v3707 = vpop.f32.mrb[0].mxu0
        %v3708 = vadd.f32 %v3603, %v3707
        %v3709 = vpop.f32.mrb[0].mxu0
        %v3710 = vpop.f32.mrb[0].mxu0
        %v3711 = vadd.f32 %v3603, %v3710
        %v3712 = vpop.f32.mrb[0].mxu0
        %3713 = vmatprep.mubr.bf16.mxu0 0
        %3714 = vmatmul.mubr.bf16.gmra.mrb[0].mxu0 %v3629
        %v3715 = vpop.f32.mrb[0].mxu0
        %v3716 = vadd.f32 %v3603, %v3715
        %v3717 = vpop.f32.mrb[0].mxu0
        %v3718 = vpop.f32.mrb[0].mxu0
        %v3719 = vadd.f32 %v3603, %v3718
        %v3720 = vpop.f32.mrb[0].mxu0
        %3721 = vmatprep.mubr.bf16.mxu0 0
        %3722 = vmatmul.mubr.bf16.gmra.mrb[0].mxu0 %v3631
        %v3723 = vpop.f32.mrb[0].mxu0
        %v3724 = vadd.f32 %v3603, %v3723
        %v3725 = vpop.f32.mrb[0].mxu0
        %v3726 = vpop.f32.mrb[0].mxu0
        %v3727 = vadd.f32 %v3603, %v3726
        %v3728 = vpop.f32.mrb[0].mxu0
        %3729 = vdwg.mxu0
        %3730 = vst.msk [vmem:[%s314] sm:$0xff] %vm365, %v3668
        %3731 = vst.msk [vmem:[%s314 + $0x8] sm:$0xff] %vm365, %v3671
        %3732 = vst.msk [vmem:[%s314 + $0x10] sm:$0xff] %vm365, %v3676
        %3733 = vst.msk [vmem:[%s314 + $0x18] sm:$0xff] %vm365, %v3679
        %3734 = vst.msk [vmem:[%s314 + $0x20] sm:$0xff] %vm365, %v3684
        %3735 = vst.msk [vmem:[%s314 + $0x28] sm:$0xff] %vm365, %v3687
        %3736 = vst.msk [vmem:[%s314 + $0x30] sm:$0xff] %vm365, %v3692
        %3737 = vst.msk [vmem:[%s314 + $0x38] sm:$0xff] %vm365, %v3695
        %3738 = vst.msk [vmem:[%s314 + $0x40] sm:$0xff] %vm365, %v3700
        %3739 = vst.msk [vmem:[%s314 + $0x48] sm:$0xff] %vm365, %v3703
        %3740 = vst.msk [vmem:[%s314 + $0x50] sm:$0xff] %vm365, %v3708
        %3741 = vst.msk [vmem:[%s314 + $0x58] sm:$0xff] %vm365, %v3711
        %3742 = vst.msk [vmem:[%s314 + $0x60] sm:$0xff] %vm365, %v3716
        %3743 = vst.msk [vmem:[%s314 + $0x68] sm:$0xff] %vm365, %v3719
        %3744 = vst.msk [vmem:[%s314 + $0x70] sm:$0xff] %vm365, %v3724
        %3745 = vst.msk [vmem:[%s314 + $0x78] sm:$0xff] %vm365, %v3727
        %s3746 = sand.u32 %s164, 1
        %s3747 = scalar_lea.sflag [#allocation4], %s3746
        %s3748 = sand.u32 %s164, 1
        %s3749 = smul.addr %s3748, 128
        %s3750 = scalar_lea.vmem [#allocation10], %s3749
        // Predicated region
        $region61: #{tpu_custom_call.1} parent=43 // pred_check
          %p3751 = pneg %p174
        $region62: #{tpu_custom_call.1} parent=43 // pred_check_branch
          %3753 = sbr.rel (%p3751) target = $region64
        $region63: #{tpu_custom_call.1} parent=43 // pred_region
          %s3754 = smul.u32 4, %s25
          %s3756 = ssub.s32 2048, 2048
          %3757 = vsyncadd %s3747, %s3756
          %s3758 = smul.addr %s3754, 4
          %s3759 = smul.addr %s3758, 128
          %s3760 = scalar_lea.hbm %s6, %s3759
          %s3761 = sshll.u32 %s3750, 4
          %s3762 = int_to_ptr.vmem [resolvable:$true] %s3761
          %3767 = dma.vmem_to_hbm [thread:$0]  %s3762, 2048, %s3760, %s3747, 128, 128, 8
        $region64: #{tpu_custom_call.1} parent=43 // pred_fallthru
          _
      $region44: #{tpu_custom_call.1} parent=5 // pred_fallthru
        _
      %p3768 = scmp.le.s32.totalorder 2, %s20
      // Predicated region
      $region65: #{tpu_custom_call.1} parent=5 // pred_check
        %p3769 = pneg %p3768
      $region66: #{tpu_custom_call.1} parent=5 // pred_check_branch
        %3771 = sbr.rel (%p3769) target = $region68
      $region67: #{tpu_custom_call.1} parent=5 // pred_region
        %s3772 = ssub.s32 %s20, 2
        // Predicated region
        $region69: #{tpu_custom_call.1} parent=67 // pred_check
          %p3773 = pneg %p180
        $region70: #{tpu_custom_call.1} parent=67 // pred_check_branch
          %3775 = sbr.rel (%p3773) target = $region72
        $region71: #{tpu_custom_call.1} parent=67 // pred_region
          %s3776 = sand.u32 %s165, 1
          %s3777 = scalar_lea.sflag [#allocation4], %s3776
          %s3778 = sand.u32 %s165, 1
          %s3779 = smul.addr %s3778, 128
          %s3780 = scalar_lea.vmem [#allocation10], %s3779
          %3781 = dma.done %s3777, 2048
        $region72: #{tpu_custom_call.1} parent=67 // pred_fallthru
          _
      $region68: #{tpu_custom_call.1} parent=5 // pred_fallthru
        _
    $region6: #{tpu_custom_call.1} parent=1 // loop_footer
      %s24 = sadd.s32 1, %s20
    $region7: #{tpu_custom_call.1} parent=1 // loop_footer_branch
      %19 = sbr.rel target = $region3
    $region8: #{tpu_custom_call.1} parent=1 // loop_exit
      _
    %3782 = vsyncpa [#allocation3], 1
    %s3783 = scalar_lea.sflag [#allocation3], 1
    %3784 = vsyncpa %s3783, 1
    %3785 = vsyncpa [#allocation6], 1
    %3786 = vsyncpa [#allocation9], 1
    %3787 = vsyncpa [#allocation4], 1
    %s3788 = scalar_lea.sflag [#allocation4], 1
    %3789 = vsyncpa %s3788, 1

</llo_original>
